<compile_context>
chip_gen: v7x
topology: tpu7x:2x2x1
jax: 0.10.0
libtpu: 0.0.40
codegen_flags: <defaults>
</compile_context>

<pallas_src>
import jax
import jax.numpy as jnp
import numpy as np
from jax import lax
from jax.experimental import pallas as pl
from jax.experimental.pallas import tpu as pltpu

IMAGE_SIZE = 3 * 128 * 128   # 49152
HIDDEN_SIZE = 400
N_SPLIT = 2                  # leading "parallel" grid axis (2 TCs on v7x)


def _layer1_stream_kernel(z_ref, w1t_ref, part_ref):
    """part[c] (B, H) += z[:, K-slice] @ W1[:, K-slice].T  (bf16 in, f32 acc)."""
    c = pl.program_id(0)
    k = pl.program_id(1)
    n_k_per_core = pl.num_programs(1)
    tk = w1t_ref.shape[1]          # static K-tile size

    @pl.when(k == 0)
    def _():
        part_ref[...] = jnp.zeros_like(part_ref)

    # z is fully resident in VMEM; slice the K window here (no per-step DMA).
    start = pl.multiple_of((c * n_k_per_core + k) * tk, tk)
    z_tile = z_ref[:, pl.ds(start, tk)]                        # (B, tk) bf16
    # Contract the K axis of both operands: (B, tk) x (H, tk) -> (B, H).
    part_ref[...] += lax.dot_general(
        z_tile, w1t_ref[...],
        dimension_numbers=(((1,), (1,)), ((), ())),
        preferred_element_type=jnp.float32)


def _tail_kernel(part_ref, b1_ref, w2_ref, b2_ref, w3_ref, b3_ref,
                 w4_ref, b4_ref, o_ref):
    """Combine the two layer-1 partials, then the 400-wide tail MLP + sigmoid."""
    acc = part_ref[0] + part_ref[1]                            # (B, H) f32
    h = jnp.maximum(acc + b1_ref[...], 0.0)                    # ReLU
    h = jnp.dot(h.astype(jnp.bfloat16), w2_ref[...],
                preferred_element_type=jnp.float32)
    h = jnp.maximum(h + b2_ref[...], 0.0)                      # ReLU
    h = jnp.dot(h.astype(jnp.bfloat16), w3_ref[...],
                preferred_element_type=jnp.float32)
    h = jnp.maximum(h + b3_ref[...], 0.0)                      # ReLU
    logit = jnp.dot(h, w4_ref[...], preferred_element_type=jnp.float32)
    logit = logit + b4_ref[...]
    o_ref[...] = 1.0 / (1.0 + jnp.exp(-logit))                 # Sigmoid


def discriminator_forward(z, params, *, tk=8192):
    """z: (B, IMAGE_SIZE) float32.  params: f32, PyTorch nn.Linear layout.
    Returns (B, 1) float32 = Discriminator(z)."""
    w1, b1, w2, b2, w3, b3, w4, b4 = params
    B, F = z.shape
    H = w1.shape[0]
    assert F % tk == 0 and (F // tk) % N_SPLIT == 0
    n_k_per_core = (F // tk) // N_SPLIT

    # Kernel-side dtypes / layouts (bf16 streams, f32 accumulation).
    z_bf = z.astype(jnp.bfloat16)           # cast once, resident in VMEM
    w1t = w1.astype(jnp.bfloat16)           # (H, F): lane-dense W1 stream
    w2k = w2.T.astype(jnp.bfloat16)         # (H, H), in -> out
    w3k = w3.T.astype(jnp.bfloat16)         # (H, H), in -> out
    w4k = w4.T                              # (H, 1), keep f32 (tiny)

    partials = pl.pallas_call(
        _layer1_stream_kernel,
        out_shape=jax.ShapeDtypeStruct((N_SPLIT, B, H), jnp.float32),
        grid_spec=pltpu.PrefetchScalarGridSpec(
            num_scalar_prefetch=0,
            grid=(N_SPLIT, n_k_per_core),
            in_specs=[
                # z: fully VMEM-resident (constant block index).
                pl.BlockSpec((B, F), lambda c, k: (0, 0)),
                # W1^T tile (400, tk); each core streams a disjoint K half.
                pl.BlockSpec((H, tk),
                             lambda c, k: (0, c * n_k_per_core + k)),
            ],
            out_specs=pl.BlockSpec((None, B, H), lambda c, k: (c, 0, 0)),
        ),
        compiler_params=pltpu.CompilerParams(
            dimension_semantics=("parallel", "arbitrary"),
            vmem_limit_bytes=48 << 20,      # footprint ~16 MiB; < v7x 64 MiB
        ),
        cost_estimate=pl.CostEstimate(
            flops=2 * B * F * H,
            transcendentals=0,
            bytes_accessed=int(w1t.size) * 2 + int(z_bf.size) * 2
                           + N_SPLIT * B * H * 4,
        ),
    )(z_bf, w1t)

    # Tiny epilogue kernel: combine partials + tail MLP + sigmoid, all in VMEM.
    out = pl.pallas_call(
        _tail_kernel,
        out_shape=jax.ShapeDtypeStruct((B, 1), jnp.float32),
    )(partials, b1, w2k, b2, w3k, b3, w4k, b4)
    return out


def init_params(key):
    """f32 parameters in PyTorch nn.Linear layout: W is (out, in), b is (1, out)."""
    ks = jax.random.split(key, 8)

    def lin(kw, kb, fan_in, fan_out):
        bound = 1.0 / np.sqrt(fan_in)
        w = jax.random.uniform(kw, (fan_out, fan_in), jnp.float32, -bound, bound)
        b = jax.random.uniform(kb, (1, fan_out), jnp.float32, -bound, bound)
        return w, b

    w1, b1 = lin(ks[0], ks[1], IMAGE_SIZE, HIDDEN_SIZE)
    w2, b2 = lin(ks[2], ks[3], HIDDEN_SIZE, HIDDEN_SIZE)
    w3, b3 = lin(ks[4], ks[5], HIDDEN_SIZE, HIDDEN_SIZE)
    w4, b4 = lin(ks[6], ks[7], HIDDEN_SIZE, 1)
    return (w1, b1, w2, b2, w3, b3, w4, b4)


def reference_forward(z, params):
    """Pure-f32 JAX reference of the PyTorch Discriminator forward."""
    w1, b1, w2, b2, w3, b3, w4, b4 = params
    h = jnp.maximum(z @ w1.T + b1, 0.0)
    h = jnp.maximum(h @ w2.T + b2, 0.0)
    h = jnp.maximum(h @ w3.T + b3, 0.0)
    return jax.nn.sigmoid(h @ w4.T + b4)


if __name__ == "__main__":
    key = jax.random.PRNGKey(0)
    k_param, k_z = jax.random.split(key)
    params = init_params(k_param)

    B = 2
    z = jax.random.normal(k_z, (B, IMAGE_SIZE), dtype=jnp.float32)

    out = jax.block_until_ready(discriminator_forward(z, params))
    ref = jax.block_until_ready(reference_forward(z, params))

    # bf16 layer-1 inputs / bf16 W2,W3 with f32 accumulation: expected
    # deviation from the pure-f32 reference is ~1e-3 post-sigmoid (<< 2e-2).
    np.testing.assert_allclose(np.asarray(out), np.asarray(ref),
                               rtol=2e-2, atol=2e-2)

    print("KERNEL_OK")
</pallas_src>

<mosaic_0001>
module attributes {stable_mosaic.version = 11 : i64} {
  func.func @_layer1_stream_kernel(%arg0: i32, %arg1: i32, %arg2: memref<2x49152xbf16, #tpu.memory_space<vmem>>, %arg3: memref<400x8192xbf16, #tpu.memory_space<vmem>>, %arg4: memref<1x2x400xf32, #tpu.memory_space<vmem>>) attributes {dimension_semantics = [#tpu.dimension_semantics<parallel>, #tpu.dimension_semantics<arbitrary>], iteration_bounds = array<i64: 2, 3>, scalar_prefetch = 0 : i64, scratch_operands = 0 : i64, tpu.core_type = #tpu.core_type<tc>, window_params = [{pipeline_mode = #tpu.pipeline_mode<synchronous>, transform_indices = @transform_0, window_bounds = array<i64: 2, 49152>}, {transform_indices = @transform_1, window_bounds = array<i64: 400, 8192>}, {transform_indices = @transform_2, window_bounds = array<i64: 1, 2, 400>}]} {
    %c0_i32 = arith.constant 0 : i32
    %0 = arith.cmpi eq, %arg1, %c0_i32 : i32
    %1 = arith.extui %0 : i1 to i32
    %c0_i32_0 = arith.constant 0 : i32
    %2 = arith.cmpi ne, %1, %c0_i32_0 : i32
    scf.if %2 {
      %cst_9 = arith.constant 0.000000e+00 : f32
      %17 = vector.broadcast %cst_9 : f32 to vector<2x400xf32>
      %c0_10 = arith.constant 0 : index
      %c0_11 = arith.constant 0 : index
      %c0_12 = arith.constant 0 : index
      %18 = vector.load %arg4[%c0_10, %c0_11, %c0_12] : memref<1x2x400xf32, #tpu.memory_space<vmem>>, vector<1x2x400xf32>
      %19 = vector.shape_cast %18 : vector<1x2x400xf32> to vector<2x400xf32>
      %20 = vector.shape_cast %17 : vector<2x400xf32> to vector<1x2x400xf32>
      tpu.vector_store %arg4[%c0_10, %c0_11, %c0_12], %20 {strides = array<i32>} : memref<1x2x400xf32, #tpu.memory_space<vmem>>, vector<1x2x400xf32>,
    } else {
    }
    %c3_i32 = arith.constant 3 : i32
    %3 = arith.muli %arg0, %c3_i32 : i32
    %4 = arith.addi %3, %arg1 : i32
    %c8192_i32 = arith.constant 8192 : i32
    %5 = arith.muli %4, %c8192_i32 : i32
    %6 = tpu.assume_multiple %5, 8192 : i32
    %c0 = arith.constant 0 : index
    %7 = arith.index_cast %6 : i32 to index
    %8 = vector.load %arg2[%c0, %7] : memref<2x49152xbf16, #tpu.memory_space<vmem>>, vector<2x8192xbf16>
    %c0_1 = arith.constant 0 : index
    %c0_2 = arith.constant 0 : index
    %c0_3 = arith.constant 0 : index
    %9 = vector.load %arg4[%c0_1, %c0_2, %c0_3] : memref<1x2x400xf32, #tpu.memory_space<vmem>>, vector<1x2x400xf32>
    %10 = vector.shape_cast %9 : vector<1x2x400xf32> to vector<2x400xf32>
    %c0_4 = arith.constant 0 : index
    %c0_5 = arith.constant 0 : index
    %11 = vector.load %arg3[%c0_4, %c0_5] : memref<400x8192xbf16, #tpu.memory_space<vmem>>, vector<400x8192xbf16>
    %cst = arith.constant dense<0.000000e+00> : vector<2x400xf32>
    %12 = tpu.matmul %8, %11, %cst {dimension_numbers = #tpu.dot_dimension_numbers<[1], [1], [0], [0], [0, 0, 1, 0], [], []>} : vector<2x8192xbf16>, vector<400x8192xbf16>, vector<2x400xf32> -> vector<2x400xf32>
    %13 = arith.addf %10, %12 : vector<2x400xf32>
    %c0_6 = arith.constant 0 : index
    %c0_7 = arith.constant 0 : index
    %c0_8 = arith.constant 0 : index
    %14 = vector.load %arg4[%c0_6, %c0_7, %c0_8] : memref<1x2x400xf32, #tpu.memory_space<vmem>>, vector<1x2x400xf32>
    %15 = vector.shape_cast %14 : vector<1x2x400xf32> to vector<2x400xf32>
    %16 = vector.shape_cast %13 : vector<2x400xf32> to vector<1x2x400xf32>
    tpu.vector_store %arg4[%c0_6, %c0_7, %c0_8], %16 {strides = array<i32>} : memref<1x2x400xf32, #tpu.memory_space<vmem>>, vector<1x2x400xf32>,
    return
  }
  func.func @transform_0(%arg0: i32, %arg1: i32) -> (i32, i32) {
    %c0_i32 = arith.constant 0 : i32
    %c0_i32_0 = arith.constant 0 : i32
    %c0_i32_1 = arith.constant 0 : i32
    return %c0_i32, %c0_i32_0 : i32, i32
  }
  func.func @transform_1(%arg0: i32, %arg1: i32) -> (i32, i32) {
    %c3_i32 = arith.constant 3 : i32
    %0 = arith.muli %arg0, %c3_i32 : i32
    %1 = arith.addi %0, %arg1 : i32
    %c0_i32 = arith.constant 0 : i32
    %c0_i32_0 = arith.constant 0 : i32
    return %c0_i32, %1 : i32, i32
  }
  func.func @transform_2(%arg0: i32, %arg1: i32) -> (i32, i32, i32) {
    %c0_i32 = arith.constant 0 : i32
    %c0_i32_0 = arith.constant 0 : i32
    %c0_i32_1 = arith.constant 0 : i32
    return %arg0, %c0_i32, %c0_i32_0 : i32, i32, i32
  }
}

</mosaic_0001>

<llo_original>
// kernel: tpu_custom_call.1
$region0: #{tpu_custom_call.1}
  #allocation0 [shape = 'u32[]', space=smem, size = 0x4, offset = 0x4, fixed_abs, tag = 'smem constant byte address 0x4 - core index']
  #allocation1 [shape = 'u32[144,128]{1,0:T(1,128)}', space=vmem, size = 0x12000, scoped, tag = 'internal scratch']
  %s0 = inlined_call_operand.hbm [shape: bf16[2,49152], index: 0, kind: input, shape index: {}]
  %s1 = inlined_call_operand.hbm [shape: bf16[400,49152], index: 1, kind: input, shape index: {}]
  %s2 = inlined_call_operand.hbm [shape: f32[2,2,400], index: 2, kind: output, shape index: {}]
  %s3 = sld [smem:[#allocation0]]
  $region53: #{tpu_custom_call.1} parent=0
    _
  %s5 = ssub.s32 1, %s3
  %s6 = scalar_select 0, %s5, %s3
  $region1: #{tpu_custom_call.1} parent=0
    #allocation2 [shape = 'u8[196608]{0}', space=vmem, size = 0x30000, scoped, tag = 'input window, operand 0, single buffered']
    #allocation3 [shape = 's32[2]{0}', space=sflag, size = 0x8, scoped, tag = 'scoped memory for tpu_custom_call.1']
    #allocation4 [shape = 's32[2]{0}', space=sflag, size = 0x8, scoped, tag = 'scoped memory for tpu_custom_call.1']
    #allocation5 [shape = 'u8[13107200]{0}', space=vmem, size = 0xc80000, scoped, tag = 'input window, operand 1']
    #allocation6 [shape = 's32[2]{0}', space=sflag, size = 0x8, scoped, tag = 'scoped memory for tpu_custom_call.1']
    #allocation7 [shape = 'u8[8192]{0}', space=vmem, size = 0x2000, scoped, tag = 'output window, operand 0']
    %7 = vsyncpa [#allocation3], 0
    %8 = vsyncpa [#allocation6], 0
    %s9 = scalar_lea.sflag [#allocation6], 1
    %10 = vsyncpa %s9, 0
    %11 = vsyncpa [#allocation4], 0
    %s12 = scalar_lea.sflag [#allocation4], 1
    %13 = vsyncpa %s12, 0
    loop: start=0, step=1, limit=8
    $region2: #{tpu_custom_call.1} parent=1 // loop_pre_header
      _
    $region3: #{tpu_custom_call.1} parent=1 // loop_header
      %s15 = sphi 0, %s19
      %p16 = scmp.ge.s32.totalorder %s15, 8
      %s22 = sphi 0, %s34
      %s23 = sphi 0, %s30
      %s24 = sphi 0, %s22
      %s25 = sphi 0, %s23
      %s26 = sphi 0, %s24
      %s27 = sphi 0, %s25
      %s35 = sphi 0, %s35
      %s37 = sphi 0, %s35
      %s38 = sphi 0, %s37
      %s52 = sphi 0, %s38
      %s62 = sphi 0, %s64
      %s65 = sphi 0, %s62
      %s66 = sphi 0, %s65
      %s82 = sphi 0, %s66
      %s88 = sphi 0, %s90
      %s91 = sphi 0, %s88
      %s92 = sphi 0, %s91
      %s108 = sphi 0, %s92
    $region4: #{tpu_custom_call.1} parent=1 // loop_header_branch
      %18 = sbr.rel (%p16) target = $region8
    $region5: #{tpu_custom_call.1} parent=1 // loop_body
      %s20 = ssub.s32 %s15, 1
      %s21 = ssub.s32 %s15, 2
      %s28 = sadd.s32 1, %s23
      %p29 = scmp.ge.s32.totalorder %s28, 3
      %s30 = scalar_select %p29, 0, %s28
      %s31 = sadd.s32 1, %s22
      %s32 = scalar_select %p29, %s31, %s22
      %p33 = scmp.ge.s32.totalorder %s32, 2
      %s34 = scalar_select %p33, 0, %s32
      %s36 = sadd.s32 %s35, 1
      %p39 = scmp.eq.s32.totalorder %s15, 5
      %p40 = scmp.ne.s32.totalorder %s35, %s37
      %p41 = scmp.eq.s32.totalorder %s15, 0
      %p42 = por %p40, %p41
      %p43 = scmp.ne.s32.totalorder %s35, %s37
      %p44 = scmp.eq.s32.totalorder %s20, 5
      %p45 = por %p43, %p44
      %p46 = scmp.ne.s32.totalorder %s37, %s38
      %p47 = scmp.eq.s32.totalorder %s20, 0
      %p48 = por %p46, %p47
      %p49 = scmp.ne.s32.totalorder %s37, %s38
      %p50 = scmp.eq.s32.totalorder %s21, 5
      %p51 = por %p49, %p50
      %p53 = scmp.ne.s32.totalorder %s38, %s52
      %p54 = scmp.eq.s32.totalorder %s21, 0
      %p55 = por %p53, %p54
      %s56 = smul.u32 %s22, 3
      %s57 = sadd.s32 %s56, %s23
      %s58 = smul.u32 %s34, 3
      %s59 = sadd.s32 %s58, %s30
      %s60 = ssub.s32 %s57, %s59
      %p61 = scmp.eq.s32.totalorder %s60, 0
      %s63 = sadd.s32 %s62, 1
      %s64 = scalar_select %p61, %s62, %s63
      %p67 = pneg %p61
      %p68 = scmp.eq.s32.totalorder %s15, 5
      %p69 = por %p67, %p68
      %p70 = scmp.ne.s32.totalorder %s62, %s65
      %p71 = scmp.eq.s32.totalorder %s15, 0
      %p72 = por %p70, %p71
      %p73 = scmp.ne.s32.totalorder %s62, %s65
      %p74 = scmp.eq.s32.totalorder %s20, 5
      %p75 = por %p73, %p74
      %p76 = scmp.ne.s32.totalorder %s65, %s66
      %p77 = scmp.eq.s32.totalorder %s20, 0
      %p78 = por %p76, %p77
      %p79 = scmp.ne.s32.totalorder %s65, %s66
      %p80 = scmp.eq.s32.totalorder %s21, 5
      %p81 = por %p79, %p80
      %p83 = scmp.ne.s32.totalorder %s66, %s82
      %p84 = scmp.eq.s32.totalorder %s21, 0
      %p85 = por %p83, %p84
      %s86 = ssub.s32 %s22, %s34
      %p87 = scmp.eq.s32.totalorder %s86, 0
      %s89 = sadd.s32 %s88, 1
      %s90 = scalar_select %p87, %s88, %s89
      %p93 = pneg %p87
      %p94 = scmp.eq.s32.totalorder %s15, 5
      %p95 = por %p93, %p94
      %p96 = scmp.ne.s32.totalorder %s88, %s91
      %p97 = scmp.eq.s32.totalorder %s15, 0
      %p98 = por %p96, %p97
      %p99 = scmp.ne.s32.totalorder %s88, %s91
      %p100 = scmp.eq.s32.totalorder %s20, 5
      %p101 = por %p99, %p100
      %p102 = scmp.ne.s32.totalorder %s91, %s92
      %p103 = scmp.eq.s32.totalorder %s20, 0
      %p104 = por %p102, %p103
      %p105 = scmp.ne.s32.totalorder %s91, %s92
      %p106 = scmp.eq.s32.totalorder %s21, 5
      %p107 = por %p105, %p106
      %p109 = scmp.ne.s32.totalorder %s92, %s108
      %p110 = scmp.eq.s32.totalorder %s21, 0
      %p111 = por %p109, %p110
      %p112 = scmp.le.s32.totalorder 1, %s15
      %p113 = scmp.lt.s32.totalorder %s15, 7
      %p114 = pnand %p112, %p113
      %p115 = pneg %p114
      // Predicated region
      $region9: #{tpu_custom_call.1} parent=5 // pred_check
        _
      $region10: #{tpu_custom_call.1} parent=5 // pred_check_branch
        %117 = sbr.rel (%p114) target = $region12
      $region11: #{tpu_custom_call.1} parent=5 // pred_region
        %s118 = ssub.s32 %s15, 1
        // Predicated region
        $region13: #{tpu_custom_call.1} parent=11 // pred_check
          %p119 = pneg %p48
        $region14: #{tpu_custom_call.1} parent=11 // pred_check_branch
          %121 = sbr.rel (%p119) target = $region16
        $region15: #{tpu_custom_call.1} parent=11 // pred_region
          %s123 = ssub.s32 6144, 6144
          %124 = vsyncadd [#allocation3], %s123
          %s126 = sshll.u32 [#allocation2], 4
          %s127 = int_to_ptr.vmem [resolvable:$true] %s126
          %129 = dma.hbm_to_vmem [thread:$0]  %s0, 6144, %s127, [#allocation3]
        $region16: #{tpu_custom_call.1} parent=11 // pred_fallthru
          _
      $region12: #{tpu_custom_call.1} parent=5 // pred_fallthru
        _
      %p130 = scmp.lt.s32.totalorder %s15, 6
      // Predicated region
      $region17: #{tpu_custom_call.1} parent=5 // pred_check
        %p131 = pneg %p130
      $region18: #{tpu_custom_call.1} parent=5 // pred_check_branch
        %133 = sbr.rel (%p131) target = $region20
      $region19: #{tpu_custom_call.1} parent=5 // pred_region
        // Predicated region
        $region21: #{tpu_custom_call.1} parent=19 // pred_check
          %p134 = pneg %p72
        $region22: #{tpu_custom_call.1} parent=19 // pred_check_branch
          %136 = sbr.rel (%p134) target = $region24
        $region23: #{tpu_custom_call.1} parent=19 // pred_region
          %s137 = sand.u32 %s62, 1
          %s138 = scalar_lea.sflag [#allocation6], %s137
          %s139 = sand.u32 %s62, 1
          %s140 = smul.addr %s139, 12800
          %s141 = scalar_lea.vmem [#allocation5], %s140
          %s142 = smul.u32 %s22, 3
          %s143 = sadd.s32 %s142, %s23
          %s144 = smul.u32 64, %s143
          %s146 = ssub.s32 204800, 204800
          %147 = vsyncadd %s138, %s146
          %s148 = smul.addr %s144, 64
          %s149 = scalar_lea.hbm %s1, %s148
          %s150 = sshll.u32 %s141, 4
          %s151 = int_to_ptr.vmem [resolvable:$true] %s150
          %156 = dma.hbm_to_vmem [thread:$0]  %s149, 204800, %s151, %s138, 24576, 4096, 256
        $region24: #{tpu_custom_call.1} parent=19 // pred_fallthru
          _
      $region20: #{tpu_custom_call.1} parent=5 // pred_fallthru
        _
      %p157 = scmp.le.s32.totalorder 1, %s15
      %p158 = scmp.lt.s32.totalorder %s15, 7
      %p159 = pnand %p157, %p158
      %p160 = pneg %p159
      // Predicated region
      $region25: #{tpu_custom_call.1} parent=5 // pred_check
        _
      $region26: #{tpu_custom_call.1} parent=5 // pred_check_branch
        %162 = sbr.rel (%p159) target = $region28
      $region27: #{tpu_custom_call.1} parent=5 // pred_region
        %s163 = ssub.s32 %s15, 1
        // Predicated region
        $region29: #{tpu_custom_call.1} parent=27 // pred_check
          %p164 = pneg %p48
        $region30: #{tpu_custom_call.1} parent=27 // pred_check_branch
          %166 = sbr.rel (%p164) target = $region32
        $region31: #{tpu_custom_call.1} parent=27 // pred_region
          %167 = dma.done [#allocation3], 6144
        $region32: #{tpu_custom_call.1} parent=27 // pred_fallthru
          _
        %s168 = sand.u32 %s65, 1
        %s169 = scalar_lea.sflag [#allocation6], %s168
        %s170 = sand.u32 %s65, 1
        %s171 = smul.addr %s170, 12800
        %s172 = scalar_lea.vmem [#allocation5], %s171
        // Predicated region
        $region33: #{tpu_custom_call.1} parent=27 // pred_check
          %p173 = pneg %p78
        $region34: #{tpu_custom_call.1} parent=27 // pred_check_branch
          %175 = sbr.rel (%p173) target = $region36
        $region35: #{tpu_custom_call.1} parent=27 // pred_region
          %176 = dma.done %s169, 204800
        $region36: #{tpu_custom_call.1} parent=27 // pred_fallthru
          _
        %p177 = pneg %p48
        %p178 = pneg %p45
        %s179 = sand.u32 %s65, 1
        %s180 = scalar_lea.sflag [#allocation6], %s179
        %s181 = sand.u32 %s65, 1
        %s182 = smul.addr %s181, 12800
        %s183 = scalar_lea.vmem [#allocation5], %s182
        %p184 = pneg %p78
        %p185 = pneg %p75
        %p186 = pneg %p104
        %p187 = pneg %p101
        %s188 = sand.u32 %s91, 1
        %s189 = scalar_lea.sflag [#allocation4], %s188
        %s190 = sand.u32 %s91, 1
        %s191 = smul.addr %s190, 8
        %s192 = scalar_lea.vmem [#allocation7], %s191
        %s193 = smul.u32 %s24, 3
        %s194 = sadd.s32 %s193, %s25
        %s195 = smul.u32 64, %s194
        %p197 = scmp.eq.s32.totalorder %s25, 0
        // Predicated region
        $region37: #{tpu_custom_call.1} parent=27 // pred_check
          %p198 = pneg %p197
        $region38: #{tpu_custom_call.1} parent=27 // pred_check_branch
          %200 = sbr.rel (%p198) target = $region40
        $region39: #{tpu_custom_call.1} parent=27 // pred_region
          %vm201 = vcmask 1041408
          %vm202 = vcmask 1043458
          %vm203 = vmor %vm202, %vm201
          %vm204 = vcmask 1045508
          %vm205 = vmor %vm204, %vm203
          %vm206 = vcmask 130054
          %vm207 = vmor %vm206, %vm205
          %208 = vst.msk [vmem:[%s192] sm:$0xff] %vm207, 0.0
        $region40: #{tpu_custom_call.1} parent=27 // pred_fallthru
          _
        %s209 = smul.u32 %s24, 3
        %s210 = sadd.s32 %s209, %s25
        %s211 = smul.u32 %s210, 8192
        %s212 = sshra.s32 %s211, 7
        %s213 = sand.u32 %s211, 127
        %s214 = scalar_lea.vmem [#allocation2], %s212
        %v215 = vld [vmem:[%s214] sm:$0xff]
        %v216 = vld [vmem:[%s214 + $0x8] sm:$0xff]
        %v217 = vld [vmem:[%s214 + $0x10] sm:$0xff]
        %v218 = vld [vmem:[%s214 + $0x18] sm:$0xff]
        %v219 = vld [vmem:[%s214 + $0x20] sm:$0xff]
        %v220 = vld [vmem:[%s214 + $0x28] sm:$0xff]
        %v221 = vld [vmem:[%s214 + $0x30] sm:$0xff]
        %v222 = vld [vmem:[%s214 + $0x38] sm:$0xff]
        %v223 = vld [vmem:[%s192] sm:$0xff]
        %v224 = vld [vmem:[%s172] sm:$0xff]
        %v225 = vld [vmem:[%s172 + $0x8] sm:$0xff]
        %v226 = vld [vmem:[%s172 + $0x10] sm:$0xff]
        %v227 = vld [vmem:[%s172 + $0x18] sm:$0xff]
        %v228 = vld [vmem:[%s172 + $0x20] sm:$0xff]
        %v229 = vld [vmem:[%s172 + $0x28] sm:$0xff]
        %v230 = vld [vmem:[%s172 + $0x30] sm:$0xff]
        %v231 = vld [vmem:[%s172 + $0x38] sm:$0xff]
        %v232 = vld [vmem:[%s172 + $0x40] sm:$0xff]
        %v233 = vld [vmem:[%s172 + $0x48] sm:$0xff]
        %v234 = vld [vmem:[%s172 + $0x50] sm:$0xff]
        %v235 = vld [vmem:[%s172 + $0x58] sm:$0xff]
        %v236 = vld [vmem:[%s172 + $0x60] sm:$0xff]
        %v237 = vld [vmem:[%s172 + $0x68] sm:$0xff]
        %v238 = vld [vmem:[%s172 + $0x70] sm:$0xff]
        %v239 = vld [vmem:[%s172 + $0x78] sm:$0xff]
        %v240 = vld [vmem:[%s172 + $0x80] sm:$0xff]
        %v241 = vld [vmem:[%s172 + $0x88] sm:$0xff]
        %v242 = vld [vmem:[%s172 + $0x90] sm:$0xff]
        %v243 = vld [vmem:[%s172 + $0x98] sm:$0xff]
        %v244 = vld [vmem:[%s172 + $0xa0] sm:$0xff]
        %v245 = vld [vmem:[%s172 + $0xa8] sm:$0xff]
        %v246 = vld [vmem:[%s172 + $0xb0] sm:$0xff]
        %v247 = vld [vmem:[%s172 + $0xb8] sm:$0xff]
        %v248 = vld [vmem:[%s172 + $0xc0] sm:$0xff]
        %v249 = vld [vmem:[%s172 + $0xc8] sm:$0xff]
        %v250 = vld [vmem:[%s172 + $0xd0] sm:$0xff]
        %v251 = vld [vmem:[%s172 + $0xd8] sm:$0xff]
        %v252 = vld [vmem:[%s172 + $0xe0] sm:$0xff]
        %v253 = vld [vmem:[%s172 + $0xe8] sm:$0xff]
        %v254 = vld [vmem:[%s172 + $0xf0] sm:$0xff]
        %v255 = vld [vmem:[%s172 + $0xf8] sm:$0xff]
        %v256 = vld [vmem:[%s172 + $0x100] sm:$0xff]
        %v257 = vld [vmem:[%s172 + $0x108] sm:$0xff]
        %v258 = vld [vmem:[%s172 + $0x110] sm:$0xff]
        %v259 = vld [vmem:[%s172 + $0x118] sm:$0xff]
        %v260 = vld [vmem:[%s172 + $0x120] sm:$0xff]
        %v261 = vld [vmem:[%s172 + $0x128] sm:$0xff]
        %v262 = vld [vmem:[%s172 + $0x130] sm:$0xff]
        %v263 = vld [vmem:[%s172 + $0x138] sm:$0xff]
        %v264 = vld [vmem:[%s172 + $0x140] sm:$0xff]
        %v265 = vld [vmem:[%s172 + $0x148] sm:$0xff]
        %v266 = vld [vmem:[%s172 + $0x150] sm:$0xff]
        %v267 = vld [vmem:[%s172 + $0x158] sm:$0xff]
        %v268 = vld [vmem:[%s172 + $0x160] sm:$0xff]
        %v269 = vld [vmem:[%s172 + $0x168] sm:$0xff]
        %v270 = vld [vmem:[%s172 + $0x170] sm:$0xff]
        %v271 = vld [vmem:[%s172 + $0x178] sm:$0xff]
        %v272 = vld [vmem:[%s172 + $0x180] sm:$0xff]
        %v273 = vld [vmem:[%s172 + $0x188] sm:$0xff]
        %v274 = vld [vmem:[%s172 + $0x190] sm:$0xff]
        %v275 = vld [vmem:[%s172 + $0x198] sm:$0xff]
        %v276 = vld [vmem:[%s172 + $0x1a0] sm:$0xff]
        %v277 = vld [vmem:[%s172 + $0x1a8] sm:$0xff]
        %v278 = vld [vmem:[%s172 + $0x1b0] sm:$0xff]
        %v279 = vld [vmem:[%s172 + $0x1b8] sm:$0xff]
        %v280 = vld [vmem:[%s172 + $0x1c0] sm:$0xff]
        %v281 = vld [vmem:[%s172 + $0x1c8] sm:$0xff]
        %v282 = vld [vmem:[%s172 + $0x1d0] sm:$0xff]
        %v283 = vld [vmem:[%s172 + $0x1d8] sm:$0xff]
        %v284 = vld [vmem:[%s172 + $0x1e0] sm:$0xff]
        %v285 = vld [vmem:[%s172 + $0x1e8] sm:$0xff]
        %v286 = vld [vmem:[%s172 + $0x1f0] sm:$0xff]
        %v287 = vld [vmem:[%s172 + $0x1f8] sm:$0xff]
        %v288 = vld [vmem:[%s172 + $0x200] sm:$0xff]
        %v289 = vld [vmem:[%s172 + $0x208] sm:$0xff]
        %v290 = vld [vmem:[%s172 + $0x210] sm:$0xff]
        %v291 = vld [vmem:[%s172 + $0x218] sm:$0xff]
        %v292 = vld [vmem:[%s172 + $0x220] sm:$0xff]
        %v293 = vld [vmem:[%s172 + $0x228] sm:$0xff]
        %v294 = vld [vmem:[%s172 + $0x230] sm:$0xff]
        %v295 = vld [vmem:[%s172 + $0x238] sm:$0xff]
        %v296 = vld [vmem:[%s172 + $0x240] sm:$0xff]
        %v297 = vld [vmem:[%s172 + $0x248] sm:$0xff]
        %v298 = vld [vmem:[%s172 + $0x250] sm:$0xff]
        %v299 = vld [vmem:[%s172 + $0x258] sm:$0xff]
        %v300 = vld [vmem:[%s172 + $0x260] sm:$0xff]
        %v301 = vld [vmem:[%s172 + $0x268] sm:$0xff]
        %v302 = vld [vmem:[%s172 + $0x270] sm:$0xff]
        %v303 = vld [vmem:[%s172 + $0x278] sm:$0xff]
        %v304 = vld [vmem:[%s172 + $0x280] sm:$0xff]
        %v305 = vld [vmem:[%s172 + $0x288] sm:$0xff]
        %v306 = vld [vmem:[%s172 + $0x290] sm:$0xff]
        %v307 = vld [vmem:[%s172 + $0x298] sm:$0xff]
        %v308 = vld [vmem:[%s172 + $0x2a0] sm:$0xff]
        %v309 = vld [vmem:[%s172 + $0x2a8] sm:$0xff]
        %v310 = vld [vmem:[%s172 + $0x2b0] sm:$0xff]
        %v311 = vld [vmem:[%s172 + $0x2b8] sm:$0xff]
        %v312 = vld [vmem:[%s172 + $0x2c0] sm:$0xff]
        %v313 = vld [vmem:[%s172 + $0x2c8] sm:$0xff]
        %v314 = vld [vmem:[%s172 + $0x2d0] sm:$0xff]
        %v315 = vld [vmem:[%s172 + $0x2d8] sm:$0xff]
        %v316 = vld [vmem:[%s172 + $0x2e0] sm:$0xff]
        %v317 = vld [vmem:[%s172 + $0x2e8] sm:$0xff]
        %v318 = vld [vmem:[%s172 + $0x2f0] sm:$0xff]
        %v319 = vld [vmem:[%s172 + $0x2f8] sm:$0xff]
        %v320 = vld [vmem:[%s172 + $0x300] sm:$0xff]
        %v321 = vld [vmem:[%s172 + $0x308] sm:$0xff]
        %v322 = vld [vmem:[%s172 + $0x310] sm:$0xff]
        %v323 = vld [vmem:[%s172 + $0x318] sm:$0xff]
        %v324 = vld [vmem:[%s172 + $0x320] sm:$0xff]
        %v325 = vld [vmem:[%s172 + $0x328] sm:$0xff]
        %v326 = vld [vmem:[%s172 + $0x330] sm:$0xff]
        %v327 = vld [vmem:[%s172 + $0x338] sm:$0xff]
        %v328 = vld [vmem:[%s172 + $0x340] sm:$0xff]
        %v329 = vld [vmem:[%s172 + $0x348] sm:$0xff]
        %v330 = vld [vmem:[%s172 + $0x350] sm:$0xff]
        %v331 = vld [vmem:[%s172 + $0x358] sm:$0xff]
        %v332 = vld [vmem:[%s172 + $0x360] sm:$0xff]
        %v333 = vld [vmem:[%s172 + $0x368] sm:$0xff]
        %v334 = vld [vmem:[%s172 + $0x370] sm:$0xff]
        %v335 = vld [vmem:[%s172 + $0x378] sm:$0xff]
        %v336 = vld [vmem:[%s172 + $0x380] sm:$0xff]
        %v337 = vld [vmem:[%s172 + $0x388] sm:$0xff]
        %v338 = vld [vmem:[%s172 + $0x390] sm:$0xff]
        %v339 = vld [vmem:[%s172 + $0x398] sm:$0xff]
        %v340 = vld [vmem:[%s172 + $0x3a0] sm:$0xff]
        %v341 = vld [vmem:[%s172 + $0x3a8] sm:$0xff]
        %v342 = vld [vmem:[%s172 + $0x3b0] sm:$0xff]
        %v343 = vld [vmem:[%s172 + $0x3b8] sm:$0xff]
        %v344 = vld [vmem:[%s172 + $0x3c0] sm:$0xff]
        %v345 = vld [vmem:[%s172 + $0x3c8] sm:$0xff]
        %v346 = vld [vmem:[%s172 + $0x3d0] sm:$0xff]
        %v347 = vld [vmem:[%s172 + $0x3d8] sm:$0xff]
        %v348 = vld [vmem:[%s172 + $0x3e0] sm:$0xff]
        %v349 = vld [vmem:[%s172 + $0x3e8] sm:$0xff]
        %v350 = vld [vmem:[%s172 + $0x3f0] sm:$0xff]
        %v351 = vld [vmem:[%s172 + $0x3f8] sm:$0xff]
        %v352 = vld [vmem:[%s172 + $0x400] sm:$0xff]
        %v353 = vld [vmem:[%s172 + $0x408] sm:$0xff]
        %v354 = vld [vmem:[%s172 + $0x410] sm:$0xff]
        %v355 = vld [vmem:[%s172 + $0x418] sm:$0xff]
        %v356 = vld [vmem:[%s172 + $0x420] sm:$0xff]
        %v357 = vld [vmem:[%s172 + $0x428] sm:$0xff]
        %v358 = vld [vmem:[%s172 + $0x430] sm:$0xff]
        %v359 = vld [vmem:[%s172 + $0x438] sm:$0xff]
        %v360 = vld [vmem:[%s172 + $0x440] sm:$0xff]
        %v361 = vld [vmem:[%s172 + $0x448] sm:$0xff]
        %v362 = vld [vmem:[%s172 + $0x450] sm:$0xff]
        %v363 = vld [vmem:[%s172 + $0x458] sm:$0xff]
        %v364 = vld [vmem:[%s172 + $0x460] sm:$0xff]
        %v365 = vld [vmem:[%s172 + $0x468] sm:$0xff]
        %v366 = vld [vmem:[%s172 + $0x470] sm:$0xff]
        %v367 = vld [vmem:[%s172 + $0x478] sm:$0xff]
        %v368 = vld [vmem:[%s172 + $0x480] sm:$0xff]
        %v369 = vld [vmem:[%s172 + $0x488] sm:$0xff]
        %v370 = vld [vmem:[%s172 + $0x490] sm:$0xff]
        %v371 = vld [vmem:[%s172 + $0x498] sm:$0xff]
        %v372 = vld [vmem:[%s172 + $0x4a0] sm:$0xff]
        %v373 = vld [vmem:[%s172 + $0x4a8] sm:$0xff]
        %v374 = vld [vmem:[%s172 + $0x4b0] sm:$0xff]
        %v375 = vld [vmem:[%s172 + $0x4b8] sm:$0xff]
        %v376 = vld [vmem:[%s172 + $0x4c0] sm:$0xff]
        %v377 = vld [vmem:[%s172 + $0x4c8] sm:$0xff]
        %v378 = vld [vmem:[%s172 + $0x4d0] sm:$0xff]
        %v379 = vld [vmem:[%s172 + $0x4d8] sm:$0xff]
        %v380 = vld [vmem:[%s172 + $0x4e0] sm:$0xff]
        %v381 = vld [vmem:[%s172 + $0x4e8] sm:$0xff]
        %v382 = vld [vmem:[%s172 + $0x4f0] sm:$0xff]
        %v383 = vld [vmem:[%s172 + $0x4f8] sm:$0xff]
        %v384 = vld [vmem:[%s172 + $0x500] sm:$0xff]
        %v385 = vld [vmem:[%s172 + $0x508] sm:$0xff]
        %v386 = vld [vmem:[%s172 + $0x510] sm:$0xff]
        %v387 = vld [vmem:[%s172 + $0x518] sm:$0xff]
        %v388 = vld [vmem:[%s172 + $0x520] sm:$0xff]
        %v389 = vld [vmem:[%s172 + $0x528] sm:$0xff]
        %v390 = vld [vmem:[%s172 + $0x530] sm:$0xff]
        %v391 = vld [vmem:[%s172 + $0x538] sm:$0xff]
        %v392 = vld [vmem:[%s172 + $0x540] sm:$0xff]
        %v393 = vld [vmem:[%s172 + $0x548] sm:$0xff]
        %v394 = vld [vmem:[%s172 + $0x550] sm:$0xff]
        %v395 = vld [vmem:[%s172 + $0x558] sm:$0xff]
        %v396 = vld [vmem:[%s172 + $0x560] sm:$0xff]
        %v397 = vld [vmem:[%s172 + $0x568] sm:$0xff]
        %v398 = vld [vmem:[%s172 + $0x570] sm:$0xff]
        %v399 = vld [vmem:[%s172 + $0x578] sm:$0xff]
        %v400 = vld [vmem:[%s172 + $0x580] sm:$0xff]
        %v401 = vld [vmem:[%s172 + $0x588] sm:$0xff]
        %v402 = vld [vmem:[%s172 + $0x590] sm:$0xff]
        %v403 = vld [vmem:[%s172 + $0x598] sm:$0xff]
        %v404 = vld [vmem:[%s172 + $0x5a0] sm:$0xff]
        %v405 = vld [vmem:[%s172 + $0x5a8] sm:$0xff]
        %v406 = vld [vmem:[%s172 + $0x5b0] sm:$0xff]
        %v407 = vld [vmem:[%s172 + $0x5b8] sm:$0xff]
        %v408 = vld [vmem:[%s172 + $0x5c0] sm:$0xff]
        %v409 = vld [vmem:[%s172 + $0x5c8] sm:$0xff]
        %v410 = vld [vmem:[%s172 + $0x5d0] sm:$0xff]
        %v411 = vld [vmem:[%s172 + $0x5d8] sm:$0xff]
        %v412 = vld [vmem:[%s172 + $0x5e0] sm:$0xff]
        %v413 = vld [vmem:[%s172 + $0x5e8] sm:$0xff]
        %v414 = vld [vmem:[%s172 + $0x5f0] sm:$0xff]
        %v415 = vld [vmem:[%s172 + $0x5f8] sm:$0xff]
        %v416 = vld [vmem:[%s172 + $0x600] sm:$0xff]
        %v417 = vld [vmem:[%s172 + $0x608] sm:$0xff]
        %v418 = vld [vmem:[%s172 + $0x610] sm:$0xff]
        %v419 = vld [vmem:[%s172 + $0x618] sm:$0xff]
        %v420 = vld [vmem:[%s172 + $0x620] sm:$0xff]
        %v421 = vld [vmem:[%s172 + $0x628] sm:$0xff]
        %v422 = vld [vmem:[%s172 + $0x630] sm:$0xff]
        %v423 = vld [vmem:[%s172 + $0x638] sm:$0xff]
        %v424 = vld [vmem:[%s172 + $0x640] sm:$0xff]
        %v425 = vld [vmem:[%s172 + $0x648] sm:$0xff]
        %v426 = vld [vmem:[%s172 + $0x650] sm:$0xff]
        %v427 = vld [vmem:[%s172 + $0x658] sm:$0xff]
        %v428 = vld [vmem:[%s172 + $0x660] sm:$0xff]
        %v429 = vld [vmem:[%s172 + $0x668] sm:$0xff]
        %v430 = vld [vmem:[%s172 + $0x670] sm:$0xff]
        %v431 = vld [vmem:[%s172 + $0x678] sm:$0xff]
        %v432 = vld [vmem:[%s172 + $0x680] sm:$0xff]
        %v433 = vld [vmem:[%s172 + $0x688] sm:$0xff]
        %v434 = vld [vmem:[%s172 + $0x690] sm:$0xff]
        %v435 = vld [vmem:[%s172 + $0x698] sm:$0xff]
        %v436 = vld [vmem:[%s172 + $0x6a0] sm:$0xff]
        %v437 = vld [vmem:[%s172 + $0x6a8] sm:$0xff]
        %v438 = vld [vmem:[%s172 + $0x6b0] sm:$0xff]
        %v439 = vld [vmem:[%s172 + $0x6b8] sm:$0xff]
        %v440 = vld [vmem:[%s172 + $0x6c0] sm:$0xff]
        %v441 = vld [vmem:[%s172 + $0x6c8] sm:$0xff]
        %v442 = vld [vmem:[%s172 + $0x6d0] sm:$0xff]
        %v443 = vld [vmem:[%s172 + $0x6d8] sm:$0xff]
        %v444 = vld [vmem:[%s172 + $0x6e0] sm:$0xff]
        %v445 = vld [vmem:[%s172 + $0x6e8] sm:$0xff]
        %v446 = vld [vmem:[%s172 + $0x6f0] sm:$0xff]
        %v447 = vld [vmem:[%s172 + $0x6f8] sm:$0xff]
        %v448 = vld [vmem:[%s172 + $0x700] sm:$0xff]
        %v449 = vld [vmem:[%s172 + $0x708] sm:$0xff]
        %v450 = vld [vmem:[%s172 + $0x710] sm:$0xff]
        %v451 = vld [vmem:[%s172 + $0x718] sm:$0xff]
        %v452 = vld [vmem:[%s172 + $0x720] sm:$0xff]
        %v453 = vld [vmem:[%s172 + $0x728] sm:$0xff]
        %v454 = vld [vmem:[%s172 + $0x730] sm:$0xff]
        %v455 = vld [vmem:[%s172 + $0x738] sm:$0xff]
        %v456 = vld [vmem:[%s172 + $0x740] sm:$0xff]
        %v457 = vld [vmem:[%s172 + $0x748] sm:$0xff]
        %v458 = vld [vmem:[%s172 + $0x750] sm:$0xff]
        %v459 = vld [vmem:[%s172 + $0x758] sm:$0xff]
        %v460 = vld [vmem:[%s172 + $0x760] sm:$0xff]
        %v461 = vld [vmem:[%s172 + $0x768] sm:$0xff]
        %v462 = vld [vmem:[%s172 + $0x770] sm:$0xff]
        %v463 = vld [vmem:[%s172 + $0x778] sm:$0xff]
        %v464 = vld [vmem:[%s172 + $0x780] sm:$0xff]
        %v465 = vld [vmem:[%s172 + $0x788] sm:$0xff]
        %v466 = vld [vmem:[%s172 + $0x790] sm:$0xff]
        %v467 = vld [vmem:[%s172 + $0x798] sm:$0xff]
        %v468 = vld [vmem:[%s172 + $0x7a0] sm:$0xff]
        %v469 = vld [vmem:[%s172 + $0x7a8] sm:$0xff]
        %v470 = vld [vmem:[%s172 + $0x7b0] sm:$0xff]
        %v471 = vld [vmem:[%s172 + $0x7b8] sm:$0xff]
        %v472 = vld [vmem:[%s172 + $0x7c0] sm:$0xff]
        %v473 = vld [vmem:[%s172 + $0x7c8] sm:$0xff]
        %v474 = vld [vmem:[%s172 + $0x7d0] sm:$0xff]
        %v475 = vld [vmem:[%s172 + $0x7d8] sm:$0xff]
        %v476 = vld [vmem:[%s172 + $0x7e0] sm:$0xff]
        %v477 = vld [vmem:[%s172 + $0x7e8] sm:$0xff]
        %v478 = vld [vmem:[%s172 + $0x7f0] sm:$0xff]
        %v479 = vld [vmem:[%s172 + $0x7f8] sm:$0xff]
        %v480 = vld [vmem:[%s172 + $0x800] sm:$0xff]
        %v481 = vld [vmem:[%s172 + $0x808] sm:$0xff]
        %v482 = vld [vmem:[%s172 + $0x810] sm:$0xff]
        %v483 = vld [vmem:[%s172 + $0x818] sm:$0xff]
        %v484 = vld [vmem:[%s172 + $0x820] sm:$0xff]
        %v485 = vld [vmem:[%s172 + $0x828] sm:$0xff]
        %v486 = vld [vmem:[%s172 + $0x830] sm:$0xff]
        %v487 = vld [vmem:[%s172 + $0x838] sm:$0xff]
        %v488 = vld [vmem:[%s172 + $0x840] sm:$0xff]
        %v489 = vld [vmem:[%s172 + $0x848] sm:$0xff]
        %v490 = vld [vmem:[%s172 + $0x850] sm:$0xff]
        %v491 = vld [vmem:[%s172 + $0x858] sm:$0xff]
        %v492 = vld [vmem:[%s172 + $0x860] sm:$0xff]
        %v493 = vld [vmem:[%s172 + $0x868] sm:$0xff]
        %v494 = vld [vmem:[%s172 + $0x870] sm:$0xff]
        %v495 = vld [vmem:[%s172 + $0x878] sm:$0xff]
        %v496 = vld [vmem:[%s172 + $0x880] sm:$0xff]
        %v497 = vld [vmem:[%s172 + $0x888] sm:$0xff]
        %v498 = vld [vmem:[%s172 + $0x890] sm:$0xff]
        %v499 = vld [vmem:[%s172 + $0x898] sm:$0xff]
        %v500 = vld [vmem:[%s172 + $0x8a0] sm:$0xff]
        %v501 = vld [vmem:[%s172 + $0x8a8] sm:$0xff]
        %v502 = vld [vmem:[%s172 + $0x8b0] sm:$0xff]
        %v503 = vld [vmem:[%s172 + $0x8b8] sm:$0xff]
        %v504 = vld [vmem:[%s172 + $0x8c0] sm:$0xff]
        %v505 = vld [vmem:[%s172 + $0x8c8] sm:$0xff]
        %v506 = vld [vmem:[%s172 + $0x8d0] sm:$0xff]
        %v507 = vld [vmem:[%s172 + $0x8d8] sm:$0xff]
        %v508 = vld [vmem:[%s172 + $0x8e0] sm:$0xff]
        %v509 = vld [vmem:[%s172 + $0x8e8] sm:$0xff]
        %v510 = vld [vmem:[%s172 + $0x8f0] sm:$0xff]
        %v511 = vld [vmem:[%s172 + $0x8f8] sm:$0xff]
        %v512 = vld [vmem:[%s172 + $0x900] sm:$0xff]
        %v513 = vld [vmem:[%s172 + $0x908] sm:$0xff]
        %v514 = vld [vmem:[%s172 + $0x910] sm:$0xff]
        %v515 = vld [vmem:[%s172 + $0x918] sm:$0xff]
        %v516 = vld [vmem:[%s172 + $0x920] sm:$0xff]
        %v517 = vld [vmem:[%s172 + $0x928] sm:$0xff]
        %v518 = vld [vmem:[%s172 + $0x930] sm:$0xff]
        %v519 = vld [vmem:[%s172 + $0x938] sm:$0xff]
        %v520 = vld [vmem:[%s172 + $0x940] sm:$0xff]
        %v521 = vld [vmem:[%s172 + $0x948] sm:$0xff]
        %v522 = vld [vmem:[%s172 + $0x950] sm:$0xff]
        %v523 = vld [vmem:[%s172 + $0x958] sm:$0xff]
        %v524 = vld [vmem:[%s172 + $0x960] sm:$0xff]
        %v525 = vld [vmem:[%s172 + $0x968] sm:$0xff]
        %v526 = vld [vmem:[%s172 + $0x970] sm:$0xff]
        %v527 = vld [vmem:[%s172 + $0x978] sm:$0xff]
        %v528 = vld [vmem:[%s172 + $0x980] sm:$0xff]
        %v529 = vld [vmem:[%s172 + $0x988] sm:$0xff]
        %v530 = vld [vmem:[%s172 + $0x990] sm:$0xff]
        %v531 = vld [vmem:[%s172 + $0x998] sm:$0xff]
        %v532 = vld [vmem:[%s172 + $0x9a0] sm:$0xff]
        %v533 = vld [vmem:[%s172 + $0x9a8] sm:$0xff]
        %v534 = vld [vmem:[%s172 + $0x9b0] sm:$0xff]
        %v535 = vld [vmem:[%s172 + $0x9b8] sm:$0xff]
        %v536 = vld [vmem:[%s172 + $0x9c0] sm:$0xff]
        %v537 = vld [vmem:[%s172 + $0x9c8] sm:$0xff]
        %v538 = vld [vmem:[%s172 + $0x9d0] sm:$0xff]
        %v539 = vld [vmem:[%s172 + $0x9d8] sm:$0xff]
        %v540 = vld [vmem:[%s172 + $0x9e0] sm:$0xff]
        %v541 = vld [vmem:[%s172 + $0x9e8] sm:$0xff]
        %v542 = vld [vmem:[%s172 + $0x9f0] sm:$0xff]
        %v543 = vld [vmem:[%s172 + $0x9f8] sm:$0xff]
        %v544 = vld [vmem:[%s172 + $0xa00] sm:$0xff]
        %v545 = vld [vmem:[%s172 + $0xa08] sm:$0xff]
        %v546 = vld [vmem:[%s172 + $0xa10] sm:$0xff]
        %v547 = vld [vmem:[%s172 + $0xa18] sm:$0xff]
        %v548 = vld [vmem:[%s172 + $0xa20] sm:$0xff]
        %v549 = vld [vmem:[%s172 + $0xa28] sm:$0xff]
        %v550 = vld [vmem:[%s172 + $0xa30] sm:$0xff]
        %v551 = vld [vmem:[%s172 + $0xa38] sm:$0xff]
        %v552 = vld [vmem:[%s172 + $0xa40] sm:$0xff]
        %v553 = vld [vmem:[%s172 + $0xa48] sm:$0xff]
        %v554 = vld [vmem:[%s172 + $0xa50] sm:$0xff]
        %v555 = vld [vmem:[%s172 + $0xa58] sm:$0xff]
        %v556 = vld [vmem:[%s172 + $0xa60] sm:$0xff]
        %v557 = vld [vmem:[%s172 + $0xa68] sm:$0xff]
        %v558 = vld [vmem:[%s172 + $0xa70] sm:$0xff]
        %v559 = vld [vmem:[%s172 + $0xa78] sm:$0xff]
        %v560 = vld [vmem:[%s172 + $0xa80] sm:$0xff]
        %v561 = vld [vmem:[%s172 + $0xa88] sm:$0xff]
        %v562 = vld [vmem:[%s172 + $0xa90] sm:$0xff]
        %v563 = vld [vmem:[%s172 + $0xa98] sm:$0xff]
        %v564 = vld [vmem:[%s172 + $0xaa0] sm:$0xff]
        %v565 = vld [vmem:[%s172 + $0xaa8] sm:$0xff]
        %v566 = vld [vmem:[%s172 + $0xab0] sm:$0xff]
        %v567 = vld [vmem:[%s172 + $0xab8] sm:$0xff]
        %v568 = vld [vmem:[%s172 + $0xac0] sm:$0xff]
        %v569 = vld [vmem:[%s172 + $0xac8] sm:$0xff]
        %v570 = vld [vmem:[%s172 + $0xad0] sm:$0xff]
        %v571 = vld [vmem:[%s172 + $0xad8] sm:$0xff]
        %v572 = vld [vmem:[%s172 + $0xae0] sm:$0xff]
        %v573 = vld [vmem:[%s172 + $0xae8] sm:$0xff]
        %v574 = vld [vmem:[%s172 + $0xaf0] sm:$0xff]
        %v575 = vld [vmem:[%s172 + $0xaf8] sm:$0xff]
        %v576 = vld [vmem:[%s172 + $0xb00] sm:$0xff]
        %v577 = vld [vmem:[%s172 + $0xb08] sm:$0xff]
        %v578 = vld [vmem:[%s172 + $0xb10] sm:$0xff]
        %v579 = vld [vmem:[%s172 + $0xb18] sm:$0xff]
        %v580 = vld [vmem:[%s172 + $0xb20] sm:$0xff]
        %v581 = vld [vmem:[%s172 + $0xb28] sm:$0xff]
        %v582 = vld [vmem:[%s172 + $0xb30] sm:$0xff]
        %v583 = vld [vmem:[%s172 + $0xb38] sm:$0xff]
        %v584 = vld [vmem:[%s172 + $0xb40] sm:$0xff]
        %v585 = vld [vmem:[%s172 + $0xb48] sm:$0xff]
        %v586 = vld [vmem:[%s172 + $0xb50] sm:$0xff]
        %v587 = vld [vmem:[%s172 + $0xb58] sm:$0xff]
        %v588 = vld [vmem:[%s172 + $0xb60] sm:$0xff]
        %v589 = vld [vmem:[%s172 + $0xb68] sm:$0xff]
        %v590 = vld [vmem:[%s172 + $0xb70] sm:$0xff]
        %v591 = vld [vmem:[%s172 + $0xb78] sm:$0xff]
        %v592 = vld [vmem:[%s172 + $0xb80] sm:$0xff]
        %v593 = vld [vmem:[%s172 + $0xb88] sm:$0xff]
        %v594 = vld [vmem:[%s172 + $0xb90] sm:$0xff]
        %v595 = vld [vmem:[%s172 + $0xb98] sm:$0xff]
        %v596 = vld [vmem:[%s172 + $0xba0] sm:$0xff]
        %v597 = vld [vmem:[%s172 + $0xba8] sm:$0xff]
        %v598 = vld [vmem:[%s172 + $0xbb0] sm:$0xff]
        %v599 = vld [vmem:[%s172 + $0xbb8] sm:$0xff]
        %v600 = vld [vmem:[%s172 + $0xbc0] sm:$0xff]
        %v601 = vld [vmem:[%s172 + $0xbc8] sm:$0xff]
        %v602 = vld [vmem:[%s172 + $0xbd0] sm:$0xff]
        %v603 = vld [vmem:[%s172 + $0xbd8] sm:$0xff]
        %v604 = vld [vmem:[%s172 + $0xbe0] sm:$0xff]
        %v605 = vld [vmem:[%s172 + $0xbe8] sm:$0xff]
        %v606 = vld [vmem:[%s172 + $0xbf0] sm:$0xff]
        %v607 = vld [vmem:[%s172 + $0xbf8] sm:$0xff]
        %v608 = vld [vmem:[%s172 + $0xc00] sm:$0xff]
        %v609 = vld [vmem:[%s172 + $0xc08] sm:$0xff]
        %v610 = vld [vmem:[%s172 + $0xc10] sm:$0xff]
        %v611 = vld [vmem:[%s172 + $0xc18] sm:$0xff]
        %v612 = vld [vmem:[%s172 + $0xc20] sm:$0xff]
        %v613 = vld [vmem:[%s172 + $0xc28] sm:$0xff]
        %v614 = vld [vmem:[%s172 + $0xc30] sm:$0xff]
        %v615 = vld [vmem:[%s172 + $0xc38] sm:$0xff]
        %v616 = vld [vmem:[%s172 + $0xc40] sm:$0xff]
        %v617 = vld [vmem:[%s172 + $0xc48] sm:$0xff]
        %v618 = vld [vmem:[%s172 + $0xc50] sm:$0xff]
        %v619 = vld [vmem:[%s172 + $0xc58] sm:$0xff]
        %v620 = vld [vmem:[%s172 + $0xc60] sm:$0xff]
        %v621 = vld [vmem:[%s172 + $0xc68] sm:$0xff]
        %v622 = vld [vmem:[%s172 + $0xc70] sm:$0xff]
        %v623 = vld [vmem:[%s172 + $0xc78] sm:$0xff]
        %v624 = vld [vmem:[%s172 + $0xc80] sm:$0xff]
        %v625 = vld [vmem:[%s172 + $0xc88] sm:$0xff]
        %v626 = vld [vmem:[%s172 + $0xc90] sm:$0xff]
        %v627 = vld [vmem:[%s172 + $0xc98] sm:$0xff]
        %v628 = vld [vmem:[%s172 + $0xca0] sm:$0xff]
        %v629 = vld [vmem:[%s172 + $0xca8] sm:$0xff]
        %v630 = vld [vmem:[%s172 + $0xcb0] sm:$0xff]
        %v631 = vld [vmem:[%s172 + $0xcb8] sm:$0xff]
        %v632 = vld [vmem:[%s172 + $0xcc0] sm:$0xff]
        %v633 = vld [vmem:[%s172 + $0xcc8] sm:$0xff]
        %v634 = vld [vmem:[%s172 + $0xcd0] sm:$0xff]
        %v635 = vld [vmem:[%s172 + $0xcd8] sm:$0xff]
        %v636 = vld [vmem:[%s172 + $0xce0] sm:$0xff]
        %v637 = vld [vmem:[%s172 + $0xce8] sm:$0xff]
        %v638 = vld [vmem:[%s172 + $0xcf0] sm:$0xff]
        %v639 = vld [vmem:[%s172 + $0xcf8] sm:$0xff]
        %v640 = vld [vmem:[%s172 + $0xd00] sm:$0xff]
        %v641 = vld [vmem:[%s172 + $0xd08] sm:$0xff]
        %v642 = vld [vmem:[%s172 + $0xd10] sm:$0xff]
        %v643 = vld [vmem:[%s172 + $0xd18] sm:$0xff]
        %v644 = vld [vmem:[%s172 + $0xd20] sm:$0xff]
        %v645 = vld [vmem:[%s172 + $0xd28] sm:$0xff]
        %v646 = vld [vmem:[%s172 + $0xd30] sm:$0xff]
        %v647 = vld [vmem:[%s172 + $0xd38] sm:$0xff]
        %v648 = vld [vmem:[%s172 + $0xd40] sm:$0xff]
        %v649 = vld [vmem:[%s172 + $0xd48] sm:$0xff]
        %v650 = vld [vmem:[%s172 + $0xd50] sm:$0xff]
        %v651 = vld [vmem:[%s172 + $0xd58] sm:$0xff]
        %v652 = vld [vmem:[%s172 + $0xd60] sm:$0xff]
        %v653 = vld [vmem:[%s172 + $0xd68] sm:$0xff]
        %v654 = vld [vmem:[%s172 + $0xd70] sm:$0xff]
        %v655 = vld [vmem:[%s172 + $0xd78] sm:$0xff]
        %v656 = vld [vmem:[%s172 + $0xd80] sm:$0xff]
        %v657 = vld [vmem:[%s172 + $0xd88] sm:$0xff]
        %v658 = vld [vmem:[%s172 + $0xd90] sm:$0xff]
        %v659 = vld [vmem:[%s172 + $0xd98] sm:$0xff]
        %v660 = vld [vmem:[%s172 + $0xda0] sm:$0xff]
        %v661 = vld [vmem:[%s172 + $0xda8] sm:$0xff]
        %v662 = vld [vmem:[%s172 + $0xdb0] sm:$0xff]
        %v663 = vld [vmem:[%s172 + $0xdb8] sm:$0xff]
        %v664 = vld [vmem:[%s172 + $0xdc0] sm:$0xff]
        %v665 = vld [vmem:[%s172 + $0xdc8] sm:$0xff]
        %v666 = vld [vmem:[%s172 + $0xdd0] sm:$0xff]
        %v667 = vld [vmem:[%s172 + $0xdd8] sm:$0xff]
        %v668 = vld [vmem:[%s172 + $0xde0] sm:$0xff]
        %v669 = vld [vmem:[%s172 + $0xde8] sm:$0xff]
        %v670 = vld [vmem:[%s172 + $0xdf0] sm:$0xff]
        %v671 = vld [vmem:[%s172 + $0xdf8] sm:$0xff]
        %v672 = vld [vmem:[%s172 + $0xe00] sm:$0xff]
        %v673 = vld [vmem:[%s172 + $0xe08] sm:$0xff]
        %v674 = vld [vmem:[%s172 + $0xe10] sm:$0xff]
        %v675 = vld [vmem:[%s172 + $0xe18] sm:$0xff]
        %v676 = vld [vmem:[%s172 + $0xe20] sm:$0xff]
        %v677 = vld [vmem:[%s172 + $0xe28] sm:$0xff]
        %v678 = vld [vmem:[%s172 + $0xe30] sm:$0xff]
        %v679 = vld [vmem:[%s172 + $0xe38] sm:$0xff]
        %v680 = vld [vmem:[%s172 + $0xe40] sm:$0xff]
        %v681 = vld [vmem:[%s172 + $0xe48] sm:$0xff]
        %v682 = vld [vmem:[%s172 + $0xe50] sm:$0xff]
        %v683 = vld [vmem:[%s172 + $0xe58] sm:$0xff]
        %v684 = vld [vmem:[%s172 + $0xe60] sm:$0xff]
        %v685 = vld [vmem:[%s172 + $0xe68] sm:$0xff]
        %v686 = vld [vmem:[%s172 + $0xe70] sm:$0xff]
        %v687 = vld [vmem:[%s172 + $0xe78] sm:$0xff]
        %v688 = vld [vmem:[%s172 + $0xe80] sm:$0xff]
        %v689 = vld [vmem:[%s172 + $0xe88] sm:$0xff]
        %v690 = vld [vmem:[%s172 + $0xe90] sm:$0xff]
        %v691 = vld [vmem:[%s172 + $0xe98] sm:$0xff]
        %v692 = vld [vmem:[%s172 + $0xea0] sm:$0xff]
        %v693 = vld [vmem:[%s172 + $0xea8] sm:$0xff]
        %v694 = vld [vmem:[%s172 + $0xeb0] sm:$0xff]
        %v695 = vld [vmem:[%s172 + $0xeb8] sm:$0xff]
        %v696 = vld [vmem:[%s172 + $0xec0] sm:$0xff]
        %v697 = vld [vmem:[%s172 + $0xec8] sm:$0xff]
        %v698 = vld [vmem:[%s172 + $0xed0] sm:$0xff]
        %v699 = vld [vmem:[%s172 + $0xed8] sm:$0xff]
        %v700 = vld [vmem:[%s172 + $0xee0] sm:$0xff]
        %v701 = vld [vmem:[%s172 + $0xee8] sm:$0xff]
        %v702 = vld [vmem:[%s172 + $0xef0] sm:$0xff]
        %v703 = vld [vmem:[%s172 + $0xef8] sm:$0xff]
        %v704 = vld [vmem:[%s172 + $0xf00] sm:$0xff]
        %v705 = vld [vmem:[%s172 + $0xf08] sm:$0xff]
        %v706 = vld [vmem:[%s172 + $0xf10] sm:$0xff]
        %v707 = vld [vmem:[%s172 + $0xf18] sm:$0xff]
        %v708 = vld [vmem:[%s172 + $0xf20] sm:$0xff]
        %v709 = vld [vmem:[%s172 + $0xf28] sm:$0xff]
        %v710 = vld [vmem:[%s172 + $0xf30] sm:$0xff]
        %v711 = vld [vmem:[%s172 + $0xf38] sm:$0xff]
        %v712 = vld [vmem:[%s172 + $0xf40] sm:$0xff]
        %v713 = vld [vmem:[%s172 + $0xf48] sm:$0xff]
        %v714 = vld [vmem:[%s172 + $0xf50] sm:$0xff]
        %v715 = vld [vmem:[%s172 + $0xf58] sm:$0xff]
        %v716 = vld [vmem:[%s172 + $0xf60] sm:$0xff]
        %v717 = vld [vmem:[%s172 + $0xf68] sm:$0xff]
        %v718 = vld [vmem:[%s172 + $0xf70] sm:$0xff]
        %v719 = vld [vmem:[%s172 + $0xf78] sm:$0xff]
        %v720 = vld [vmem:[%s172 + $0xf80] sm:$0xff]
        %v721 = vld [vmem:[%s172 + $0xf88] sm:$0xff]
        %v722 = vld [vmem:[%s172 + $0xf90] sm:$0xff]
        %v723 = vld [vmem:[%s172 + $0xf98] sm:$0xff]
        %v724 = vld [vmem:[%s172 + $0xfa0] sm:$0xff]
        %v725 = vld [vmem:[%s172 + $0xfa8] sm:$0xff]
        %v726 = vld [vmem:[%s172 + $0xfb0] sm:$0xff]
        %v727 = vld [vmem:[%s172 + $0xfb8] sm:$0xff]
        %v728 = vld [vmem:[%s172 + $0xfc0] sm:$0xff]
        %v729 = vld [vmem:[%s172 + $0xfc8] sm:$0xff]
        %v730 = vld [vmem:[%s172 + $0xfd0] sm:$0xff]
        %v731 = vld [vmem:[%s172 + $0xfd8] sm:$0xff]
        %v732 = vld [vmem:[%s172 + $0xfe0] sm:$0xff]
        %v733 = vld [vmem:[%s172 + $0xfe8] sm:$0xff]
        %v734 = vld [vmem:[%s172 + $0xff0] sm:$0xff]
        %v735 = vld [vmem:[%s172 + $0xff8] sm:$0xff]
        %v736 = vld [vmem:[%s172 + $0x1000] sm:$0xff]
        %v737 = vld [vmem:[%s172 + $0x1008] sm:$0xff]
        %v738 = vld [vmem:[%s172 + $0x1010] sm:$0xff]
        %v739 = vld [vmem:[%s172 + $0x1018] sm:$0xff]
        %v740 = vld [vmem:[%s172 + $0x1020] sm:$0xff]
        %v741 = vld [vmem:[%s172 + $0x1028] sm:$0xff]
        %v742 = vld [vmem:[%s172 + $0x1030] sm:$0xff]
        %v743 = vld [vmem:[%s172 + $0x1038] sm:$0xff]
        %v744 = vld [vmem:[%s172 + $0x1040] sm:$0xff]
        %v745 = vld [vmem:[%s172 + $0x1048] sm:$0xff]
        %v746 = vld [vmem:[%s172 + $0x1050] sm:$0xff]
        %v747 = vld [vmem:[%s172 + $0x1058] sm:$0xff]
        %v748 = vld [vmem:[%s172 + $0x1060] sm:$0xff]
        %v749 = vld [vmem:[%s172 + $0x1068] sm:$0xff]
        %v750 = vld [vmem:[%s172 + $0x1070] sm:$0xff]
        %v751 = vld [vmem:[%s172 + $0x1078] sm:$0xff]
        %v752 = vld [vmem:[%s172 + $0x1080] sm:$0xff]
        %v753 = vld [vmem:[%s172 + $0x1088] sm:$0xff]
        %v754 = vld [vmem:[%s172 + $0x1090] sm:$0xff]
        %v755 = vld [vmem:[%s172 + $0x1098] sm:$0xff]
        %v756 = vld [vmem:[%s172 + $0x10a0] sm:$0xff]
        %v757 = vld [vmem:[%s172 + $0x10a8] sm:$0xff]
        %v758 = vld [vmem:[%s172 + $0x10b0] sm:$0xff]
        %v759 = vld [vmem:[%s172 + $0x10b8] sm:$0xff]
        %v760 = vld [vmem:[%s172 + $0x10c0] sm:$0xff]
        %v761 = vld [vmem:[%s172 + $0x10c8] sm:$0xff]
        %v762 = vld [vmem:[%s172 + $0x10d0] sm:$0xff]
        %v763 = vld [vmem:[%s172 + $0x10d8] sm:$0xff]
        %v764 = vld [vmem:[%s172 + $0x10e0] sm:$0xff]
        %v765 = vld [vmem:[%s172 + $0x10e8] sm:$0xff]
        %v766 = vld [vmem:[%s172 + $0x10f0] sm:$0xff]
        %v767 = vld [vmem:[%s172 + $0x10f8] sm:$0xff]
        %v768 = vld [vmem:[%s172 + $0x1100] sm:$0xff]
        %v769 = vld [vmem:[%s172 + $0x1108] sm:$0xff]
        %v770 = vld [vmem:[%s172 + $0x1110] sm:$0xff]
        %v771 = vld [vmem:[%s172 + $0x1118] sm:$0xff]
        %v772 = vld [vmem:[%s172 + $0x1120] sm:$0xff]
        %v773 = vld [vmem:[%s172 + $0x1128] sm:$0xff]
        %v774 = vld [vmem:[%s172 + $0x1130] sm:$0xff]
        %v775 = vld [vmem:[%s172 + $0x1138] sm:$0xff]
        %v776 = vld [vmem:[%s172 + $0x1140] sm:$0xff]
        %v777 = vld [vmem:[%s172 + $0x1148] sm:$0xff]
        %v778 = vld [vmem:[%s172 + $0x1150] sm:$0xff]
        %v779 = vld [vmem:[%s172 + $0x1158] sm:$0xff]
        %v780 = vld [vmem:[%s172 + $0x1160] sm:$0xff]
        %v781 = vld [vmem:[%s172 + $0x1168] sm:$0xff]
        %v782 = vld [vmem:[%s172 + $0x1170] sm:$0xff]
        %v783 = vld [vmem:[%s172 + $0x1178] sm:$0xff]
        %v784 = vld [vmem:[%s172 + $0x1180] sm:$0xff]
        %v785 = vld [vmem:[%s172 + $0x1188] sm:$0xff]
        %v786 = vld [vmem:[%s172 + $0x1190] sm:$0xff]
        %v787 = vld [vmem:[%s172 + $0x1198] sm:$0xff]
        %v788 = vld [vmem:[%s172 + $0x11a0] sm:$0xff]
        %v789 = vld [vmem:[%s172 + $0x11a8] sm:$0xff]
        %v790 = vld [vmem:[%s172 + $0x11b0] sm:$0xff]
        %v791 = vld [vmem:[%s172 + $0x11b8] sm:$0xff]
        %v792 = vld [vmem:[%s172 + $0x11c0] sm:$0xff]
        %v793 = vld [vmem:[%s172 + $0x11c8] sm:$0xff]
        %v794 = vld [vmem:[%s172 + $0x11d0] sm:$0xff]
        %v795 = vld [vmem:[%s172 + $0x11d8] sm:$0xff]
        %v796 = vld [vmem:[%s172 + $0x11e0] sm:$0xff]
        %v797 = vld [vmem:[%s172 + $0x11e8] sm:$0xff]
        %v798 = vld [vmem:[%s172 + $0x11f0] sm:$0xff]
        %v799 = vld [vmem:[%s172 + $0x11f8] sm:$0xff]
        %v800 = vld [vmem:[%s172 + $0x1200] sm:$0xff]
        %v801 = vld [vmem:[%s172 + $0x1208] sm:$0xff]
        %v802 = vld [vmem:[%s172 + $0x1210] sm:$0xff]
        %v803 = vld [vmem:[%s172 + $0x1218] sm:$0xff]
        %v804 = vld [vmem:[%s172 + $0x1220] sm:$0xff]
        %v805 = vld [vmem:[%s172 + $0x1228] sm:$0xff]
        %v806 = vld [vmem:[%s172 + $0x1230] sm:$0xff]
        %v807 = vld [vmem:[%s172 + $0x1238] sm:$0xff]
        %v808 = vld [vmem:[%s172 + $0x1240] sm:$0xff]
        %v809 = vld [vmem:[%s172 + $0x1248] sm:$0xff]
        %v810 = vld [vmem:[%s172 + $0x1250] sm:$0xff]
        %v811 = vld [vmem:[%s172 + $0x1258] sm:$0xff]
        %v812 = vld [vmem:[%s172 + $0x1260] sm:$0xff]
        %v813 = vld [vmem:[%s172 + $0x1268] sm:$0xff]
        %v814 = vld [vmem:[%s172 + $0x1270] sm:$0xff]
        %v815 = vld [vmem:[%s172 + $0x1278] sm:$0xff]
        %v816 = vld [vmem:[%s172 + $0x1280] sm:$0xff]
        %v817 = vld [vmem:[%s172 + $0x1288] sm:$0xff]
        %v818 = vld [vmem:[%s172 + $0x1290] sm:$0xff]
        %v819 = vld [vmem:[%s172 + $0x1298] sm:$0xff]
        %v820 = vld [vmem:[%s172 + $0x12a0] sm:$0xff]
        %v821 = vld [vmem:[%s172 + $0x12a8] sm:$0xff]
        %v822 = vld [vmem:[%s172 + $0x12b0] sm:$0xff]
        %v823 = vld [vmem:[%s172 + $0x12b8] sm:$0xff]
        %v824 = vld [vmem:[%s172 + $0x12c0] sm:$0xff]
        %v825 = vld [vmem:[%s172 + $0x12c8] sm:$0xff]
        %v826 = vld [vmem:[%s172 + $0x12d0] sm:$0xff]
        %v827 = vld [vmem:[%s172 + $0x12d8] sm:$0xff]
        %v828 = vld [vmem:[%s172 + $0x12e0] sm:$0xff]
        %v829 = vld [vmem:[%s172 + $0x12e8] sm:$0xff]
        %v830 = vld [vmem:[%s172 + $0x12f0] sm:$0xff]
        %v831 = vld [vmem:[%s172 + $0x12f8] sm:$0xff]
        %v832 = vld [vmem:[%s172 + $0x1300] sm:$0xff]
        %v833 = vld [vmem:[%s172 + $0x1308] sm:$0xff]
        %v834 = vld [vmem:[%s172 + $0x1310] sm:$0xff]
        %v835 = vld [vmem:[%s172 + $0x1318] sm:$0xff]
        %v836 = vld [vmem:[%s172 + $0x1320] sm:$0xff]
        %v837 = vld [vmem:[%s172 + $0x1328] sm:$0xff]
        %v838 = vld [vmem:[%s172 + $0x1330] sm:$0xff]
        %v839 = vld [vmem:[%s172 + $0x1338] sm:$0xff]
        %v840 = vld [vmem:[%s172 + $0x1340] sm:$0xff]
        %v841 = vld [vmem:[%s172 + $0x1348] sm:$0xff]
        %v842 = vld [vmem:[%s172 + $0x1350] sm:$0xff]
        %v843 = vld [vmem:[%s172 + $0x1358] sm:$0xff]
        %v844 = vld [vmem:[%s172 + $0x1360] sm:$0xff]
        %v845 = vld [vmem:[%s172 + $0x1368] sm:$0xff]
        %v846 = vld [vmem:[%s172 + $0x1370] sm:$0xff]
        %v847 = vld [vmem:[%s172 + $0x1378] sm:$0xff]
        %v848 = vld [vmem:[%s172 + $0x1380] sm:$0xff]
        %v849 = vld [vmem:[%s172 + $0x1388] sm:$0xff]
        %v850 = vld [vmem:[%s172 + $0x1390] sm:$0xff]
        %v851 = vld [vmem:[%s172 + $0x1398] sm:$0xff]
        %v852 = vld [vmem:[%s172 + $0x13a0] sm:$0xff]
        %v853 = vld [vmem:[%s172 + $0x13a8] sm:$0xff]
        %v854 = vld [vmem:[%s172 + $0x13b0] sm:$0xff]
        %v855 = vld [vmem:[%s172 + $0x13b8] sm:$0xff]
        %v856 = vld [vmem:[%s172 + $0x13c0] sm:$0xff]
        %v857 = vld [vmem:[%s172 + $0x13c8] sm:$0xff]
        %v858 = vld [vmem:[%s172 + $0x13d0] sm:$0xff]
        %v859 = vld [vmem:[%s172 + $0x13d8] sm:$0xff]
        %v860 = vld [vmem:[%s172 + $0x13e0] sm:$0xff]
        %v861 = vld [vmem:[%s172 + $0x13e8] sm:$0xff]
        %v862 = vld [vmem:[%s172 + $0x13f0] sm:$0xff]
        %v863 = vld [vmem:[%s172 + $0x13f8] sm:$0xff]
        %v864 = vld [vmem:[%s172 + $0x1400] sm:$0xff]
        %v865 = vld [vmem:[%s172 + $0x1408] sm:$0xff]
        %v866 = vld [vmem:[%s172 + $0x1410] sm:$0xff]
        %v867 = vld [vmem:[%s172 + $0x1418] sm:$0xff]
        %v868 = vld [vmem:[%s172 + $0x1420] sm:$0xff]
        %v869 = vld [vmem:[%s172 + $0x1428] sm:$0xff]
        %v870 = vld [vmem:[%s172 + $0x1430] sm:$0xff]
        %v871 = vld [vmem:[%s172 + $0x1438] sm:$0xff]
        %v872 = vld [vmem:[%s172 + $0x1440] sm:$0xff]
        %v873 = vld [vmem:[%s172 + $0x1448] sm:$0xff]
        %v874 = vld [vmem:[%s172 + $0x1450] sm:$0xff]
        %v875 = vld [vmem:[%s172 + $0x1458] sm:$0xff]
        %v876 = vld [vmem:[%s172 + $0x1460] sm:$0xff]
        %v877 = vld [vmem:[%s172 + $0x1468] sm:$0xff]
        %v878 = vld [vmem:[%s172 + $0x1470] sm:$0xff]
        %v879 = vld [vmem:[%s172 + $0x1478] sm:$0xff]
        %v880 = vld [vmem:[%s172 + $0x1480] sm:$0xff]
        %v881 = vld [vmem:[%s172 + $0x1488] sm:$0xff]
        %v882 = vld [vmem:[%s172 + $0x1490] sm:$0xff]
        %v883 = vld [vmem:[%s172 + $0x1498] sm:$0xff]
        %v884 = vld [vmem:[%s172 + $0x14a0] sm:$0xff]
        %v885 = vld [vmem:[%s172 + $0x14a8] sm:$0xff]
        %v886 = vld [vmem:[%s172 + $0x14b0] sm:$0xff]
        %v887 = vld [vmem:[%s172 + $0x14b8] sm:$0xff]
        %v888 = vld [vmem:[%s172 + $0x14c0] sm:$0xff]
        %v889 = vld [vmem:[%s172 + $0x14c8] sm:$0xff]
        %v890 = vld [vmem:[%s172 + $0x14d0] sm:$0xff]
        %v891 = vld [vmem:[%s172 + $0x14d8] sm:$0xff]
        %v892 = vld [vmem:[%s172 + $0x14e0] sm:$0xff]
        %v893 = vld [vmem:[%s172 + $0x14e8] sm:$0xff]
        %v894 = vld [vmem:[%s172 + $0x14f0] sm:$0xff]
        %v895 = vld [vmem:[%s172 + $0x14f8] sm:$0xff]
        %v896 = vld [vmem:[%s172 + $0x1500] sm:$0xff]
        %v897 = vld [vmem:[%s172 + $0x1508] sm:$0xff]
        %v898 = vld [vmem:[%s172 + $0x1510] sm:$0xff]
        %v899 = vld [vmem:[%s172 + $0x1518] sm:$0xff]
        %v900 = vld [vmem:[%s172 + $0x1520] sm:$0xff]
        %v901 = vld [vmem:[%s172 + $0x1528] sm:$0xff]
        %v902 = vld [vmem:[%s172 + $0x1530] sm:$0xff]
        %v903 = vld [vmem:[%s172 + $0x1538] sm:$0xff]
        %v904 = vld [vmem:[%s172 + $0x1540] sm:$0xff]
        %v905 = vld [vmem:[%s172 + $0x1548] sm:$0xff]
        %v906 = vld [vmem:[%s172 + $0x1550] sm:$0xff]
        %v907 = vld [vmem:[%s172 + $0x1558] sm:$0xff]
        %v908 = vld [vmem:[%s172 + $0x1560] sm:$0xff]
        %v909 = vld [vmem:[%s172 + $0x1568] sm:$0xff]
        %v910 = vld [vmem:[%s172 + $0x1570] sm:$0xff]
        %v911 = vld [vmem:[%s172 + $0x1578] sm:$0xff]
        %v912 = vld [vmem:[%s172 + $0x1580] sm:$0xff]
        %v913 = vld [vmem:[%s172 + $0x1588] sm:$0xff]
        %v914 = vld [vmem:[%s172 + $0x1590] sm:$0xff]
        %v915 = vld [vmem:[%s172 + $0x1598] sm:$0xff]
        %v916 = vld [vmem:[%s172 + $0x15a0] sm:$0xff]
        %v917 = vld [vmem:[%s172 + $0x15a8] sm:$0xff]
        %v918 = vld [vmem:[%s172 + $0x15b0] sm:$0xff]
        %v919 = vld [vmem:[%s172 + $0x15b8] sm:$0xff]
        %v920 = vld [vmem:[%s172 + $0x15c0] sm:$0xff]
        %v921 = vld [vmem:[%s172 + $0x15c8] sm:$0xff]
        %v922 = vld [vmem:[%s172 + $0x15d0] sm:$0xff]
        %v923 = vld [vmem:[%s172 + $0x15d8] sm:$0xff]
        %v924 = vld [vmem:[%s172 + $0x15e0] sm:$0xff]
        %v925 = vld [vmem:[%s172 + $0x15e8] sm:$0xff]
        %v926 = vld [vmem:[%s172 + $0x15f0] sm:$0xff]
        %v927 = vld [vmem:[%s172 + $0x15f8] sm:$0xff]
        %v928 = vld [vmem:[%s172 + $0x1600] sm:$0xff]
        %v929 = vld [vmem:[%s172 + $0x1608] sm:$0xff]
        %v930 = vld [vmem:[%s172 + $0x1610] sm:$0xff]
        %v931 = vld [vmem:[%s172 + $0x1618] sm:$0xff]
        %v932 = vld [vmem:[%s172 + $0x1620] sm:$0xff]
        %v933 = vld [vmem:[%s172 + $0x1628] sm:$0xff]
        %v934 = vld [vmem:[%s172 + $0x1630] sm:$0xff]
        %v935 = vld [vmem:[%s172 + $0x1638] sm:$0xff]
        %v936 = vld [vmem:[%s172 + $0x1640] sm:$0xff]
        %v937 = vld [vmem:[%s172 + $0x1648] sm:$0xff]
        %v938 = vld [vmem:[%s172 + $0x1650] sm:$0xff]
        %v939 = vld [vmem:[%s172 + $0x1658] sm:$0xff]
        %v940 = vld [vmem:[%s172 + $0x1660] sm:$0xff]
        %v941 = vld [vmem:[%s172 + $0x1668] sm:$0xff]
        %v942 = vld [vmem:[%s172 + $0x1670] sm:$0xff]
        %v943 = vld [vmem:[%s172 + $0x1678] sm:$0xff]
        %v944 = vld [vmem:[%s172 + $0x1680] sm:$0xff]
        %v945 = vld [vmem:[%s172 + $0x1688] sm:$0xff]
        %v946 = vld [vmem:[%s172 + $0x1690] sm:$0xff]
        %v947 = vld [vmem:[%s172 + $0x1698] sm:$0xff]
        %v948 = vld [vmem:[%s172 + $0x16a0] sm:$0xff]
        %v949 = vld [vmem:[%s172 + $0x16a8] sm:$0xff]
        %v950 = vld [vmem:[%s172 + $0x16b0] sm:$0xff]
        %v951 = vld [vmem:[%s172 + $0x16b8] sm:$0xff]
        %v952 = vld [vmem:[%s172 + $0x16c0] sm:$0xff]
        %v953 = vld [vmem:[%s172 + $0x16c8] sm:$0xff]
        %v954 = vld [vmem:[%s172 + $0x16d0] sm:$0xff]
        %v955 = vld [vmem:[%s172 + $0x16d8] sm:$0xff]
        %v956 = vld [vmem:[%s172 + $0x16e0] sm:$0xff]
        %v957 = vld [vmem:[%s172 + $0x16e8] sm:$0xff]
        %v958 = vld [vmem:[%s172 + $0x16f0] sm:$0xff]
        %v959 = vld [vmem:[%s172 + $0x16f8] sm:$0xff]
        %v960 = vld [vmem:[%s172 + $0x1700] sm:$0xff]
        %v961 = vld [vmem:[%s172 + $0x1708] sm:$0xff]
        %v962 = vld [vmem:[%s172 + $0x1710] sm:$0xff]
        %v963 = vld [vmem:[%s172 + $0x1718] sm:$0xff]
        %v964 = vld [vmem:[%s172 + $0x1720] sm:$0xff]
        %v965 = vld [vmem:[%s172 + $0x1728] sm:$0xff]
        %v966 = vld [vmem:[%s172 + $0x1730] sm:$0xff]
        %v967 = vld [vmem:[%s172 + $0x1738] sm:$0xff]
        %v968 = vld [vmem:[%s172 + $0x1740] sm:$0xff]
        %v969 = vld [vmem:[%s172 + $0x1748] sm:$0xff]
        %v970 = vld [vmem:[%s172 + $0x1750] sm:$0xff]
        %v971 = vld [vmem:[%s172 + $0x1758] sm:$0xff]
        %v972 = vld [vmem:[%s172 + $0x1760] sm:$0xff]
        %v973 = vld [vmem:[%s172 + $0x1768] sm:$0xff]
        %v974 = vld [vmem:[%s172 + $0x1770] sm:$0xff]
        %v975 = vld [vmem:[%s172 + $0x1778] sm:$0xff]
        %v976 = vld [vmem:[%s172 + $0x1780] sm:$0xff]
        %v977 = vld [vmem:[%s172 + $0x1788] sm:$0xff]
        %v978 = vld [vmem:[%s172 + $0x1790] sm:$0xff]
        %v979 = vld [vmem:[%s172 + $0x1798] sm:$0xff]
        %v980 = vld [vmem:[%s172 + $0x17a0] sm:$0xff]
        %v981 = vld [vmem:[%s172 + $0x17a8] sm:$0xff]
        %v982 = vld [vmem:[%s172 + $0x17b0] sm:$0xff]
        %v983 = vld [vmem:[%s172 + $0x17b8] sm:$0xff]
        %v984 = vld [vmem:[%s172 + $0x17c0] sm:$0xff]
        %v985 = vld [vmem:[%s172 + $0x17c8] sm:$0xff]
        %v986 = vld [vmem:[%s172 + $0x17d0] sm:$0xff]
        %v987 = vld [vmem:[%s172 + $0x17d8] sm:$0xff]
        %v988 = vld [vmem:[%s172 + $0x17e0] sm:$0xff]
        %v989 = vld [vmem:[%s172 + $0x17e8] sm:$0xff]
        %v990 = vld [vmem:[%s172 + $0x17f0] sm:$0xff]
        %v991 = vld [vmem:[%s172 + $0x17f8] sm:$0xff]
        %v992 = vld [vmem:[%s172 + $0x1800] sm:$0xff]
        %v993 = vld [vmem:[%s172 + $0x1808] sm:$0xff]
        %v994 = vld [vmem:[%s172 + $0x1810] sm:$0xff]
        %v995 = vld [vmem:[%s172 + $0x1818] sm:$0xff]
        %v996 = vld [vmem:[%s172 + $0x1820] sm:$0xff]
        %v997 = vld [vmem:[%s172 + $0x1828] sm:$0xff]
        %v998 = vld [vmem:[%s172 + $0x1830] sm:$0xff]
        %v999 = vld [vmem:[%s172 + $0x1838] sm:$0xff]
        %v1000 = vld [vmem:[%s172 + $0x1840] sm:$0xff]
        %v1001 = vld [vmem:[%s172 + $0x1848] sm:$0xff]
        %v1002 = vld [vmem:[%s172 + $0x1850] sm:$0xff]
        %v1003 = vld [vmem:[%s172 + $0x1858] sm:$0xff]
        %v1004 = vld [vmem:[%s172 + $0x1860] sm:$0xff]
        %v1005 = vld [vmem:[%s172 + $0x1868] sm:$0xff]
        %v1006 = vld [vmem:[%s172 + $0x1870] sm:$0xff]
        %v1007 = vld [vmem:[%s172 + $0x1878] sm:$0xff]
        %v1008 = vld [vmem:[%s172 + $0x1880] sm:$0xff]
        %v1009 = vld [vmem:[%s172 + $0x1888] sm:$0xff]
        %v1010 = vld [vmem:[%s172 + $0x1890] sm:$0xff]
        %v1011 = vld [vmem:[%s172 + $0x1898] sm:$0xff]
        %v1012 = vld [vmem:[%s172 + $0x18a0] sm:$0xff]
        %v1013 = vld [vmem:[%s172 + $0x18a8] sm:$0xff]
        %v1014 = vld [vmem:[%s172 + $0x18b0] sm:$0xff]
        %v1015 = vld [vmem:[%s172 + $0x18b8] sm:$0xff]
        %v1016 = vld [vmem:[%s172 + $0x18c0] sm:$0xff]
        %v1017 = vld [vmem:[%s172 + $0x18c8] sm:$0xff]
        %v1018 = vld [vmem:[%s172 + $0x18d0] sm:$0xff]
        %v1019 = vld [vmem:[%s172 + $0x18d8] sm:$0xff]
        %v1020 = vld [vmem:[%s172 + $0x18e0] sm:$0xff]
        %v1021 = vld [vmem:[%s172 + $0x18e8] sm:$0xff]
        %v1022 = vld [vmem:[%s172 + $0x18f0] sm:$0xff]
        %v1023 = vld [vmem:[%s172 + $0x18f8] sm:$0xff]
        %v1024 = vld [vmem:[%s172 + $0x1900] sm:$0xff]
        %v1025 = vld [vmem:[%s172 + $0x1908] sm:$0xff]
        %v1026 = vld [vmem:[%s172 + $0x1910] sm:$0xff]
        %v1027 = vld [vmem:[%s172 + $0x1918] sm:$0xff]
        %v1028 = vld [vmem:[%s172 + $0x1920] sm:$0xff]
        %v1029 = vld [vmem:[%s172 + $0x1928] sm:$0xff]
        %v1030 = vld [vmem:[%s172 + $0x1930] sm:$0xff]
        %v1031 = vld [vmem:[%s172 + $0x1938] sm:$0xff]
        %v1032 = vld [vmem:[%s172 + $0x1940] sm:$0xff]
        %v1033 = vld [vmem:[%s172 + $0x1948] sm:$0xff]
        %v1034 = vld [vmem:[%s172 + $0x1950] sm:$0xff]
        %v1035 = vld [vmem:[%s172 + $0x1958] sm:$0xff]
        %v1036 = vld [vmem:[%s172 + $0x1960] sm:$0xff]
        %v1037 = vld [vmem:[%s172 + $0x1968] sm:$0xff]
        %v1038 = vld [vmem:[%s172 + $0x1970] sm:$0xff]
        %v1039 = vld [vmem:[%s172 + $0x1978] sm:$0xff]
        %v1040 = vld [vmem:[%s172 + $0x1980] sm:$0xff]
        %v1041 = vld [vmem:[%s172 + $0x1988] sm:$0xff]
        %v1042 = vld [vmem:[%s172 + $0x1990] sm:$0xff]
        %v1043 = vld [vmem:[%s172 + $0x1998] sm:$0xff]
        %v1044 = vld [vmem:[%s172 + $0x19a0] sm:$0xff]
        %v1045 = vld [vmem:[%s172 + $0x19a8] sm:$0xff]
        %v1046 = vld [vmem:[%s172 + $0x19b0] sm:$0xff]
        %v1047 = vld [vmem:[%s172 + $0x19b8] sm:$0xff]
        %v1048 = vld [vmem:[%s172 + $0x19c0] sm:$0xff]
        %v1049 = vld [vmem:[%s172 + $0x19c8] sm:$0xff]
        %v1050 = vld [vmem:[%s172 + $0x19d0] sm:$0xff]
        %v1051 = vld [vmem:[%s172 + $0x19d8] sm:$0xff]
        %v1052 = vld [vmem:[%s172 + $0x19e0] sm:$0xff]
        %v1053 = vld [vmem:[%s172 + $0x19e8] sm:$0xff]
        %v1054 = vld [vmem:[%s172 + $0x19f0] sm:$0xff]
        %v1055 = vld [vmem:[%s172 + $0x19f8] sm:$0xff]
        %v1056 = vld [vmem:[%s172 + $0x1a00] sm:$0xff]
        %v1057 = vld [vmem:[%s172 + $0x1a08] sm:$0xff]
        %v1058 = vld [vmem:[%s172 + $0x1a10] sm:$0xff]
        %v1059 = vld [vmem:[%s172 + $0x1a18] sm:$0xff]
        %v1060 = vld [vmem:[%s172 + $0x1a20] sm:$0xff]
        %v1061 = vld [vmem:[%s172 + $0x1a28] sm:$0xff]
        %v1062 = vld [vmem:[%s172 + $0x1a30] sm:$0xff]
        %v1063 = vld [vmem:[%s172 + $0x1a38] sm:$0xff]
        %v1064 = vld [vmem:[%s172 + $0x1a40] sm:$0xff]
        %v1065 = vld [vmem:[%s172 + $0x1a48] sm:$0xff]
        %v1066 = vld [vmem:[%s172 + $0x1a50] sm:$0xff]
        %v1067 = vld [vmem:[%s172 + $0x1a58] sm:$0xff]
        %v1068 = vld [vmem:[%s172 + $0x1a60] sm:$0xff]
        %v1069 = vld [vmem:[%s172 + $0x1a68] sm:$0xff]
        %v1070 = vld [vmem:[%s172 + $0x1a70] sm:$0xff]
        %v1071 = vld [vmem:[%s172 + $0x1a78] sm:$0xff]
        %v1072 = vld [vmem:[%s172 + $0x1a80] sm:$0xff]
        %v1073 = vld [vmem:[%s172 + $0x1a88] sm:$0xff]
        %v1074 = vld [vmem:[%s172 + $0x1a90] sm:$0xff]
        %v1075 = vld [vmem:[%s172 + $0x1a98] sm:$0xff]
        %v1076 = vld [vmem:[%s172 + $0x1aa0] sm:$0xff]
        %v1077 = vld [vmem:[%s172 + $0x1aa8] sm:$0xff]
        %v1078 = vld [vmem:[%s172 + $0x1ab0] sm:$0xff]
        %v1079 = vld [vmem:[%s172 + $0x1ab8] sm:$0xff]
        %v1080 = vld [vmem:[%s172 + $0x1ac0] sm:$0xff]
        %v1081 = vld [vmem:[%s172 + $0x1ac8] sm:$0xff]
        %v1082 = vld [vmem:[%s172 + $0x1ad0] sm:$0xff]
        %v1083 = vld [vmem:[%s172 + $0x1ad8] sm:$0xff]
        %v1084 = vld [vmem:[%s172 + $0x1ae0] sm:$0xff]
        %v1085 = vld [vmem:[%s172 + $0x1ae8] sm:$0xff]
        %v1086 = vld [vmem:[%s172 + $0x1af0] sm:$0xff]
        %v1087 = vld [vmem:[%s172 + $0x1af8] sm:$0xff]
        %v1088 = vld [vmem:[%s172 + $0x1b00] sm:$0xff]
        %v1089 = vld [vmem:[%s172 + $0x1b08] sm:$0xff]
        %v1090 = vld [vmem:[%s172 + $0x1b10] sm:$0xff]
        %v1091 = vld [vmem:[%s172 + $0x1b18] sm:$0xff]
        %v1092 = vld [vmem:[%s172 + $0x1b20] sm:$0xff]
        %v1093 = vld [vmem:[%s172 + $0x1b28] sm:$0xff]
        %v1094 = vld [vmem:[%s172 + $0x1b30] sm:$0xff]
        %v1095 = vld [vmem:[%s172 + $0x1b38] sm:$0xff]
        %v1096 = vld [vmem:[%s172 + $0x1b40] sm:$0xff]
        %v1097 = vld [vmem:[%s172 + $0x1b48] sm:$0xff]
        %v1098 = vld [vmem:[%s172 + $0x1b50] sm:$0xff]
        %v1099 = vld [vmem:[%s172 + $0x1b58] sm:$0xff]
        %v1100 = vld [vmem:[%s172 + $0x1b60] sm:$0xff]
        %v1101 = vld [vmem:[%s172 + $0x1b68] sm:$0xff]
        %v1102 = vld [vmem:[%s172 + $0x1b70] sm:$0xff]
        %v1103 = vld [vmem:[%s172 + $0x1b78] sm:$0xff]
        %v1104 = vld [vmem:[%s172 + $0x1b80] sm:$0xff]
        %v1105 = vld [vmem:[%s172 + $0x1b88] sm:$0xff]
        %v1106 = vld [vmem:[%s172 + $0x1b90] sm:$0xff]
        %v1107 = vld [vmem:[%s172 + $0x1b98] sm:$0xff]
        %v1108 = vld [vmem:[%s172 + $0x1ba0] sm:$0xff]
        %v1109 = vld [vmem:[%s172 + $0x1ba8] sm:$0xff]
        %v1110 = vld [vmem:[%s172 + $0x1bb0] sm:$0xff]
        %v1111 = vld [vmem:[%s172 + $0x1bb8] sm:$0xff]
        %v1112 = vld [vmem:[%s172 + $0x1bc0] sm:$0xff]
        %v1113 = vld [vmem:[%s172 + $0x1bc8] sm:$0xff]
        %v1114 = vld [vmem:[%s172 + $0x1bd0] sm:$0xff]
        %v1115 = vld [vmem:[%s172 + $0x1bd8] sm:$0xff]
        %v1116 = vld [vmem:[%s172 + $0x1be0] sm:$0xff]
        %v1117 = vld [vmem:[%s172 + $0x1be8] sm:$0xff]
        %v1118 = vld [vmem:[%s172 + $0x1bf0] sm:$0xff]
        %v1119 = vld [vmem:[%s172 + $0x1bf8] sm:$0xff]
        %v1120 = vld [vmem:[%s172 + $0x1c00] sm:$0xff]
        %v1121 = vld [vmem:[%s172 + $0x1c08] sm:$0xff]
        %v1122 = vld [vmem:[%s172 + $0x1c10] sm:$0xff]
        %v1123 = vld [vmem:[%s172 + $0x1c18] sm:$0xff]
        %v1124 = vld [vmem:[%s172 + $0x1c20] sm:$0xff]
        %v1125 = vld [vmem:[%s172 + $0x1c28] sm:$0xff]
        %v1126 = vld [vmem:[%s172 + $0x1c30] sm:$0xff]
        %v1127 = vld [vmem:[%s172 + $0x1c38] sm:$0xff]
        %v1128 = vld [vmem:[%s172 + $0x1c40] sm:$0xff]
        %v1129 = vld [vmem:[%s172 + $0x1c48] sm:$0xff]
        %v1130 = vld [vmem:[%s172 + $0x1c50] sm:$0xff]
        %v1131 = vld [vmem:[%s172 + $0x1c58] sm:$0xff]
        %v1132 = vld [vmem:[%s172 + $0x1c60] sm:$0xff]
        %v1133 = vld [vmem:[%s172 + $0x1c68] sm:$0xff]
        %v1134 = vld [vmem:[%s172 + $0x1c70] sm:$0xff]
        %v1135 = vld [vmem:[%s172 + $0x1c78] sm:$0xff]
        %v1136 = vld [vmem:[%s172 + $0x1c80] sm:$0xff]
        %v1137 = vld [vmem:[%s172 + $0x1c88] sm:$0xff]
        %v1138 = vld [vmem:[%s172 + $0x1c90] sm:$0xff]
        %v1139 = vld [vmem:[%s172 + $0x1c98] sm:$0xff]
        %v1140 = vld [vmem:[%s172 + $0x1ca0] sm:$0xff]
        %v1141 = vld [vmem:[%s172 + $0x1ca8] sm:$0xff]
        %v1142 = vld [vmem:[%s172 + $0x1cb0] sm:$0xff]
        %v1143 = vld [vmem:[%s172 + $0x1cb8] sm:$0xff]
        %v1144 = vld [vmem:[%s172 + $0x1cc0] sm:$0xff]
        %v1145 = vld [vmem:[%s172 + $0x1cc8] sm:$0xff]
        %v1146 = vld [vmem:[%s172 + $0x1cd0] sm:$0xff]
        %v1147 = vld [vmem:[%s172 + $0x1cd8] sm:$0xff]
        %v1148 = vld [vmem:[%s172 + $0x1ce0] sm:$0xff]
        %v1149 = vld [vmem:[%s172 + $0x1ce8] sm:$0xff]
        %v1150 = vld [vmem:[%s172 + $0x1cf0] sm:$0xff]
        %v1151 = vld [vmem:[%s172 + $0x1cf8] sm:$0xff]
        %v1152 = vld [vmem:[%s172 + $0x1d00] sm:$0xff]
        %v1153 = vld [vmem:[%s172 + $0x1d08] sm:$0xff]
        %v1154 = vld [vmem:[%s172 + $0x1d10] sm:$0xff]
        %v1155 = vld [vmem:[%s172 + $0x1d18] sm:$0xff]
        %v1156 = vld [vmem:[%s172 + $0x1d20] sm:$0xff]
        %v1157 = vld [vmem:[%s172 + $0x1d28] sm:$0xff]
        %v1158 = vld [vmem:[%s172 + $0x1d30] sm:$0xff]
        %v1159 = vld [vmem:[%s172 + $0x1d38] sm:$0xff]
        %v1160 = vld [vmem:[%s172 + $0x1d40] sm:$0xff]
        %v1161 = vld [vmem:[%s172 + $0x1d48] sm:$0xff]
        %v1162 = vld [vmem:[%s172 + $0x1d50] sm:$0xff]
        %v1163 = vld [vmem:[%s172 + $0x1d58] sm:$0xff]
        %v1164 = vld [vmem:[%s172 + $0x1d60] sm:$0xff]
        %v1165 = vld [vmem:[%s172 + $0x1d68] sm:$0xff]
        %v1166 = vld [vmem:[%s172 + $0x1d70] sm:$0xff]
        %v1167 = vld [vmem:[%s172 + $0x1d78] sm:$0xff]
        %v1168 = vld [vmem:[%s172 + $0x1d80] sm:$0xff]
        %v1169 = vld [vmem:[%s172 + $0x1d88] sm:$0xff]
        %v1170 = vld [vmem:[%s172 + $0x1d90] sm:$0xff]
        %v1171 = vld [vmem:[%s172 + $0x1d98] sm:$0xff]
        %v1172 = vld [vmem:[%s172 + $0x1da0] sm:$0xff]
        %v1173 = vld [vmem:[%s172 + $0x1da8] sm:$0xff]
        %v1174 = vld [vmem:[%s172 + $0x1db0] sm:$0xff]
        %v1175 = vld [vmem:[%s172 + $0x1db8] sm:$0xff]
        %v1176 = vld [vmem:[%s172 + $0x1dc0] sm:$0xff]
        %v1177 = vld [vmem:[%s172 + $0x1dc8] sm:$0xff]
        %v1178 = vld [vmem:[%s172 + $0x1dd0] sm:$0xff]
        %v1179 = vld [vmem:[%s172 + $0x1dd8] sm:$0xff]
        %v1180 = vld [vmem:[%s172 + $0x1de0] sm:$0xff]
        %v1181 = vld [vmem:[%s172 + $0x1de8] sm:$0xff]
        %v1182 = vld [vmem:[%s172 + $0x1df0] sm:$0xff]
        %v1183 = vld [vmem:[%s172 + $0x1df8] sm:$0xff]
        %v1184 = vld [vmem:[%s172 + $0x1e00] sm:$0xff]
        %v1185 = vld [vmem:[%s172 + $0x1e08] sm:$0xff]
        %v1186 = vld [vmem:[%s172 + $0x1e10] sm:$0xff]
        %v1187 = vld [vmem:[%s172 + $0x1e18] sm:$0xff]
        %v1188 = vld [vmem:[%s172 + $0x1e20] sm:$0xff]
        %v1189 = vld [vmem:[%s172 + $0x1e28] sm:$0xff]
        %v1190 = vld [vmem:[%s172 + $0x1e30] sm:$0xff]
        %v1191 = vld [vmem:[%s172 + $0x1e38] sm:$0xff]
        %v1192 = vld [vmem:[%s172 + $0x1e40] sm:$0xff]
        %v1193 = vld [vmem:[%s172 + $0x1e48] sm:$0xff]
        %v1194 = vld [vmem:[%s172 + $0x1e50] sm:$0xff]
        %v1195 = vld [vmem:[%s172 + $0x1e58] sm:$0xff]
        %v1196 = vld [vmem:[%s172 + $0x1e60] sm:$0xff]
        %v1197 = vld [vmem:[%s172 + $0x1e68] sm:$0xff]
        %v1198 = vld [vmem:[%s172 + $0x1e70] sm:$0xff]
        %v1199 = vld [vmem:[%s172 + $0x1e78] sm:$0xff]
        %v1200 = vld [vmem:[%s172 + $0x1e80] sm:$0xff]
        %v1201 = vld [vmem:[%s172 + $0x1e88] sm:$0xff]
        %v1202 = vld [vmem:[%s172 + $0x1e90] sm:$0xff]
        %v1203 = vld [vmem:[%s172 + $0x1e98] sm:$0xff]
        %v1204 = vld [vmem:[%s172 + $0x1ea0] sm:$0xff]
        %v1205 = vld [vmem:[%s172 + $0x1ea8] sm:$0xff]
        %v1206 = vld [vmem:[%s172 + $0x1eb0] sm:$0xff]
        %v1207 = vld [vmem:[%s172 + $0x1eb8] sm:$0xff]
        %v1208 = vld [vmem:[%s172 + $0x1ec0] sm:$0xff]
        %v1209 = vld [vmem:[%s172 + $0x1ec8] sm:$0xff]
        %v1210 = vld [vmem:[%s172 + $0x1ed0] sm:$0xff]
        %v1211 = vld [vmem:[%s172 + $0x1ed8] sm:$0xff]
        %v1212 = vld [vmem:[%s172 + $0x1ee0] sm:$0xff]
        %v1213 = vld [vmem:[%s172 + $0x1ee8] sm:$0xff]
        %v1214 = vld [vmem:[%s172 + $0x1ef0] sm:$0xff]
        %v1215 = vld [vmem:[%s172 + $0x1ef8] sm:$0xff]
        %v1216 = vld [vmem:[%s172 + $0x1f00] sm:$0xff]
        %v1217 = vld [vmem:[%s172 + $0x1f08] sm:$0xff]
        %v1218 = vld [vmem:[%s172 + $0x1f10] sm:$0xff]
        %v1219 = vld [vmem:[%s172 + $0x1f18] sm:$0xff]
        %v1220 = vld [vmem:[%s172 + $0x1f20] sm:$0xff]
        %v1221 = vld [vmem:[%s172 + $0x1f28] sm:$0xff]
        %v1222 = vld [vmem:[%s172 + $0x1f30] sm:$0xff]
        %v1223 = vld [vmem:[%s172 + $0x1f38] sm:$0xff]
        %v1224 = vld [vmem:[%s172 + $0x1f40] sm:$0xff]
        %v1225 = vld [vmem:[%s172 + $0x1f48] sm:$0xff]
        %v1226 = vld [vmem:[%s172 + $0x1f50] sm:$0xff]
        %v1227 = vld [vmem:[%s172 + $0x1f58] sm:$0xff]
        %v1228 = vld [vmem:[%s172 + $0x1f60] sm:$0xff]
        %v1229 = vld [vmem:[%s172 + $0x1f68] sm:$0xff]
        %v1230 = vld [vmem:[%s172 + $0x1f70] sm:$0xff]
        %v1231 = vld [vmem:[%s172 + $0x1f78] sm:$0xff]
        %v1232 = vld [vmem:[%s172 + $0x1f80] sm:$0xff]
        %v1233 = vld [vmem:[%s172 + $0x1f88] sm:$0xff]
        %v1234 = vld [vmem:[%s172 + $0x1f90] sm:$0xff]
        %v1235 = vld [vmem:[%s172 + $0x1f98] sm:$0xff]
        %v1236 = vld [vmem:[%s172 + $0x1fa0] sm:$0xff]
        %v1237 = vld [vmem:[%s172 + $0x1fa8] sm:$0xff]
        %v1238 = vld [vmem:[%s172 + $0x1fb0] sm:$0xff]
        %v1239 = vld [vmem:[%s172 + $0x1fb8] sm:$0xff]
        %v1240 = vld [vmem:[%s172 + $0x1fc0] sm:$0xff]
        %v1241 = vld [vmem:[%s172 + $0x1fc8] sm:$0xff]
        %v1242 = vld [vmem:[%s172 + $0x1fd0] sm:$0xff]
        %v1243 = vld [vmem:[%s172 + $0x1fd8] sm:$0xff]
        %v1244 = vld [vmem:[%s172 + $0x1fe0] sm:$0xff]
        %v1245 = vld [vmem:[%s172 + $0x1fe8] sm:$0xff]
        %v1246 = vld [vmem:[%s172 + $0x1ff0] sm:$0xff]
        %v1247 = vld [vmem:[%s172 + $0x1ff8] sm:$0xff]
        %v1248 = vld [vmem:[%s172 + $0x2000] sm:$0xff]
        %v1249 = vld [vmem:[%s172 + $0x2008] sm:$0xff]
        %v1250 = vld [vmem:[%s172 + $0x2010] sm:$0xff]
        %v1251 = vld [vmem:[%s172 + $0x2018] sm:$0xff]
        %v1252 = vld [vmem:[%s172 + $0x2020] sm:$0xff]
        %v1253 = vld [vmem:[%s172 + $0x2028] sm:$0xff]
        %v1254 = vld [vmem:[%s172 + $0x2030] sm:$0xff]
        %v1255 = vld [vmem:[%s172 + $0x2038] sm:$0xff]
        %v1256 = vld [vmem:[%s172 + $0x2040] sm:$0xff]
        %v1257 = vld [vmem:[%s172 + $0x2048] sm:$0xff]
        %v1258 = vld [vmem:[%s172 + $0x2050] sm:$0xff]
        %v1259 = vld [vmem:[%s172 + $0x2058] sm:$0xff]
        %v1260 = vld [vmem:[%s172 + $0x2060] sm:$0xff]
        %v1261 = vld [vmem:[%s172 + $0x2068] sm:$0xff]
        %v1262 = vld [vmem:[%s172 + $0x2070] sm:$0xff]
        %v1263 = vld [vmem:[%s172 + $0x2078] sm:$0xff]
        %v1264 = vld [vmem:[%s172 + $0x2080] sm:$0xff]
        %v1265 = vld [vmem:[%s172 + $0x2088] sm:$0xff]
        %v1266 = vld [vmem:[%s172 + $0x2090] sm:$0xff]
        %v1267 = vld [vmem:[%s172 + $0x2098] sm:$0xff]
        %v1268 = vld [vmem:[%s172 + $0x20a0] sm:$0xff]
        %v1269 = vld [vmem:[%s172 + $0x20a8] sm:$0xff]
        %v1270 = vld [vmem:[%s172 + $0x20b0] sm:$0xff]
        %v1271 = vld [vmem:[%s172 + $0x20b8] sm:$0xff]
        %v1272 = vld [vmem:[%s172 + $0x20c0] sm:$0xff]
        %v1273 = vld [vmem:[%s172 + $0x20c8] sm:$0xff]
        %v1274 = vld [vmem:[%s172 + $0x20d0] sm:$0xff]
        %v1275 = vld [vmem:[%s172 + $0x20d8] sm:$0xff]
        %v1276 = vld [vmem:[%s172 + $0x20e0] sm:$0xff]
        %v1277 = vld [vmem:[%s172 + $0x20e8] sm:$0xff]
        %v1278 = vld [vmem:[%s172 + $0x20f0] sm:$0xff]
        %v1279 = vld [vmem:[%s172 + $0x20f8] sm:$0xff]
        %v1280 = vld [vmem:[%s172 + $0x2100] sm:$0xff]
        %v1281 = vld [vmem:[%s172 + $0x2108] sm:$0xff]
        %v1282 = vld [vmem:[%s172 + $0x2110] sm:$0xff]
        %v1283 = vld [vmem:[%s172 + $0x2118] sm:$0xff]
        %v1284 = vld [vmem:[%s172 + $0x2120] sm:$0xff]
        %v1285 = vld [vmem:[%s172 + $0x2128] sm:$0xff]
        %v1286 = vld [vmem:[%s172 + $0x2130] sm:$0xff]
        %v1287 = vld [vmem:[%s172 + $0x2138] sm:$0xff]
        %v1288 = vld [vmem:[%s172 + $0x2140] sm:$0xff]
        %v1289 = vld [vmem:[%s172 + $0x2148] sm:$0xff]
        %v1290 = vld [vmem:[%s172 + $0x2150] sm:$0xff]
        %v1291 = vld [vmem:[%s172 + $0x2158] sm:$0xff]
        %v1292 = vld [vmem:[%s172 + $0x2160] sm:$0xff]
        %v1293 = vld [vmem:[%s172 + $0x2168] sm:$0xff]
        %v1294 = vld [vmem:[%s172 + $0x2170] sm:$0xff]
        %v1295 = vld [vmem:[%s172 + $0x2178] sm:$0xff]
        %v1296 = vld [vmem:[%s172 + $0x2180] sm:$0xff]
        %v1297 = vld [vmem:[%s172 + $0x2188] sm:$0xff]
        %v1298 = vld [vmem:[%s172 + $0x2190] sm:$0xff]
        %v1299 = vld [vmem:[%s172 + $0x2198] sm:$0xff]
        %v1300 = vld [vmem:[%s172 + $0x21a0] sm:$0xff]
        %v1301 = vld [vmem:[%s172 + $0x21a8] sm:$0xff]
        %v1302 = vld [vmem:[%s172 + $0x21b0] sm:$0xff]
        %v1303 = vld [vmem:[%s172 + $0x21b8] sm:$0xff]
        %v1304 = vld [vmem:[%s172 + $0x21c0] sm:$0xff]
        %v1305 = vld [vmem:[%s172 + $0x21c8] sm:$0xff]
        %v1306 = vld [vmem:[%s172 + $0x21d0] sm:$0xff]
        %v1307 = vld [vmem:[%s172 + $0x21d8] sm:$0xff]
        %v1308 = vld [vmem:[%s172 + $0x21e0] sm:$0xff]
        %v1309 = vld [vmem:[%s172 + $0x21e8] sm:$0xff]
        %v1310 = vld [vmem:[%s172 + $0x21f0] sm:$0xff]
        %v1311 = vld [vmem:[%s172 + $0x21f8] sm:$0xff]
        %v1312 = vld [vmem:[%s172 + $0x2200] sm:$0xff]
        %v1313 = vld [vmem:[%s172 + $0x2208] sm:$0xff]
        %v1314 = vld [vmem:[%s172 + $0x2210] sm:$0xff]
        %v1315 = vld [vmem:[%s172 + $0x2218] sm:$0xff]
        %v1316 = vld [vmem:[%s172 + $0x2220] sm:$0xff]
        %v1317 = vld [vmem:[%s172 + $0x2228] sm:$0xff]
        %v1318 = vld [vmem:[%s172 + $0x2230] sm:$0xff]
        %v1319 = vld [vmem:[%s172 + $0x2238] sm:$0xff]
        %v1320 = vld [vmem:[%s172 + $0x2240] sm:$0xff]
        %v1321 = vld [vmem:[%s172 + $0x2248] sm:$0xff]
        %v1322 = vld [vmem:[%s172 + $0x2250] sm:$0xff]
        %v1323 = vld [vmem:[%s172 + $0x2258] sm:$0xff]
        %v1324 = vld [vmem:[%s172 + $0x2260] sm:$0xff]
        %v1325 = vld [vmem:[%s172 + $0x2268] sm:$0xff]
        %v1326 = vld [vmem:[%s172 + $0x2270] sm:$0xff]
        %v1327 = vld [vmem:[%s172 + $0x2278] sm:$0xff]
        %v1328 = vld [vmem:[%s172 + $0x2280] sm:$0xff]
        %v1329 = vld [vmem:[%s172 + $0x2288] sm:$0xff]
        %v1330 = vld [vmem:[%s172 + $0x2290] sm:$0xff]
        %v1331 = vld [vmem:[%s172 + $0x2298] sm:$0xff]
        %v1332 = vld [vmem:[%s172 + $0x22a0] sm:$0xff]
        %v1333 = vld [vmem:[%s172 + $0x22a8] sm:$0xff]
        %v1334 = vld [vmem:[%s172 + $0x22b0] sm:$0xff]
        %v1335 = vld [vmem:[%s172 + $0x22b8] sm:$0xff]
        %v1336 = vld [vmem:[%s172 + $0x22c0] sm:$0xff]
        %v1337 = vld [vmem:[%s172 + $0x22c8] sm:$0xff]
        %v1338 = vld [vmem:[%s172 + $0x22d0] sm:$0xff]
        %v1339 = vld [vmem:[%s172 + $0x22d8] sm:$0xff]
        %v1340 = vld [vmem:[%s172 + $0x22e0] sm:$0xff]
        %v1341 = vld [vmem:[%s172 + $0x22e8] sm:$0xff]
        %v1342 = vld [vmem:[%s172 + $0x22f0] sm:$0xff]
        %v1343 = vld [vmem:[%s172 + $0x22f8] sm:$0xff]
        %v1344 = vld [vmem:[%s172 + $0x2300] sm:$0xff]
        %v1345 = vld [vmem:[%s172 + $0x2308] sm:$0xff]
        %v1346 = vld [vmem:[%s172 + $0x2310] sm:$0xff]
        %v1347 = vld [vmem:[%s172 + $0x2318] sm:$0xff]
        %v1348 = vld [vmem:[%s172 + $0x2320] sm:$0xff]
        %v1349 = vld [vmem:[%s172 + $0x2328] sm:$0xff]
        %v1350 = vld [vmem:[%s172 + $0x2330] sm:$0xff]
        %v1351 = vld [vmem:[%s172 + $0x2338] sm:$0xff]
        %v1352 = vld [vmem:[%s172 + $0x2340] sm:$0xff]
        %v1353 = vld [vmem:[%s172 + $0x2348] sm:$0xff]
        %v1354 = vld [vmem:[%s172 + $0x2350] sm:$0xff]
        %v1355 = vld [vmem:[%s172 + $0x2358] sm:$0xff]
        %v1356 = vld [vmem:[%s172 + $0x2360] sm:$0xff]
        %v1357 = vld [vmem:[%s172 + $0x2368] sm:$0xff]
        %v1358 = vld [vmem:[%s172 + $0x2370] sm:$0xff]
        %v1359 = vld [vmem:[%s172 + $0x2378] sm:$0xff]
        %v1360 = vld [vmem:[%s172 + $0x2380] sm:$0xff]
        %v1361 = vld [vmem:[%s172 + $0x2388] sm:$0xff]
        %v1362 = vld [vmem:[%s172 + $0x2390] sm:$0xff]
        %v1363 = vld [vmem:[%s172 + $0x2398] sm:$0xff]
        %v1364 = vld [vmem:[%s172 + $0x23a0] sm:$0xff]
        %v1365 = vld [vmem:[%s172 + $0x23a8] sm:$0xff]
        %v1366 = vld [vmem:[%s172 + $0x23b0] sm:$0xff]
        %v1367 = vld [vmem:[%s172 + $0x23b8] sm:$0xff]
        %v1368 = vld [vmem:[%s172 + $0x23c0] sm:$0xff]
        %v1369 = vld [vmem:[%s172 + $0x23c8] sm:$0xff]
        %v1370 = vld [vmem:[%s172 + $0x23d0] sm:$0xff]
        %v1371 = vld [vmem:[%s172 + $0x23d8] sm:$0xff]
        %v1372 = vld [vmem:[%s172 + $0x23e0] sm:$0xff]
        %v1373 = vld [vmem:[%s172 + $0x23e8] sm:$0xff]
        %v1374 = vld [vmem:[%s172 + $0x23f0] sm:$0xff]
        %v1375 = vld [vmem:[%s172 + $0x23f8] sm:$0xff]
        %v1376 = vld [vmem:[%s172 + $0x2400] sm:$0xff]
        %v1377 = vld [vmem:[%s172 + $0x2408] sm:$0xff]
        %v1378 = vld [vmem:[%s172 + $0x2410] sm:$0xff]
        %v1379 = vld [vmem:[%s172 + $0x2418] sm:$0xff]
        %v1380 = vld [vmem:[%s172 + $0x2420] sm:$0xff]
        %v1381 = vld [vmem:[%s172 + $0x2428] sm:$0xff]
        %v1382 = vld [vmem:[%s172 + $0x2430] sm:$0xff]
        %v1383 = vld [vmem:[%s172 + $0x2438] sm:$0xff]
        %v1384 = vld [vmem:[%s172 + $0x2440] sm:$0xff]
        %v1385 = vld [vmem:[%s172 + $0x2448] sm:$0xff]
        %v1386 = vld [vmem:[%s172 + $0x2450] sm:$0xff]
        %v1387 = vld [vmem:[%s172 + $0x2458] sm:$0xff]
        %v1388 = vld [vmem:[%s172 + $0x2460] sm:$0xff]
        %v1389 = vld [vmem:[%s172 + $0x2468] sm:$0xff]
        %v1390 = vld [vmem:[%s172 + $0x2470] sm:$0xff]
        %v1391 = vld [vmem:[%s172 + $0x2478] sm:$0xff]
        %v1392 = vld [vmem:[%s172 + $0x2480] sm:$0xff]
        %v1393 = vld [vmem:[%s172 + $0x2488] sm:$0xff]
        %v1394 = vld [vmem:[%s172 + $0x2490] sm:$0xff]
        %v1395 = vld [vmem:[%s172 + $0x2498] sm:$0xff]
        %v1396 = vld [vmem:[%s172 + $0x24a0] sm:$0xff]
        %v1397 = vld [vmem:[%s172 + $0x24a8] sm:$0xff]
        %v1398 = vld [vmem:[%s172 + $0x24b0] sm:$0xff]
        %v1399 = vld [vmem:[%s172 + $0x24b8] sm:$0xff]
        %v1400 = vld [vmem:[%s172 + $0x24c0] sm:$0xff]
        %v1401 = vld [vmem:[%s172 + $0x24c8] sm:$0xff]
        %v1402 = vld [vmem:[%s172 + $0x24d0] sm:$0xff]
        %v1403 = vld [vmem:[%s172 + $0x24d8] sm:$0xff]
        %v1404 = vld [vmem:[%s172 + $0x24e0] sm:$0xff]
        %v1405 = vld [vmem:[%s172 + $0x24e8] sm:$0xff]
        %v1406 = vld [vmem:[%s172 + $0x24f0] sm:$0xff]
        %v1407 = vld [vmem:[%s172 + $0x24f8] sm:$0xff]
        %v1408 = vld [vmem:[%s172 + $0x2500] sm:$0xff]
        %v1409 = vld [vmem:[%s172 + $0x2508] sm:$0xff]
        %v1410 = vld [vmem:[%s172 + $0x2510] sm:$0xff]
        %v1411 = vld [vmem:[%s172 + $0x2518] sm:$0xff]
        %v1412 = vld [vmem:[%s172 + $0x2520] sm:$0xff]
        %v1413 = vld [vmem:[%s172 + $0x2528] sm:$0xff]
        %v1414 = vld [vmem:[%s172 + $0x2530] sm:$0xff]
        %v1415 = vld [vmem:[%s172 + $0x2538] sm:$0xff]
        %v1416 = vld [vmem:[%s172 + $0x2540] sm:$0xff]
        %v1417 = vld [vmem:[%s172 + $0x2548] sm:$0xff]
        %v1418 = vld [vmem:[%s172 + $0x2550] sm:$0xff]
        %v1419 = vld [vmem:[%s172 + $0x2558] sm:$0xff]
        %v1420 = vld [vmem:[%s172 + $0x2560] sm:$0xff]
        %v1421 = vld [vmem:[%s172 + $0x2568] sm:$0xff]
        %v1422 = vld [vmem:[%s172 + $0x2570] sm:$0xff]
        %v1423 = vld [vmem:[%s172 + $0x2578] sm:$0xff]
        %v1424 = vld [vmem:[%s172 + $0x2580] sm:$0xff]
        %v1425 = vld [vmem:[%s172 + $0x2588] sm:$0xff]
        %v1426 = vld [vmem:[%s172 + $0x2590] sm:$0xff]
        %v1427 = vld [vmem:[%s172 + $0x2598] sm:$0xff]
        %v1428 = vld [vmem:[%s172 + $0x25a0] sm:$0xff]
        %v1429 = vld [vmem:[%s172 + $0x25a8] sm:$0xff]
        %v1430 = vld [vmem:[%s172 + $0x25b0] sm:$0xff]
        %v1431 = vld [vmem:[%s172 + $0x25b8] sm:$0xff]
        %v1432 = vld [vmem:[%s172 + $0x25c0] sm:$0xff]
        %v1433 = vld [vmem:[%s172 + $0x25c8] sm:$0xff]
        %v1434 = vld [vmem:[%s172 + $0x25d0] sm:$0xff]
        %v1435 = vld [vmem:[%s172 + $0x25d8] sm:$0xff]
        %v1436 = vld [vmem:[%s172 + $0x25e0] sm:$0xff]
        %v1437 = vld [vmem:[%s172 + $0x25e8] sm:$0xff]
        %v1438 = vld [vmem:[%s172 + $0x25f0] sm:$0xff]
        %v1439 = vld [vmem:[%s172 + $0x25f8] sm:$0xff]
        %v1440 = vld [vmem:[%s172 + $0x2600] sm:$0xff]
        %v1441 = vld [vmem:[%s172 + $0x2608] sm:$0xff]
        %v1442 = vld [vmem:[%s172 + $0x2610] sm:$0xff]
        %v1443 = vld [vmem:[%s172 + $0x2618] sm:$0xff]
        %v1444 = vld [vmem:[%s172 + $0x2620] sm:$0xff]
        %v1445 = vld [vmem:[%s172 + $0x2628] sm:$0xff]
        %v1446 = vld [vmem:[%s172 + $0x2630] sm:$0xff]
        %v1447 = vld [vmem:[%s172 + $0x2638] sm:$0xff]
        %v1448 = vld [vmem:[%s172 + $0x2640] sm:$0xff]
        %v1449 = vld [vmem:[%s172 + $0x2648] sm:$0xff]
        %v1450 = vld [vmem:[%s172 + $0x2650] sm:$0xff]
        %v1451 = vld [vmem:[%s172 + $0x2658] sm:$0xff]
        %v1452 = vld [vmem:[%s172 + $0x2660] sm:$0xff]
        %v1453 = vld [vmem:[%s172 + $0x2668] sm:$0xff]
        %v1454 = vld [vmem:[%s172 + $0x2670] sm:$0xff]
        %v1455 = vld [vmem:[%s172 + $0x2678] sm:$0xff]
        %v1456 = vld [vmem:[%s172 + $0x2680] sm:$0xff]
        %v1457 = vld [vmem:[%s172 + $0x2688] sm:$0xff]
        %v1458 = vld [vmem:[%s172 + $0x2690] sm:$0xff]
        %v1459 = vld [vmem:[%s172 + $0x2698] sm:$0xff]
        %v1460 = vld [vmem:[%s172 + $0x26a0] sm:$0xff]
        %v1461 = vld [vmem:[%s172 + $0x26a8] sm:$0xff]
        %v1462 = vld [vmem:[%s172 + $0x26b0] sm:$0xff]
        %v1463 = vld [vmem:[%s172 + $0x26b8] sm:$0xff]
        %v1464 = vld [vmem:[%s172 + $0x26c0] sm:$0xff]
        %v1465 = vld [vmem:[%s172 + $0x26c8] sm:$0xff]
        %v1466 = vld [vmem:[%s172 + $0x26d0] sm:$0xff]
        %v1467 = vld [vmem:[%s172 + $0x26d8] sm:$0xff]
        %v1468 = vld [vmem:[%s172 + $0x26e0] sm:$0xff]
        %v1469 = vld [vmem:[%s172 + $0x26e8] sm:$0xff]
        %v1470 = vld [vmem:[%s172 + $0x26f0] sm:$0xff]
        %v1471 = vld [vmem:[%s172 + $0x26f8] sm:$0xff]
        %v1472 = vld [vmem:[%s172 + $0x2700] sm:$0xff]
        %v1473 = vld [vmem:[%s172 + $0x2708] sm:$0xff]
        %v1474 = vld [vmem:[%s172 + $0x2710] sm:$0xff]
        %v1475 = vld [vmem:[%s172 + $0x2718] sm:$0xff]
        %v1476 = vld [vmem:[%s172 + $0x2720] sm:$0xff]
        %v1477 = vld [vmem:[%s172 + $0x2728] sm:$0xff]
        %v1478 = vld [vmem:[%s172 + $0x2730] sm:$0xff]
        %v1479 = vld [vmem:[%s172 + $0x2738] sm:$0xff]
        %v1480 = vld [vmem:[%s172 + $0x2740] sm:$0xff]
        %v1481 = vld [vmem:[%s172 + $0x2748] sm:$0xff]
        %v1482 = vld [vmem:[%s172 + $0x2750] sm:$0xff]
        %v1483 = vld [vmem:[%s172 + $0x2758] sm:$0xff]
        %v1484 = vld [vmem:[%s172 + $0x2760] sm:$0xff]
        %v1485 = vld [vmem:[%s172 + $0x2768] sm:$0xff]
        %v1486 = vld [vmem:[%s172 + $0x2770] sm:$0xff]
        %v1487 = vld [vmem:[%s172 + $0x2778] sm:$0xff]
        %v1488 = vld [vmem:[%s172 + $0x2780] sm:$0xff]
        %v1489 = vld [vmem:[%s172 + $0x2788] sm:$0xff]
        %v1490 = vld [vmem:[%s172 + $0x2790] sm:$0xff]
        %v1491 = vld [vmem:[%s172 + $0x2798] sm:$0xff]
        %v1492 = vld [vmem:[%s172 + $0x27a0] sm:$0xff]
        %v1493 = vld [vmem:[%s172 + $0x27a8] sm:$0xff]
        %v1494 = vld [vmem:[%s172 + $0x27b0] sm:$0xff]
        %v1495 = vld [vmem:[%s172 + $0x27b8] sm:$0xff]
        %v1496 = vld [vmem:[%s172 + $0x27c0] sm:$0xff]
        %v1497 = vld [vmem:[%s172 + $0x27c8] sm:$0xff]
        %v1498 = vld [vmem:[%s172 + $0x27d0] sm:$0xff]
        %v1499 = vld [vmem:[%s172 + $0x27d8] sm:$0xff]
        %v1500 = vld [vmem:[%s172 + $0x27e0] sm:$0xff]
        %v1501 = vld [vmem:[%s172 + $0x27e8] sm:$0xff]
        %v1502 = vld [vmem:[%s172 + $0x27f0] sm:$0xff]
        %v1503 = vld [vmem:[%s172 + $0x27f8] sm:$0xff]
        %v1504 = vld [vmem:[%s172 + $0x2800] sm:$0xff]
        %v1505 = vld [vmem:[%s172 + $0x2808] sm:$0xff]
        %v1506 = vld [vmem:[%s172 + $0x2810] sm:$0xff]
        %v1507 = vld [vmem:[%s172 + $0x2818] sm:$0xff]
        %v1508 = vld [vmem:[%s172 + $0x2820] sm:$0xff]
        %v1509 = vld [vmem:[%s172 + $0x2828] sm:$0xff]
        %v1510 = vld [vmem:[%s172 + $0x2830] sm:$0xff]
        %v1511 = vld [vmem:[%s172 + $0x2838] sm:$0xff]
        %v1512 = vld [vmem:[%s172 + $0x2840] sm:$0xff]
        %v1513 = vld [vmem:[%s172 + $0x2848] sm:$0xff]
        %v1514 = vld [vmem:[%s172 + $0x2850] sm:$0xff]
        %v1515 = vld [vmem:[%s172 + $0x2858] sm:$0xff]
        %v1516 = vld [vmem:[%s172 + $0x2860] sm:$0xff]
        %v1517 = vld [vmem:[%s172 + $0x2868] sm:$0xff]
        %v1518 = vld [vmem:[%s172 + $0x2870] sm:$0xff]
        %v1519 = vld [vmem:[%s172 + $0x2878] sm:$0xff]
        %v1520 = vld [vmem:[%s172 + $0x2880] sm:$0xff]
        %v1521 = vld [vmem:[%s172 + $0x2888] sm:$0xff]
        %v1522 = vld [vmem:[%s172 + $0x2890] sm:$0xff]
        %v1523 = vld [vmem:[%s172 + $0x2898] sm:$0xff]
        %v1524 = vld [vmem:[%s172 + $0x28a0] sm:$0xff]
        %v1525 = vld [vmem:[%s172 + $0x28a8] sm:$0xff]
        %v1526 = vld [vmem:[%s172 + $0x28b0] sm:$0xff]
        %v1527 = vld [vmem:[%s172 + $0x28b8] sm:$0xff]
        %v1528 = vld [vmem:[%s172 + $0x28c0] sm:$0xff]
        %v1529 = vld [vmem:[%s172 + $0x28c8] sm:$0xff]
        %v1530 = vld [vmem:[%s172 + $0x28d0] sm:$0xff]
        %v1531 = vld [vmem:[%s172 + $0x28d8] sm:$0xff]
        %v1532 = vld [vmem:[%s172 + $0x28e0] sm:$0xff]
        %v1533 = vld [vmem:[%s172 + $0x28e8] sm:$0xff]
        %v1534 = vld [vmem:[%s172 + $0x28f0] sm:$0xff]
        %v1535 = vld [vmem:[%s172 + $0x28f8] sm:$0xff]
        %v1536 = vld [vmem:[%s172 + $0x2900] sm:$0xff]
        %v1537 = vld [vmem:[%s172 + $0x2908] sm:$0xff]
        %v1538 = vld [vmem:[%s172 + $0x2910] sm:$0xff]
        %v1539 = vld [vmem:[%s172 + $0x2918] sm:$0xff]
        %v1540 = vld [vmem:[%s172 + $0x2920] sm:$0xff]
        %v1541 = vld [vmem:[%s172 + $0x2928] sm:$0xff]
        %v1542 = vld [vmem:[%s172 + $0x2930] sm:$0xff]
        %v1543 = vld [vmem:[%s172 + $0x2938] sm:$0xff]
        %v1544 = vld [vmem:[%s172 + $0x2940] sm:$0xff]
        %v1545 = vld [vmem:[%s172 + $0x2948] sm:$0xff]
        %v1546 = vld [vmem:[%s172 + $0x2950] sm:$0xff]
        %v1547 = vld [vmem:[%s172 + $0x2958] sm:$0xff]
        %v1548 = vld [vmem:[%s172 + $0x2960] sm:$0xff]
        %v1549 = vld [vmem:[%s172 + $0x2968] sm:$0xff]
        %v1550 = vld [vmem:[%s172 + $0x2970] sm:$0xff]
        %v1551 = vld [vmem:[%s172 + $0x2978] sm:$0xff]
        %v1552 = vld [vmem:[%s172 + $0x2980] sm:$0xff]
        %v1553 = vld [vmem:[%s172 + $0x2988] sm:$0xff]
        %v1554 = vld [vmem:[%s172 + $0x2990] sm:$0xff]
        %v1555 = vld [vmem:[%s172 + $0x2998] sm:$0xff]
        %v1556 = vld [vmem:[%s172 + $0x29a0] sm:$0xff]
        %v1557 = vld [vmem:[%s172 + $0x29a8] sm:$0xff]
        %v1558 = vld [vmem:[%s172 + $0x29b0] sm:$0xff]
        %v1559 = vld [vmem:[%s172 + $0x29b8] sm:$0xff]
        %v1560 = vld [vmem:[%s172 + $0x29c0] sm:$0xff]
        %v1561 = vld [vmem:[%s172 + $0x29c8] sm:$0xff]
        %v1562 = vld [vmem:[%s172 + $0x29d0] sm:$0xff]
        %v1563 = vld [vmem:[%s172 + $0x29d8] sm:$0xff]
        %v1564 = vld [vmem:[%s172 + $0x29e0] sm:$0xff]
        %v1565 = vld [vmem:[%s172 + $0x29e8] sm:$0xff]
        %v1566 = vld [vmem:[%s172 + $0x29f0] sm:$0xff]
        %v1567 = vld [vmem:[%s172 + $0x29f8] sm:$0xff]
        %v1568 = vld [vmem:[%s172 + $0x2a00] sm:$0xff]
        %v1569 = vld [vmem:[%s172 + $0x2a08] sm:$0xff]
        %v1570 = vld [vmem:[%s172 + $0x2a10] sm:$0xff]
        %v1571 = vld [vmem:[%s172 + $0x2a18] sm:$0xff]
        %v1572 = vld [vmem:[%s172 + $0x2a20] sm:$0xff]
        %v1573 = vld [vmem:[%s172 + $0x2a28] sm:$0xff]
        %v1574 = vld [vmem:[%s172 + $0x2a30] sm:$0xff]
        %v1575 = vld [vmem:[%s172 + $0x2a38] sm:$0xff]
        %v1576 = vld [vmem:[%s172 + $0x2a40] sm:$0xff]
        %v1577 = vld [vmem:[%s172 + $0x2a48] sm:$0xff]
        %v1578 = vld [vmem:[%s172 + $0x2a50] sm:$0xff]
        %v1579 = vld [vmem:[%s172 + $0x2a58] sm:$0xff]
        %v1580 = vld [vmem:[%s172 + $0x2a60] sm:$0xff]
        %v1581 = vld [vmem:[%s172 + $0x2a68] sm:$0xff]
        %v1582 = vld [vmem:[%s172 + $0x2a70] sm:$0xff]
        %v1583 = vld [vmem:[%s172 + $0x2a78] sm:$0xff]
        %v1584 = vld [vmem:[%s172 + $0x2a80] sm:$0xff]
        %v1585 = vld [vmem:[%s172 + $0x2a88] sm:$0xff]
        %v1586 = vld [vmem:[%s172 + $0x2a90] sm:$0xff]
        %v1587 = vld [vmem:[%s172 + $0x2a98] sm:$0xff]
        %v1588 = vld [vmem:[%s172 + $0x2aa0] sm:$0xff]
        %v1589 = vld [vmem:[%s172 + $0x2aa8] sm:$0xff]
        %v1590 = vld [vmem:[%s172 + $0x2ab0] sm:$0xff]
        %v1591 = vld [vmem:[%s172 + $0x2ab8] sm:$0xff]
        %v1592 = vld [vmem:[%s172 + $0x2ac0] sm:$0xff]
        %v1593 = vld [vmem:[%s172 + $0x2ac8] sm:$0xff]
        %v1594 = vld [vmem:[%s172 + $0x2ad0] sm:$0xff]
        %v1595 = vld [vmem:[%s172 + $0x2ad8] sm:$0xff]
        %v1596 = vld [vmem:[%s172 + $0x2ae0] sm:$0xff]
        %v1597 = vld [vmem:[%s172 + $0x2ae8] sm:$0xff]
        %v1598 = vld [vmem:[%s172 + $0x2af0] sm:$0xff]
        %v1599 = vld [vmem:[%s172 + $0x2af8] sm:$0xff]
        %v1600 = vld [vmem:[%s172 + $0x2b00] sm:$0xff]
        %v1601 = vld [vmem:[%s172 + $0x2b08] sm:$0xff]
        %v1602 = vld [vmem:[%s172 + $0x2b10] sm:$0xff]
        %v1603 = vld [vmem:[%s172 + $0x2b18] sm:$0xff]
        %v1604 = vld [vmem:[%s172 + $0x2b20] sm:$0xff]
        %v1605 = vld [vmem:[%s172 + $0x2b28] sm:$0xff]
        %v1606 = vld [vmem:[%s172 + $0x2b30] sm:$0xff]
        %v1607 = vld [vmem:[%s172 + $0x2b38] sm:$0xff]
        %v1608 = vld [vmem:[%s172 + $0x2b40] sm:$0xff]
        %v1609 = vld [vmem:[%s172 + $0x2b48] sm:$0xff]
        %v1610 = vld [vmem:[%s172 + $0x2b50] sm:$0xff]
        %v1611 = vld [vmem:[%s172 + $0x2b58] sm:$0xff]
        %v1612 = vld [vmem:[%s172 + $0x2b60] sm:$0xff]
        %v1613 = vld [vmem:[%s172 + $0x2b68] sm:$0xff]
        %v1614 = vld [vmem:[%s172 + $0x2b70] sm:$0xff]
        %v1615 = vld [vmem:[%s172 + $0x2b78] sm:$0xff]
        %v1616 = vld [vmem:[%s172 + $0x2b80] sm:$0xff]
        %v1617 = vld [vmem:[%s172 + $0x2b88] sm:$0xff]
        %v1618 = vld [vmem:[%s172 + $0x2b90] sm:$0xff]
        %v1619 = vld [vmem:[%s172 + $0x2b98] sm:$0xff]
        %v1620 = vld [vmem:[%s172 + $0x2ba0] sm:$0xff]
        %v1621 = vld [vmem:[%s172 + $0x2ba8] sm:$0xff]
        %v1622 = vld [vmem:[%s172 + $0x2bb0] sm:$0xff]
        %v1623 = vld [vmem:[%s172 + $0x2bb8] sm:$0xff]
        %v1624 = vld [vmem:[%s172 + $0x2bc0] sm:$0xff]
        %v1625 = vld [vmem:[%s172 + $0x2bc8] sm:$0xff]
        %v1626 = vld [vmem:[%s172 + $0x2bd0] sm:$0xff]
        %v1627 = vld [vmem:[%s172 + $0x2bd8] sm:$0xff]
        %v1628 = vld [vmem:[%s172 + $0x2be0] sm:$0xff]
        %v1629 = vld [vmem:[%s172 + $0x2be8] sm:$0xff]
        %v1630 = vld [vmem:[%s172 + $0x2bf0] sm:$0xff]
        %v1631 = vld [vmem:[%s172 + $0x2bf8] sm:$0xff]
        %v1632 = vld [vmem:[%s172 + $0x2c00] sm:$0xff]
        %v1633 = vld [vmem:[%s172 + $0x2c08] sm:$0xff]
        %v1634 = vld [vmem:[%s172 + $0x2c10] sm:$0xff]
        %v1635 = vld [vmem:[%s172 + $0x2c18] sm:$0xff]
        %v1636 = vld [vmem:[%s172 + $0x2c20] sm:$0xff]
        %v1637 = vld [vmem:[%s172 + $0x2c28] sm:$0xff]
        %v1638 = vld [vmem:[%s172 + $0x2c30] sm:$0xff]
        %v1639 = vld [vmem:[%s172 + $0x2c38] sm:$0xff]
        %v1640 = vld [vmem:[%s172 + $0x2c40] sm:$0xff]
        %v1641 = vld [vmem:[%s172 + $0x2c48] sm:$0xff]
        %v1642 = vld [vmem:[%s172 + $0x2c50] sm:$0xff]
        %v1643 = vld [vmem:[%s172 + $0x2c58] sm:$0xff]
        %v1644 = vld [vmem:[%s172 + $0x2c60] sm:$0xff]
        %v1645 = vld [vmem:[%s172 + $0x2c68] sm:$0xff]
        %v1646 = vld [vmem:[%s172 + $0x2c70] sm:$0xff]
        %v1647 = vld [vmem:[%s172 + $0x2c78] sm:$0xff]
        %v1648 = vld [vmem:[%s172 + $0x2c80] sm:$0xff]
        %v1649 = vld [vmem:[%s172 + $0x2c88] sm:$0xff]
        %v1650 = vld [vmem:[%s172 + $0x2c90] sm:$0xff]
        %v1651 = vld [vmem:[%s172 + $0x2c98] sm:$0xff]
        %v1652 = vld [vmem:[%s172 + $0x2ca0] sm:$0xff]
        %v1653 = vld [vmem:[%s172 + $0x2ca8] sm:$0xff]
        %v1654 = vld [vmem:[%s172 + $0x2cb0] sm:$0xff]
        %v1655 = vld [vmem:[%s172 + $0x2cb8] sm:$0xff]
        %v1656 = vld [vmem:[%s172 + $0x2cc0] sm:$0xff]
        %v1657 = vld [vmem:[%s172 + $0x2cc8] sm:$0xff]
        %v1658 = vld [vmem:[%s172 + $0x2cd0] sm:$0xff]
        %v1659 = vld [vmem:[%s172 + $0x2cd8] sm:$0xff]
        %v1660 = vld [vmem:[%s172 + $0x2ce0] sm:$0xff]
        %v1661 = vld [vmem:[%s172 + $0x2ce8] sm:$0xff]
        %v1662 = vld [vmem:[%s172 + $0x2cf0] sm:$0xff]
        %v1663 = vld [vmem:[%s172 + $0x2cf8] sm:$0xff]
        %v1664 = vld [vmem:[%s172 + $0x2d00] sm:$0xff]
        %v1665 = vld [vmem:[%s172 + $0x2d08] sm:$0xff]
        %v1666 = vld [vmem:[%s172 + $0x2d10] sm:$0xff]
        %v1667 = vld [vmem:[%s172 + $0x2d18] sm:$0xff]
        %v1668 = vld [vmem:[%s172 + $0x2d20] sm:$0xff]
        %v1669 = vld [vmem:[%s172 + $0x2d28] sm:$0xff]
        %v1670 = vld [vmem:[%s172 + $0x2d30] sm:$0xff]
        %v1671 = vld [vmem:[%s172 + $0x2d38] sm:$0xff]
        %v1672 = vld [vmem:[%s172 + $0x2d40] sm:$0xff]
        %v1673 = vld [vmem:[%s172 + $0x2d48] sm:$0xff]
        %v1674 = vld [vmem:[%s172 + $0x2d50] sm:$0xff]
        %v1675 = vld [vmem:[%s172 + $0x2d58] sm:$0xff]
        %v1676 = vld [vmem:[%s172 + $0x2d60] sm:$0xff]
        %v1677 = vld [vmem:[%s172 + $0x2d68] sm:$0xff]
        %v1678 = vld [vmem:[%s172 + $0x2d70] sm:$0xff]
        %v1679 = vld [vmem:[%s172 + $0x2d78] sm:$0xff]
        %v1680 = vld [vmem:[%s172 + $0x2d80] sm:$0xff]
        %v1681 = vld [vmem:[%s172 + $0x2d88] sm:$0xff]
        %v1682 = vld [vmem:[%s172 + $0x2d90] sm:$0xff]
        %v1683 = vld [vmem:[%s172 + $0x2d98] sm:$0xff]
        %v1684 = vld [vmem:[%s172 + $0x2da0] sm:$0xff]
        %v1685 = vld [vmem:[%s172 + $0x2da8] sm:$0xff]
        %v1686 = vld [vmem:[%s172 + $0x2db0] sm:$0xff]
        %v1687 = vld [vmem:[%s172 + $0x2db8] sm:$0xff]
        %v1688 = vld [vmem:[%s172 + $0x2dc0] sm:$0xff]
        %v1689 = vld [vmem:[%s172 + $0x2dc8] sm:$0xff]
        %v1690 = vld [vmem:[%s172 + $0x2dd0] sm:$0xff]
        %v1691 = vld [vmem:[%s172 + $0x2dd8] sm:$0xff]
        %v1692 = vld [vmem:[%s172 + $0x2de0] sm:$0xff]
        %v1693 = vld [vmem:[%s172 + $0x2de8] sm:$0xff]
        %v1694 = vld [vmem:[%s172 + $0x2df0] sm:$0xff]
        %v1695 = vld [vmem:[%s172 + $0x2df8] sm:$0xff]
        %v1696 = vld [vmem:[%s172 + $0x2e00] sm:$0xff]
        %v1697 = vld [vmem:[%s172 + $0x2e08] sm:$0xff]
        %v1698 = vld [vmem:[%s172 + $0x2e10] sm:$0xff]
        %v1699 = vld [vmem:[%s172 + $0x2e18] sm:$0xff]
        %v1700 = vld [vmem:[%s172 + $0x2e20] sm:$0xff]
        %v1701 = vld [vmem:[%s172 + $0x2e28] sm:$0xff]
        %v1702 = vld [vmem:[%s172 + $0x2e30] sm:$0xff]
        %v1703 = vld [vmem:[%s172 + $0x2e38] sm:$0xff]
        %v1704 = vld [vmem:[%s172 + $0x2e40] sm:$0xff]
        %v1705 = vld [vmem:[%s172 + $0x2e48] sm:$0xff]
        %v1706 = vld [vmem:[%s172 + $0x2e50] sm:$0xff]
        %v1707 = vld [vmem:[%s172 + $0x2e58] sm:$0xff]
        %v1708 = vld [vmem:[%s172 + $0x2e60] sm:$0xff]
        %v1709 = vld [vmem:[%s172 + $0x2e68] sm:$0xff]
        %v1710 = vld [vmem:[%s172 + $0x2e70] sm:$0xff]
        %v1711 = vld [vmem:[%s172 + $0x2e78] sm:$0xff]
        %v1712 = vld [vmem:[%s172 + $0x2e80] sm:$0xff]
        %v1713 = vld [vmem:[%s172 + $0x2e88] sm:$0xff]
        %v1714 = vld [vmem:[%s172 + $0x2e90] sm:$0xff]
        %v1715 = vld [vmem:[%s172 + $0x2e98] sm:$0xff]
        %v1716 = vld [vmem:[%s172 + $0x2ea0] sm:$0xff]
        %v1717 = vld [vmem:[%s172 + $0x2ea8] sm:$0xff]
        %v1718 = vld [vmem:[%s172 + $0x2eb0] sm:$0xff]
        %v1719 = vld [vmem:[%s172 + $0x2eb8] sm:$0xff]
        %v1720 = vld [vmem:[%s172 + $0x2ec0] sm:$0xff]
        %v1721 = vld [vmem:[%s172 + $0x2ec8] sm:$0xff]
        %v1722 = vld [vmem:[%s172 + $0x2ed0] sm:$0xff]
        %v1723 = vld [vmem:[%s172 + $0x2ed8] sm:$0xff]
        %v1724 = vld [vmem:[%s172 + $0x2ee0] sm:$0xff]
        %v1725 = vld [vmem:[%s172 + $0x2ee8] sm:$0xff]
        %v1726 = vld [vmem:[%s172 + $0x2ef0] sm:$0xff]
        %v1727 = vld [vmem:[%s172 + $0x2ef8] sm:$0xff]
        %v1728 = vld [vmem:[%s172 + $0x2f00] sm:$0xff]
        %v1729 = vld [vmem:[%s172 + $0x2f08] sm:$0xff]
        %v1730 = vld [vmem:[%s172 + $0x2f10] sm:$0xff]
        %v1731 = vld [vmem:[%s172 + $0x2f18] sm:$0xff]
        %v1732 = vld [vmem:[%s172 + $0x2f20] sm:$0xff]
        %v1733 = vld [vmem:[%s172 + $0x2f28] sm:$0xff]
        %v1734 = vld [vmem:[%s172 + $0x2f30] sm:$0xff]
        %v1735 = vld [vmem:[%s172 + $0x2f38] sm:$0xff]
        %v1736 = vld [vmem:[%s172 + $0x2f40] sm:$0xff]
        %v1737 = vld [vmem:[%s172 + $0x2f48] sm:$0xff]
        %v1738 = vld [vmem:[%s172 + $0x2f50] sm:$0xff]
        %v1739 = vld [vmem:[%s172 + $0x2f58] sm:$0xff]
        %v1740 = vld [vmem:[%s172 + $0x2f60] sm:$0xff]
        %v1741 = vld [vmem:[%s172 + $0x2f68] sm:$0xff]
        %v1742 = vld [vmem:[%s172 + $0x2f70] sm:$0xff]
        %v1743 = vld [vmem:[%s172 + $0x2f78] sm:$0xff]
        %v1744 = vld [vmem:[%s172 + $0x2f80] sm:$0xff]
        %v1745 = vld [vmem:[%s172 + $0x2f88] sm:$0xff]
        %v1746 = vld [vmem:[%s172 + $0x2f90] sm:$0xff]
        %v1747 = vld [vmem:[%s172 + $0x2f98] sm:$0xff]
        %v1748 = vld [vmem:[%s172 + $0x2fa0] sm:$0xff]
        %v1749 = vld [vmem:[%s172 + $0x2fa8] sm:$0xff]
        %v1750 = vld [vmem:[%s172 + $0x2fb0] sm:$0xff]
        %v1751 = vld [vmem:[%s172 + $0x2fb8] sm:$0xff]
        %v1752 = vld [vmem:[%s172 + $0x2fc0] sm:$0xff]
        %v1753 = vld [vmem:[%s172 + $0x2fc8] sm:$0xff]
        %v1754 = vld [vmem:[%s172 + $0x2fd0] sm:$0xff]
        %v1755 = vld [vmem:[%s172 + $0x2fd8] sm:$0xff]
        %v1756 = vld [vmem:[%s172 + $0x2fe0] sm:$0xff]
        %v1757 = vld [vmem:[%s172 + $0x2fe8] sm:$0xff]
        %v1758 = vld [vmem:[%s172 + $0x2ff0] sm:$0xff]
        %v1759 = vld [vmem:[%s172 + $0x2ff8] sm:$0xff]
        %v1760 = vld [vmem:[%s172 + $0x3000] sm:$0xff]
        %v1761 = vld [vmem:[%s172 + $0x3008] sm:$0xff]
        %v1762 = vld [vmem:[%s172 + $0x3010] sm:$0xff]
        %v1763 = vld [vmem:[%s172 + $0x3018] sm:$0xff]
        %v1764 = vld [vmem:[%s172 + $0x3020] sm:$0xff]
        %v1765 = vld [vmem:[%s172 + $0x3028] sm:$0xff]
        %v1766 = vld [vmem:[%s172 + $0x3030] sm:$0xff]
        %v1767 = vld [vmem:[%s172 + $0x3038] sm:$0xff]
        %v1768 = vld [vmem:[%s172 + $0x3040] sm:$0xff]
        %v1769 = vld [vmem:[%s172 + $0x3048] sm:$0xff]
        %v1770 = vld [vmem:[%s172 + $0x3050] sm:$0xff]
        %v1771 = vld [vmem:[%s172 + $0x3058] sm:$0xff]
        %v1772 = vld [vmem:[%s172 + $0x3060] sm:$0xff]
        %v1773 = vld [vmem:[%s172 + $0x3068] sm:$0xff]
        %v1774 = vld [vmem:[%s172 + $0x3070] sm:$0xff]
        %v1775 = vld [vmem:[%s172 + $0x3078] sm:$0xff]
        %v1776 = vld [vmem:[%s172 + $0x3080] sm:$0xff]
        %v1777 = vld [vmem:[%s172 + $0x3088] sm:$0xff]
        %v1778 = vld [vmem:[%s172 + $0x3090] sm:$0xff]
        %v1779 = vld [vmem:[%s172 + $0x3098] sm:$0xff]
        %v1780 = vld [vmem:[%s172 + $0x30a0] sm:$0xff]
        %v1781 = vld [vmem:[%s172 + $0x30a8] sm:$0xff]
        %v1782 = vld [vmem:[%s172 + $0x30b0] sm:$0xff]
        %v1783 = vld [vmem:[%s172 + $0x30b8] sm:$0xff]
        %v1784 = vld [vmem:[%s172 + $0x30c0] sm:$0xff]
        %v1785 = vld [vmem:[%s172 + $0x30c8] sm:$0xff]
        %v1786 = vld [vmem:[%s172 + $0x30d0] sm:$0xff]
        %v1787 = vld [vmem:[%s172 + $0x30d8] sm:$0xff]
        %v1788 = vld [vmem:[%s172 + $0x30e0] sm:$0xff]
        %v1789 = vld [vmem:[%s172 + $0x30e8] sm:$0xff]
        %v1790 = vld [vmem:[%s172 + $0x30f0] sm:$0xff]
        %v1791 = vld [vmem:[%s172 + $0x30f8] sm:$0xff]
        %v1792 = vld [vmem:[%s172 + $0x3100] sm:$0xff]
        %v1793 = vld [vmem:[%s172 + $0x3108] sm:$0xff]
        %v1794 = vld [vmem:[%s172 + $0x3110] sm:$0xff]
        %v1795 = vld [vmem:[%s172 + $0x3118] sm:$0xff]
        %v1796 = vld [vmem:[%s172 + $0x3120] sm:$0xff]
        %v1797 = vld [vmem:[%s172 + $0x3128] sm:$0xff]
        %v1798 = vld [vmem:[%s172 + $0x3130] sm:$0xff]
        %v1799 = vld [vmem:[%s172 + $0x3138] sm:$0xff]
        %v1800 = vld [vmem:[%s172 + $0x3140] sm:$0xff]
        %v1801 = vld [vmem:[%s172 + $0x3148] sm:$0xff]
        %v1802 = vld [vmem:[%s172 + $0x3150] sm:$0xff]
        %v1803 = vld [vmem:[%s172 + $0x3158] sm:$0xff]
        %v1804 = vld [vmem:[%s172 + $0x3160] sm:$0xff]
        %v1805 = vld [vmem:[%s172 + $0x3168] sm:$0xff]
        %v1806 = vld [vmem:[%s172 + $0x3170] sm:$0xff]
        %v1807 = vld [vmem:[%s172 + $0x3178] sm:$0xff]
        %v1808 = vld [vmem:[%s172 + $0x3180] sm:$0xff]
        %v1809 = vld [vmem:[%s172 + $0x3188] sm:$0xff]
        %v1810 = vld [vmem:[%s172 + $0x3190] sm:$0xff]
        %v1811 = vld [vmem:[%s172 + $0x3198] sm:$0xff]
        %v1812 = vld [vmem:[%s172 + $0x31a0] sm:$0xff]
        %v1813 = vld [vmem:[%s172 + $0x31a8] sm:$0xff]
        %v1814 = vld [vmem:[%s172 + $0x31b0] sm:$0xff]
        %v1815 = vld [vmem:[%s172 + $0x31b8] sm:$0xff]
        %v1816 = vld [vmem:[%s172 + $0x31c0] sm:$0xff]
        %v1817 = vld [vmem:[%s172 + $0x31c8] sm:$0xff]
        %v1818 = vld [vmem:[%s172 + $0x31d0] sm:$0xff]
        %v1819 = vld [vmem:[%s172 + $0x31d8] sm:$0xff]
        %v1820 = vld [vmem:[%s172 + $0x31e0] sm:$0xff]
        %v1821 = vld [vmem:[%s172 + $0x31e8] sm:$0xff]
        %v1822 = vld [vmem:[%s172 + $0x31f0] sm:$0xff]
        %v1823 = vld [vmem:[%s172 + $0x31f8] sm:$0xff]
        %v1832 = vcombine.high %v215, %v215
        %v1834 = vunpack.c.l.s4 1966171168
        %v1835 = vunpack.c.0.s8 %v1834
        %v1836 = vlaneseq
        %v1837 = vshrl.u32 %v1836, 7
        %v1838 = vsub.s32 %v1835, %v1837
        %v1839 = vrot.slane %v215, %v1838
        %v1841 = vunpack.c.l.s4 1966171168
        %v1842 = vunpack.c.0.s8 %v1841
        %v1843 = vlaneseq
        %v1844 = vshrl.u32 %v1843, 7
        %v1845 = vsub.s32 %v1842, %v1844
        %v1846 = vrot.slane %v1832, %v1845
        %v1847 = vcombine.high %v1839, %v1839
        %v1848 = vcombine.high %v1846, %v1846
        %v1850 = vunpack.c.l.s4 1966171168
        %v1851 = vunpack.c.0.s8 %v1850
        %v1852 = vlaneseq
        %v1853 = vshrl.u32 %v1852, 7
        %v1854 = vsub.s32 %v1851, %v1853
        %v1855 = vrot.slane %v1839, %v1854
        %v1857 = vunpack.c.l.s4 1966171168
        %v1858 = vunpack.c.0.s8 %v1857
        %v1859 = vlaneseq
        %v1860 = vshrl.u32 %v1859, 7
        %v1861 = vsub.s32 %v1858, %v1860
        %v1862 = vrot.slane %v1846, %v1861
        %v1864 = vunpack.c.l.s4 1966171168
        %v1865 = vunpack.c.0.s8 %v1864
        %v1866 = vlaneseq
        %v1867 = vshrl.u32 %v1866, 7
        %v1868 = vsub.s32 %v1865, %v1867
        %v1869 = vrot.slane %v1847, %v1868
        %v1871 = vunpack.c.l.s4 1966171168
        %v1872 = vunpack.c.0.s8 %v1871
        %v1873 = vlaneseq
        %v1874 = vshrl.u32 %v1873, 7
        %v1875 = vsub.s32 %v1872, %v1874
        %v1876 = vrot.slane %v1848, %v1875
        %v1877 = vcombine.high %v1855, %v1855
        %v1878 = vcombine.high %v1862, %v1862
        %v1879 = vcombine.high %v1869, %v1869
        %v1880 = vcombine.high %v1876, %v1876
        %v1881 = vcombine.high %v216, %v216
        %v1883 = vunpack.c.l.s4 1966171168
        %v1884 = vunpack.c.0.s8 %v1883
        %v1885 = vlaneseq
        %v1886 = vshrl.u32 %v1885, 7
        %v1887 = vsub.s32 %v1884, %v1886
        %v1888 = vrot.slane %v216, %v1887
        %v1890 = vunpack.c.l.s4 1966171168
        %v1891 = vunpack.c.0.s8 %v1890
        %v1892 = vlaneseq
        %v1893 = vshrl.u32 %v1892, 7
        %v1894 = vsub.s32 %v1891, %v1893
        %v1895 = vrot.slane %v1881, %v1894
        %v1896 = vcombine.high %v1888, %v1888
        %v1897 = vcombine.high %v1895, %v1895
        %v1899 = vunpack.c.l.s4 1966171168
        %v1900 = vunpack.c.0.s8 %v1899
        %v1901 = vlaneseq
        %v1902 = vshrl.u32 %v1901, 7
        %v1903 = vsub.s32 %v1900, %v1902
        %v1904 = vrot.slane %v1888, %v1903
        %v1906 = vunpack.c.l.s4 1966171168
        %v1907 = vunpack.c.0.s8 %v1906
        %v1908 = vlaneseq
        %v1909 = vshrl.u32 %v1908, 7
        %v1910 = vsub.s32 %v1907, %v1909
        %v1911 = vrot.slane %v1895, %v1910
        %v1913 = vunpack.c.l.s4 1966171168
        %v1914 = vunpack.c.0.s8 %v1913
        %v1915 = vlaneseq
        %v1916 = vshrl.u32 %v1915, 7
        %v1917 = vsub.s32 %v1914, %v1916
        %v1918 = vrot.slane %v1896, %v1917
        %v1920 = vunpack.c.l.s4 1966171168
        %v1921 = vunpack.c.0.s8 %v1920
        %v1922 = vlaneseq
        %v1923 = vshrl.u32 %v1922, 7
        %v1924 = vsub.s32 %v1921, %v1923
        %v1925 = vrot.slane %v1897, %v1924
        %v1926 = vcombine.high %v1904, %v1904
        %v1927 = vcombine.high %v1911, %v1911
        %v1928 = vcombine.high %v1918, %v1918
        %v1929 = vcombine.high %v1925, %v1925
        %v1930 = vcombine.high %v217, %v217
        %v1932 = vunpack.c.l.s4 1966171168
        %v1933 = vunpack.c.0.s8 %v1932
        %v1934 = vlaneseq
        %v1935 = vshrl.u32 %v1934, 7
        %v1936 = vsub.s32 %v1933, %v1935
        %v1937 = vrot.slane %v217, %v1936
        %v1939 = vunpack.c.l.s4 1966171168
        %v1940 = vunpack.c.0.s8 %v1939
        %v1941 = vlaneseq
        %v1942 = vshrl.u32 %v1941, 7
        %v1943 = vsub.s32 %v1940, %v1942
        %v1944 = vrot.slane %v1930, %v1943
        %v1945 = vcombine.high %v1937, %v1937
        %v1946 = vcombine.high %v1944, %v1944
        %v1948 = vunpack.c.l.s4 1966171168
        %v1949 = vunpack.c.0.s8 %v1948
        %v1950 = vlaneseq
        %v1951 = vshrl.u32 %v1950, 7
        %v1952 = vsub.s32 %v1949, %v1951
        %v1953 = vrot.slane %v1937, %v1952
        %v1955 = vunpack.c.l.s4 1966171168
        %v1956 = vunpack.c.0.s8 %v1955
        %v1957 = vlaneseq
        %v1958 = vshrl.u32 %v1957, 7
        %v1959 = vsub.s32 %v1956, %v1958
        %v1960 = vrot.slane %v1944, %v1959
        %v1962 = vunpack.c.l.s4 1966171168
        %v1963 = vunpack.c.0.s8 %v1962
        %v1964 = vlaneseq
        %v1965 = vshrl.u32 %v1964, 7
        %v1966 = vsub.s32 %v1963, %v1965
        %v1967 = vrot.slane %v1945, %v1966
        %v1969 = vunpack.c.l.s4 1966171168
        %v1970 = vunpack.c.0.s8 %v1969
        %v1971 = vlaneseq
        %v1972 = vshrl.u32 %v1971, 7
        %v1973 = vsub.s32 %v1970, %v1972
        %v1974 = vrot.slane %v1946, %v1973
        %v1975 = vcombine.high %v1953, %v1953
        %v1976 = vcombine.high %v1960, %v1960
        %v1977 = vcombine.high %v1967, %v1967
        %v1978 = vcombine.high %v1974, %v1974
        %v1979 = vcombine.high %v218, %v218
        %v1981 = vunpack.c.l.s4 1966171168
        %v1982 = vunpack.c.0.s8 %v1981
        %v1983 = vlaneseq
        %v1984 = vshrl.u32 %v1983, 7
        %v1985 = vsub.s32 %v1982, %v1984
        %v1986 = vrot.slane %v218, %v1985
        %v1988 = vunpack.c.l.s4 1966171168
        %v1989 = vunpack.c.0.s8 %v1988
        %v1990 = vlaneseq
        %v1991 = vshrl.u32 %v1990, 7
        %v1992 = vsub.s32 %v1989, %v1991
        %v1993 = vrot.slane %v1979, %v1992
        %v1994 = vcombine.high %v1986, %v1986
        %v1995 = vcombine.high %v1993, %v1993
        %v1997 = vunpack.c.l.s4 1966171168
        %v1998 = vunpack.c.0.s8 %v1997
        %v1999 = vlaneseq
        %v2000 = vshrl.u32 %v1999, 7
        %v2001 = vsub.s32 %v1998, %v2000
        %v2002 = vrot.slane %v1986, %v2001
        %v2004 = vunpack.c.l.s4 1966171168
        %v2005 = vunpack.c.0.s8 %v2004
        %v2006 = vlaneseq
        %v2007 = vshrl.u32 %v2006, 7
        %v2008 = vsub.s32 %v2005, %v2007
        %v2009 = vrot.slane %v1993, %v2008
        %v2011 = vunpack.c.l.s4 1966171168
        %v2012 = vunpack.c.0.s8 %v2011
        %v2013 = vlaneseq
        %v2014 = vshrl.u32 %v2013, 7
        %v2015 = vsub.s32 %v2012, %v2014
        %v2016 = vrot.slane %v1994, %v2015
        %v2018 = vunpack.c.l.s4 1966171168
        %v2019 = vunpack.c.0.s8 %v2018
        %v2020 = vlaneseq
        %v2021 = vshrl.u32 %v2020, 7
        %v2022 = vsub.s32 %v2019, %v2021
        %v2023 = vrot.slane %v1995, %v2022
        %v2024 = vcombine.high %v2002, %v2002
        %v2025 = vcombine.high %v2009, %v2009
        %v2026 = vcombine.high %v2016, %v2016
        %v2027 = vcombine.high %v2023, %v2023
        %v2028 = vcombine.high %v219, %v219
        %v2030 = vunpack.c.l.s4 1966171168
        %v2031 = vunpack.c.0.s8 %v2030
        %v2032 = vlaneseq
        %v2033 = vshrl.u32 %v2032, 7
        %v2034 = vsub.s32 %v2031, %v2033
        %v2035 = vrot.slane %v219, %v2034
        %v2037 = vunpack.c.l.s4 1966171168
        %v2038 = vunpack.c.0.s8 %v2037
        %v2039 = vlaneseq
        %v2040 = vshrl.u32 %v2039, 7
        %v2041 = vsub.s32 %v2038, %v2040
        %v2042 = vrot.slane %v2028, %v2041
        %v2043 = vcombine.high %v2035, %v2035
        %v2044 = vcombine.high %v2042, %v2042
        %v2046 = vunpack.c.l.s4 1966171168
        %v2047 = vunpack.c.0.s8 %v2046
        %v2048 = vlaneseq
        %v2049 = vshrl.u32 %v2048, 7
        %v2050 = vsub.s32 %v2047, %v2049
        %v2051 = vrot.slane %v2035, %v2050
        %v2053 = vunpack.c.l.s4 1966171168
        %v2054 = vunpack.c.0.s8 %v2053
        %v2055 = vlaneseq
        %v2056 = vshrl.u32 %v2055, 7
        %v2057 = vsub.s32 %v2054, %v2056
        %v2058 = vrot.slane %v2042, %v2057
        %v2060 = vunpack.c.l.s4 1966171168
        %v2061 = vunpack.c.0.s8 %v2060
        %v2062 = vlaneseq
        %v2063 = vshrl.u32 %v2062, 7
        %v2064 = vsub.s32 %v2061, %v2063
        %v2065 = vrot.slane %v2043, %v2064
        %v2067 = vunpack.c.l.s4 1966171168
        %v2068 = vunpack.c.0.s8 %v2067
        %v2069 = vlaneseq
        %v2070 = vshrl.u32 %v2069, 7
        %v2071 = vsub.s32 %v2068, %v2070
        %v2072 = vrot.slane %v2044, %v2071
        %v2073 = vcombine.high %v2051, %v2051
        %v2074 = vcombine.high %v2058, %v2058
        %v2075 = vcombine.high %v2065, %v2065
        %v2076 = vcombine.high %v2072, %v2072
        %v2077 = vcombine.high %v220, %v220
        %v2079 = vunpack.c.l.s4 1966171168
        %v2080 = vunpack.c.0.s8 %v2079
        %v2081 = vlaneseq
        %v2082 = vshrl.u32 %v2081, 7
        %v2083 = vsub.s32 %v2080, %v2082
        %v2084 = vrot.slane %v220, %v2083
        %v2086 = vunpack.c.l.s4 1966171168
        %v2087 = vunpack.c.0.s8 %v2086
        %v2088 = vlaneseq
        %v2089 = vshrl.u32 %v2088, 7
        %v2090 = vsub.s32 %v2087, %v2089
        %v2091 = vrot.slane %v2077, %v2090
        %v2092 = vcombine.high %v2084, %v2084
        %v2093 = vcombine.high %v2091, %v2091
        %v2095 = vunpack.c.l.s4 1966171168
        %v2096 = vunpack.c.0.s8 %v2095
        %v2097 = vlaneseq
        %v2098 = vshrl.u32 %v2097, 7
        %v2099 = vsub.s32 %v2096, %v2098
        %v2100 = vrot.slane %v2084, %v2099
        %v2102 = vunpack.c.l.s4 1966171168
        %v2103 = vunpack.c.0.s8 %v2102
        %v2104 = vlaneseq
        %v2105 = vshrl.u32 %v2104, 7
        %v2106 = vsub.s32 %v2103, %v2105
        %v2107 = vrot.slane %v2091, %v2106
        %v2109 = vunpack.c.l.s4 1966171168
        %v2110 = vunpack.c.0.s8 %v2109
        %v2111 = vlaneseq
        %v2112 = vshrl.u32 %v2111, 7
        %v2113 = vsub.s32 %v2110, %v2112
        %v2114 = vrot.slane %v2092, %v2113
        %v2116 = vunpack.c.l.s4 1966171168
        %v2117 = vunpack.c.0.s8 %v2116
        %v2118 = vlaneseq
        %v2119 = vshrl.u32 %v2118, 7
        %v2120 = vsub.s32 %v2117, %v2119
        %v2121 = vrot.slane %v2093, %v2120
        %v2122 = vcombine.high %v2100, %v2100
        %v2123 = vcombine.high %v2107, %v2107
        %v2124 = vcombine.high %v2114, %v2114
        %v2125 = vcombine.high %v2121, %v2121
        %v2126 = vcombine.high %v221, %v221
        %v2128 = vunpack.c.l.s4 1966171168
        %v2129 = vunpack.c.0.s8 %v2128
        %v2130 = vlaneseq
        %v2131 = vshrl.u32 %v2130, 7
        %v2132 = vsub.s32 %v2129, %v2131
        %v2133 = vrot.slane %v221, %v2132
        %v2135 = vunpack.c.l.s4 1966171168
        %v2136 = vunpack.c.0.s8 %v2135
        %v2137 = vlaneseq
        %v2138 = vshrl.u32 %v2137, 7
        %v2139 = vsub.s32 %v2136, %v2138
        %v2140 = vrot.slane %v2126, %v2139
        %v2141 = vcombine.high %v2133, %v2133
        %v2142 = vcombine.high %v2140, %v2140
        %v2144 = vunpack.c.l.s4 1966171168
        %v2145 = vunpack.c.0.s8 %v2144
        %v2146 = vlaneseq
        %v2147 = vshrl.u32 %v2146, 7
        %v2148 = vsub.s32 %v2145, %v2147
        %v2149 = vrot.slane %v2133, %v2148
        %v2151 = vunpack.c.l.s4 1966171168
        %v2152 = vunpack.c.0.s8 %v2151
        %v2153 = vlaneseq
        %v2154 = vshrl.u32 %v2153, 7
        %v2155 = vsub.s32 %v2152, %v2154
        %v2156 = vrot.slane %v2140, %v2155
        %v2158 = vunpack.c.l.s4 1966171168
        %v2159 = vunpack.c.0.s8 %v2158
        %v2160 = vlaneseq
        %v2161 = vshrl.u32 %v2160, 7
        %v2162 = vsub.s32 %v2159, %v2161
        %v2163 = vrot.slane %v2141, %v2162
        %v2165 = vunpack.c.l.s4 1966171168
        %v2166 = vunpack.c.0.s8 %v2165
        %v2167 = vlaneseq
        %v2168 = vshrl.u32 %v2167, 7
        %v2169 = vsub.s32 %v2166, %v2168
        %v2170 = vrot.slane %v2142, %v2169
        %v2171 = vcombine.high %v2149, %v2149
        %v2172 = vcombine.high %v2156, %v2156
        %v2173 = vcombine.high %v2163, %v2163
        %v2174 = vcombine.high %v2170, %v2170
        %v2175 = vcombine.high %v222, %v222
        %v2177 = vunpack.c.l.s4 1966171168
        %v2178 = vunpack.c.0.s8 %v2177
        %v2179 = vlaneseq
        %v2180 = vshrl.u32 %v2179, 7
        %v2181 = vsub.s32 %v2178, %v2180
        %v2182 = vrot.slane %v222, %v2181
        %v2184 = vunpack.c.l.s4 1966171168
        %v2185 = vunpack.c.0.s8 %v2184
        %v2186 = vlaneseq
        %v2187 = vshrl.u32 %v2186, 7
        %v2188 = vsub.s32 %v2185, %v2187
        %v2189 = vrot.slane %v2175, %v2188
        %v2190 = vcombine.high %v2182, %v2182
        %v2191 = vcombine.high %v2189, %v2189
        %v2193 = vunpack.c.l.s4 1966171168
        %v2194 = vunpack.c.0.s8 %v2193
        %v2195 = vlaneseq
        %v2196 = vshrl.u32 %v2195, 7
        %v2197 = vsub.s32 %v2194, %v2196
        %v2198 = vrot.slane %v2182, %v2197
        %v2200 = vunpack.c.l.s4 1966171168
        %v2201 = vunpack.c.0.s8 %v2200
        %v2202 = vlaneseq
        %v2203 = vshrl.u32 %v2202, 7
        %v2204 = vsub.s32 %v2201, %v2203
        %v2205 = vrot.slane %v2189, %v2204
        %v2207 = vunpack.c.l.s4 1966171168
        %v2208 = vunpack.c.0.s8 %v2207
        %v2209 = vlaneseq
        %v2210 = vshrl.u32 %v2209, 7
        %v2211 = vsub.s32 %v2208, %v2210
        %v2212 = vrot.slane %v2190, %v2211
        %v2214 = vunpack.c.l.s4 1966171168
        %v2215 = vunpack.c.0.s8 %v2214
        %v2216 = vlaneseq
        %v2217 = vshrl.u32 %v2216, 7
        %v2218 = vsub.s32 %v2215, %v2217
        %v2219 = vrot.slane %v2191, %v2218
        %v2220 = vcombine.high %v2198, %v2198
        %v2221 = vcombine.high %v2205, %v2205
        %v2222 = vcombine.high %v2212, %v2212
        %v2223 = vcombine.high %v2219, %v2219
        %v3888 = vunpack.c.l.b16 %v224
        %v3889 = vunpack.c.h.b16 %v224
        %v3890 = vunpack.c.l.b16 %v225
        %v3891 = vunpack.c.h.b16 %v225
        %v3892 = vunpack.c.l.b16 %v226
        %v3893 = vunpack.c.h.b16 %v226
        %v3894 = vunpack.c.l.b16 %v227
        %v3895 = vunpack.c.h.b16 %v227
        %v3896 = vunpack.c.l.b16 %v228
        %v3897 = vunpack.c.h.b16 %v228
        %v3898 = vunpack.c.l.b16 %v229
        %v3899 = vunpack.c.h.b16 %v229
        %v3900 = vunpack.c.l.b16 %v230
        %v3901 = vunpack.c.h.b16 %v230
        %v3902 = vunpack.c.l.b16 %v231
        %v3903 = vunpack.c.h.b16 %v231
        %v3904 = vunpack.c.l.b16 %v232
        %v3905 = vunpack.c.h.b16 %v232
        %v3906 = vunpack.c.l.b16 %v233
        %v3907 = vunpack.c.h.b16 %v233
        %v3908 = vunpack.c.l.b16 %v234
        %v3909 = vunpack.c.h.b16 %v234
        %v3910 = vunpack.c.l.b16 %v235
        %v3911 = vunpack.c.h.b16 %v235
        %v3912 = vunpack.c.l.b16 %v236
        %v3913 = vunpack.c.h.b16 %v236
        %v3914 = vunpack.c.l.b16 %v237
        %v3915 = vunpack.c.h.b16 %v237
        %v3916 = vunpack.c.l.b16 %v238
        %v3917 = vunpack.c.h.b16 %v238
        %v3918 = vunpack.c.l.b16 %v239
        %v3919 = vunpack.c.h.b16 %v239
        %v3920 = vunpack.c.l.b16 %v240
        %v3921 = vunpack.c.h.b16 %v240
        %v3922 = vunpack.c.l.b16 %v241
        %v3923 = vunpack.c.h.b16 %v241
        %v3924 = vunpack.c.l.b16 %v242
        %v3925 = vunpack.c.h.b16 %v242
        %v3926 = vunpack.c.l.b16 %v243
        %v3927 = vunpack.c.h.b16 %v243
        %v3928 = vunpack.c.l.b16 %v244
        %v3929 = vunpack.c.h.b16 %v244
        %v3930 = vunpack.c.l.b16 %v245
        %v3931 = vunpack.c.h.b16 %v245
        %v3932 = vunpack.c.l.b16 %v246
        %v3933 = vunpack.c.h.b16 %v246
        %v3934 = vunpack.c.l.b16 %v247
        %v3935 = vunpack.c.h.b16 %v247
        %v3936 = vunpack.c.l.b16 %v248
        %v3937 = vunpack.c.h.b16 %v248
        %v3938 = vunpack.c.l.b16 %v249
        %v3939 = vunpack.c.h.b16 %v249
        %v3940 = vunpack.c.l.b16 %v250
        %v3941 = vunpack.c.h.b16 %v250
        %v3942 = vunpack.c.l.b16 %v251
        %v3943 = vunpack.c.h.b16 %v251
        %v3944 = vunpack.c.l.b16 %v252
        %v3945 = vunpack.c.h.b16 %v252
        %v3946 = vunpack.c.l.b16 %v253
        %v3947 = vunpack.c.h.b16 %v253
        %v3948 = vunpack.c.l.b16 %v254
        %v3949 = vunpack.c.h.b16 %v254
        %v3950 = vunpack.c.l.b16 %v255
        %v3951 = vunpack.c.h.b16 %v255
        %v3952 = vunpack.c.l.b16 %v256
        %v3953 = vunpack.c.h.b16 %v256
        %v3954 = vunpack.c.l.b16 %v257
        %v3955 = vunpack.c.h.b16 %v257
        %v3956 = vunpack.c.l.b16 %v258
        %v3957 = vunpack.c.h.b16 %v258
        %v3958 = vunpack.c.l.b16 %v259
        %v3959 = vunpack.c.h.b16 %v259
        %v3960 = vunpack.c.l.b16 %v260
        %v3961 = vunpack.c.h.b16 %v260
        %v3962 = vunpack.c.l.b16 %v261
        %v3963 = vunpack.c.h.b16 %v261
        %v3964 = vunpack.c.l.b16 %v262
        %v3965 = vunpack.c.h.b16 %v262
        %v3966 = vunpack.c.l.b16 %v263
        %v3967 = vunpack.c.h.b16 %v263
        %v3968 = vunpack.c.l.b16 %v264
        %v3969 = vunpack.c.h.b16 %v264
        %v3970 = vunpack.c.l.b16 %v265
        %v3971 = vunpack.c.h.b16 %v265
        %v3972 = vunpack.c.l.b16 %v266
        %v3973 = vunpack.c.h.b16 %v266
        %v3974 = vunpack.c.l.b16 %v267
        %v3975 = vunpack.c.h.b16 %v267
        %v3976 = vunpack.c.l.b16 %v268
        %v3977 = vunpack.c.h.b16 %v268
        %v3978 = vunpack.c.l.b16 %v269
        %v3979 = vunpack.c.h.b16 %v269
        %v3980 = vunpack.c.l.b16 %v270
        %v3981 = vunpack.c.h.b16 %v270
        %v3982 = vunpack.c.l.b16 %v271
        %v3983 = vunpack.c.h.b16 %v271
        %v3984 = vunpack.c.l.b16 %v272
        %v3985 = vunpack.c.h.b16 %v272
        %v3986 = vunpack.c.l.b16 %v273
        %v3987 = vunpack.c.h.b16 %v273
        %v3988 = vunpack.c.l.b16 %v274
        %v3989 = vunpack.c.h.b16 %v274
        %v3990 = vunpack.c.l.b16 %v275
        %v3991 = vunpack.c.h.b16 %v275
        %v3992 = vunpack.c.l.b16 %v276
        %v3993 = vunpack.c.h.b16 %v276
        %v3994 = vunpack.c.l.b16 %v277
        %v3995 = vunpack.c.h.b16 %v277
        %v3996 = vunpack.c.l.b16 %v278
        %v3997 = vunpack.c.h.b16 %v278
        %v3998 = vunpack.c.l.b16 %v279
        %v3999 = vunpack.c.h.b16 %v279
        %v4000 = vunpack.c.l.b16 %v280
        %v4001 = vunpack.c.h.b16 %v280
        %v4002 = vunpack.c.l.b16 %v281
        %v4003 = vunpack.c.h.b16 %v281
        %v4004 = vunpack.c.l.b16 %v282
        %v4005 = vunpack.c.h.b16 %v282
        %v4006 = vunpack.c.l.b16 %v283
        %v4007 = vunpack.c.h.b16 %v283
        %v4008 = vunpack.c.l.b16 %v284
        %v4009 = vunpack.c.h.b16 %v284
        %v4010 = vunpack.c.l.b16 %v285
        %v4011 = vunpack.c.h.b16 %v285
        %v4012 = vunpack.c.l.b16 %v286
        %v4013 = vunpack.c.h.b16 %v286
        %v4014 = vunpack.c.l.b16 %v287
        %v4015 = vunpack.c.h.b16 %v287
        %v4016 = vunpack.c.l.b16 %v288
        %v4017 = vunpack.c.h.b16 %v288
        %v4018 = vunpack.c.l.b16 %v289
        %v4019 = vunpack.c.h.b16 %v289
        %v4020 = vunpack.c.l.b16 %v290
        %v4021 = vunpack.c.h.b16 %v290
        %v4022 = vunpack.c.l.b16 %v291
        %v4023 = vunpack.c.h.b16 %v291
        %v4024 = vunpack.c.l.b16 %v292
        %v4025 = vunpack.c.h.b16 %v292
        %v4026 = vunpack.c.l.b16 %v293
        %v4027 = vunpack.c.h.b16 %v293
        %v4028 = vunpack.c.l.b16 %v294
        %v4029 = vunpack.c.h.b16 %v294
        %v4030 = vunpack.c.l.b16 %v295
        %v4031 = vunpack.c.h.b16 %v295
        %v4032 = vunpack.c.l.b16 %v296
        %v4033 = vunpack.c.h.b16 %v296
        %v4034 = vunpack.c.l.b16 %v297
        %v4035 = vunpack.c.h.b16 %v297
        %v4036 = vunpack.c.l.b16 %v298
        %v4037 = vunpack.c.h.b16 %v298
        %v4038 = vunpack.c.l.b16 %v299
        %v4039 = vunpack.c.h.b16 %v299
        %v4040 = vunpack.c.l.b16 %v300
        %v4041 = vunpack.c.h.b16 %v300
        %v4042 = vunpack.c.l.b16 %v301
        %v4043 = vunpack.c.h.b16 %v301
        %v4044 = vunpack.c.l.b16 %v302
        %v4045 = vunpack.c.h.b16 %v302
        %v4046 = vunpack.c.l.b16 %v303
        %v4047 = vunpack.c.h.b16 %v303
        %v4048 = vunpack.c.l.b16 %v304
        %v4049 = vunpack.c.h.b16 %v304
        %v4050 = vunpack.c.l.b16 %v305
        %v4051 = vunpack.c.h.b16 %v305
        %v4052 = vunpack.c.l.b16 %v306
        %v4053 = vunpack.c.h.b16 %v306
        %v4054 = vunpack.c.l.b16 %v307
        %v4055 = vunpack.c.h.b16 %v307
        %v4056 = vunpack.c.l.b16 %v308
        %v4057 = vunpack.c.h.b16 %v308
        %v4058 = vunpack.c.l.b16 %v309
        %v4059 = vunpack.c.h.b16 %v309
        %v4060 = vunpack.c.l.b16 %v310
        %v4061 = vunpack.c.h.b16 %v310
        %v4062 = vunpack.c.l.b16 %v311
        %v4063 = vunpack.c.h.b16 %v311
        %v4064 = vunpack.c.l.b16 %v312
        %v4065 = vunpack.c.h.b16 %v312
        %v4066 = vunpack.c.l.b16 %v313
        %v4067 = vunpack.c.h.b16 %v313
        %v4068 = vunpack.c.l.b16 %v314
        %v4069 = vunpack.c.h.b16 %v314
        %v4070 = vunpack.c.l.b16 %v315
        %v4071 = vunpack.c.h.b16 %v315
        %v4072 = vunpack.c.l.b16 %v316
        %v4073 = vunpack.c.h.b16 %v316
        %v4074 = vunpack.c.l.b16 %v317
        %v4075 = vunpack.c.h.b16 %v317
        %v4076 = vunpack.c.l.b16 %v318
        %v4077 = vunpack.c.h.b16 %v318
        %v4078 = vunpack.c.l.b16 %v319
        %v4079 = vunpack.c.h.b16 %v319
        %v4080 = vunpack.c.l.b16 %v320
        %v4081 = vunpack.c.h.b16 %v320
        %v4082 = vunpack.c.l.b16 %v321
        %v4083 = vunpack.c.h.b16 %v321
        %v4084 = vunpack.c.l.b16 %v322
        %v4085 = vunpack.c.h.b16 %v322
        %v4086 = vunpack.c.l.b16 %v323
        %v4087 = vunpack.c.h.b16 %v323
        %v4088 = vunpack.c.l.b16 %v324
        %v4089 = vunpack.c.h.b16 %v324
        %v4090 = vunpack.c.l.b16 %v325
        %v4091 = vunpack.c.h.b16 %v325
        %v4092 = vunpack.c.l.b16 %v326
        %v4093 = vunpack.c.h.b16 %v326
        %v4094 = vunpack.c.l.b16 %v327
        %v4095 = vunpack.c.h.b16 %v327
        %v4096 = vunpack.c.l.b16 %v328
        %v4097 = vunpack.c.h.b16 %v328
        %v4098 = vunpack.c.l.b16 %v329
        %v4099 = vunpack.c.h.b16 %v329
        %v4100 = vunpack.c.l.b16 %v330
        %v4101 = vunpack.c.h.b16 %v330
        %v4102 = vunpack.c.l.b16 %v331
        %v4103 = vunpack.c.h.b16 %v331
        %v4104 = vunpack.c.l.b16 %v332
        %v4105 = vunpack.c.h.b16 %v332
        %v4106 = vunpack.c.l.b16 %v333
        %v4107 = vunpack.c.h.b16 %v333
        %v4108 = vunpack.c.l.b16 %v334
        %v4109 = vunpack.c.h.b16 %v334
        %v4110 = vunpack.c.l.b16 %v335
        %v4111 = vunpack.c.h.b16 %v335
        %v4112 = vunpack.c.l.b16 %v336
        %v4113 = vunpack.c.h.b16 %v336
        %v4114 = vunpack.c.l.b16 %v337
        %v4115 = vunpack.c.h.b16 %v337
        %v4116 = vunpack.c.l.b16 %v338
        %v4117 = vunpack.c.h.b16 %v338
        %v4118 = vunpack.c.l.b16 %v339
        %v4119 = vunpack.c.h.b16 %v339
        %v4120 = vunpack.c.l.b16 %v340
        %v4121 = vunpack.c.h.b16 %v340
        %v4122 = vunpack.c.l.b16 %v341
        %v4123 = vunpack.c.h.b16 %v341
        %v4124 = vunpack.c.l.b16 %v342
        %v4125 = vunpack.c.h.b16 %v342
        %v4126 = vunpack.c.l.b16 %v343
        %v4127 = vunpack.c.h.b16 %v343
        %v4128 = vunpack.c.l.b16 %v344
        %v4129 = vunpack.c.h.b16 %v344
        %v4130 = vunpack.c.l.b16 %v345
        %v4131 = vunpack.c.h.b16 %v345
        %v4132 = vunpack.c.l.b16 %v346
        %v4133 = vunpack.c.h.b16 %v346
        %v4134 = vunpack.c.l.b16 %v347
        %v4135 = vunpack.c.h.b16 %v347
        %v4136 = vunpack.c.l.b16 %v348
        %v4137 = vunpack.c.h.b16 %v348
        %v4138 = vunpack.c.l.b16 %v349
        %v4139 = vunpack.c.h.b16 %v349
        %v4140 = vunpack.c.l.b16 %v350
        %v4141 = vunpack.c.h.b16 %v350
        %v4142 = vunpack.c.l.b16 %v351
        %v4143 = vunpack.c.h.b16 %v351
        %v4144 = vunpack.c.l.b16 %v352
        %v4145 = vunpack.c.h.b16 %v352
        %v4146 = vunpack.c.l.b16 %v353
        %v4147 = vunpack.c.h.b16 %v353
        %v4148 = vunpack.c.l.b16 %v354
        %v4149 = vunpack.c.h.b16 %v354
        %v4150 = vunpack.c.l.b16 %v355
        %v4151 = vunpack.c.h.b16 %v355
        %v4152 = vunpack.c.l.b16 %v356
        %v4153 = vunpack.c.h.b16 %v356
        %v4154 = vunpack.c.l.b16 %v357
        %v4155 = vunpack.c.h.b16 %v357
        %v4156 = vunpack.c.l.b16 %v358
        %v4157 = vunpack.c.h.b16 %v358
        %v4158 = vunpack.c.l.b16 %v359
        %v4159 = vunpack.c.h.b16 %v359
        %v4160 = vunpack.c.l.b16 %v360
        %v4161 = vunpack.c.h.b16 %v360
        %v4162 = vunpack.c.l.b16 %v361
        %v4163 = vunpack.c.h.b16 %v361
        %v4164 = vunpack.c.l.b16 %v362
        %v4165 = vunpack.c.h.b16 %v362
        %v4166 = vunpack.c.l.b16 %v363
        %v4167 = vunpack.c.h.b16 %v363
        %v4168 = vunpack.c.l.b16 %v364
        %v4169 = vunpack.c.h.b16 %v364
        %v4170 = vunpack.c.l.b16 %v365
        %v4171 = vunpack.c.h.b16 %v365
        %v4172 = vunpack.c.l.b16 %v366
        %v4173 = vunpack.c.h.b16 %v366
        %v4174 = vunpack.c.l.b16 %v367
        %v4175 = vunpack.c.h.b16 %v367
        %v4176 = vunpack.c.l.b16 %v368
        %v4177 = vunpack.c.h.b16 %v368
        %v4178 = vunpack.c.l.b16 %v369
        %v4179 = vunpack.c.h.b16 %v369
        %v4180 = vunpack.c.l.b16 %v370
        %v4181 = vunpack.c.h.b16 %v370
        %v4182 = vunpack.c.l.b16 %v371
        %v4183 = vunpack.c.h.b16 %v371
        %v4184 = vunpack.c.l.b16 %v372
        %v4185 = vunpack.c.h.b16 %v372
        %v4186 = vunpack.c.l.b16 %v373
        %v4187 = vunpack.c.h.b16 %v373
        %v4188 = vunpack.c.l.b16 %v374
        %v4189 = vunpack.c.h.b16 %v374
        %v4190 = vunpack.c.l.b16 %v375
        %v4191 = vunpack.c.h.b16 %v375
        %v4192 = vunpack.c.l.b16 %v376
        %v4193 = vunpack.c.h.b16 %v376
        %v4194 = vunpack.c.l.b16 %v377
        %v4195 = vunpack.c.h.b16 %v377
        %v4196 = vunpack.c.l.b16 %v378
        %v4197 = vunpack.c.h.b16 %v378
        %v4198 = vunpack.c.l.b16 %v379
        %v4199 = vunpack.c.h.b16 %v379
        %v4200 = vunpack.c.l.b16 %v380
        %v4201 = vunpack.c.h.b16 %v380
        %v4202 = vunpack.c.l.b16 %v381
        %v4203 = vunpack.c.h.b16 %v381
        %v4204 = vunpack.c.l.b16 %v382
        %v4205 = vunpack.c.h.b16 %v382
        %v4206 = vunpack.c.l.b16 %v383
        %v4207 = vunpack.c.h.b16 %v383
        %v4208 = vunpack.c.l.b16 %v384
        %v4209 = vunpack.c.h.b16 %v384
        %v4210 = vunpack.c.l.b16 %v385
        %v4211 = vunpack.c.h.b16 %v385
        %v4212 = vunpack.c.l.b16 %v386
        %v4213 = vunpack.c.h.b16 %v386
        %v4214 = vunpack.c.l.b16 %v387
        %v4215 = vunpack.c.h.b16 %v387
        %v4216 = vunpack.c.l.b16 %v388
        %v4217 = vunpack.c.h.b16 %v388
        %v4218 = vunpack.c.l.b16 %v389
        %v4219 = vunpack.c.h.b16 %v389
        %v4220 = vunpack.c.l.b16 %v390
        %v4221 = vunpack.c.h.b16 %v390
        %v4222 = vunpack.c.l.b16 %v391
        %v4223 = vunpack.c.h.b16 %v391
        %v4224 = vunpack.c.l.b16 %v392
        %v4225 = vunpack.c.h.b16 %v392
        %v4226 = vunpack.c.l.b16 %v393
        %v4227 = vunpack.c.h.b16 %v393
        %v4228 = vunpack.c.l.b16 %v394
        %v4229 = vunpack.c.h.b16 %v394
        %v4230 = vunpack.c.l.b16 %v395
        %v4231 = vunpack.c.h.b16 %v395
        %v4232 = vunpack.c.l.b16 %v396
        %v4233 = vunpack.c.h.b16 %v396
        %v4234 = vunpack.c.l.b16 %v397
        %v4235 = vunpack.c.h.b16 %v397
        %v4236 = vunpack.c.l.b16 %v398
        %v4237 = vunpack.c.h.b16 %v398
        %v4238 = vunpack.c.l.b16 %v399
        %v4239 = vunpack.c.h.b16 %v399
        %v4240 = vunpack.c.l.b16 %v400
        %v4241 = vunpack.c.h.b16 %v400
        %v4242 = vunpack.c.l.b16 %v401
        %v4243 = vunpack.c.h.b16 %v401
        %v4244 = vunpack.c.l.b16 %v402
        %v4245 = vunpack.c.h.b16 %v402
        %v4246 = vunpack.c.l.b16 %v403
        %v4247 = vunpack.c.h.b16 %v403
        %v4248 = vunpack.c.l.b16 %v404
        %v4249 = vunpack.c.h.b16 %v404
        %v4250 = vunpack.c.l.b16 %v405
        %v4251 = vunpack.c.h.b16 %v405
        %v4252 = vunpack.c.l.b16 %v406
        %v4253 = vunpack.c.h.b16 %v406
        %v4254 = vunpack.c.l.b16 %v407
        %v4255 = vunpack.c.h.b16 %v407
        %v4256 = vunpack.c.l.b16 %v408
        %v4257 = vunpack.c.h.b16 %v408
        %v4258 = vunpack.c.l.b16 %v409
        %v4259 = vunpack.c.h.b16 %v409
        %v4260 = vunpack.c.l.b16 %v410
        %v4261 = vunpack.c.h.b16 %v410
        %v4262 = vunpack.c.l.b16 %v411
        %v4263 = vunpack.c.h.b16 %v411
        %v4264 = vunpack.c.l.b16 %v412
        %v4265 = vunpack.c.h.b16 %v412
        %v4266 = vunpack.c.l.b16 %v413
        %v4267 = vunpack.c.h.b16 %v413
        %v4268 = vunpack.c.l.b16 %v414
        %v4269 = vunpack.c.h.b16 %v414
        %v4270 = vunpack.c.l.b16 %v415
        %v4271 = vunpack.c.h.b16 %v415
        %v4272 = vunpack.c.l.b16 %v416
        %v4273 = vunpack.c.h.b16 %v416
        %v4274 = vunpack.c.l.b16 %v417
        %v4275 = vunpack.c.h.b16 %v417
        %v4276 = vunpack.c.l.b16 %v418
        %v4277 = vunpack.c.h.b16 %v418
        %v4278 = vunpack.c.l.b16 %v419
        %v4279 = vunpack.c.h.b16 %v419
        %v4280 = vunpack.c.l.b16 %v420
        %v4281 = vunpack.c.h.b16 %v420
        %v4282 = vunpack.c.l.b16 %v421
        %v4283 = vunpack.c.h.b16 %v421
        %v4284 = vunpack.c.l.b16 %v422
        %v4285 = vunpack.c.h.b16 %v422
        %v4286 = vunpack.c.l.b16 %v423
        %v4287 = vunpack.c.h.b16 %v423
        %v4288 = vunpack.c.l.b16 %v424
        %v4289 = vunpack.c.h.b16 %v424
        %v4290 = vunpack.c.l.b16 %v425
        %v4291 = vunpack.c.h.b16 %v425
        %v4292 = vunpack.c.l.b16 %v426
        %v4293 = vunpack.c.h.b16 %v426
        %v4294 = vunpack.c.l.b16 %v427
        %v4295 = vunpack.c.h.b16 %v427
        %v4296 = vunpack.c.l.b16 %v428
        %v4297 = vunpack.c.h.b16 %v428
        %v4298 = vunpack.c.l.b16 %v429
        %v4299 = vunpack.c.h.b16 %v429
        %v4300 = vunpack.c.l.b16 %v430
        %v4301 = vunpack.c.h.b16 %v430
        %v4302 = vunpack.c.l.b16 %v431
        %v4303 = vunpack.c.h.b16 %v431
        %v4304 = vunpack.c.l.b16 %v432
        %v4305 = vunpack.c.h.b16 %v432
        %v4306 = vunpack.c.l.b16 %v433
        %v4307 = vunpack.c.h.b16 %v433
        %v4308 = vunpack.c.l.b16 %v434
        %v4309 = vunpack.c.h.b16 %v434
        %v4310 = vunpack.c.l.b16 %v435
        %v4311 = vunpack.c.h.b16 %v435
        %v4312 = vunpack.c.l.b16 %v436
        %v4313 = vunpack.c.h.b16 %v436
        %v4314 = vunpack.c.l.b16 %v437
        %v4315 = vunpack.c.h.b16 %v437
        %v4316 = vunpack.c.l.b16 %v438
        %v4317 = vunpack.c.h.b16 %v438
        %v4318 = vunpack.c.l.b16 %v439
        %v4319 = vunpack.c.h.b16 %v439
        %v4320 = vunpack.c.l.b16 %v440
        %v4321 = vunpack.c.h.b16 %v440
        %v4322 = vunpack.c.l.b16 %v441
        %v4323 = vunpack.c.h.b16 %v441
        %v4324 = vunpack.c.l.b16 %v442
        %v4325 = vunpack.c.h.b16 %v442
        %v4326 = vunpack.c.l.b16 %v443
        %v4327 = vunpack.c.h.b16 %v443
        %v4328 = vunpack.c.l.b16 %v444
        %v4329 = vunpack.c.h.b16 %v444
        %v4330 = vunpack.c.l.b16 %v445
        %v4331 = vunpack.c.h.b16 %v445
        %v4332 = vunpack.c.l.b16 %v446
        %v4333 = vunpack.c.h.b16 %v446
        %v4334 = vunpack.c.l.b16 %v447
        %v4335 = vunpack.c.h.b16 %v447
        %v4336 = vunpack.c.l.b16 %v448
        %v4337 = vunpack.c.h.b16 %v448
        %v4338 = vunpack.c.l.b16 %v449
        %v4339 = vunpack.c.h.b16 %v449
        %v4340 = vunpack.c.l.b16 %v450
        %v4341 = vunpack.c.h.b16 %v450
        %v4342 = vunpack.c.l.b16 %v451
        %v4343 = vunpack.c.h.b16 %v451
        %v4344 = vunpack.c.l.b16 %v452
        %v4345 = vunpack.c.h.b16 %v452
        %v4346 = vunpack.c.l.b16 %v453
        %v4347 = vunpack.c.h.b16 %v453
        %v4348 = vunpack.c.l.b16 %v454
        %v4349 = vunpack.c.h.b16 %v454
        %v4350 = vunpack.c.l.b16 %v455
        %v4351 = vunpack.c.h.b16 %v455
        %v4352 = vunpack.c.l.b16 %v456
        %v4353 = vunpack.c.h.b16 %v456
        %v4354 = vunpack.c.l.b16 %v457
        %v4355 = vunpack.c.h.b16 %v457
        %v4356 = vunpack.c.l.b16 %v458
        %v4357 = vunpack.c.h.b16 %v458
        %v4358 = vunpack.c.l.b16 %v459
        %v4359 = vunpack.c.h.b16 %v459
        %v4360 = vunpack.c.l.b16 %v460
        %v4361 = vunpack.c.h.b16 %v460
        %v4362 = vunpack.c.l.b16 %v461
        %v4363 = vunpack.c.h.b16 %v461
        %v4364 = vunpack.c.l.b16 %v462
        %v4365 = vunpack.c.h.b16 %v462
        %v4366 = vunpack.c.l.b16 %v463
        %v4367 = vunpack.c.h.b16 %v463
        %v4368 = vunpack.c.l.b16 %v464
        %v4369 = vunpack.c.h.b16 %v464
        %v4370 = vunpack.c.l.b16 %v465
        %v4371 = vunpack.c.h.b16 %v465
        %v4372 = vunpack.c.l.b16 %v466
        %v4373 = vunpack.c.h.b16 %v466
        %v4374 = vunpack.c.l.b16 %v467
        %v4375 = vunpack.c.h.b16 %v467
        %v4376 = vunpack.c.l.b16 %v468
        %v4377 = vunpack.c.h.b16 %v468
        %v4378 = vunpack.c.l.b16 %v469
        %v4379 = vunpack.c.h.b16 %v469
        %v4380 = vunpack.c.l.b16 %v470
        %v4381 = vunpack.c.h.b16 %v470
        %v4382 = vunpack.c.l.b16 %v471
        %v4383 = vunpack.c.h.b16 %v471
        %v4384 = vunpack.c.l.b16 %v472
        %v4385 = vunpack.c.h.b16 %v472
        %v4386 = vunpack.c.l.b16 %v473
        %v4387 = vunpack.c.h.b16 %v473
        %v4388 = vunpack.c.l.b16 %v474
        %v4389 = vunpack.c.h.b16 %v474
        %v4390 = vunpack.c.l.b16 %v475
        %v4391 = vunpack.c.h.b16 %v475
        %v4392 = vunpack.c.l.b16 %v476
        %v4393 = vunpack.c.h.b16 %v476
        %v4394 = vunpack.c.l.b16 %v477
        %v4395 = vunpack.c.h.b16 %v477
        %v4396 = vunpack.c.l.b16 %v478
        %v4397 = vunpack.c.h.b16 %v478
        %v4398 = vunpack.c.l.b16 %v479
        %v4399 = vunpack.c.h.b16 %v479
        %v4400 = vunpack.c.l.b16 %v480
        %v4401 = vunpack.c.h.b16 %v480
        %v4402 = vunpack.c.l.b16 %v481
        %v4403 = vunpack.c.h.b16 %v481
        %v4404 = vunpack.c.l.b16 %v482
        %v4405 = vunpack.c.h.b16 %v482
        %v4406 = vunpack.c.l.b16 %v483
        %v4407 = vunpack.c.h.b16 %v483
        %v4408 = vunpack.c.l.b16 %v484
        %v4409 = vunpack.c.h.b16 %v484
        %v4410 = vunpack.c.l.b16 %v485
        %v4411 = vunpack.c.h.b16 %v485
        %v4412 = vunpack.c.l.b16 %v486
        %v4413 = vunpack.c.h.b16 %v486
        %v4414 = vunpack.c.l.b16 %v487
        %v4415 = vunpack.c.h.b16 %v487
        %v4416 = vunpack.c.l.b16 %v488
        %v4417 = vunpack.c.h.b16 %v488
        %v4418 = vunpack.c.l.b16 %v489
        %v4419 = vunpack.c.h.b16 %v489
        %v4420 = vunpack.c.l.b16 %v490
        %v4421 = vunpack.c.h.b16 %v490
        %v4422 = vunpack.c.l.b16 %v491
        %v4423 = vunpack.c.h.b16 %v491
        %v4424 = vunpack.c.l.b16 %v492
        %v4425 = vunpack.c.h.b16 %v492
        %v4426 = vunpack.c.l.b16 %v493
        %v4427 = vunpack.c.h.b16 %v493
        %v4428 = vunpack.c.l.b16 %v494
        %v4429 = vunpack.c.h.b16 %v494
        %v4430 = vunpack.c.l.b16 %v495
        %v4431 = vunpack.c.h.b16 %v495
        %v4432 = vunpack.c.l.b16 %v496
        %v4433 = vunpack.c.h.b16 %v496
        %v4434 = vunpack.c.l.b16 %v497
        %v4435 = vunpack.c.h.b16 %v497
        %v4436 = vunpack.c.l.b16 %v498
        %v4437 = vunpack.c.h.b16 %v498
        %v4438 = vunpack.c.l.b16 %v499
        %v4439 = vunpack.c.h.b16 %v499
        %v4440 = vunpack.c.l.b16 %v500
        %v4441 = vunpack.c.h.b16 %v500
        %v4442 = vunpack.c.l.b16 %v501
        %v4443 = vunpack.c.h.b16 %v501
        %v4444 = vunpack.c.l.b16 %v502
        %v4445 = vunpack.c.h.b16 %v502
        %v4446 = vunpack.c.l.b16 %v503
        %v4447 = vunpack.c.h.b16 %v503
        %v4448 = vunpack.c.l.b16 %v504
        %v4449 = vunpack.c.h.b16 %v504
        %v4450 = vunpack.c.l.b16 %v505
        %v4451 = vunpack.c.h.b16 %v505
        %v4452 = vunpack.c.l.b16 %v506
        %v4453 = vunpack.c.h.b16 %v506
        %v4454 = vunpack.c.l.b16 %v507
        %v4455 = vunpack.c.h.b16 %v507
        %v4456 = vunpack.c.l.b16 %v508
        %v4457 = vunpack.c.h.b16 %v508
        %v4458 = vunpack.c.l.b16 %v509
        %v4459 = vunpack.c.h.b16 %v509
        %v4460 = vunpack.c.l.b16 %v510
        %v4461 = vunpack.c.h.b16 %v510
        %v4462 = vunpack.c.l.b16 %v511
        %v4463 = vunpack.c.h.b16 %v511
        %v4464 = vunpack.c.l.b16 %v512
        %v4465 = vunpack.c.h.b16 %v512
        %v4466 = vunpack.c.l.b16 %v513
        %v4467 = vunpack.c.h.b16 %v513
        %v4468 = vunpack.c.l.b16 %v514
        %v4469 = vunpack.c.h.b16 %v514
        %v4470 = vunpack.c.l.b16 %v515
        %v4471 = vunpack.c.h.b16 %v515
        %v4472 = vunpack.c.l.b16 %v516
        %v4473 = vunpack.c.h.b16 %v516
        %v4474 = vunpack.c.l.b16 %v517
        %v4475 = vunpack.c.h.b16 %v517
        %v4476 = vunpack.c.l.b16 %v518
        %v4477 = vunpack.c.h.b16 %v518
        %v4478 = vunpack.c.l.b16 %v519
        %v4479 = vunpack.c.h.b16 %v519
        %v4480 = vunpack.c.l.b16 %v520
        %v4481 = vunpack.c.h.b16 %v520
        %v4482 = vunpack.c.l.b16 %v521
        %v4483 = vunpack.c.h.b16 %v521
        %v4484 = vunpack.c.l.b16 %v522
        %v4485 = vunpack.c.h.b16 %v522
        %v4486 = vunpack.c.l.b16 %v523
        %v4487 = vunpack.c.h.b16 %v523
        %v4488 = vunpack.c.l.b16 %v524
        %v4489 = vunpack.c.h.b16 %v524
        %v4490 = vunpack.c.l.b16 %v525
        %v4491 = vunpack.c.h.b16 %v525
        %v4492 = vunpack.c.l.b16 %v526
        %v4493 = vunpack.c.h.b16 %v526
        %v4494 = vunpack.c.l.b16 %v527
        %v4495 = vunpack.c.h.b16 %v527
        %v4496 = vunpack.c.l.b16 %v528
        %v4497 = vunpack.c.h.b16 %v528
        %v4498 = vunpack.c.l.b16 %v529
        %v4499 = vunpack.c.h.b16 %v529
        %v4500 = vunpack.c.l.b16 %v530
        %v4501 = vunpack.c.h.b16 %v530
        %v4502 = vunpack.c.l.b16 %v531
        %v4503 = vunpack.c.h.b16 %v531
        %v4504 = vunpack.c.l.b16 %v532
        %v4505 = vunpack.c.h.b16 %v532
        %v4506 = vunpack.c.l.b16 %v533
        %v4507 = vunpack.c.h.b16 %v533
        %v4508 = vunpack.c.l.b16 %v534
        %v4509 = vunpack.c.h.b16 %v534
        %v4510 = vunpack.c.l.b16 %v535
        %v4511 = vunpack.c.h.b16 %v535
        %v4512 = vunpack.c.l.b16 %v536
        %v4513 = vunpack.c.h.b16 %v536
        %v4514 = vunpack.c.l.b16 %v537
        %v4515 = vunpack.c.h.b16 %v537
        %v4516 = vunpack.c.l.b16 %v538
        %v4517 = vunpack.c.h.b16 %v538
        %v4518 = vunpack.c.l.b16 %v539
        %v4519 = vunpack.c.h.b16 %v539
        %v4520 = vunpack.c.l.b16 %v540
        %v4521 = vunpack.c.h.b16 %v540
        %v4522 = vunpack.c.l.b16 %v541
        %v4523 = vunpack.c.h.b16 %v541
        %v4524 = vunpack.c.l.b16 %v542
        %v4525 = vunpack.c.h.b16 %v542
        %v4526 = vunpack.c.l.b16 %v543
        %v4527 = vunpack.c.h.b16 %v543
        %v4528 = vunpack.c.l.b16 %v544
        %v4529 = vunpack.c.h.b16 %v544
        %v4530 = vunpack.c.l.b16 %v545
        %v4531 = vunpack.c.h.b16 %v545
        %v4532 = vunpack.c.l.b16 %v546
        %v4533 = vunpack.c.h.b16 %v546
        %v4534 = vunpack.c.l.b16 %v547
        %v4535 = vunpack.c.h.b16 %v547
        %v4536 = vunpack.c.l.b16 %v548
        %v4537 = vunpack.c.h.b16 %v548
        %v4538 = vunpack.c.l.b16 %v549
        %v4539 = vunpack.c.h.b16 %v549
        %v4540 = vunpack.c.l.b16 %v550
        %v4541 = vunpack.c.h.b16 %v550
        %v4542 = vunpack.c.l.b16 %v551
        %v4543 = vunpack.c.h.b16 %v551
        %v4544 = vunpack.c.l.b16 %v552
        %v4545 = vunpack.c.h.b16 %v552
        %v4546 = vunpack.c.l.b16 %v553
        %v4547 = vunpack.c.h.b16 %v553
        %v4548 = vunpack.c.l.b16 %v554
        %v4549 = vunpack.c.h.b16 %v554
        %v4550 = vunpack.c.l.b16 %v555
        %v4551 = vunpack.c.h.b16 %v555
        %v4552 = vunpack.c.l.b16 %v556
        %v4553 = vunpack.c.h.b16 %v556
        %v4554 = vunpack.c.l.b16 %v557
        %v4555 = vunpack.c.h.b16 %v557
        %v4556 = vunpack.c.l.b16 %v558
        %v4557 = vunpack.c.h.b16 %v558
        %v4558 = vunpack.c.l.b16 %v559
        %v4559 = vunpack.c.h.b16 %v559
        %v4560 = vunpack.c.l.b16 %v560
        %v4561 = vunpack.c.h.b16 %v560
        %v4562 = vunpack.c.l.b16 %v561
        %v4563 = vunpack.c.h.b16 %v561
        %v4564 = vunpack.c.l.b16 %v562
        %v4565 = vunpack.c.h.b16 %v562
        %v4566 = vunpack.c.l.b16 %v563
        %v4567 = vunpack.c.h.b16 %v563
        %v4568 = vunpack.c.l.b16 %v564
        %v4569 = vunpack.c.h.b16 %v564
        %v4570 = vunpack.c.l.b16 %v565
        %v4571 = vunpack.c.h.b16 %v565
        %v4572 = vunpack.c.l.b16 %v566
        %v4573 = vunpack.c.h.b16 %v566
        %v4574 = vunpack.c.l.b16 %v567
        %v4575 = vunpack.c.h.b16 %v567
        %v4576 = vunpack.c.l.b16 %v568
        %v4577 = vunpack.c.h.b16 %v568
        %v4578 = vunpack.c.l.b16 %v569
        %v4579 = vunpack.c.h.b16 %v569
        %v4580 = vunpack.c.l.b16 %v570
        %v4581 = vunpack.c.h.b16 %v570
        %v4582 = vunpack.c.l.b16 %v571
        %v4583 = vunpack.c.h.b16 %v571
        %v4584 = vunpack.c.l.b16 %v572
        %v4585 = vunpack.c.h.b16 %v572
        %v4586 = vunpack.c.l.b16 %v573
        %v4587 = vunpack.c.h.b16 %v573
        %v4588 = vunpack.c.l.b16 %v574
        %v4589 = vunpack.c.h.b16 %v574
        %v4590 = vunpack.c.l.b16 %v575
        %v4591 = vunpack.c.h.b16 %v575
        %v4592 = vunpack.c.l.b16 %v576
        %v4593 = vunpack.c.h.b16 %v576
        %v4594 = vunpack.c.l.b16 %v577
        %v4595 = vunpack.c.h.b16 %v577
        %v4596 = vunpack.c.l.b16 %v578
        %v4597 = vunpack.c.h.b16 %v578
        %v4598 = vunpack.c.l.b16 %v579
        %v4599 = vunpack.c.h.b16 %v579
        %v4600 = vunpack.c.l.b16 %v580
        %v4601 = vunpack.c.h.b16 %v580
        %v4602 = vunpack.c.l.b16 %v581
        %v4603 = vunpack.c.h.b16 %v581
        %v4604 = vunpack.c.l.b16 %v582
        %v4605 = vunpack.c.h.b16 %v582
        %v4606 = vunpack.c.l.b16 %v583
        %v4607 = vunpack.c.h.b16 %v583
        %v4608 = vunpack.c.l.b16 %v584
        %v4609 = vunpack.c.h.b16 %v584
        %v4610 = vunpack.c.l.b16 %v585
        %v4611 = vunpack.c.h.b16 %v585
        %v4612 = vunpack.c.l.b16 %v586
        %v4613 = vunpack.c.h.b16 %v586
        %v4614 = vunpack.c.l.b16 %v587
        %v4615 = vunpack.c.h.b16 %v587
        %v4616 = vunpack.c.l.b16 %v588
        %v4617 = vunpack.c.h.b16 %v588
        %v4618 = vunpack.c.l.b16 %v589
        %v4619 = vunpack.c.h.b16 %v589
        %v4620 = vunpack.c.l.b16 %v590
        %v4621 = vunpack.c.h.b16 %v590
        %v4622 = vunpack.c.l.b16 %v591
        %v4623 = vunpack.c.h.b16 %v591
        %v4624 = vunpack.c.l.b16 %v592
        %v4625 = vunpack.c.h.b16 %v592
        %v4626 = vunpack.c.l.b16 %v593
        %v4627 = vunpack.c.h.b16 %v593
        %v4628 = vunpack.c.l.b16 %v594
        %v4629 = vunpack.c.h.b16 %v594
        %v4630 = vunpack.c.l.b16 %v595
        %v4631 = vunpack.c.h.b16 %v595
        %v4632 = vunpack.c.l.b16 %v596
        %v4633 = vunpack.c.h.b16 %v596
        %v4634 = vunpack.c.l.b16 %v597
        %v4635 = vunpack.c.h.b16 %v597
        %v4636 = vunpack.c.l.b16 %v598
        %v4637 = vunpack.c.h.b16 %v598
        %v4638 = vunpack.c.l.b16 %v599
        %v4639 = vunpack.c.h.b16 %v599
        %v4640 = vunpack.c.l.b16 %v600
        %v4641 = vunpack.c.h.b16 %v600
        %v4642 = vunpack.c.l.b16 %v601
        %v4643 = vunpack.c.h.b16 %v601
        %v4644 = vunpack.c.l.b16 %v602
        %v4645 = vunpack.c.h.b16 %v602
        %v4646 = vunpack.c.l.b16 %v603
        %v4647 = vunpack.c.h.b16 %v603
        %v4648 = vunpack.c.l.b16 %v604
        %v4649 = vunpack.c.h.b16 %v604
        %v4650 = vunpack.c.l.b16 %v605
        %v4651 = vunpack.c.h.b16 %v605
        %v4652 = vunpack.c.l.b16 %v606
        %v4653 = vunpack.c.h.b16 %v606
        %v4654 = vunpack.c.l.b16 %v607
        %v4655 = vunpack.c.h.b16 %v607
        %v4656 = vunpack.c.l.b16 %v608
        %v4657 = vunpack.c.h.b16 %v608
        %v4658 = vunpack.c.l.b16 %v609
        %v4659 = vunpack.c.h.b16 %v609
        %v4660 = vunpack.c.l.b16 %v610
        %v4661 = vunpack.c.h.b16 %v610
        %v4662 = vunpack.c.l.b16 %v611
        %v4663 = vunpack.c.h.b16 %v611
        %v4664 = vunpack.c.l.b16 %v612
        %v4665 = vunpack.c.h.b16 %v612
        %v4666 = vunpack.c.l.b16 %v613
        %v4667 = vunpack.c.h.b16 %v613
        %v4668 = vunpack.c.l.b16 %v614
        %v4669 = vunpack.c.h.b16 %v614
        %v4670 = vunpack.c.l.b16 %v615
        %v4671 = vunpack.c.h.b16 %v615
        %v4672 = vunpack.c.l.b16 %v616
        %v4673 = vunpack.c.h.b16 %v616
        %v4674 = vunpack.c.l.b16 %v617
        %v4675 = vunpack.c.h.b16 %v617
        %v4676 = vunpack.c.l.b16 %v618
        %v4677 = vunpack.c.h.b16 %v618
        %v4678 = vunpack.c.l.b16 %v619
        %v4679 = vunpack.c.h.b16 %v619
        %v4680 = vunpack.c.l.b16 %v620
        %v4681 = vunpack.c.h.b16 %v620
        %v4682 = vunpack.c.l.b16 %v621
        %v4683 = vunpack.c.h.b16 %v621
        %v4684 = vunpack.c.l.b16 %v622
        %v4685 = vunpack.c.h.b16 %v622
        %v4686 = vunpack.c.l.b16 %v623
        %v4687 = vunpack.c.h.b16 %v623
        %v4688 = vunpack.c.l.b16 %v624
        %v4689 = vunpack.c.h.b16 %v624
        %v4690 = vunpack.c.l.b16 %v625
        %v4691 = vunpack.c.h.b16 %v625
        %v4692 = vunpack.c.l.b16 %v626
        %v4693 = vunpack.c.h.b16 %v626
        %v4694 = vunpack.c.l.b16 %v627
        %v4695 = vunpack.c.h.b16 %v627
        %v4696 = vunpack.c.l.b16 %v628
        %v4697 = vunpack.c.h.b16 %v628
        %v4698 = vunpack.c.l.b16 %v629
        %v4699 = vunpack.c.h.b16 %v629
        %v4700 = vunpack.c.l.b16 %v630
        %v4701 = vunpack.c.h.b16 %v630
        %v4702 = vunpack.c.l.b16 %v631
        %v4703 = vunpack.c.h.b16 %v631
        %v4704 = vunpack.c.l.b16 %v632
        %v4705 = vunpack.c.h.b16 %v632
        %v4706 = vunpack.c.l.b16 %v633
        %v4707 = vunpack.c.h.b16 %v633
        %v4708 = vunpack.c.l.b16 %v634
        %v4709 = vunpack.c.h.b16 %v634
        %v4710 = vunpack.c.l.b16 %v635
        %v4711 = vunpack.c.h.b16 %v635
        %v4712 = vunpack.c.l.b16 %v636
        %v4713 = vunpack.c.h.b16 %v636
        %v4714 = vunpack.c.l.b16 %v637
        %v4715 = vunpack.c.h.b16 %v637
        %v4716 = vunpack.c.l.b16 %v638
        %v4717 = vunpack.c.h.b16 %v638
        %v4718 = vunpack.c.l.b16 %v639
        %v4719 = vunpack.c.h.b16 %v639
        %v4720 = vunpack.c.l.b16 %v640
        %v4721 = vunpack.c.h.b16 %v640
        %v4722 = vunpack.c.l.b16 %v641
        %v4723 = vunpack.c.h.b16 %v641
        %v4724 = vunpack.c.l.b16 %v642
        %v4725 = vunpack.c.h.b16 %v642
        %v4726 = vunpack.c.l.b16 %v643
        %v4727 = vunpack.c.h.b16 %v643
        %v4728 = vunpack.c.l.b16 %v644
        %v4729 = vunpack.c.h.b16 %v644
        %v4730 = vunpack.c.l.b16 %v645
        %v4731 = vunpack.c.h.b16 %v645
        %v4732 = vunpack.c.l.b16 %v646
        %v4733 = vunpack.c.h.b16 %v646
        %v4734 = vunpack.c.l.b16 %v647
        %v4735 = vunpack.c.h.b16 %v647
        %v4736 = vunpack.c.l.b16 %v648
        %v4737 = vunpack.c.h.b16 %v648
        %v4738 = vunpack.c.l.b16 %v649
        %v4739 = vunpack.c.h.b16 %v649
        %v4740 = vunpack.c.l.b16 %v650
        %v4741 = vunpack.c.h.b16 %v650
        %v4742 = vunpack.c.l.b16 %v651
        %v4743 = vunpack.c.h.b16 %v651
        %v4744 = vunpack.c.l.b16 %v652
        %v4745 = vunpack.c.h.b16 %v652
        %v4746 = vunpack.c.l.b16 %v653
        %v4747 = vunpack.c.h.b16 %v653
        %v4748 = vunpack.c.l.b16 %v654
        %v4749 = vunpack.c.h.b16 %v654
        %v4750 = vunpack.c.l.b16 %v655
        %v4751 = vunpack.c.h.b16 %v655
        %v4752 = vunpack.c.l.b16 %v656
        %v4753 = vunpack.c.h.b16 %v656
        %v4754 = vunpack.c.l.b16 %v657
        %v4755 = vunpack.c.h.b16 %v657
        %v4756 = vunpack.c.l.b16 %v658
        %v4757 = vunpack.c.h.b16 %v658
        %v4758 = vunpack.c.l.b16 %v659
        %v4759 = vunpack.c.h.b16 %v659
        %v4760 = vunpack.c.l.b16 %v660
        %v4761 = vunpack.c.h.b16 %v660
        %v4762 = vunpack.c.l.b16 %v661
        %v4763 = vunpack.c.h.b16 %v661
        %v4764 = vunpack.c.l.b16 %v662
        %v4765 = vunpack.c.h.b16 %v662
        %v4766 = vunpack.c.l.b16 %v663
        %v4767 = vunpack.c.h.b16 %v663
        %v4768 = vunpack.c.l.b16 %v664
        %v4769 = vunpack.c.h.b16 %v664
        %v4770 = vunpack.c.l.b16 %v665
        %v4771 = vunpack.c.h.b16 %v665
        %v4772 = vunpack.c.l.b16 %v666
        %v4773 = vunpack.c.h.b16 %v666
        %v4774 = vunpack.c.l.b16 %v667
        %v4775 = vunpack.c.h.b16 %v667
        %v4776 = vunpack.c.l.b16 %v668
        %v4777 = vunpack.c.h.b16 %v668
        %v4778 = vunpack.c.l.b16 %v669
        %v4779 = vunpack.c.h.b16 %v669
        %v4780 = vunpack.c.l.b16 %v670
        %v4781 = vunpack.c.h.b16 %v670
        %v4782 = vunpack.c.l.b16 %v671
        %v4783 = vunpack.c.h.b16 %v671
        %v4784 = vunpack.c.l.b16 %v672
        %v4785 = vunpack.c.h.b16 %v672
        %v4786 = vunpack.c.l.b16 %v673
        %v4787 = vunpack.c.h.b16 %v673
        %v4788 = vunpack.c.l.b16 %v674
        %v4789 = vunpack.c.h.b16 %v674
        %v4790 = vunpack.c.l.b16 %v675
        %v4791 = vunpack.c.h.b16 %v675
        %v4792 = vunpack.c.l.b16 %v676
        %v4793 = vunpack.c.h.b16 %v676
        %v4794 = vunpack.c.l.b16 %v677
        %v4795 = vunpack.c.h.b16 %v677
        %v4796 = vunpack.c.l.b16 %v678
        %v4797 = vunpack.c.h.b16 %v678
        %v4798 = vunpack.c.l.b16 %v679
        %v4799 = vunpack.c.h.b16 %v679
        %v4800 = vunpack.c.l.b16 %v680
        %v4801 = vunpack.c.h.b16 %v680
        %v4802 = vunpack.c.l.b16 %v681
        %v4803 = vunpack.c.h.b16 %v681
        %v4804 = vunpack.c.l.b16 %v682
        %v4805 = vunpack.c.h.b16 %v682
        %v4806 = vunpack.c.l.b16 %v683
        %v4807 = vunpack.c.h.b16 %v683
        %v4808 = vunpack.c.l.b16 %v684
        %v4809 = vunpack.c.h.b16 %v684
        %v4810 = vunpack.c.l.b16 %v685
        %v4811 = vunpack.c.h.b16 %v685
        %v4812 = vunpack.c.l.b16 %v686
        %v4813 = vunpack.c.h.b16 %v686
        %v4814 = vunpack.c.l.b16 %v687
        %v4815 = vunpack.c.h.b16 %v687
        %v4816 = vunpack.c.l.b16 %v688
        %v4817 = vunpack.c.h.b16 %v688
        %v4818 = vunpack.c.l.b16 %v689
        %v4819 = vunpack.c.h.b16 %v689
        %v4820 = vunpack.c.l.b16 %v690
        %v4821 = vunpack.c.h.b16 %v690
        %v4822 = vunpack.c.l.b16 %v691
        %v4823 = vunpack.c.h.b16 %v691
        %v4824 = vunpack.c.l.b16 %v692
        %v4825 = vunpack.c.h.b16 %v692
        %v4826 = vunpack.c.l.b16 %v693
        %v4827 = vunpack.c.h.b16 %v693
        %v4828 = vunpack.c.l.b16 %v694
        %v4829 = vunpack.c.h.b16 %v694
        %v4830 = vunpack.c.l.b16 %v695
        %v4831 = vunpack.c.h.b16 %v695
        %v4832 = vunpack.c.l.b16 %v696
        %v4833 = vunpack.c.h.b16 %v696
        %v4834 = vunpack.c.l.b16 %v697
        %v4835 = vunpack.c.h.b16 %v697
        %v4836 = vunpack.c.l.b16 %v698
        %v4837 = vunpack.c.h.b16 %v698
        %v4838 = vunpack.c.l.b16 %v699
        %v4839 = vunpack.c.h.b16 %v699
        %v4840 = vunpack.c.l.b16 %v700
        %v4841 = vunpack.c.h.b16 %v700
        %v4842 = vunpack.c.l.b16 %v701
        %v4843 = vunpack.c.h.b16 %v701
        %v4844 = vunpack.c.l.b16 %v702
        %v4845 = vunpack.c.h.b16 %v702
        %v4846 = vunpack.c.l.b16 %v703
        %v4847 = vunpack.c.h.b16 %v703
        %v4848 = vunpack.c.l.b16 %v704
        %v4849 = vunpack.c.h.b16 %v704
        %v4850 = vunpack.c.l.b16 %v705
        %v4851 = vunpack.c.h.b16 %v705
        %v4852 = vunpack.c.l.b16 %v706
        %v4853 = vunpack.c.h.b16 %v706
        %v4854 = vunpack.c.l.b16 %v707
        %v4855 = vunpack.c.h.b16 %v707
        %v4856 = vunpack.c.l.b16 %v708
        %v4857 = vunpack.c.h.b16 %v708
        %v4858 = vunpack.c.l.b16 %v709
        %v4859 = vunpack.c.h.b16 %v709
        %v4860 = vunpack.c.l.b16 %v710
        %v4861 = vunpack.c.h.b16 %v710
        %v4862 = vunpack.c.l.b16 %v711
        %v4863 = vunpack.c.h.b16 %v711
        %v4864 = vunpack.c.l.b16 %v712
        %v4865 = vunpack.c.h.b16 %v712
        %v4866 = vunpack.c.l.b16 %v713
        %v4867 = vunpack.c.h.b16 %v713
        %v4868 = vunpack.c.l.b16 %v714
        %v4869 = vunpack.c.h.b16 %v714
        %v4870 = vunpack.c.l.b16 %v715
        %v4871 = vunpack.c.h.b16 %v715
        %v4872 = vunpack.c.l.b16 %v716
        %v4873 = vunpack.c.h.b16 %v716
        %v4874 = vunpack.c.l.b16 %v717
        %v4875 = vunpack.c.h.b16 %v717
        %v4876 = vunpack.c.l.b16 %v718
        %v4877 = vunpack.c.h.b16 %v718
        %v4878 = vunpack.c.l.b16 %v719
        %v4879 = vunpack.c.h.b16 %v719
        %v4880 = vunpack.c.l.b16 %v720
        %v4881 = vunpack.c.h.b16 %v720
        %v4882 = vunpack.c.l.b16 %v721
        %v4883 = vunpack.c.h.b16 %v721
        %v4884 = vunpack.c.l.b16 %v722
        %v4885 = vunpack.c.h.b16 %v722
        %v4886 = vunpack.c.l.b16 %v723
        %v4887 = vunpack.c.h.b16 %v723
        %v4888 = vunpack.c.l.b16 %v724
        %v4889 = vunpack.c.h.b16 %v724
        %v4890 = vunpack.c.l.b16 %v725
        %v4891 = vunpack.c.h.b16 %v725
        %v4892 = vunpack.c.l.b16 %v726
        %v4893 = vunpack.c.h.b16 %v726
        %v4894 = vunpack.c.l.b16 %v727
        %v4895 = vunpack.c.h.b16 %v727
        %v4896 = vunpack.c.l.b16 %v728
        %v4897 = vunpack.c.h.b16 %v728
        %v4898 = vunpack.c.l.b16 %v729
        %v4899 = vunpack.c.h.b16 %v729
        %v4900 = vunpack.c.l.b16 %v730
        %v4901 = vunpack.c.h.b16 %v730
        %v4902 = vunpack.c.l.b16 %v731
        %v4903 = vunpack.c.h.b16 %v731
        %v4904 = vunpack.c.l.b16 %v732
        %v4905 = vunpack.c.h.b16 %v732
        %v4906 = vunpack.c.l.b16 %v733
        %v4907 = vunpack.c.h.b16 %v733
        %v4908 = vunpack.c.l.b16 %v734
        %v4909 = vunpack.c.h.b16 %v734
        %v4910 = vunpack.c.l.b16 %v735
        %v4911 = vunpack.c.h.b16 %v735
        %v4912 = vunpack.c.l.b16 %v736
        %v4913 = vunpack.c.h.b16 %v736
        %v4914 = vunpack.c.l.b16 %v737
        %v4915 = vunpack.c.h.b16 %v737
        %v4916 = vunpack.c.l.b16 %v738
        %v4917 = vunpack.c.h.b16 %v738
        %v4918 = vunpack.c.l.b16 %v739
        %v4919 = vunpack.c.h.b16 %v739
        %v4920 = vunpack.c.l.b16 %v740
        %v4921 = vunpack.c.h.b16 %v740
        %v4922 = vunpack.c.l.b16 %v741
        %v4923 = vunpack.c.h.b16 %v741
        %v4924 = vunpack.c.l.b16 %v742
        %v4925 = vunpack.c.h.b16 %v742
        %v4926 = vunpack.c.l.b16 %v743
        %v4927 = vunpack.c.h.b16 %v743
        %v4928 = vunpack.c.l.b16 %v744
        %v4929 = vunpack.c.h.b16 %v744
        %v4930 = vunpack.c.l.b16 %v745
        %v4931 = vunpack.c.h.b16 %v745
        %v4932 = vunpack.c.l.b16 %v746
        %v4933 = vunpack.c.h.b16 %v746
        %v4934 = vunpack.c.l.b16 %v747
        %v4935 = vunpack.c.h.b16 %v747
        %v4936 = vunpack.c.l.b16 %v748
        %v4937 = vunpack.c.h.b16 %v748
        %v4938 = vunpack.c.l.b16 %v749
        %v4939 = vunpack.c.h.b16 %v749
        %v4940 = vunpack.c.l.b16 %v750
        %v4941 = vunpack.c.h.b16 %v750
        %v4942 = vunpack.c.l.b16 %v751
        %v4943 = vunpack.c.h.b16 %v751
        %v4944 = vunpack.c.l.b16 %v752
        %v4945 = vunpack.c.h.b16 %v752
        %v4946 = vunpack.c.l.b16 %v753
        %v4947 = vunpack.c.h.b16 %v753
        %v4948 = vunpack.c.l.b16 %v754
        %v4949 = vunpack.c.h.b16 %v754
        %v4950 = vunpack.c.l.b16 %v755
        %v4951 = vunpack.c.h.b16 %v755
        %v4952 = vunpack.c.l.b16 %v756
        %v4953 = vunpack.c.h.b16 %v756
        %v4954 = vunpack.c.l.b16 %v757
        %v4955 = vunpack.c.h.b16 %v757
        %v4956 = vunpack.c.l.b16 %v758
        %v4957 = vunpack.c.h.b16 %v758
        %v4958 = vunpack.c.l.b16 %v759
        %v4959 = vunpack.c.h.b16 %v759
        %v4960 = vunpack.c.l.b16 %v760
        %v4961 = vunpack.c.h.b16 %v760
        %v4962 = vunpack.c.l.b16 %v761
        %v4963 = vunpack.c.h.b16 %v761
        %v4964 = vunpack.c.l.b16 %v762
        %v4965 = vunpack.c.h.b16 %v762
        %v4966 = vunpack.c.l.b16 %v763
        %v4967 = vunpack.c.h.b16 %v763
        %v4968 = vunpack.c.l.b16 %v764
        %v4969 = vunpack.c.h.b16 %v764
        %v4970 = vunpack.c.l.b16 %v765
        %v4971 = vunpack.c.h.b16 %v765
        %v4972 = vunpack.c.l.b16 %v766
        %v4973 = vunpack.c.h.b16 %v766
        %v4974 = vunpack.c.l.b16 %v767
        %v4975 = vunpack.c.h.b16 %v767
        %v4976 = vunpack.c.l.b16 %v768
        %v4977 = vunpack.c.h.b16 %v768
        %v4978 = vunpack.c.l.b16 %v769
        %v4979 = vunpack.c.h.b16 %v769
        %v4980 = vunpack.c.l.b16 %v770
        %v4981 = vunpack.c.h.b16 %v770
        %v4982 = vunpack.c.l.b16 %v771
        %v4983 = vunpack.c.h.b16 %v771
        %v4984 = vunpack.c.l.b16 %v772
        %v4985 = vunpack.c.h.b16 %v772
        %v4986 = vunpack.c.l.b16 %v773
        %v4987 = vunpack.c.h.b16 %v773
        %v4988 = vunpack.c.l.b16 %v774
        %v4989 = vunpack.c.h.b16 %v774
        %v4990 = vunpack.c.l.b16 %v775
        %v4991 = vunpack.c.h.b16 %v775
        %v4992 = vunpack.c.l.b16 %v776
        %v4993 = vunpack.c.h.b16 %v776
        %v4994 = vunpack.c.l.b16 %v777
        %v4995 = vunpack.c.h.b16 %v777
        %v4996 = vunpack.c.l.b16 %v778
        %v4997 = vunpack.c.h.b16 %v778
        %v4998 = vunpack.c.l.b16 %v779
        %v4999 = vunpack.c.h.b16 %v779
        %v5000 = vunpack.c.l.b16 %v780
        %v5001 = vunpack.c.h.b16 %v780
        %v5002 = vunpack.c.l.b16 %v781
        %v5003 = vunpack.c.h.b16 %v781
        %v5004 = vunpack.c.l.b16 %v782
        %v5005 = vunpack.c.h.b16 %v782
        %v5006 = vunpack.c.l.b16 %v783
        %v5007 = vunpack.c.h.b16 %v783
        %v5008 = vunpack.c.l.b16 %v784
        %v5009 = vunpack.c.h.b16 %v784
        %v5010 = vunpack.c.l.b16 %v785
        %v5011 = vunpack.c.h.b16 %v785
        %v5012 = vunpack.c.l.b16 %v786
        %v5013 = vunpack.c.h.b16 %v786
        %v5014 = vunpack.c.l.b16 %v787
        %v5015 = vunpack.c.h.b16 %v787
        %v5016 = vunpack.c.l.b16 %v788
        %v5017 = vunpack.c.h.b16 %v788
        %v5018 = vunpack.c.l.b16 %v789
        %v5019 = vunpack.c.h.b16 %v789
        %v5020 = vunpack.c.l.b16 %v790
        %v5021 = vunpack.c.h.b16 %v790
        %v5022 = vunpack.c.l.b16 %v791
        %v5023 = vunpack.c.h.b16 %v791
        %v5024 = vunpack.c.l.b16 %v792
        %v5025 = vunpack.c.h.b16 %v792
        %v5026 = vunpack.c.l.b16 %v793
        %v5027 = vunpack.c.h.b16 %v793
        %v5028 = vunpack.c.l.b16 %v794
        %v5029 = vunpack.c.h.b16 %v794
        %v5030 = vunpack.c.l.b16 %v795
        %v5031 = vunpack.c.h.b16 %v795
        %v5032 = vunpack.c.l.b16 %v796
        %v5033 = vunpack.c.h.b16 %v796
        %v5034 = vunpack.c.l.b16 %v797
        %v5035 = vunpack.c.h.b16 %v797
        %v5036 = vunpack.c.l.b16 %v798
        %v5037 = vunpack.c.h.b16 %v798
        %v5038 = vunpack.c.l.b16 %v799
        %v5039 = vunpack.c.h.b16 %v799
        %v5040 = vunpack.c.l.b16 %v800
        %v5041 = vunpack.c.h.b16 %v800
        %v5042 = vunpack.c.l.b16 %v801
        %v5043 = vunpack.c.h.b16 %v801
        %v5044 = vunpack.c.l.b16 %v802
        %v5045 = vunpack.c.h.b16 %v802
        %v5046 = vunpack.c.l.b16 %v803
        %v5047 = vunpack.c.h.b16 %v803
        %v5048 = vunpack.c.l.b16 %v804
        %v5049 = vunpack.c.h.b16 %v804
        %v5050 = vunpack.c.l.b16 %v805
        %v5051 = vunpack.c.h.b16 %v805
        %v5052 = vunpack.c.l.b16 %v806
        %v5053 = vunpack.c.h.b16 %v806
        %v5054 = vunpack.c.l.b16 %v807
        %v5055 = vunpack.c.h.b16 %v807
        %v5056 = vunpack.c.l.b16 %v808
        %v5057 = vunpack.c.h.b16 %v808
        %v5058 = vunpack.c.l.b16 %v809
        %v5059 = vunpack.c.h.b16 %v809
        %v5060 = vunpack.c.l.b16 %v810
        %v5061 = vunpack.c.h.b16 %v810
        %v5062 = vunpack.c.l.b16 %v811
        %v5063 = vunpack.c.h.b16 %v811
        %v5064 = vunpack.c.l.b16 %v812
        %v5065 = vunpack.c.h.b16 %v812
        %v5066 = vunpack.c.l.b16 %v813
        %v5067 = vunpack.c.h.b16 %v813
        %v5068 = vunpack.c.l.b16 %v814
        %v5069 = vunpack.c.h.b16 %v814
        %v5070 = vunpack.c.l.b16 %v815
        %v5071 = vunpack.c.h.b16 %v815
        %v5072 = vunpack.c.l.b16 %v816
        %v5073 = vunpack.c.h.b16 %v816
        %v5074 = vunpack.c.l.b16 %v817
        %v5075 = vunpack.c.h.b16 %v817
        %v5076 = vunpack.c.l.b16 %v818
        %v5077 = vunpack.c.h.b16 %v818
        %v5078 = vunpack.c.l.b16 %v819
        %v5079 = vunpack.c.h.b16 %v819
        %v5080 = vunpack.c.l.b16 %v820
        %v5081 = vunpack.c.h.b16 %v820
        %v5082 = vunpack.c.l.b16 %v821
        %v5083 = vunpack.c.h.b16 %v821
        %v5084 = vunpack.c.l.b16 %v822
        %v5085 = vunpack.c.h.b16 %v822
        %v5086 = vunpack.c.l.b16 %v823
        %v5087 = vunpack.c.h.b16 %v823
        %v5088 = vunpack.c.l.b16 %v824
        %v5089 = vunpack.c.h.b16 %v824
        %v5090 = vunpack.c.l.b16 %v825
        %v5091 = vunpack.c.h.b16 %v825
        %v5092 = vunpack.c.l.b16 %v826
        %v5093 = vunpack.c.h.b16 %v826
        %v5094 = vunpack.c.l.b16 %v827
        %v5095 = vunpack.c.h.b16 %v827
        %v5096 = vunpack.c.l.b16 %v828
        %v5097 = vunpack.c.h.b16 %v828
        %v5098 = vunpack.c.l.b16 %v829
        %v5099 = vunpack.c.h.b16 %v829
        %v5100 = vunpack.c.l.b16 %v830
        %v5101 = vunpack.c.h.b16 %v830
        %v5102 = vunpack.c.l.b16 %v831
        %v5103 = vunpack.c.h.b16 %v831
        %v5104 = vunpack.c.l.b16 %v832
        %v5105 = vunpack.c.h.b16 %v832
        %v5106 = vunpack.c.l.b16 %v833
        %v5107 = vunpack.c.h.b16 %v833
        %v5108 = vunpack.c.l.b16 %v834
        %v5109 = vunpack.c.h.b16 %v834
        %v5110 = vunpack.c.l.b16 %v835
        %v5111 = vunpack.c.h.b16 %v835
        %v5112 = vunpack.c.l.b16 %v836
        %v5113 = vunpack.c.h.b16 %v836
        %v5114 = vunpack.c.l.b16 %v837
        %v5115 = vunpack.c.h.b16 %v837
        %v5116 = vunpack.c.l.b16 %v838
        %v5117 = vunpack.c.h.b16 %v838
        %v5118 = vunpack.c.l.b16 %v839
        %v5119 = vunpack.c.h.b16 %v839
        %v5120 = vunpack.c.l.b16 %v840
        %v5121 = vunpack.c.h.b16 %v840
        %v5122 = vunpack.c.l.b16 %v841
        %v5123 = vunpack.c.h.b16 %v841
        %v5124 = vunpack.c.l.b16 %v842
        %v5125 = vunpack.c.h.b16 %v842
        %v5126 = vunpack.c.l.b16 %v843
        %v5127 = vunpack.c.h.b16 %v843
        %v5128 = vunpack.c.l.b16 %v844
        %v5129 = vunpack.c.h.b16 %v844
        %v5130 = vunpack.c.l.b16 %v845
        %v5131 = vunpack.c.h.b16 %v845
        %v5132 = vunpack.c.l.b16 %v846
        %v5133 = vunpack.c.h.b16 %v846
        %v5134 = vunpack.c.l.b16 %v847
        %v5135 = vunpack.c.h.b16 %v847
        %v5136 = vunpack.c.l.b16 %v848
        %v5137 = vunpack.c.h.b16 %v848
        %v5138 = vunpack.c.l.b16 %v849
        %v5139 = vunpack.c.h.b16 %v849
        %v5140 = vunpack.c.l.b16 %v850
        %v5141 = vunpack.c.h.b16 %v850
        %v5142 = vunpack.c.l.b16 %v851
        %v5143 = vunpack.c.h.b16 %v851
        %v5144 = vunpack.c.l.b16 %v852
        %v5145 = vunpack.c.h.b16 %v852
        %v5146 = vunpack.c.l.b16 %v853
        %v5147 = vunpack.c.h.b16 %v853
        %v5148 = vunpack.c.l.b16 %v854
        %v5149 = vunpack.c.h.b16 %v854
        %v5150 = vunpack.c.l.b16 %v855
        %v5151 = vunpack.c.h.b16 %v855
        %v5152 = vunpack.c.l.b16 %v856
        %v5153 = vunpack.c.h.b16 %v856
        %v5154 = vunpack.c.l.b16 %v857
        %v5155 = vunpack.c.h.b16 %v857
        %v5156 = vunpack.c.l.b16 %v858
        %v5157 = vunpack.c.h.b16 %v858
        %v5158 = vunpack.c.l.b16 %v859
        %v5159 = vunpack.c.h.b16 %v859
        %v5160 = vunpack.c.l.b16 %v860
        %v5161 = vunpack.c.h.b16 %v860
        %v5162 = vunpack.c.l.b16 %v861
        %v5163 = vunpack.c.h.b16 %v861
        %v5164 = vunpack.c.l.b16 %v862
        %v5165 = vunpack.c.h.b16 %v862
        %v5166 = vunpack.c.l.b16 %v863
        %v5167 = vunpack.c.h.b16 %v863
        %v5168 = vunpack.c.l.b16 %v864
        %v5169 = vunpack.c.h.b16 %v864
        %v5170 = vunpack.c.l.b16 %v865
        %v5171 = vunpack.c.h.b16 %v865
        %v5172 = vunpack.c.l.b16 %v866
        %v5173 = vunpack.c.h.b16 %v866
        %v5174 = vunpack.c.l.b16 %v867
        %v5175 = vunpack.c.h.b16 %v867
        %v5176 = vunpack.c.l.b16 %v868
        %v5177 = vunpack.c.h.b16 %v868
        %v5178 = vunpack.c.l.b16 %v869
        %v5179 = vunpack.c.h.b16 %v869
        %v5180 = vunpack.c.l.b16 %v870
        %v5181 = vunpack.c.h.b16 %v870
        %v5182 = vunpack.c.l.b16 %v871
        %v5183 = vunpack.c.h.b16 %v871
        %v5184 = vunpack.c.l.b16 %v872
        %v5185 = vunpack.c.h.b16 %v872
        %v5186 = vunpack.c.l.b16 %v873
        %v5187 = vunpack.c.h.b16 %v873
        %v5188 = vunpack.c.l.b16 %v874
        %v5189 = vunpack.c.h.b16 %v874
        %v5190 = vunpack.c.l.b16 %v875
        %v5191 = vunpack.c.h.b16 %v875
        %v5192 = vunpack.c.l.b16 %v876
        %v5193 = vunpack.c.h.b16 %v876
        %v5194 = vunpack.c.l.b16 %v877
        %v5195 = vunpack.c.h.b16 %v877
        %v5196 = vunpack.c.l.b16 %v878
        %v5197 = vunpack.c.h.b16 %v878
        %v5198 = vunpack.c.l.b16 %v879
        %v5199 = vunpack.c.h.b16 %v879
        %v5200 = vunpack.c.l.b16 %v880
        %v5201 = vunpack.c.h.b16 %v880
        %v5202 = vunpack.c.l.b16 %v881
        %v5203 = vunpack.c.h.b16 %v881
        %v5204 = vunpack.c.l.b16 %v882
        %v5205 = vunpack.c.h.b16 %v882
        %v5206 = vunpack.c.l.b16 %v883
        %v5207 = vunpack.c.h.b16 %v883
        %v5208 = vunpack.c.l.b16 %v884
        %v5209 = vunpack.c.h.b16 %v884
        %v5210 = vunpack.c.l.b16 %v885
        %v5211 = vunpack.c.h.b16 %v885
        %v5212 = vunpack.c.l.b16 %v886
        %v5213 = vunpack.c.h.b16 %v886
        %v5214 = vunpack.c.l.b16 %v887
        %v5215 = vunpack.c.h.b16 %v887
        %v5216 = vunpack.c.l.b16 %v888
        %v5217 = vunpack.c.h.b16 %v888
        %v5218 = vunpack.c.l.b16 %v889
        %v5219 = vunpack.c.h.b16 %v889
        %v5220 = vunpack.c.l.b16 %v890
        %v5221 = vunpack.c.h.b16 %v890
        %v5222 = vunpack.c.l.b16 %v891
        %v5223 = vunpack.c.h.b16 %v891
        %v5224 = vunpack.c.l.b16 %v892
        %v5225 = vunpack.c.h.b16 %v892
        %v5226 = vunpack.c.l.b16 %v893
        %v5227 = vunpack.c.h.b16 %v893
        %v5228 = vunpack.c.l.b16 %v894
        %v5229 = vunpack.c.h.b16 %v894
        %v5230 = vunpack.c.l.b16 %v895
        %v5231 = vunpack.c.h.b16 %v895
        %v5232 = vunpack.c.l.b16 %v896
        %v5233 = vunpack.c.h.b16 %v896
        %v5234 = vunpack.c.l.b16 %v897
        %v5235 = vunpack.c.h.b16 %v897
        %v5236 = vunpack.c.l.b16 %v898
        %v5237 = vunpack.c.h.b16 %v898
        %v5238 = vunpack.c.l.b16 %v899
        %v5239 = vunpack.c.h.b16 %v899
        %v5240 = vunpack.c.l.b16 %v900
        %v5241 = vunpack.c.h.b16 %v900
        %v5242 = vunpack.c.l.b16 %v901
        %v5243 = vunpack.c.h.b16 %v901
        %v5244 = vunpack.c.l.b16 %v902
        %v5245 = vunpack.c.h.b16 %v902
        %v5246 = vunpack.c.l.b16 %v903
        %v5247 = vunpack.c.h.b16 %v903
        %v5248 = vunpack.c.l.b16 %v904
        %v5249 = vunpack.c.h.b16 %v904
        %v5250 = vunpack.c.l.b16 %v905
        %v5251 = vunpack.c.h.b16 %v905
        %v5252 = vunpack.c.l.b16 %v906
        %v5253 = vunpack.c.h.b16 %v906
        %v5254 = vunpack.c.l.b16 %v907
        %v5255 = vunpack.c.h.b16 %v907
        %v5256 = vunpack.c.l.b16 %v908
        %v5257 = vunpack.c.h.b16 %v908
        %v5258 = vunpack.c.l.b16 %v909
        %v5259 = vunpack.c.h.b16 %v909
        %v5260 = vunpack.c.l.b16 %v910
        %v5261 = vunpack.c.h.b16 %v910
        %v5262 = vunpack.c.l.b16 %v911
        %v5263 = vunpack.c.h.b16 %v911
        %v5264 = vunpack.c.l.b16 %v912
        %v5265 = vunpack.c.h.b16 %v912
        %v5266 = vunpack.c.l.b16 %v913
        %v5267 = vunpack.c.h.b16 %v913
        %v5268 = vunpack.c.l.b16 %v914
        %v5269 = vunpack.c.h.b16 %v914
        %v5270 = vunpack.c.l.b16 %v915
        %v5271 = vunpack.c.h.b16 %v915
        %v5272 = vunpack.c.l.b16 %v916
        %v5273 = vunpack.c.h.b16 %v916
        %v5274 = vunpack.c.l.b16 %v917
        %v5275 = vunpack.c.h.b16 %v917
        %v5276 = vunpack.c.l.b16 %v918
        %v5277 = vunpack.c.h.b16 %v918
        %v5278 = vunpack.c.l.b16 %v919
        %v5279 = vunpack.c.h.b16 %v919
        %v5280 = vunpack.c.l.b16 %v920
        %v5281 = vunpack.c.h.b16 %v920
        %v5282 = vunpack.c.l.b16 %v921
        %v5283 = vunpack.c.h.b16 %v921
        %v5284 = vunpack.c.l.b16 %v922
        %v5285 = vunpack.c.h.b16 %v922
        %v5286 = vunpack.c.l.b16 %v923
        %v5287 = vunpack.c.h.b16 %v923
        %v5288 = vunpack.c.l.b16 %v924
        %v5289 = vunpack.c.h.b16 %v924
        %v5290 = vunpack.c.l.b16 %v925
        %v5291 = vunpack.c.h.b16 %v925
        %v5292 = vunpack.c.l.b16 %v926
        %v5293 = vunpack.c.h.b16 %v926
        %v5294 = vunpack.c.l.b16 %v927
        %v5295 = vunpack.c.h.b16 %v927
        %v5296 = vunpack.c.l.b16 %v928
        %v5297 = vunpack.c.h.b16 %v928
        %v5298 = vunpack.c.l.b16 %v929
        %v5299 = vunpack.c.h.b16 %v929
        %v5300 = vunpack.c.l.b16 %v930
        %v5301 = vunpack.c.h.b16 %v930
        %v5302 = vunpack.c.l.b16 %v931
        %v5303 = vunpack.c.h.b16 %v931
        %v5304 = vunpack.c.l.b16 %v932
        %v5305 = vunpack.c.h.b16 %v932
        %v5306 = vunpack.c.l.b16 %v933
        %v5307 = vunpack.c.h.b16 %v933
        %v5308 = vunpack.c.l.b16 %v934
        %v5309 = vunpack.c.h.b16 %v934
        %v5310 = vunpack.c.l.b16 %v935
        %v5311 = vunpack.c.h.b16 %v935
        %v5312 = vunpack.c.l.b16 %v936
        %v5313 = vunpack.c.h.b16 %v936
        %v5314 = vunpack.c.l.b16 %v937
        %v5315 = vunpack.c.h.b16 %v937
        %v5316 = vunpack.c.l.b16 %v938
        %v5317 = vunpack.c.h.b16 %v938
        %v5318 = vunpack.c.l.b16 %v939
        %v5319 = vunpack.c.h.b16 %v939
        %v5320 = vunpack.c.l.b16 %v940
        %v5321 = vunpack.c.h.b16 %v940
        %v5322 = vunpack.c.l.b16 %v941
        %v5323 = vunpack.c.h.b16 %v941
        %v5324 = vunpack.c.l.b16 %v942
        %v5325 = vunpack.c.h.b16 %v942
        %v5326 = vunpack.c.l.b16 %v943
        %v5327 = vunpack.c.h.b16 %v943
        %v5328 = vunpack.c.l.b16 %v944
        %v5329 = vunpack.c.h.b16 %v944
        %v5330 = vunpack.c.l.b16 %v945
        %v5331 = vunpack.c.h.b16 %v945
        %v5332 = vunpack.c.l.b16 %v946
        %v5333 = vunpack.c.h.b16 %v946
        %v5334 = vunpack.c.l.b16 %v947
        %v5335 = vunpack.c.h.b16 %v947
        %v5336 = vunpack.c.l.b16 %v948
        %v5337 = vunpack.c.h.b16 %v948
        %v5338 = vunpack.c.l.b16 %v949
        %v5339 = vunpack.c.h.b16 %v949
        %v5340 = vunpack.c.l.b16 %v950
        %v5341 = vunpack.c.h.b16 %v950
        %v5342 = vunpack.c.l.b16 %v951
        %v5343 = vunpack.c.h.b16 %v951
        %v5344 = vunpack.c.l.b16 %v952
        %v5345 = vunpack.c.h.b16 %v952
        %v5346 = vunpack.c.l.b16 %v953
        %v5347 = vunpack.c.h.b16 %v953
        %v5348 = vunpack.c.l.b16 %v954
        %v5349 = vunpack.c.h.b16 %v954
        %v5350 = vunpack.c.l.b16 %v955
        %v5351 = vunpack.c.h.b16 %v955
        %v5352 = vunpack.c.l.b16 %v956
        %v5353 = vunpack.c.h.b16 %v956
        %v5354 = vunpack.c.l.b16 %v957
        %v5355 = vunpack.c.h.b16 %v957
        %v5356 = vunpack.c.l.b16 %v958
        %v5357 = vunpack.c.h.b16 %v958
        %v5358 = vunpack.c.l.b16 %v959
        %v5359 = vunpack.c.h.b16 %v959
        %v5360 = vunpack.c.l.b16 %v960
        %v5361 = vunpack.c.h.b16 %v960
        %v5362 = vunpack.c.l.b16 %v961
        %v5363 = vunpack.c.h.b16 %v961
        %v5364 = vunpack.c.l.b16 %v962
        %v5365 = vunpack.c.h.b16 %v962
        %v5366 = vunpack.c.l.b16 %v963
        %v5367 = vunpack.c.h.b16 %v963
        %v5368 = vunpack.c.l.b16 %v964
        %v5369 = vunpack.c.h.b16 %v964
        %v5370 = vunpack.c.l.b16 %v965
        %v5371 = vunpack.c.h.b16 %v965
        %v5372 = vunpack.c.l.b16 %v966
        %v5373 = vunpack.c.h.b16 %v966
        %v5374 = vunpack.c.l.b16 %v967
        %v5375 = vunpack.c.h.b16 %v967
        %v5376 = vunpack.c.l.b16 %v968
        %v5377 = vunpack.c.h.b16 %v968
        %v5378 = vunpack.c.l.b16 %v969
        %v5379 = vunpack.c.h.b16 %v969
        %v5380 = vunpack.c.l.b16 %v970
        %v5381 = vunpack.c.h.b16 %v970
        %v5382 = vunpack.c.l.b16 %v971
        %v5383 = vunpack.c.h.b16 %v971
        %v5384 = vunpack.c.l.b16 %v972
        %v5385 = vunpack.c.h.b16 %v972
        %v5386 = vunpack.c.l.b16 %v973
        %v5387 = vunpack.c.h.b16 %v973
        %v5388 = vunpack.c.l.b16 %v974
        %v5389 = vunpack.c.h.b16 %v974
        %v5390 = vunpack.c.l.b16 %v975
        %v5391 = vunpack.c.h.b16 %v975
        %v5392 = vunpack.c.l.b16 %v976
        %v5393 = vunpack.c.h.b16 %v976
        %v5394 = vunpack.c.l.b16 %v977
        %v5395 = vunpack.c.h.b16 %v977
        %v5396 = vunpack.c.l.b16 %v978
        %v5397 = vunpack.c.h.b16 %v978
        %v5398 = vunpack.c.l.b16 %v979
        %v5399 = vunpack.c.h.b16 %v979
        %v5400 = vunpack.c.l.b16 %v980
        %v5401 = vunpack.c.h.b16 %v980
        %v5402 = vunpack.c.l.b16 %v981
        %v5403 = vunpack.c.h.b16 %v981
        %v5404 = vunpack.c.l.b16 %v982
        %v5405 = vunpack.c.h.b16 %v982
        %v5406 = vunpack.c.l.b16 %v983
        %v5407 = vunpack.c.h.b16 %v983
        %v5408 = vunpack.c.l.b16 %v984
        %v5409 = vunpack.c.h.b16 %v984
        %v5410 = vunpack.c.l.b16 %v985
        %v5411 = vunpack.c.h.b16 %v985
        %v5412 = vunpack.c.l.b16 %v986
        %v5413 = vunpack.c.h.b16 %v986
        %v5414 = vunpack.c.l.b16 %v987
        %v5415 = vunpack.c.h.b16 %v987
        %v5416 = vunpack.c.l.b16 %v988
        %v5417 = vunpack.c.h.b16 %v988
        %v5418 = vunpack.c.l.b16 %v989
        %v5419 = vunpack.c.h.b16 %v989
        %v5420 = vunpack.c.l.b16 %v990
        %v5421 = vunpack.c.h.b16 %v990
        %v5422 = vunpack.c.l.b16 %v991
        %v5423 = vunpack.c.h.b16 %v991
        %v5424 = vunpack.c.l.b16 %v992
        %v5425 = vunpack.c.h.b16 %v992
        %v5426 = vunpack.c.l.b16 %v993
        %v5427 = vunpack.c.h.b16 %v993
        %v5428 = vunpack.c.l.b16 %v994
        %v5429 = vunpack.c.h.b16 %v994
        %v5430 = vunpack.c.l.b16 %v995
        %v5431 = vunpack.c.h.b16 %v995
        %v5432 = vunpack.c.l.b16 %v996
        %v5433 = vunpack.c.h.b16 %v996
        %v5434 = vunpack.c.l.b16 %v997
        %v5435 = vunpack.c.h.b16 %v997
        %v5436 = vunpack.c.l.b16 %v998
        %v5437 = vunpack.c.h.b16 %v998
        %v5438 = vunpack.c.l.b16 %v999
        %v5439 = vunpack.c.h.b16 %v999
        %v5440 = vunpack.c.l.b16 %v1000
        %v5441 = vunpack.c.h.b16 %v1000
        %v5442 = vunpack.c.l.b16 %v1001
        %v5443 = vunpack.c.h.b16 %v1001
        %v5444 = vunpack.c.l.b16 %v1002
        %v5445 = vunpack.c.h.b16 %v1002
        %v5446 = vunpack.c.l.b16 %v1003
        %v5447 = vunpack.c.h.b16 %v1003
        %v5448 = vunpack.c.l.b16 %v1004
        %v5449 = vunpack.c.h.b16 %v1004
        %v5450 = vunpack.c.l.b16 %v1005
        %v5451 = vunpack.c.h.b16 %v1005
        %v5452 = vunpack.c.l.b16 %v1006
        %v5453 = vunpack.c.h.b16 %v1006
        %v5454 = vunpack.c.l.b16 %v1007
        %v5455 = vunpack.c.h.b16 %v1007
        %v5456 = vunpack.c.l.b16 %v1008
        %v5457 = vunpack.c.h.b16 %v1008
        %v5458 = vunpack.c.l.b16 %v1009
        %v5459 = vunpack.c.h.b16 %v1009
        %v5460 = vunpack.c.l.b16 %v1010
        %v5461 = vunpack.c.h.b16 %v1010
        %v5462 = vunpack.c.l.b16 %v1011
        %v5463 = vunpack.c.h.b16 %v1011
        %v5464 = vunpack.c.l.b16 %v1012
        %v5465 = vunpack.c.h.b16 %v1012
        %v5466 = vunpack.c.l.b16 %v1013
        %v5467 = vunpack.c.h.b16 %v1013
        %v5468 = vunpack.c.l.b16 %v1014
        %v5469 = vunpack.c.h.b16 %v1014
        %v5470 = vunpack.c.l.b16 %v1015
        %v5471 = vunpack.c.h.b16 %v1015
        %v5472 = vunpack.c.l.b16 %v1016
        %v5473 = vunpack.c.h.b16 %v1016
        %v5474 = vunpack.c.l.b16 %v1017
        %v5475 = vunpack.c.h.b16 %v1017
        %v5476 = vunpack.c.l.b16 %v1018
        %v5477 = vunpack.c.h.b16 %v1018
        %v5478 = vunpack.c.l.b16 %v1019
        %v5479 = vunpack.c.h.b16 %v1019
        %v5480 = vunpack.c.l.b16 %v1020
        %v5481 = vunpack.c.h.b16 %v1020
        %v5482 = vunpack.c.l.b16 %v1021
        %v5483 = vunpack.c.h.b16 %v1021
        %v5484 = vunpack.c.l.b16 %v1022
        %v5485 = vunpack.c.h.b16 %v1022
        %v5486 = vunpack.c.l.b16 %v1023
        %v5487 = vunpack.c.h.b16 %v1023
        %v5488 = vunpack.c.l.b16 %v1024
        %v5489 = vunpack.c.h.b16 %v1024
        %v5490 = vunpack.c.l.b16 %v1025
        %v5491 = vunpack.c.h.b16 %v1025
        %v5492 = vunpack.c.l.b16 %v1026
        %v5493 = vunpack.c.h.b16 %v1026
        %v5494 = vunpack.c.l.b16 %v1027
        %v5495 = vunpack.c.h.b16 %v1027
        %v5496 = vunpack.c.l.b16 %v1028
        %v5497 = vunpack.c.h.b16 %v1028
        %v5498 = vunpack.c.l.b16 %v1029
        %v5499 = vunpack.c.h.b16 %v1029
        %v5500 = vunpack.c.l.b16 %v1030
        %v5501 = vunpack.c.h.b16 %v1030
        %v5502 = vunpack.c.l.b16 %v1031
        %v5503 = vunpack.c.h.b16 %v1031
        %v5504 = vunpack.c.l.b16 %v1032
        %v5505 = vunpack.c.h.b16 %v1032
        %v5506 = vunpack.c.l.b16 %v1033
        %v5507 = vunpack.c.h.b16 %v1033
        %v5508 = vunpack.c.l.b16 %v1034
        %v5509 = vunpack.c.h.b16 %v1034
        %v5510 = vunpack.c.l.b16 %v1035
        %v5511 = vunpack.c.h.b16 %v1035
        %v5512 = vunpack.c.l.b16 %v1036
        %v5513 = vunpack.c.h.b16 %v1036
        %v5514 = vunpack.c.l.b16 %v1037
        %v5515 = vunpack.c.h.b16 %v1037
        %v5516 = vunpack.c.l.b16 %v1038
        %v5517 = vunpack.c.h.b16 %v1038
        %v5518 = vunpack.c.l.b16 %v1039
        %v5519 = vunpack.c.h.b16 %v1039
        %v5520 = vunpack.c.l.b16 %v1040
        %v5521 = vunpack.c.h.b16 %v1040
        %v5522 = vunpack.c.l.b16 %v1041
        %v5523 = vunpack.c.h.b16 %v1041
        %v5524 = vunpack.c.l.b16 %v1042
        %v5525 = vunpack.c.h.b16 %v1042
        %v5526 = vunpack.c.l.b16 %v1043
        %v5527 = vunpack.c.h.b16 %v1043
        %v5528 = vunpack.c.l.b16 %v1044
        %v5529 = vunpack.c.h.b16 %v1044
        %v5530 = vunpack.c.l.b16 %v1045
        %v5531 = vunpack.c.h.b16 %v1045
        %v5532 = vunpack.c.l.b16 %v1046
        %v5533 = vunpack.c.h.b16 %v1046
        %v5534 = vunpack.c.l.b16 %v1047
        %v5535 = vunpack.c.h.b16 %v1047
        %v5536 = vunpack.c.l.b16 %v1048
        %v5537 = vunpack.c.h.b16 %v1048
        %v5538 = vunpack.c.l.b16 %v1049
        %v5539 = vunpack.c.h.b16 %v1049
        %v5540 = vunpack.c.l.b16 %v1050
        %v5541 = vunpack.c.h.b16 %v1050
        %v5542 = vunpack.c.l.b16 %v1051
        %v5543 = vunpack.c.h.b16 %v1051
        %v5544 = vunpack.c.l.b16 %v1052
        %v5545 = vunpack.c.h.b16 %v1052
        %v5546 = vunpack.c.l.b16 %v1053
        %v5547 = vunpack.c.h.b16 %v1053
        %v5548 = vunpack.c.l.b16 %v1054
        %v5549 = vunpack.c.h.b16 %v1054
        %v5550 = vunpack.c.l.b16 %v1055
        %v5551 = vunpack.c.h.b16 %v1055
        %v5552 = vunpack.c.l.b16 %v1056
        %v5553 = vunpack.c.h.b16 %v1056
        %v5554 = vunpack.c.l.b16 %v1057
        %v5555 = vunpack.c.h.b16 %v1057
        %v5556 = vunpack.c.l.b16 %v1058
        %v5557 = vunpack.c.h.b16 %v1058
        %v5558 = vunpack.c.l.b16 %v1059
        %v5559 = vunpack.c.h.b16 %v1059
        %v5560 = vunpack.c.l.b16 %v1060
        %v5561 = vunpack.c.h.b16 %v1060
        %v5562 = vunpack.c.l.b16 %v1061
        %v5563 = vunpack.c.h.b16 %v1061
        %v5564 = vunpack.c.l.b16 %v1062
        %v5565 = vunpack.c.h.b16 %v1062
        %v5566 = vunpack.c.l.b16 %v1063
        %v5567 = vunpack.c.h.b16 %v1063
        %v5568 = vunpack.c.l.b16 %v1064
        %v5569 = vunpack.c.h.b16 %v1064
        %v5570 = vunpack.c.l.b16 %v1065
        %v5571 = vunpack.c.h.b16 %v1065
        %v5572 = vunpack.c.l.b16 %v1066
        %v5573 = vunpack.c.h.b16 %v1066
        %v5574 = vunpack.c.l.b16 %v1067
        %v5575 = vunpack.c.h.b16 %v1067
        %v5576 = vunpack.c.l.b16 %v1068
        %v5577 = vunpack.c.h.b16 %v1068
        %v5578 = vunpack.c.l.b16 %v1069
        %v5579 = vunpack.c.h.b16 %v1069
        %v5580 = vunpack.c.l.b16 %v1070
        %v5581 = vunpack.c.h.b16 %v1070
        %v5582 = vunpack.c.l.b16 %v1071
        %v5583 = vunpack.c.h.b16 %v1071
        %v5584 = vunpack.c.l.b16 %v1072
        %v5585 = vunpack.c.h.b16 %v1072
        %v5586 = vunpack.c.l.b16 %v1073
        %v5587 = vunpack.c.h.b16 %v1073
        %v5588 = vunpack.c.l.b16 %v1074
        %v5589 = vunpack.c.h.b16 %v1074
        %v5590 = vunpack.c.l.b16 %v1075
        %v5591 = vunpack.c.h.b16 %v1075
        %v5592 = vunpack.c.l.b16 %v1076
        %v5593 = vunpack.c.h.b16 %v1076
        %v5594 = vunpack.c.l.b16 %v1077
        %v5595 = vunpack.c.h.b16 %v1077
        %v5596 = vunpack.c.l.b16 %v1078
        %v5597 = vunpack.c.h.b16 %v1078
        %v5598 = vunpack.c.l.b16 %v1079
        %v5599 = vunpack.c.h.b16 %v1079
        %v5600 = vunpack.c.l.b16 %v1080
        %v5601 = vunpack.c.h.b16 %v1080
        %v5602 = vunpack.c.l.b16 %v1081
        %v5603 = vunpack.c.h.b16 %v1081
        %v5604 = vunpack.c.l.b16 %v1082
        %v5605 = vunpack.c.h.b16 %v1082
        %v5606 = vunpack.c.l.b16 %v1083
        %v5607 = vunpack.c.h.b16 %v1083
        %v5608 = vunpack.c.l.b16 %v1084
        %v5609 = vunpack.c.h.b16 %v1084
        %v5610 = vunpack.c.l.b16 %v1085
        %v5611 = vunpack.c.h.b16 %v1085
        %v5612 = vunpack.c.l.b16 %v1086
        %v5613 = vunpack.c.h.b16 %v1086
        %v5614 = vunpack.c.l.b16 %v1087
        %v5615 = vunpack.c.h.b16 %v1087
        %v5616 = vunpack.c.l.b16 %v1088
        %v5617 = vunpack.c.h.b16 %v1088
        %v5618 = vunpack.c.l.b16 %v1089
        %v5619 = vunpack.c.h.b16 %v1089
        %v5620 = vunpack.c.l.b16 %v1090
        %v5621 = vunpack.c.h.b16 %v1090
        %v5622 = vunpack.c.l.b16 %v1091
        %v5623 = vunpack.c.h.b16 %v1091
        %v5624 = vunpack.c.l.b16 %v1092
        %v5625 = vunpack.c.h.b16 %v1092
        %v5626 = vunpack.c.l.b16 %v1093
        %v5627 = vunpack.c.h.b16 %v1093
        %v5628 = vunpack.c.l.b16 %v1094
        %v5629 = vunpack.c.h.b16 %v1094
        %v5630 = vunpack.c.l.b16 %v1095
        %v5631 = vunpack.c.h.b16 %v1095
        %v5632 = vunpack.c.l.b16 %v1096
        %v5633 = vunpack.c.h.b16 %v1096
        %v5634 = vunpack.c.l.b16 %v1097
        %v5635 = vunpack.c.h.b16 %v1097
        %v5636 = vunpack.c.l.b16 %v1098
        %v5637 = vunpack.c.h.b16 %v1098
        %v5638 = vunpack.c.l.b16 %v1099
        %v5639 = vunpack.c.h.b16 %v1099
        %v5640 = vunpack.c.l.b16 %v1100
        %v5641 = vunpack.c.h.b16 %v1100
        %v5642 = vunpack.c.l.b16 %v1101
        %v5643 = vunpack.c.h.b16 %v1101
        %v5644 = vunpack.c.l.b16 %v1102
        %v5645 = vunpack.c.h.b16 %v1102
        %v5646 = vunpack.c.l.b16 %v1103
        %v5647 = vunpack.c.h.b16 %v1103
        %v5648 = vunpack.c.l.b16 %v1104
        %v5649 = vunpack.c.h.b16 %v1104
        %v5650 = vunpack.c.l.b16 %v1105
        %v5651 = vunpack.c.h.b16 %v1105
        %v5652 = vunpack.c.l.b16 %v1106
        %v5653 = vunpack.c.h.b16 %v1106
        %v5654 = vunpack.c.l.b16 %v1107
        %v5655 = vunpack.c.h.b16 %v1107
        %v5656 = vunpack.c.l.b16 %v1108
        %v5657 = vunpack.c.h.b16 %v1108
        %v5658 = vunpack.c.l.b16 %v1109
        %v5659 = vunpack.c.h.b16 %v1109
        %v5660 = vunpack.c.l.b16 %v1110
        %v5661 = vunpack.c.h.b16 %v1110
        %v5662 = vunpack.c.l.b16 %v1111
        %v5663 = vunpack.c.h.b16 %v1111
        %v5664 = vunpack.c.l.b16 %v1112
        %v5665 = vunpack.c.h.b16 %v1112
        %v5666 = vunpack.c.l.b16 %v1113
        %v5667 = vunpack.c.h.b16 %v1113
        %v5668 = vunpack.c.l.b16 %v1114
        %v5669 = vunpack.c.h.b16 %v1114
        %v5670 = vunpack.c.l.b16 %v1115
        %v5671 = vunpack.c.h.b16 %v1115
        %v5672 = vunpack.c.l.b16 %v1116
        %v5673 = vunpack.c.h.b16 %v1116
        %v5674 = vunpack.c.l.b16 %v1117
        %v5675 = vunpack.c.h.b16 %v1117
        %v5676 = vunpack.c.l.b16 %v1118
        %v5677 = vunpack.c.h.b16 %v1118
        %v5678 = vunpack.c.l.b16 %v1119
        %v5679 = vunpack.c.h.b16 %v1119
        %v5680 = vunpack.c.l.b16 %v1120
        %v5681 = vunpack.c.h.b16 %v1120
        %v5682 = vunpack.c.l.b16 %v1121
        %v5683 = vunpack.c.h.b16 %v1121
        %v5684 = vunpack.c.l.b16 %v1122
        %v5685 = vunpack.c.h.b16 %v1122
        %v5686 = vunpack.c.l.b16 %v1123
        %v5687 = vunpack.c.h.b16 %v1123
        %v5688 = vunpack.c.l.b16 %v1124
        %v5689 = vunpack.c.h.b16 %v1124
        %v5690 = vunpack.c.l.b16 %v1125
        %v5691 = vunpack.c.h.b16 %v1125
        %v5692 = vunpack.c.l.b16 %v1126
        %v5693 = vunpack.c.h.b16 %v1126
        %v5694 = vunpack.c.l.b16 %v1127
        %v5695 = vunpack.c.h.b16 %v1127
        %v5696 = vunpack.c.l.b16 %v1128
        %v5697 = vunpack.c.h.b16 %v1128
        %v5698 = vunpack.c.l.b16 %v1129
        %v5699 = vunpack.c.h.b16 %v1129
        %v5700 = vunpack.c.l.b16 %v1130
        %v5701 = vunpack.c.h.b16 %v1130
        %v5702 = vunpack.c.l.b16 %v1131
        %v5703 = vunpack.c.h.b16 %v1131
        %v5704 = vunpack.c.l.b16 %v1132
        %v5705 = vunpack.c.h.b16 %v1132
        %v5706 = vunpack.c.l.b16 %v1133
        %v5707 = vunpack.c.h.b16 %v1133
        %v5708 = vunpack.c.l.b16 %v1134
        %v5709 = vunpack.c.h.b16 %v1134
        %v5710 = vunpack.c.l.b16 %v1135
        %v5711 = vunpack.c.h.b16 %v1135
        %v5712 = vunpack.c.l.b16 %v1136
        %v5713 = vunpack.c.h.b16 %v1136
        %v5714 = vunpack.c.l.b16 %v1137
        %v5715 = vunpack.c.h.b16 %v1137
        %v5716 = vunpack.c.l.b16 %v1138
        %v5717 = vunpack.c.h.b16 %v1138
        %v5718 = vunpack.c.l.b16 %v1139
        %v5719 = vunpack.c.h.b16 %v1139
        %v5720 = vunpack.c.l.b16 %v1140
        %v5721 = vunpack.c.h.b16 %v1140
        %v5722 = vunpack.c.l.b16 %v1141
        %v5723 = vunpack.c.h.b16 %v1141
        %v5724 = vunpack.c.l.b16 %v1142
        %v5725 = vunpack.c.h.b16 %v1142
        %v5726 = vunpack.c.l.b16 %v1143
        %v5727 = vunpack.c.h.b16 %v1143
        %v5728 = vunpack.c.l.b16 %v1144
        %v5729 = vunpack.c.h.b16 %v1144
        %v5730 = vunpack.c.l.b16 %v1145
        %v5731 = vunpack.c.h.b16 %v1145
        %v5732 = vunpack.c.l.b16 %v1146
        %v5733 = vunpack.c.h.b16 %v1146
        %v5734 = vunpack.c.l.b16 %v1147
        %v5735 = vunpack.c.h.b16 %v1147
        %v5736 = vunpack.c.l.b16 %v1148
        %v5737 = vunpack.c.h.b16 %v1148
        %v5738 = vunpack.c.l.b16 %v1149
        %v5739 = vunpack.c.h.b16 %v1149
        %v5740 = vunpack.c.l.b16 %v1150
        %v5741 = vunpack.c.h.b16 %v1150
        %v5742 = vunpack.c.l.b16 %v1151
        %v5743 = vunpack.c.h.b16 %v1151
        %v5744 = vunpack.c.l.b16 %v1152
        %v5745 = vunpack.c.h.b16 %v1152
        %v5746 = vunpack.c.l.b16 %v1153
        %v5747 = vunpack.c.h.b16 %v1153
        %v5748 = vunpack.c.l.b16 %v1154
        %v5749 = vunpack.c.h.b16 %v1154
        %v5750 = vunpack.c.l.b16 %v1155
        %v5751 = vunpack.c.h.b16 %v1155
        %v5752 = vunpack.c.l.b16 %v1156
        %v5753 = vunpack.c.h.b16 %v1156
        %v5754 = vunpack.c.l.b16 %v1157
        %v5755 = vunpack.c.h.b16 %v1157
        %v5756 = vunpack.c.l.b16 %v1158
        %v5757 = vunpack.c.h.b16 %v1158
        %v5758 = vunpack.c.l.b16 %v1159
        %v5759 = vunpack.c.h.b16 %v1159
        %v5760 = vunpack.c.l.b16 %v1160
        %v5761 = vunpack.c.h.b16 %v1160
        %v5762 = vunpack.c.l.b16 %v1161
        %v5763 = vunpack.c.h.b16 %v1161
        %v5764 = vunpack.c.l.b16 %v1162
        %v5765 = vunpack.c.h.b16 %v1162
        %v5766 = vunpack.c.l.b16 %v1163
        %v5767 = vunpack.c.h.b16 %v1163
        %v5768 = vunpack.c.l.b16 %v1164
        %v5769 = vunpack.c.h.b16 %v1164
        %v5770 = vunpack.c.l.b16 %v1165
        %v5771 = vunpack.c.h.b16 %v1165
        %v5772 = vunpack.c.l.b16 %v1166
        %v5773 = vunpack.c.h.b16 %v1166
        %v5774 = vunpack.c.l.b16 %v1167
        %v5775 = vunpack.c.h.b16 %v1167
        %v5776 = vunpack.c.l.b16 %v1168
        %v5777 = vunpack.c.h.b16 %v1168
        %v5778 = vunpack.c.l.b16 %v1169
        %v5779 = vunpack.c.h.b16 %v1169
        %v5780 = vunpack.c.l.b16 %v1170
        %v5781 = vunpack.c.h.b16 %v1170
        %v5782 = vunpack.c.l.b16 %v1171
        %v5783 = vunpack.c.h.b16 %v1171
        %v5784 = vunpack.c.l.b16 %v1172
        %v5785 = vunpack.c.h.b16 %v1172
        %v5786 = vunpack.c.l.b16 %v1173
        %v5787 = vunpack.c.h.b16 %v1173
        %v5788 = vunpack.c.l.b16 %v1174
        %v5789 = vunpack.c.h.b16 %v1174
        %v5790 = vunpack.c.l.b16 %v1175
        %v5791 = vunpack.c.h.b16 %v1175
        %v5792 = vunpack.c.l.b16 %v1176
        %v5793 = vunpack.c.h.b16 %v1176
        %v5794 = vunpack.c.l.b16 %v1177
        %v5795 = vunpack.c.h.b16 %v1177
        %v5796 = vunpack.c.l.b16 %v1178
        %v5797 = vunpack.c.h.b16 %v1178
        %v5798 = vunpack.c.l.b16 %v1179
        %v5799 = vunpack.c.h.b16 %v1179
        %v5800 = vunpack.c.l.b16 %v1180
        %v5801 = vunpack.c.h.b16 %v1180
        %v5802 = vunpack.c.l.b16 %v1181
        %v5803 = vunpack.c.h.b16 %v1181
        %v5804 = vunpack.c.l.b16 %v1182
        %v5805 = vunpack.c.h.b16 %v1182
        %v5806 = vunpack.c.l.b16 %v1183
        %v5807 = vunpack.c.h.b16 %v1183
        %v5808 = vunpack.c.l.b16 %v1184
        %v5809 = vunpack.c.h.b16 %v1184
        %v5810 = vunpack.c.l.b16 %v1185
        %v5811 = vunpack.c.h.b16 %v1185
        %v5812 = vunpack.c.l.b16 %v1186
        %v5813 = vunpack.c.h.b16 %v1186
        %v5814 = vunpack.c.l.b16 %v1187
        %v5815 = vunpack.c.h.b16 %v1187
        %v5816 = vunpack.c.l.b16 %v1188
        %v5817 = vunpack.c.h.b16 %v1188
        %v5818 = vunpack.c.l.b16 %v1189
        %v5819 = vunpack.c.h.b16 %v1189
        %v5820 = vunpack.c.l.b16 %v1190
        %v5821 = vunpack.c.h.b16 %v1190
        %v5822 = vunpack.c.l.b16 %v1191
        %v5823 = vunpack.c.h.b16 %v1191
        %v5824 = vunpack.c.l.b16 %v1192
        %v5825 = vunpack.c.h.b16 %v1192
        %v5826 = vunpack.c.l.b16 %v1193
        %v5827 = vunpack.c.h.b16 %v1193
        %v5828 = vunpack.c.l.b16 %v1194
        %v5829 = vunpack.c.h.b16 %v1194
        %v5830 = vunpack.c.l.b16 %v1195
        %v5831 = vunpack.c.h.b16 %v1195
        %v5832 = vunpack.c.l.b16 %v1196
        %v5833 = vunpack.c.h.b16 %v1196
        %v5834 = vunpack.c.l.b16 %v1197
        %v5835 = vunpack.c.h.b16 %v1197
        %v5836 = vunpack.c.l.b16 %v1198
        %v5837 = vunpack.c.h.b16 %v1198
        %v5838 = vunpack.c.l.b16 %v1199
        %v5839 = vunpack.c.h.b16 %v1199
        %v5840 = vunpack.c.l.b16 %v1200
        %v5841 = vunpack.c.h.b16 %v1200
        %v5842 = vunpack.c.l.b16 %v1201
        %v5843 = vunpack.c.h.b16 %v1201
        %v5844 = vunpack.c.l.b16 %v1202
        %v5845 = vunpack.c.h.b16 %v1202
        %v5846 = vunpack.c.l.b16 %v1203
        %v5847 = vunpack.c.h.b16 %v1203
        %v5848 = vunpack.c.l.b16 %v1204
        %v5849 = vunpack.c.h.b16 %v1204
        %v5850 = vunpack.c.l.b16 %v1205
        %v5851 = vunpack.c.h.b16 %v1205
        %v5852 = vunpack.c.l.b16 %v1206
        %v5853 = vunpack.c.h.b16 %v1206
        %v5854 = vunpack.c.l.b16 %v1207
        %v5855 = vunpack.c.h.b16 %v1207
        %v5856 = vunpack.c.l.b16 %v1208
        %v5857 = vunpack.c.h.b16 %v1208
        %v5858 = vunpack.c.l.b16 %v1209
        %v5859 = vunpack.c.h.b16 %v1209
        %v5860 = vunpack.c.l.b16 %v1210
        %v5861 = vunpack.c.h.b16 %v1210
        %v5862 = vunpack.c.l.b16 %v1211
        %v5863 = vunpack.c.h.b16 %v1211
        %v5864 = vunpack.c.l.b16 %v1212
        %v5865 = vunpack.c.h.b16 %v1212
        %v5866 = vunpack.c.l.b16 %v1213
        %v5867 = vunpack.c.h.b16 %v1213
        %v5868 = vunpack.c.l.b16 %v1214
        %v5869 = vunpack.c.h.b16 %v1214
        %v5870 = vunpack.c.l.b16 %v1215
        %v5871 = vunpack.c.h.b16 %v1215
        %v5872 = vunpack.c.l.b16 %v1216
        %v5873 = vunpack.c.h.b16 %v1216
        %v5874 = vunpack.c.l.b16 %v1217
        %v5875 = vunpack.c.h.b16 %v1217
        %v5876 = vunpack.c.l.b16 %v1218
        %v5877 = vunpack.c.h.b16 %v1218
        %v5878 = vunpack.c.l.b16 %v1219
        %v5879 = vunpack.c.h.b16 %v1219
        %v5880 = vunpack.c.l.b16 %v1220
        %v5881 = vunpack.c.h.b16 %v1220
        %v5882 = vunpack.c.l.b16 %v1221
        %v5883 = vunpack.c.h.b16 %v1221
        %v5884 = vunpack.c.l.b16 %v1222
        %v5885 = vunpack.c.h.b16 %v1222
        %v5886 = vunpack.c.l.b16 %v1223
        %v5887 = vunpack.c.h.b16 %v1223
        %v5888 = vunpack.c.l.b16 %v1224
        %v5889 = vunpack.c.h.b16 %v1224
        %v5890 = vunpack.c.l.b16 %v1225
        %v5891 = vunpack.c.h.b16 %v1225
        %v5892 = vunpack.c.l.b16 %v1226
        %v5893 = vunpack.c.h.b16 %v1226
        %v5894 = vunpack.c.l.b16 %v1227
        %v5895 = vunpack.c.h.b16 %v1227
        %v5896 = vunpack.c.l.b16 %v1228
        %v5897 = vunpack.c.h.b16 %v1228
        %v5898 = vunpack.c.l.b16 %v1229
        %v5899 = vunpack.c.h.b16 %v1229
        %v5900 = vunpack.c.l.b16 %v1230
        %v5901 = vunpack.c.h.b16 %v1230
        %v5902 = vunpack.c.l.b16 %v1231
        %v5903 = vunpack.c.h.b16 %v1231
        %v5904 = vunpack.c.l.b16 %v1232
        %v5905 = vunpack.c.h.b16 %v1232
        %v5906 = vunpack.c.l.b16 %v1233
        %v5907 = vunpack.c.h.b16 %v1233
        %v5908 = vunpack.c.l.b16 %v1234
        %v5909 = vunpack.c.h.b16 %v1234
        %v5910 = vunpack.c.l.b16 %v1235
        %v5911 = vunpack.c.h.b16 %v1235
        %v5912 = vunpack.c.l.b16 %v1236
        %v5913 = vunpack.c.h.b16 %v1236
        %v5914 = vunpack.c.l.b16 %v1237
        %v5915 = vunpack.c.h.b16 %v1237
        %v5916 = vunpack.c.l.b16 %v1238
        %v5917 = vunpack.c.h.b16 %v1238
        %v5918 = vunpack.c.l.b16 %v1239
        %v5919 = vunpack.c.h.b16 %v1239
        %v5920 = vunpack.c.l.b16 %v1240
        %v5921 = vunpack.c.h.b16 %v1240
        %v5922 = vunpack.c.l.b16 %v1241
        %v5923 = vunpack.c.h.b16 %v1241
        %v5924 = vunpack.c.l.b16 %v1242
        %v5925 = vunpack.c.h.b16 %v1242
        %v5926 = vunpack.c.l.b16 %v1243
        %v5927 = vunpack.c.h.b16 %v1243
        %v5928 = vunpack.c.l.b16 %v1244
        %v5929 = vunpack.c.h.b16 %v1244
        %v5930 = vunpack.c.l.b16 %v1245
        %v5931 = vunpack.c.h.b16 %v1245
        %v5932 = vunpack.c.l.b16 %v1246
        %v5933 = vunpack.c.h.b16 %v1246
        %v5934 = vunpack.c.l.b16 %v1247
        %v5935 = vunpack.c.h.b16 %v1247
        %v5936 = vunpack.c.l.b16 %v1248
        %v5937 = vunpack.c.h.b16 %v1248
        %v5938 = vunpack.c.l.b16 %v1249
        %v5939 = vunpack.c.h.b16 %v1249
        %v5940 = vunpack.c.l.b16 %v1250
        %v5941 = vunpack.c.h.b16 %v1250
        %v5942 = vunpack.c.l.b16 %v1251
        %v5943 = vunpack.c.h.b16 %v1251
        %v5944 = vunpack.c.l.b16 %v1252
        %v5945 = vunpack.c.h.b16 %v1252
        %v5946 = vunpack.c.l.b16 %v1253
        %v5947 = vunpack.c.h.b16 %v1253
        %v5948 = vunpack.c.l.b16 %v1254
        %v5949 = vunpack.c.h.b16 %v1254
        %v5950 = vunpack.c.l.b16 %v1255
        %v5951 = vunpack.c.h.b16 %v1255
        %v5952 = vunpack.c.l.b16 %v1256
        %v5953 = vunpack.c.h.b16 %v1256
        %v5954 = vunpack.c.l.b16 %v1257
        %v5955 = vunpack.c.h.b16 %v1257
        %v5956 = vunpack.c.l.b16 %v1258
        %v5957 = vunpack.c.h.b16 %v1258
        %v5958 = vunpack.c.l.b16 %v1259
        %v5959 = vunpack.c.h.b16 %v1259
        %v5960 = vunpack.c.l.b16 %v1260
        %v5961 = vunpack.c.h.b16 %v1260
        %v5962 = vunpack.c.l.b16 %v1261
        %v5963 = vunpack.c.h.b16 %v1261
        %v5964 = vunpack.c.l.b16 %v1262
        %v5965 = vunpack.c.h.b16 %v1262
        %v5966 = vunpack.c.l.b16 %v1263
        %v5967 = vunpack.c.h.b16 %v1263
        %v5968 = vunpack.c.l.b16 %v1264
        %v5969 = vunpack.c.h.b16 %v1264
        %v5970 = vunpack.c.l.b16 %v1265
        %v5971 = vunpack.c.h.b16 %v1265
        %v5972 = vunpack.c.l.b16 %v1266
        %v5973 = vunpack.c.h.b16 %v1266
        %v5974 = vunpack.c.l.b16 %v1267
        %v5975 = vunpack.c.h.b16 %v1267
        %v5976 = vunpack.c.l.b16 %v1268
        %v5977 = vunpack.c.h.b16 %v1268
        %v5978 = vunpack.c.l.b16 %v1269
        %v5979 = vunpack.c.h.b16 %v1269
        %v5980 = vunpack.c.l.b16 %v1270
        %v5981 = vunpack.c.h.b16 %v1270
        %v5982 = vunpack.c.l.b16 %v1271
        %v5983 = vunpack.c.h.b16 %v1271
        %v5984 = vunpack.c.l.b16 %v1272
        %v5985 = vunpack.c.h.b16 %v1272
        %v5986 = vunpack.c.l.b16 %v1273
        %v5987 = vunpack.c.h.b16 %v1273
        %v5988 = vunpack.c.l.b16 %v1274
        %v5989 = vunpack.c.h.b16 %v1274
        %v5990 = vunpack.c.l.b16 %v1275
        %v5991 = vunpack.c.h.b16 %v1275
        %v5992 = vunpack.c.l.b16 %v1276
        %v5993 = vunpack.c.h.b16 %v1276
        %v5994 = vunpack.c.l.b16 %v1277
        %v5995 = vunpack.c.h.b16 %v1277
        %v5996 = vunpack.c.l.b16 %v1278
        %v5997 = vunpack.c.h.b16 %v1278
        %v5998 = vunpack.c.l.b16 %v1279
        %v5999 = vunpack.c.h.b16 %v1279
        %v6000 = vunpack.c.l.b16 %v1280
        %v6001 = vunpack.c.h.b16 %v1280
        %v6002 = vunpack.c.l.b16 %v1281
        %v6003 = vunpack.c.h.b16 %v1281
        %v6004 = vunpack.c.l.b16 %v1282
        %v6005 = vunpack.c.h.b16 %v1282
        %v6006 = vunpack.c.l.b16 %v1283
        %v6007 = vunpack.c.h.b16 %v1283
        %v6008 = vunpack.c.l.b16 %v1284
        %v6009 = vunpack.c.h.b16 %v1284
        %v6010 = vunpack.c.l.b16 %v1285
        %v6011 = vunpack.c.h.b16 %v1285
        %v6012 = vunpack.c.l.b16 %v1286
        %v6013 = vunpack.c.h.b16 %v1286
        %v6014 = vunpack.c.l.b16 %v1287
        %v6015 = vunpack.c.h.b16 %v1287
        %v6016 = vunpack.c.l.b16 %v1288
        %v6017 = vunpack.c.h.b16 %v1288
        %v6018 = vunpack.c.l.b16 %v1289
        %v6019 = vunpack.c.h.b16 %v1289
        %v6020 = vunpack.c.l.b16 %v1290
        %v6021 = vunpack.c.h.b16 %v1290
        %v6022 = vunpack.c.l.b16 %v1291
        %v6023 = vunpack.c.h.b16 %v1291
        %v6024 = vunpack.c.l.b16 %v1292
        %v6025 = vunpack.c.h.b16 %v1292
        %v6026 = vunpack.c.l.b16 %v1293
        %v6027 = vunpack.c.h.b16 %v1293
        %v6028 = vunpack.c.l.b16 %v1294
        %v6029 = vunpack.c.h.b16 %v1294
        %v6030 = vunpack.c.l.b16 %v1295
        %v6031 = vunpack.c.h.b16 %v1295
        %v6032 = vunpack.c.l.b16 %v1296
        %v6033 = vunpack.c.h.b16 %v1296
        %v6034 = vunpack.c.l.b16 %v1297
        %v6035 = vunpack.c.h.b16 %v1297
        %v6036 = vunpack.c.l.b16 %v1298
        %v6037 = vunpack.c.h.b16 %v1298
        %v6038 = vunpack.c.l.b16 %v1299
        %v6039 = vunpack.c.h.b16 %v1299
        %v6040 = vunpack.c.l.b16 %v1300
        %v6041 = vunpack.c.h.b16 %v1300
        %v6042 = vunpack.c.l.b16 %v1301
        %v6043 = vunpack.c.h.b16 %v1301
        %v6044 = vunpack.c.l.b16 %v1302
        %v6045 = vunpack.c.h.b16 %v1302
        %v6046 = vunpack.c.l.b16 %v1303
        %v6047 = vunpack.c.h.b16 %v1303
        %v6048 = vunpack.c.l.b16 %v1304
        %v6049 = vunpack.c.h.b16 %v1304
        %v6050 = vunpack.c.l.b16 %v1305
        %v6051 = vunpack.c.h.b16 %v1305
        %v6052 = vunpack.c.l.b16 %v1306
        %v6053 = vunpack.c.h.b16 %v1306
        %v6054 = vunpack.c.l.b16 %v1307
        %v6055 = vunpack.c.h.b16 %v1307
        %v6056 = vunpack.c.l.b16 %v1308
        %v6057 = vunpack.c.h.b16 %v1308
        %v6058 = vunpack.c.l.b16 %v1309
        %v6059 = vunpack.c.h.b16 %v1309
        %v6060 = vunpack.c.l.b16 %v1310
        %v6061 = vunpack.c.h.b16 %v1310
        %v6062 = vunpack.c.l.b16 %v1311
        %v6063 = vunpack.c.h.b16 %v1311
        %v6064 = vunpack.c.l.b16 %v1312
        %v6065 = vunpack.c.h.b16 %v1312
        %v6066 = vunpack.c.l.b16 %v1313
        %v6067 = vunpack.c.h.b16 %v1313
        %v6068 = vunpack.c.l.b16 %v1314
        %v6069 = vunpack.c.h.b16 %v1314
        %v6070 = vunpack.c.l.b16 %v1315
        %v6071 = vunpack.c.h.b16 %v1315
        %v6072 = vunpack.c.l.b16 %v1316
        %v6073 = vunpack.c.h.b16 %v1316
        %v6074 = vunpack.c.l.b16 %v1317
        %v6075 = vunpack.c.h.b16 %v1317
        %v6076 = vunpack.c.l.b16 %v1318
        %v6077 = vunpack.c.h.b16 %v1318
        %v6078 = vunpack.c.l.b16 %v1319
        %v6079 = vunpack.c.h.b16 %v1319
        %v6080 = vunpack.c.l.b16 %v1320
        %v6081 = vunpack.c.h.b16 %v1320
        %v6082 = vunpack.c.l.b16 %v1321
        %v6083 = vunpack.c.h.b16 %v1321
        %v6084 = vunpack.c.l.b16 %v1322
        %v6085 = vunpack.c.h.b16 %v1322
        %v6086 = vunpack.c.l.b16 %v1323
        %v6087 = vunpack.c.h.b16 %v1323
        %v6088 = vunpack.c.l.b16 %v1324
        %v6089 = vunpack.c.h.b16 %v1324
        %v6090 = vunpack.c.l.b16 %v1325
        %v6091 = vunpack.c.h.b16 %v1325
        %v6092 = vunpack.c.l.b16 %v1326
        %v6093 = vunpack.c.h.b16 %v1326
        %v6094 = vunpack.c.l.b16 %v1327
        %v6095 = vunpack.c.h.b16 %v1327
        %v6096 = vunpack.c.l.b16 %v1328
        %v6097 = vunpack.c.h.b16 %v1328
        %v6098 = vunpack.c.l.b16 %v1329
        %v6099 = vunpack.c.h.b16 %v1329
        %v6100 = vunpack.c.l.b16 %v1330
        %v6101 = vunpack.c.h.b16 %v1330
        %v6102 = vunpack.c.l.b16 %v1331
        %v6103 = vunpack.c.h.b16 %v1331
        %v6104 = vunpack.c.l.b16 %v1332
        %v6105 = vunpack.c.h.b16 %v1332
        %v6106 = vunpack.c.l.b16 %v1333
        %v6107 = vunpack.c.h.b16 %v1333
        %v6108 = vunpack.c.l.b16 %v1334
        %v6109 = vunpack.c.h.b16 %v1334
        %v6110 = vunpack.c.l.b16 %v1335
        %v6111 = vunpack.c.h.b16 %v1335
        %v6112 = vunpack.c.l.b16 %v1336
        %v6113 = vunpack.c.h.b16 %v1336
        %v6114 = vunpack.c.l.b16 %v1337
        %v6115 = vunpack.c.h.b16 %v1337
        %v6116 = vunpack.c.l.b16 %v1338
        %v6117 = vunpack.c.h.b16 %v1338
        %v6118 = vunpack.c.l.b16 %v1339
        %v6119 = vunpack.c.h.b16 %v1339
        %v6120 = vunpack.c.l.b16 %v1340
        %v6121 = vunpack.c.h.b16 %v1340
        %v6122 = vunpack.c.l.b16 %v1341
        %v6123 = vunpack.c.h.b16 %v1341
        %v6124 = vunpack.c.l.b16 %v1342
        %v6125 = vunpack.c.h.b16 %v1342
        %v6126 = vunpack.c.l.b16 %v1343
        %v6127 = vunpack.c.h.b16 %v1343
        %v6128 = vunpack.c.l.b16 %v1344
        %v6129 = vunpack.c.h.b16 %v1344
        %v6130 = vunpack.c.l.b16 %v1345
        %v6131 = vunpack.c.h.b16 %v1345
        %v6132 = vunpack.c.l.b16 %v1346
        %v6133 = vunpack.c.h.b16 %v1346
        %v6134 = vunpack.c.l.b16 %v1347
        %v6135 = vunpack.c.h.b16 %v1347
        %v6136 = vunpack.c.l.b16 %v1348
        %v6137 = vunpack.c.h.b16 %v1348
        %v6138 = vunpack.c.l.b16 %v1349
        %v6139 = vunpack.c.h.b16 %v1349
        %v6140 = vunpack.c.l.b16 %v1350
        %v6141 = vunpack.c.h.b16 %v1350
        %v6142 = vunpack.c.l.b16 %v1351
        %v6143 = vunpack.c.h.b16 %v1351
        %v6144 = vunpack.c.l.b16 %v1352
        %v6145 = vunpack.c.h.b16 %v1352
        %v6146 = vunpack.c.l.b16 %v1353
        %v6147 = vunpack.c.h.b16 %v1353
        %v6148 = vunpack.c.l.b16 %v1354
        %v6149 = vunpack.c.h.b16 %v1354
        %v6150 = vunpack.c.l.b16 %v1355
        %v6151 = vunpack.c.h.b16 %v1355
        %v6152 = vunpack.c.l.b16 %v1356
        %v6153 = vunpack.c.h.b16 %v1356
        %v6154 = vunpack.c.l.b16 %v1357
        %v6155 = vunpack.c.h.b16 %v1357
        %v6156 = vunpack.c.l.b16 %v1358
        %v6157 = vunpack.c.h.b16 %v1358
        %v6158 = vunpack.c.l.b16 %v1359
        %v6159 = vunpack.c.h.b16 %v1359
        %v6160 = vunpack.c.l.b16 %v1360
        %v6161 = vunpack.c.h.b16 %v1360
        %v6162 = vunpack.c.l.b16 %v1361
        %v6163 = vunpack.c.h.b16 %v1361
        %v6164 = vunpack.c.l.b16 %v1362
        %v6165 = vunpack.c.h.b16 %v1362
        %v6166 = vunpack.c.l.b16 %v1363
        %v6167 = vunpack.c.h.b16 %v1363
        %v6168 = vunpack.c.l.b16 %v1364
        %v6169 = vunpack.c.h.b16 %v1364
        %v6170 = vunpack.c.l.b16 %v1365
        %v6171 = vunpack.c.h.b16 %v1365
        %v6172 = vunpack.c.l.b16 %v1366
        %v6173 = vunpack.c.h.b16 %v1366
        %v6174 = vunpack.c.l.b16 %v1367
        %v6175 = vunpack.c.h.b16 %v1367
        %v6176 = vunpack.c.l.b16 %v1368
        %v6177 = vunpack.c.h.b16 %v1368
        %v6178 = vunpack.c.l.b16 %v1369
        %v6179 = vunpack.c.h.b16 %v1369
        %v6180 = vunpack.c.l.b16 %v1370
        %v6181 = vunpack.c.h.b16 %v1370
        %v6182 = vunpack.c.l.b16 %v1371
        %v6183 = vunpack.c.h.b16 %v1371
        %v6184 = vunpack.c.l.b16 %v1372
        %v6185 = vunpack.c.h.b16 %v1372
        %v6186 = vunpack.c.l.b16 %v1373
        %v6187 = vunpack.c.h.b16 %v1373
        %v6188 = vunpack.c.l.b16 %v1374
        %v6189 = vunpack.c.h.b16 %v1374
        %v6190 = vunpack.c.l.b16 %v1375
        %v6191 = vunpack.c.h.b16 %v1375
        %v6192 = vunpack.c.l.b16 %v1376
        %v6193 = vunpack.c.h.b16 %v1376
        %v6194 = vunpack.c.l.b16 %v1377
        %v6195 = vunpack.c.h.b16 %v1377
        %v6196 = vunpack.c.l.b16 %v1378
        %v6197 = vunpack.c.h.b16 %v1378
        %v6198 = vunpack.c.l.b16 %v1379
        %v6199 = vunpack.c.h.b16 %v1379
        %v6200 = vunpack.c.l.b16 %v1380
        %v6201 = vunpack.c.h.b16 %v1380
        %v6202 = vunpack.c.l.b16 %v1381
        %v6203 = vunpack.c.h.b16 %v1381
        %v6204 = vunpack.c.l.b16 %v1382
        %v6205 = vunpack.c.h.b16 %v1382
        %v6206 = vunpack.c.l.b16 %v1383
        %v6207 = vunpack.c.h.b16 %v1383
        %v6208 = vunpack.c.l.b16 %v1384
        %v6209 = vunpack.c.h.b16 %v1384
        %v6210 = vunpack.c.l.b16 %v1385
        %v6211 = vunpack.c.h.b16 %v1385
        %v6212 = vunpack.c.l.b16 %v1386
        %v6213 = vunpack.c.h.b16 %v1386
        %v6214 = vunpack.c.l.b16 %v1387
        %v6215 = vunpack.c.h.b16 %v1387
        %v6216 = vunpack.c.l.b16 %v1388
        %v6217 = vunpack.c.h.b16 %v1388
        %v6218 = vunpack.c.l.b16 %v1389
        %v6219 = vunpack.c.h.b16 %v1389
        %v6220 = vunpack.c.l.b16 %v1390
        %v6221 = vunpack.c.h.b16 %v1390
        %v6222 = vunpack.c.l.b16 %v1391
        %v6223 = vunpack.c.h.b16 %v1391
        %v6224 = vunpack.c.l.b16 %v1392
        %v6225 = vunpack.c.h.b16 %v1392
        %v6226 = vunpack.c.l.b16 %v1393
        %v6227 = vunpack.c.h.b16 %v1393
        %v6228 = vunpack.c.l.b16 %v1394
        %v6229 = vunpack.c.h.b16 %v1394
        %v6230 = vunpack.c.l.b16 %v1395
        %v6231 = vunpack.c.h.b16 %v1395
        %v6232 = vunpack.c.l.b16 %v1396
        %v6233 = vunpack.c.h.b16 %v1396
        %v6234 = vunpack.c.l.b16 %v1397
        %v6235 = vunpack.c.h.b16 %v1397
        %v6236 = vunpack.c.l.b16 %v1398
        %v6237 = vunpack.c.h.b16 %v1398
        %v6238 = vunpack.c.l.b16 %v1399
        %v6239 = vunpack.c.h.b16 %v1399
        %v6240 = vunpack.c.l.b16 %v1400
        %v6241 = vunpack.c.h.b16 %v1400
        %v6242 = vunpack.c.l.b16 %v1401
        %v6243 = vunpack.c.h.b16 %v1401
        %v6244 = vunpack.c.l.b16 %v1402
        %v6245 = vunpack.c.h.b16 %v1402
        %v6246 = vunpack.c.l.b16 %v1403
        %v6247 = vunpack.c.h.b16 %v1403
        %v6248 = vunpack.c.l.b16 %v1404
        %v6249 = vunpack.c.h.b16 %v1404
        %v6250 = vunpack.c.l.b16 %v1405
        %v6251 = vunpack.c.h.b16 %v1405
        %v6252 = vunpack.c.l.b16 %v1406
        %v6253 = vunpack.c.h.b16 %v1406
        %v6254 = vunpack.c.l.b16 %v1407
        %v6255 = vunpack.c.h.b16 %v1407
        %v6256 = vunpack.c.l.b16 %v1408
        %v6257 = vunpack.c.h.b16 %v1408
        %v6258 = vunpack.c.l.b16 %v1409
        %v6259 = vunpack.c.h.b16 %v1409
        %v6260 = vunpack.c.l.b16 %v1410
        %v6261 = vunpack.c.h.b16 %v1410
        %v6262 = vunpack.c.l.b16 %v1411
        %v6263 = vunpack.c.h.b16 %v1411
        %v6264 = vunpack.c.l.b16 %v1412
        %v6265 = vunpack.c.h.b16 %v1412
        %v6266 = vunpack.c.l.b16 %v1413
        %v6267 = vunpack.c.h.b16 %v1413
        %v6268 = vunpack.c.l.b16 %v1414
        %v6269 = vunpack.c.h.b16 %v1414
        %v6270 = vunpack.c.l.b16 %v1415
        %v6271 = vunpack.c.h.b16 %v1415
        %v6272 = vunpack.c.l.b16 %v1416
        %v6273 = vunpack.c.h.b16 %v1416
        %v6274 = vunpack.c.l.b16 %v1417
        %v6275 = vunpack.c.h.b16 %v1417
        %v6276 = vunpack.c.l.b16 %v1418
        %v6277 = vunpack.c.h.b16 %v1418
        %v6278 = vunpack.c.l.b16 %v1419
        %v6279 = vunpack.c.h.b16 %v1419
        %v6280 = vunpack.c.l.b16 %v1420
        %v6281 = vunpack.c.h.b16 %v1420
        %v6282 = vunpack.c.l.b16 %v1421
        %v6283 = vunpack.c.h.b16 %v1421
        %v6284 = vunpack.c.l.b16 %v1422
        %v6285 = vunpack.c.h.b16 %v1422
        %v6286 = vunpack.c.l.b16 %v1423
        %v6287 = vunpack.c.h.b16 %v1423
        %v6288 = vunpack.c.l.b16 %v1424
        %v6289 = vunpack.c.h.b16 %v1424
        %v6290 = vunpack.c.l.b16 %v1425
        %v6291 = vunpack.c.h.b16 %v1425
        %v6292 = vunpack.c.l.b16 %v1426
        %v6293 = vunpack.c.h.b16 %v1426
        %v6294 = vunpack.c.l.b16 %v1427
        %v6295 = vunpack.c.h.b16 %v1427
        %v6296 = vunpack.c.l.b16 %v1428
        %v6297 = vunpack.c.h.b16 %v1428
        %v6298 = vunpack.c.l.b16 %v1429
        %v6299 = vunpack.c.h.b16 %v1429
        %v6300 = vunpack.c.l.b16 %v1430
        %v6301 = vunpack.c.h.b16 %v1430
        %v6302 = vunpack.c.l.b16 %v1431
        %v6303 = vunpack.c.h.b16 %v1431
        %v6304 = vunpack.c.l.b16 %v1432
        %v6305 = vunpack.c.h.b16 %v1432
        %v6306 = vunpack.c.l.b16 %v1433
        %v6307 = vunpack.c.h.b16 %v1433
        %v6308 = vunpack.c.l.b16 %v1434
        %v6309 = vunpack.c.h.b16 %v1434
        %v6310 = vunpack.c.l.b16 %v1435
        %v6311 = vunpack.c.h.b16 %v1435
        %v6312 = vunpack.c.l.b16 %v1436
        %v6313 = vunpack.c.h.b16 %v1436
        %v6314 = vunpack.c.l.b16 %v1437
        %v6315 = vunpack.c.h.b16 %v1437
        %v6316 = vunpack.c.l.b16 %v1438
        %v6317 = vunpack.c.h.b16 %v1438
        %v6318 = vunpack.c.l.b16 %v1439
        %v6319 = vunpack.c.h.b16 %v1439
        %v6320 = vunpack.c.l.b16 %v1440
        %v6321 = vunpack.c.h.b16 %v1440
        %v6322 = vunpack.c.l.b16 %v1441
        %v6323 = vunpack.c.h.b16 %v1441
        %v6324 = vunpack.c.l.b16 %v1442
        %v6325 = vunpack.c.h.b16 %v1442
        %v6326 = vunpack.c.l.b16 %v1443
        %v6327 = vunpack.c.h.b16 %v1443
        %v6328 = vunpack.c.l.b16 %v1444
        %v6329 = vunpack.c.h.b16 %v1444
        %v6330 = vunpack.c.l.b16 %v1445
        %v6331 = vunpack.c.h.b16 %v1445
        %v6332 = vunpack.c.l.b16 %v1446
        %v6333 = vunpack.c.h.b16 %v1446
        %v6334 = vunpack.c.l.b16 %v1447
        %v6335 = vunpack.c.h.b16 %v1447
        %v6336 = vunpack.c.l.b16 %v1448
        %v6337 = vunpack.c.h.b16 %v1448
        %v6338 = vunpack.c.l.b16 %v1449
        %v6339 = vunpack.c.h.b16 %v1449
        %v6340 = vunpack.c.l.b16 %v1450
        %v6341 = vunpack.c.h.b16 %v1450
        %v6342 = vunpack.c.l.b16 %v1451
        %v6343 = vunpack.c.h.b16 %v1451
        %v6344 = vunpack.c.l.b16 %v1452
        %v6345 = vunpack.c.h.b16 %v1452
        %v6346 = vunpack.c.l.b16 %v1453
        %v6347 = vunpack.c.h.b16 %v1453
        %v6348 = vunpack.c.l.b16 %v1454
        %v6349 = vunpack.c.h.b16 %v1454
        %v6350 = vunpack.c.l.b16 %v1455
        %v6351 = vunpack.c.h.b16 %v1455
        %v6352 = vunpack.c.l.b16 %v1456
        %v6353 = vunpack.c.h.b16 %v1456
        %v6354 = vunpack.c.l.b16 %v1457
        %v6355 = vunpack.c.h.b16 %v1457
        %v6356 = vunpack.c.l.b16 %v1458
        %v6357 = vunpack.c.h.b16 %v1458
        %v6358 = vunpack.c.l.b16 %v1459
        %v6359 = vunpack.c.h.b16 %v1459
        %v6360 = vunpack.c.l.b16 %v1460
        %v6361 = vunpack.c.h.b16 %v1460
        %v6362 = vunpack.c.l.b16 %v1461
        %v6363 = vunpack.c.h.b16 %v1461
        %v6364 = vunpack.c.l.b16 %v1462
        %v6365 = vunpack.c.h.b16 %v1462
        %v6366 = vunpack.c.l.b16 %v1463
        %v6367 = vunpack.c.h.b16 %v1463
        %v6368 = vunpack.c.l.b16 %v1464
        %v6369 = vunpack.c.h.b16 %v1464
        %v6370 = vunpack.c.l.b16 %v1465
        %v6371 = vunpack.c.h.b16 %v1465
        %v6372 = vunpack.c.l.b16 %v1466
        %v6373 = vunpack.c.h.b16 %v1466
        %v6374 = vunpack.c.l.b16 %v1467
        %v6375 = vunpack.c.h.b16 %v1467
        %v6376 = vunpack.c.l.b16 %v1468
        %v6377 = vunpack.c.h.b16 %v1468
        %v6378 = vunpack.c.l.b16 %v1469
        %v6379 = vunpack.c.h.b16 %v1469
        %v6380 = vunpack.c.l.b16 %v1470
        %v6381 = vunpack.c.h.b16 %v1470
        %v6382 = vunpack.c.l.b16 %v1471
        %v6383 = vunpack.c.h.b16 %v1471
        %v6384 = vunpack.c.l.b16 %v1472
        %v6385 = vunpack.c.h.b16 %v1472
        %v6386 = vunpack.c.l.b16 %v1473
        %v6387 = vunpack.c.h.b16 %v1473
        %v6388 = vunpack.c.l.b16 %v1474
        %v6389 = vunpack.c.h.b16 %v1474
        %v6390 = vunpack.c.l.b16 %v1475
        %v6391 = vunpack.c.h.b16 %v1475
        %v6392 = vunpack.c.l.b16 %v1476
        %v6393 = vunpack.c.h.b16 %v1476
        %v6394 = vunpack.c.l.b16 %v1477
        %v6395 = vunpack.c.h.b16 %v1477
        %v6396 = vunpack.c.l.b16 %v1478
        %v6397 = vunpack.c.h.b16 %v1478
        %v6398 = vunpack.c.l.b16 %v1479
        %v6399 = vunpack.c.h.b16 %v1479
        %v6400 = vunpack.c.l.b16 %v1480
        %v6401 = vunpack.c.h.b16 %v1480
        %v6402 = vunpack.c.l.b16 %v1481
        %v6403 = vunpack.c.h.b16 %v1481
        %v6404 = vunpack.c.l.b16 %v1482
        %v6405 = vunpack.c.h.b16 %v1482
        %v6406 = vunpack.c.l.b16 %v1483
        %v6407 = vunpack.c.h.b16 %v1483
        %v6408 = vunpack.c.l.b16 %v1484
        %v6409 = vunpack.c.h.b16 %v1484
        %v6410 = vunpack.c.l.b16 %v1485
        %v6411 = vunpack.c.h.b16 %v1485
        %v6412 = vunpack.c.l.b16 %v1486
        %v6413 = vunpack.c.h.b16 %v1486
        %v6414 = vunpack.c.l.b16 %v1487
        %v6415 = vunpack.c.h.b16 %v1487
        %v6416 = vunpack.c.l.b16 %v1488
        %v6417 = vunpack.c.h.b16 %v1488
        %v6418 = vunpack.c.l.b16 %v1489
        %v6419 = vunpack.c.h.b16 %v1489
        %v6420 = vunpack.c.l.b16 %v1490
        %v6421 = vunpack.c.h.b16 %v1490
        %v6422 = vunpack.c.l.b16 %v1491
        %v6423 = vunpack.c.h.b16 %v1491
        %v6424 = vunpack.c.l.b16 %v1492
        %v6425 = vunpack.c.h.b16 %v1492
        %v6426 = vunpack.c.l.b16 %v1493
        %v6427 = vunpack.c.h.b16 %v1493
        %v6428 = vunpack.c.l.b16 %v1494
        %v6429 = vunpack.c.h.b16 %v1494
        %v6430 = vunpack.c.l.b16 %v1495
        %v6431 = vunpack.c.h.b16 %v1495
        %v6432 = vunpack.c.l.b16 %v1496
        %v6433 = vunpack.c.h.b16 %v1496
        %v6434 = vunpack.c.l.b16 %v1497
        %v6435 = vunpack.c.h.b16 %v1497
        %v6436 = vunpack.c.l.b16 %v1498
        %v6437 = vunpack.c.h.b16 %v1498
        %v6438 = vunpack.c.l.b16 %v1499
        %v6439 = vunpack.c.h.b16 %v1499
        %v6440 = vunpack.c.l.b16 %v1500
        %v6441 = vunpack.c.h.b16 %v1500
        %v6442 = vunpack.c.l.b16 %v1501
        %v6443 = vunpack.c.h.b16 %v1501
        %v6444 = vunpack.c.l.b16 %v1502
        %v6445 = vunpack.c.h.b16 %v1502
        %v6446 = vunpack.c.l.b16 %v1503
        %v6447 = vunpack.c.h.b16 %v1503
        %v6448 = vunpack.c.l.b16 %v1504
        %v6449 = vunpack.c.h.b16 %v1504
        %v6450 = vunpack.c.l.b16 %v1505
        %v6451 = vunpack.c.h.b16 %v1505
        %v6452 = vunpack.c.l.b16 %v1506
        %v6453 = vunpack.c.h.b16 %v1506
        %v6454 = vunpack.c.l.b16 %v1507
        %v6455 = vunpack.c.h.b16 %v1507
        %v6456 = vunpack.c.l.b16 %v1508
        %v6457 = vunpack.c.h.b16 %v1508
        %v6458 = vunpack.c.l.b16 %v1509
        %v6459 = vunpack.c.h.b16 %v1509
        %v6460 = vunpack.c.l.b16 %v1510
        %v6461 = vunpack.c.h.b16 %v1510
        %v6462 = vunpack.c.l.b16 %v1511
        %v6463 = vunpack.c.h.b16 %v1511
        %v6464 = vunpack.c.l.b16 %v1512
        %v6465 = vunpack.c.h.b16 %v1512
        %v6466 = vunpack.c.l.b16 %v1513
        %v6467 = vunpack.c.h.b16 %v1513
        %v6468 = vunpack.c.l.b16 %v1514
        %v6469 = vunpack.c.h.b16 %v1514
        %v6470 = vunpack.c.l.b16 %v1515
        %v6471 = vunpack.c.h.b16 %v1515
        %v6472 = vunpack.c.l.b16 %v1516
        %v6473 = vunpack.c.h.b16 %v1516
        %v6474 = vunpack.c.l.b16 %v1517
        %v6475 = vunpack.c.h.b16 %v1517
        %v6476 = vunpack.c.l.b16 %v1518
        %v6477 = vunpack.c.h.b16 %v1518
        %v6478 = vunpack.c.l.b16 %v1519
        %v6479 = vunpack.c.h.b16 %v1519
        %v6480 = vunpack.c.l.b16 %v1520
        %v6481 = vunpack.c.h.b16 %v1520
        %v6482 = vunpack.c.l.b16 %v1521
        %v6483 = vunpack.c.h.b16 %v1521
        %v6484 = vunpack.c.l.b16 %v1522
        %v6485 = vunpack.c.h.b16 %v1522
        %v6486 = vunpack.c.l.b16 %v1523
        %v6487 = vunpack.c.h.b16 %v1523
        %v6488 = vunpack.c.l.b16 %v1524
        %v6489 = vunpack.c.h.b16 %v1524
        %v6490 = vunpack.c.l.b16 %v1525
        %v6491 = vunpack.c.h.b16 %v1525
        %v6492 = vunpack.c.l.b16 %v1526
        %v6493 = vunpack.c.h.b16 %v1526
        %v6494 = vunpack.c.l.b16 %v1527
        %v6495 = vunpack.c.h.b16 %v1527
        %v6496 = vunpack.c.l.b16 %v1528
        %v6497 = vunpack.c.h.b16 %v1528
        %v6498 = vunpack.c.l.b16 %v1529
        %v6499 = vunpack.c.h.b16 %v1529
        %v6500 = vunpack.c.l.b16 %v1530
        %v6501 = vunpack.c.h.b16 %v1530
        %v6502 = vunpack.c.l.b16 %v1531
        %v6503 = vunpack.c.h.b16 %v1531
        %v6504 = vunpack.c.l.b16 %v1532
        %v6505 = vunpack.c.h.b16 %v1532
        %v6506 = vunpack.c.l.b16 %v1533
        %v6507 = vunpack.c.h.b16 %v1533
        %v6508 = vunpack.c.l.b16 %v1534
        %v6509 = vunpack.c.h.b16 %v1534
        %v6510 = vunpack.c.l.b16 %v1535
        %v6511 = vunpack.c.h.b16 %v1535
        %v6512 = vunpack.c.l.b16 %v1536
        %v6513 = vunpack.c.h.b16 %v1536
        %v6514 = vunpack.c.l.b16 %v1537
        %v6515 = vunpack.c.h.b16 %v1537
        %v6516 = vunpack.c.l.b16 %v1538
        %v6517 = vunpack.c.h.b16 %v1538
        %v6518 = vunpack.c.l.b16 %v1539
        %v6519 = vunpack.c.h.b16 %v1539
        %v6520 = vunpack.c.l.b16 %v1540
        %v6521 = vunpack.c.h.b16 %v1540
        %v6522 = vunpack.c.l.b16 %v1541
        %v6523 = vunpack.c.h.b16 %v1541
        %v6524 = vunpack.c.l.b16 %v1542
        %v6525 = vunpack.c.h.b16 %v1542
        %v6526 = vunpack.c.l.b16 %v1543
        %v6527 = vunpack.c.h.b16 %v1543
        %v6528 = vunpack.c.l.b16 %v1544
        %v6529 = vunpack.c.h.b16 %v1544
        %v6530 = vunpack.c.l.b16 %v1545
        %v6531 = vunpack.c.h.b16 %v1545
        %v6532 = vunpack.c.l.b16 %v1546
        %v6533 = vunpack.c.h.b16 %v1546
        %v6534 = vunpack.c.l.b16 %v1547
        %v6535 = vunpack.c.h.b16 %v1547
        %v6536 = vunpack.c.l.b16 %v1548
        %v6537 = vunpack.c.h.b16 %v1548
        %v6538 = vunpack.c.l.b16 %v1549
        %v6539 = vunpack.c.h.b16 %v1549
        %v6540 = vunpack.c.l.b16 %v1550
        %v6541 = vunpack.c.h.b16 %v1550
        %v6542 = vunpack.c.l.b16 %v1551
        %v6543 = vunpack.c.h.b16 %v1551
        %v6544 = vunpack.c.l.b16 %v1552
        %v6545 = vunpack.c.h.b16 %v1552
        %v6546 = vunpack.c.l.b16 %v1553
        %v6547 = vunpack.c.h.b16 %v1553
        %v6548 = vunpack.c.l.b16 %v1554
        %v6549 = vunpack.c.h.b16 %v1554
        %v6550 = vunpack.c.l.b16 %v1555
        %v6551 = vunpack.c.h.b16 %v1555
        %v6552 = vunpack.c.l.b16 %v1556
        %v6553 = vunpack.c.h.b16 %v1556
        %v6554 = vunpack.c.l.b16 %v1557
        %v6555 = vunpack.c.h.b16 %v1557
        %v6556 = vunpack.c.l.b16 %v1558
        %v6557 = vunpack.c.h.b16 %v1558
        %v6558 = vunpack.c.l.b16 %v1559
        %v6559 = vunpack.c.h.b16 %v1559
        %v6560 = vunpack.c.l.b16 %v1560
        %v6561 = vunpack.c.h.b16 %v1560
        %v6562 = vunpack.c.l.b16 %v1561
        %v6563 = vunpack.c.h.b16 %v1561
        %v6564 = vunpack.c.l.b16 %v1562
        %v6565 = vunpack.c.h.b16 %v1562
        %v6566 = vunpack.c.l.b16 %v1563
        %v6567 = vunpack.c.h.b16 %v1563
        %v6568 = vunpack.c.l.b16 %v1564
        %v6569 = vunpack.c.h.b16 %v1564
        %v6570 = vunpack.c.l.b16 %v1565
        %v6571 = vunpack.c.h.b16 %v1565
        %v6572 = vunpack.c.l.b16 %v1566
        %v6573 = vunpack.c.h.b16 %v1566
        %v6574 = vunpack.c.l.b16 %v1567
        %v6575 = vunpack.c.h.b16 %v1567
        %v6576 = vunpack.c.l.b16 %v1568
        %v6577 = vunpack.c.h.b16 %v1568
        %v6578 = vunpack.c.l.b16 %v1569
        %v6579 = vunpack.c.h.b16 %v1569
        %v6580 = vunpack.c.l.b16 %v1570
        %v6581 = vunpack.c.h.b16 %v1570
        %v6582 = vunpack.c.l.b16 %v1571
        %v6583 = vunpack.c.h.b16 %v1571
        %v6584 = vunpack.c.l.b16 %v1572
        %v6585 = vunpack.c.h.b16 %v1572
        %v6586 = vunpack.c.l.b16 %v1573
        %v6587 = vunpack.c.h.b16 %v1573
        %v6588 = vunpack.c.l.b16 %v1574
        %v6589 = vunpack.c.h.b16 %v1574
        %v6590 = vunpack.c.l.b16 %v1575
        %v6591 = vunpack.c.h.b16 %v1575
        %v6592 = vunpack.c.l.b16 %v1576
        %v6593 = vunpack.c.h.b16 %v1576
        %v6594 = vunpack.c.l.b16 %v1577
        %v6595 = vunpack.c.h.b16 %v1577
        %v6596 = vunpack.c.l.b16 %v1578
        %v6597 = vunpack.c.h.b16 %v1578
        %v6598 = vunpack.c.l.b16 %v1579
        %v6599 = vunpack.c.h.b16 %v1579
        %v6600 = vunpack.c.l.b16 %v1580
        %v6601 = vunpack.c.h.b16 %v1580
        %v6602 = vunpack.c.l.b16 %v1581
        %v6603 = vunpack.c.h.b16 %v1581
        %v6604 = vunpack.c.l.b16 %v1582
        %v6605 = vunpack.c.h.b16 %v1582
        %v6606 = vunpack.c.l.b16 %v1583
        %v6607 = vunpack.c.h.b16 %v1583
        %v6608 = vunpack.c.l.b16 %v1584
        %v6609 = vunpack.c.h.b16 %v1584
        %v6610 = vunpack.c.l.b16 %v1585
        %v6611 = vunpack.c.h.b16 %v1585
        %v6612 = vunpack.c.l.b16 %v1586
        %v6613 = vunpack.c.h.b16 %v1586
        %v6614 = vunpack.c.l.b16 %v1587
        %v6615 = vunpack.c.h.b16 %v1587
        %v6616 = vunpack.c.l.b16 %v1588
        %v6617 = vunpack.c.h.b16 %v1588
        %v6618 = vunpack.c.l.b16 %v1589
        %v6619 = vunpack.c.h.b16 %v1589
        %v6620 = vunpack.c.l.b16 %v1590
        %v6621 = vunpack.c.h.b16 %v1590
        %v6622 = vunpack.c.l.b16 %v1591
        %v6623 = vunpack.c.h.b16 %v1591
        %v6624 = vunpack.c.l.b16 %v1592
        %v6625 = vunpack.c.h.b16 %v1592
        %v6626 = vunpack.c.l.b16 %v1593
        %v6627 = vunpack.c.h.b16 %v1593
        %v6628 = vunpack.c.l.b16 %v1594
        %v6629 = vunpack.c.h.b16 %v1594
        %v6630 = vunpack.c.l.b16 %v1595
        %v6631 = vunpack.c.h.b16 %v1595
        %v6632 = vunpack.c.l.b16 %v1596
        %v6633 = vunpack.c.h.b16 %v1596
        %v6634 = vunpack.c.l.b16 %v1597
        %v6635 = vunpack.c.h.b16 %v1597
        %v6636 = vunpack.c.l.b16 %v1598
        %v6637 = vunpack.c.h.b16 %v1598
        %v6638 = vunpack.c.l.b16 %v1599
        %v6639 = vunpack.c.h.b16 %v1599
        %v6640 = vunpack.c.l.b16 %v1600
        %v6641 = vunpack.c.h.b16 %v1600
        %v6642 = vunpack.c.l.b16 %v1601
        %v6643 = vunpack.c.h.b16 %v1601
        %v6644 = vunpack.c.l.b16 %v1602
        %v6645 = vunpack.c.h.b16 %v1602
        %v6646 = vunpack.c.l.b16 %v1603
        %v6647 = vunpack.c.h.b16 %v1603
        %v6648 = vunpack.c.l.b16 %v1604
        %v6649 = vunpack.c.h.b16 %v1604
        %v6650 = vunpack.c.l.b16 %v1605
        %v6651 = vunpack.c.h.b16 %v1605
        %v6652 = vunpack.c.l.b16 %v1606
        %v6653 = vunpack.c.h.b16 %v1606
        %v6654 = vunpack.c.l.b16 %v1607
        %v6655 = vunpack.c.h.b16 %v1607
        %v6656 = vunpack.c.l.b16 %v1608
        %v6657 = vunpack.c.h.b16 %v1608
        %v6658 = vunpack.c.l.b16 %v1609
        %v6659 = vunpack.c.h.b16 %v1609
        %v6660 = vunpack.c.l.b16 %v1610
        %v6661 = vunpack.c.h.b16 %v1610
        %v6662 = vunpack.c.l.b16 %v1611
        %v6663 = vunpack.c.h.b16 %v1611
        %v6664 = vunpack.c.l.b16 %v1612
        %v6665 = vunpack.c.h.b16 %v1612
        %v6666 = vunpack.c.l.b16 %v1613
        %v6667 = vunpack.c.h.b16 %v1613
        %v6668 = vunpack.c.l.b16 %v1614
        %v6669 = vunpack.c.h.b16 %v1614
        %v6670 = vunpack.c.l.b16 %v1615
        %v6671 = vunpack.c.h.b16 %v1615
        %v6672 = vunpack.c.l.b16 %v1616
        %v6673 = vunpack.c.h.b16 %v1616
        %v6674 = vunpack.c.l.b16 %v1617
        %v6675 = vunpack.c.h.b16 %v1617
        %v6676 = vunpack.c.l.b16 %v1618
        %v6677 = vunpack.c.h.b16 %v1618
        %v6678 = vunpack.c.l.b16 %v1619
        %v6679 = vunpack.c.h.b16 %v1619
        %v6680 = vunpack.c.l.b16 %v1620
        %v6681 = vunpack.c.h.b16 %v1620
        %v6682 = vunpack.c.l.b16 %v1621
        %v6683 = vunpack.c.h.b16 %v1621
        %v6684 = vunpack.c.l.b16 %v1622
        %v6685 = vunpack.c.h.b16 %v1622
        %v6686 = vunpack.c.l.b16 %v1623
        %v6687 = vunpack.c.h.b16 %v1623
        %v6688 = vunpack.c.l.b16 %v1624
        %v6689 = vunpack.c.h.b16 %v1624
        %v6690 = vunpack.c.l.b16 %v1625
        %v6691 = vunpack.c.h.b16 %v1625
        %v6692 = vunpack.c.l.b16 %v1626
        %v6693 = vunpack.c.h.b16 %v1626
        %v6694 = vunpack.c.l.b16 %v1627
        %v6695 = vunpack.c.h.b16 %v1627
        %v6696 = vunpack.c.l.b16 %v1628
        %v6697 = vunpack.c.h.b16 %v1628
        %v6698 = vunpack.c.l.b16 %v1629
        %v6699 = vunpack.c.h.b16 %v1629
        %v6700 = vunpack.c.l.b16 %v1630
        %v6701 = vunpack.c.h.b16 %v1630
        %v6702 = vunpack.c.l.b16 %v1631
        %v6703 = vunpack.c.h.b16 %v1631
        %v6704 = vunpack.c.l.b16 %v1632
        %v6705 = vunpack.c.h.b16 %v1632
        %v6706 = vunpack.c.l.b16 %v1633
        %v6707 = vunpack.c.h.b16 %v1633
        %v6708 = vunpack.c.l.b16 %v1634
        %v6709 = vunpack.c.h.b16 %v1634
        %v6710 = vunpack.c.l.b16 %v1635
        %v6711 = vunpack.c.h.b16 %v1635
        %v6712 = vunpack.c.l.b16 %v1636
        %v6713 = vunpack.c.h.b16 %v1636
        %v6714 = vunpack.c.l.b16 %v1637
        %v6715 = vunpack.c.h.b16 %v1637
        %v6716 = vunpack.c.l.b16 %v1638
        %v6717 = vunpack.c.h.b16 %v1638
        %v6718 = vunpack.c.l.b16 %v1639
        %v6719 = vunpack.c.h.b16 %v1639
        %v6720 = vunpack.c.l.b16 %v1640
        %v6721 = vunpack.c.h.b16 %v1640
        %v6722 = vunpack.c.l.b16 %v1641
        %v6723 = vunpack.c.h.b16 %v1641
        %v6724 = vunpack.c.l.b16 %v1642
        %v6725 = vunpack.c.h.b16 %v1642
        %v6726 = vunpack.c.l.b16 %v1643
        %v6727 = vunpack.c.h.b16 %v1643
        %v6728 = vunpack.c.l.b16 %v1644
        %v6729 = vunpack.c.h.b16 %v1644
        %v6730 = vunpack.c.l.b16 %v1645
        %v6731 = vunpack.c.h.b16 %v1645
        %v6732 = vunpack.c.l.b16 %v1646
        %v6733 = vunpack.c.h.b16 %v1646
        %v6734 = vunpack.c.l.b16 %v1647
        %v6735 = vunpack.c.h.b16 %v1647
        %v6736 = vunpack.c.l.b16 %v1648
        %v6737 = vunpack.c.h.b16 %v1648
        %v6738 = vunpack.c.l.b16 %v1649
        %v6739 = vunpack.c.h.b16 %v1649
        %v6740 = vunpack.c.l.b16 %v1650
        %v6741 = vunpack.c.h.b16 %v1650
        %v6742 = vunpack.c.l.b16 %v1651
        %v6743 = vunpack.c.h.b16 %v1651
        %v6744 = vunpack.c.l.b16 %v1652
        %v6745 = vunpack.c.h.b16 %v1652
        %v6746 = vunpack.c.l.b16 %v1653
        %v6747 = vunpack.c.h.b16 %v1653
        %v6748 = vunpack.c.l.b16 %v1654
        %v6749 = vunpack.c.h.b16 %v1654
        %v6750 = vunpack.c.l.b16 %v1655
        %v6751 = vunpack.c.h.b16 %v1655
        %v6752 = vunpack.c.l.b16 %v1656
        %v6753 = vunpack.c.h.b16 %v1656
        %v6754 = vunpack.c.l.b16 %v1657
        %v6755 = vunpack.c.h.b16 %v1657
        %v6756 = vunpack.c.l.b16 %v1658
        %v6757 = vunpack.c.h.b16 %v1658
        %v6758 = vunpack.c.l.b16 %v1659
        %v6759 = vunpack.c.h.b16 %v1659
        %v6760 = vunpack.c.l.b16 %v1660
        %v6761 = vunpack.c.h.b16 %v1660
        %v6762 = vunpack.c.l.b16 %v1661
        %v6763 = vunpack.c.h.b16 %v1661
        %v6764 = vunpack.c.l.b16 %v1662
        %v6765 = vunpack.c.h.b16 %v1662
        %v6766 = vunpack.c.l.b16 %v1663
        %v6767 = vunpack.c.h.b16 %v1663
        %v6768 = vunpack.c.l.b16 %v1664
        %v6769 = vunpack.c.h.b16 %v1664
        %v6770 = vunpack.c.l.b16 %v1665
        %v6771 = vunpack.c.h.b16 %v1665
        %v6772 = vunpack.c.l.b16 %v1666
        %v6773 = vunpack.c.h.b16 %v1666
        %v6774 = vunpack.c.l.b16 %v1667
        %v6775 = vunpack.c.h.b16 %v1667
        %v6776 = vunpack.c.l.b16 %v1668
        %v6777 = vunpack.c.h.b16 %v1668
        %v6778 = vunpack.c.l.b16 %v1669
        %v6779 = vunpack.c.h.b16 %v1669
        %v6780 = vunpack.c.l.b16 %v1670
        %v6781 = vunpack.c.h.b16 %v1670
        %v6782 = vunpack.c.l.b16 %v1671
        %v6783 = vunpack.c.h.b16 %v1671
        %v6784 = vunpack.c.l.b16 %v1672
        %v6785 = vunpack.c.h.b16 %v1672
        %v6786 = vunpack.c.l.b16 %v1673
        %v6787 = vunpack.c.h.b16 %v1673
        %v6788 = vunpack.c.l.b16 %v1674
        %v6789 = vunpack.c.h.b16 %v1674
        %v6790 = vunpack.c.l.b16 %v1675
        %v6791 = vunpack.c.h.b16 %v1675
        %v6792 = vunpack.c.l.b16 %v1676
        %v6793 = vunpack.c.h.b16 %v1676
        %v6794 = vunpack.c.l.b16 %v1677
        %v6795 = vunpack.c.h.b16 %v1677
        %v6796 = vunpack.c.l.b16 %v1678
        %v6797 = vunpack.c.h.b16 %v1678
        %v6798 = vunpack.c.l.b16 %v1679
        %v6799 = vunpack.c.h.b16 %v1679
        %v6800 = vunpack.c.l.b16 %v1680
        %v6801 = vunpack.c.h.b16 %v1680
        %v6802 = vunpack.c.l.b16 %v1681
        %v6803 = vunpack.c.h.b16 %v1681
        %v6804 = vunpack.c.l.b16 %v1682
        %v6805 = vunpack.c.h.b16 %v1682
        %v6806 = vunpack.c.l.b16 %v1683
        %v6807 = vunpack.c.h.b16 %v1683
        %v6808 = vunpack.c.l.b16 %v1684
        %v6809 = vunpack.c.h.b16 %v1684
        %v6810 = vunpack.c.l.b16 %v1685
        %v6811 = vunpack.c.h.b16 %v1685
        %v6812 = vunpack.c.l.b16 %v1686
        %v6813 = vunpack.c.h.b16 %v1686
        %v6814 = vunpack.c.l.b16 %v1687
        %v6815 = vunpack.c.h.b16 %v1687
        %v6816 = vunpack.c.l.b16 %v1688
        %v6817 = vunpack.c.h.b16 %v1688
        %v6818 = vunpack.c.l.b16 %v1689
        %v6819 = vunpack.c.h.b16 %v1689
        %v6820 = vunpack.c.l.b16 %v1690
        %v6821 = vunpack.c.h.b16 %v1690
        %v6822 = vunpack.c.l.b16 %v1691
        %v6823 = vunpack.c.h.b16 %v1691
        %v6824 = vunpack.c.l.b16 %v1692
        %v6825 = vunpack.c.h.b16 %v1692
        %v6826 = vunpack.c.l.b16 %v1693
        %v6827 = vunpack.c.h.b16 %v1693
        %v6828 = vunpack.c.l.b16 %v1694
        %v6829 = vunpack.c.h.b16 %v1694
        %v6830 = vunpack.c.l.b16 %v1695
        %v6831 = vunpack.c.h.b16 %v1695
        %v6832 = vunpack.c.l.b16 %v1696
        %v6833 = vunpack.c.h.b16 %v1696
        %v6834 = vunpack.c.l.b16 %v1697
        %v6835 = vunpack.c.h.b16 %v1697
        %v6836 = vunpack.c.l.b16 %v1698
        %v6837 = vunpack.c.h.b16 %v1698
        %v6838 = vunpack.c.l.b16 %v1699
        %v6839 = vunpack.c.h.b16 %v1699
        %v6840 = vunpack.c.l.b16 %v1700
        %v6841 = vunpack.c.h.b16 %v1700
        %v6842 = vunpack.c.l.b16 %v1701
        %v6843 = vunpack.c.h.b16 %v1701
        %v6844 = vunpack.c.l.b16 %v1702
        %v6845 = vunpack.c.h.b16 %v1702
        %v6846 = vunpack.c.l.b16 %v1703
        %v6847 = vunpack.c.h.b16 %v1703
        %v6848 = vunpack.c.l.b16 %v1704
        %v6849 = vunpack.c.h.b16 %v1704
        %v6850 = vunpack.c.l.b16 %v1705
        %v6851 = vunpack.c.h.b16 %v1705
        %v6852 = vunpack.c.l.b16 %v1706
        %v6853 = vunpack.c.h.b16 %v1706
        %v6854 = vunpack.c.l.b16 %v1707
        %v6855 = vunpack.c.h.b16 %v1707
        %v6856 = vunpack.c.l.b16 %v1708
        %v6857 = vunpack.c.h.b16 %v1708
        %v6858 = vunpack.c.l.b16 %v1709
        %v6859 = vunpack.c.h.b16 %v1709
        %v6860 = vunpack.c.l.b16 %v1710
        %v6861 = vunpack.c.h.b16 %v1710
        %v6862 = vunpack.c.l.b16 %v1711
        %v6863 = vunpack.c.h.b16 %v1711
        %v6864 = vunpack.c.l.b16 %v1712
        %v6865 = vunpack.c.h.b16 %v1712
        %v6866 = vunpack.c.l.b16 %v1713
        %v6867 = vunpack.c.h.b16 %v1713
        %v6868 = vunpack.c.l.b16 %v1714
        %v6869 = vunpack.c.h.b16 %v1714
        %v6870 = vunpack.c.l.b16 %v1715
        %v6871 = vunpack.c.h.b16 %v1715
        %v6872 = vunpack.c.l.b16 %v1716
        %v6873 = vunpack.c.h.b16 %v1716
        %v6874 = vunpack.c.l.b16 %v1717
        %v6875 = vunpack.c.h.b16 %v1717
        %v6876 = vunpack.c.l.b16 %v1718
        %v6877 = vunpack.c.h.b16 %v1718
        %v6878 = vunpack.c.l.b16 %v1719
        %v6879 = vunpack.c.h.b16 %v1719
        %v6880 = vunpack.c.l.b16 %v1720
        %v6881 = vunpack.c.h.b16 %v1720
        %v6882 = vunpack.c.l.b16 %v1721
        %v6883 = vunpack.c.h.b16 %v1721
        %v6884 = vunpack.c.l.b16 %v1722
        %v6885 = vunpack.c.h.b16 %v1722
        %v6886 = vunpack.c.l.b16 %v1723
        %v6887 = vunpack.c.h.b16 %v1723
        %v6888 = vunpack.c.l.b16 %v1724
        %v6889 = vunpack.c.h.b16 %v1724
        %v6890 = vunpack.c.l.b16 %v1725
        %v6891 = vunpack.c.h.b16 %v1725
        %v6892 = vunpack.c.l.b16 %v1726
        %v6893 = vunpack.c.h.b16 %v1726
        %v6894 = vunpack.c.l.b16 %v1727
        %v6895 = vunpack.c.h.b16 %v1727
        %v6896 = vunpack.c.l.b16 %v1728
        %v6897 = vunpack.c.h.b16 %v1728
        %v6898 = vunpack.c.l.b16 %v1729
        %v6899 = vunpack.c.h.b16 %v1729
        %v6900 = vunpack.c.l.b16 %v1730
        %v6901 = vunpack.c.h.b16 %v1730
        %v6902 = vunpack.c.l.b16 %v1731
        %v6903 = vunpack.c.h.b16 %v1731
        %v6904 = vunpack.c.l.b16 %v1732
        %v6905 = vunpack.c.h.b16 %v1732
        %v6906 = vunpack.c.l.b16 %v1733
        %v6907 = vunpack.c.h.b16 %v1733
        %v6908 = vunpack.c.l.b16 %v1734
        %v6909 = vunpack.c.h.b16 %v1734
        %v6910 = vunpack.c.l.b16 %v1735
        %v6911 = vunpack.c.h.b16 %v1735
        %v6912 = vunpack.c.l.b16 %v1736
        %v6913 = vunpack.c.h.b16 %v1736
        %v6914 = vunpack.c.l.b16 %v1737
        %v6915 = vunpack.c.h.b16 %v1737
        %v6916 = vunpack.c.l.b16 %v1738
        %v6917 = vunpack.c.h.b16 %v1738
        %v6918 = vunpack.c.l.b16 %v1739
        %v6919 = vunpack.c.h.b16 %v1739
        %v6920 = vunpack.c.l.b16 %v1740
        %v6921 = vunpack.c.h.b16 %v1740
        %v6922 = vunpack.c.l.b16 %v1741
        %v6923 = vunpack.c.h.b16 %v1741
        %v6924 = vunpack.c.l.b16 %v1742
        %v6925 = vunpack.c.h.b16 %v1742
        %v6926 = vunpack.c.l.b16 %v1743
        %v6927 = vunpack.c.h.b16 %v1743
        %v6928 = vunpack.c.l.b16 %v1744
        %v6929 = vunpack.c.h.b16 %v1744
        %v6930 = vunpack.c.l.b16 %v1745
        %v6931 = vunpack.c.h.b16 %v1745
        %v6932 = vunpack.c.l.b16 %v1746
        %v6933 = vunpack.c.h.b16 %v1746
        %v6934 = vunpack.c.l.b16 %v1747
        %v6935 = vunpack.c.h.b16 %v1747
        %v6936 = vunpack.c.l.b16 %v1748
        %v6937 = vunpack.c.h.b16 %v1748
        %v6938 = vunpack.c.l.b16 %v1749
        %v6939 = vunpack.c.h.b16 %v1749
        %v6940 = vunpack.c.l.b16 %v1750
        %v6941 = vunpack.c.h.b16 %v1750
        %v6942 = vunpack.c.l.b16 %v1751
        %v6943 = vunpack.c.h.b16 %v1751
        %v6944 = vunpack.c.l.b16 %v1752
        %v6945 = vunpack.c.h.b16 %v1752
        %v6946 = vunpack.c.l.b16 %v1753
        %v6947 = vunpack.c.h.b16 %v1753
        %v6948 = vunpack.c.l.b16 %v1754
        %v6949 = vunpack.c.h.b16 %v1754
        %v6950 = vunpack.c.l.b16 %v1755
        %v6951 = vunpack.c.h.b16 %v1755
        %v6952 = vunpack.c.l.b16 %v1756
        %v6953 = vunpack.c.h.b16 %v1756
        %v6954 = vunpack.c.l.b16 %v1757
        %v6955 = vunpack.c.h.b16 %v1757
        %v6956 = vunpack.c.l.b16 %v1758
        %v6957 = vunpack.c.h.b16 %v1758
        %v6958 = vunpack.c.l.b16 %v1759
        %v6959 = vunpack.c.h.b16 %v1759
        %v6960 = vunpack.c.l.b16 %v1760
        %v6961 = vunpack.c.h.b16 %v1760
        %v6962 = vunpack.c.l.b16 %v1761
        %v6963 = vunpack.c.h.b16 %v1761
        %v6964 = vunpack.c.l.b16 %v1762
        %v6965 = vunpack.c.h.b16 %v1762
        %v6966 = vunpack.c.l.b16 %v1763
        %v6967 = vunpack.c.h.b16 %v1763
        %v6968 = vunpack.c.l.b16 %v1764
        %v6969 = vunpack.c.h.b16 %v1764
        %v6970 = vunpack.c.l.b16 %v1765
        %v6971 = vunpack.c.h.b16 %v1765
        %v6972 = vunpack.c.l.b16 %v1766
        %v6973 = vunpack.c.h.b16 %v1766
        %v6974 = vunpack.c.l.b16 %v1767
        %v6975 = vunpack.c.h.b16 %v1767
        %v6976 = vunpack.c.l.b16 %v1768
        %v6977 = vunpack.c.h.b16 %v1768
        %v6978 = vunpack.c.l.b16 %v1769
        %v6979 = vunpack.c.h.b16 %v1769
        %v6980 = vunpack.c.l.b16 %v1770
        %v6981 = vunpack.c.h.b16 %v1770
        %v6982 = vunpack.c.l.b16 %v1771
        %v6983 = vunpack.c.h.b16 %v1771
        %v6984 = vunpack.c.l.b16 %v1772
        %v6985 = vunpack.c.h.b16 %v1772
        %v6986 = vunpack.c.l.b16 %v1773
        %v6987 = vunpack.c.h.b16 %v1773
        %v6988 = vunpack.c.l.b16 %v1774
        %v6989 = vunpack.c.h.b16 %v1774
        %v6990 = vunpack.c.l.b16 %v1775
        %v6991 = vunpack.c.h.b16 %v1775
        %v6992 = vunpack.c.l.b16 %v1776
        %v6993 = vunpack.c.h.b16 %v1776
        %v6994 = vunpack.c.l.b16 %v1777
        %v6995 = vunpack.c.h.b16 %v1777
        %v6996 = vunpack.c.l.b16 %v1778
        %v6997 = vunpack.c.h.b16 %v1778
        %v6998 = vunpack.c.l.b16 %v1779
        %v6999 = vunpack.c.h.b16 %v1779
        %v7000 = vunpack.c.l.b16 %v1780
        %v7001 = vunpack.c.h.b16 %v1780
        %v7002 = vunpack.c.l.b16 %v1781
        %v7003 = vunpack.c.h.b16 %v1781
        %v7004 = vunpack.c.l.b16 %v1782
        %v7005 = vunpack.c.h.b16 %v1782
        %v7006 = vunpack.c.l.b16 %v1783
        %v7007 = vunpack.c.h.b16 %v1783
        %v7008 = vunpack.c.l.b16 %v1784
        %v7009 = vunpack.c.h.b16 %v1784
        %v7010 = vunpack.c.l.b16 %v1785
        %v7011 = vunpack.c.h.b16 %v1785
        %v7012 = vunpack.c.l.b16 %v1786
        %v7013 = vunpack.c.h.b16 %v1786
        %v7014 = vunpack.c.l.b16 %v1787
        %v7015 = vunpack.c.h.b16 %v1787
        %v7016 = vunpack.c.l.b16 %v1788
        %v7017 = vunpack.c.h.b16 %v1788
        %v7018 = vunpack.c.l.b16 %v1789
        %v7019 = vunpack.c.h.b16 %v1789
        %v7020 = vunpack.c.l.b16 %v1790
        %v7021 = vunpack.c.h.b16 %v1790
        %v7022 = vunpack.c.l.b16 %v1791
        %v7023 = vunpack.c.h.b16 %v1791
        %v7024 = vunpack.c.l.b16 %v1792
        %v7025 = vunpack.c.h.b16 %v1792
        %v7026 = vunpack.c.l.b16 %v1793
        %v7027 = vunpack.c.h.b16 %v1793
        %v7028 = vunpack.c.l.b16 %v1794
        %v7029 = vunpack.c.h.b16 %v1794
        %v7030 = vunpack.c.l.b16 %v1795
        %v7031 = vunpack.c.h.b16 %v1795
        %v7032 = vunpack.c.l.b16 %v1796
        %v7033 = vunpack.c.h.b16 %v1796
        %v7034 = vunpack.c.l.b16 %v1797
        %v7035 = vunpack.c.h.b16 %v1797
        %v7036 = vunpack.c.l.b16 %v1798
        %v7037 = vunpack.c.h.b16 %v1798
        %v7038 = vunpack.c.l.b16 %v1799
        %v7039 = vunpack.c.h.b16 %v1799
        %v7040 = vunpack.c.l.b16 %v1800
        %v7041 = vunpack.c.h.b16 %v1800
        %v7042 = vunpack.c.l.b16 %v1801
        %v7043 = vunpack.c.h.b16 %v1801
        %v7044 = vunpack.c.l.b16 %v1802
        %v7045 = vunpack.c.h.b16 %v1802
        %v7046 = vunpack.c.l.b16 %v1803
        %v7047 = vunpack.c.h.b16 %v1803
        %v7048 = vunpack.c.l.b16 %v1804
        %v7049 = vunpack.c.h.b16 %v1804
        %v7050 = vunpack.c.l.b16 %v1805
        %v7051 = vunpack.c.h.b16 %v1805
        %v7052 = vunpack.c.l.b16 %v1806
        %v7053 = vunpack.c.h.b16 %v1806
        %v7054 = vunpack.c.l.b16 %v1807
        %v7055 = vunpack.c.h.b16 %v1807
        %v7056 = vunpack.c.l.b16 %v1808
        %v7057 = vunpack.c.h.b16 %v1808
        %v7058 = vunpack.c.l.b16 %v1809
        %v7059 = vunpack.c.h.b16 %v1809
        %v7060 = vunpack.c.l.b16 %v1810
        %v7061 = vunpack.c.h.b16 %v1810
        %v7062 = vunpack.c.l.b16 %v1811
        %v7063 = vunpack.c.h.b16 %v1811
        %v7064 = vunpack.c.l.b16 %v1812
        %v7065 = vunpack.c.h.b16 %v1812
        %v7066 = vunpack.c.l.b16 %v1813
        %v7067 = vunpack.c.h.b16 %v1813
        %v7068 = vunpack.c.l.b16 %v1814
        %v7069 = vunpack.c.h.b16 %v1814
        %v7070 = vunpack.c.l.b16 %v1815
        %v7071 = vunpack.c.h.b16 %v1815
        %v7072 = vunpack.c.l.b16 %v1816
        %v7073 = vunpack.c.h.b16 %v1816
        %v7074 = vunpack.c.l.b16 %v1817
        %v7075 = vunpack.c.h.b16 %v1817
        %v7076 = vunpack.c.l.b16 %v1818
        %v7077 = vunpack.c.h.b16 %v1818
        %v7078 = vunpack.c.l.b16 %v1819
        %v7079 = vunpack.c.h.b16 %v1819
        %v7080 = vunpack.c.l.b16 %v1820
        %v7081 = vunpack.c.h.b16 %v1820
        %v7082 = vunpack.c.l.b16 %v1821
        %v7083 = vunpack.c.h.b16 %v1821
        %v7084 = vunpack.c.l.b16 %v1822
        %v7085 = vunpack.c.h.b16 %v1822
        %v7086 = vunpack.c.l.b16 %v1823
        %v7087 = vunpack.c.h.b16 %v1823
        %v7088 = vpack.c.b16 %v3952, %v3888
        %v7089 = vpack.c.b16 %v3953, %v3889
        %v7090 = vpack.c.b16 %v3954, %v3890
        %v7091 = vpack.c.b16 %v3955, %v3891
        %v7092 = vpack.c.b16 %v3956, %v3892
        %v7093 = vpack.c.b16 %v3957, %v3893
        %v7094 = vpack.c.b16 %v3958, %v3894
        %v7095 = vpack.c.b16 %v3959, %v3895
        %v7096 = vpack.c.b16 %v3960, %v3896
        %v7097 = vpack.c.b16 %v3961, %v3897
        %v7098 = vpack.c.b16 %v3962, %v3898
        %v7099 = vpack.c.b16 %v3963, %v3899
        %v7100 = vpack.c.b16 %v3964, %v3900
        %v7101 = vpack.c.b16 %v3965, %v3901
        %v7102 = vpack.c.b16 %v3966, %v3902
        %v7103 = vpack.c.b16 %v3967, %v3903
        %v7104 = vpack.c.b16 %v3968, %v3904
        %v7105 = vpack.c.b16 %v3969, %v3905
        %v7106 = vpack.c.b16 %v3970, %v3906
        %v7107 = vpack.c.b16 %v3971, %v3907
        %v7108 = vpack.c.b16 %v3972, %v3908
        %v7109 = vpack.c.b16 %v3973, %v3909
        %v7110 = vpack.c.b16 %v3974, %v3910
        %v7111 = vpack.c.b16 %v3975, %v3911
        %v7112 = vpack.c.b16 %v3976, %v3912
        %v7113 = vpack.c.b16 %v3977, %v3913
        %v7114 = vpack.c.b16 %v3978, %v3914
        %v7115 = vpack.c.b16 %v3979, %v3915
        %v7116 = vpack.c.b16 %v3980, %v3916
        %v7117 = vpack.c.b16 %v3981, %v3917
        %v7118 = vpack.c.b16 %v3982, %v3918
        %v7119 = vpack.c.b16 %v3983, %v3919
        %v7120 = vpack.c.b16 %v3984, %v3920
        %v7121 = vpack.c.b16 %v3985, %v3921
        %v7122 = vpack.c.b16 %v3986, %v3922
        %v7123 = vpack.c.b16 %v3987, %v3923
        %v7124 = vpack.c.b16 %v3988, %v3924
        %v7125 = vpack.c.b16 %v3989, %v3925
        %v7126 = vpack.c.b16 %v3990, %v3926
        %v7127 = vpack.c.b16 %v3991, %v3927
        %v7128 = vpack.c.b16 %v3992, %v3928
        %v7129 = vpack.c.b16 %v3993, %v3929
        %v7130 = vpack.c.b16 %v3994, %v3930
        %v7131 = vpack.c.b16 %v3995, %v3931
        %v7132 = vpack.c.b16 %v3996, %v3932
        %v7133 = vpack.c.b16 %v3997, %v3933
        %v7134 = vpack.c.b16 %v3998, %v3934
        %v7135 = vpack.c.b16 %v3999, %v3935
        %v7136 = vpack.c.b16 %v4000, %v3936
        %v7137 = vpack.c.b16 %v4001, %v3937
        %v7138 = vpack.c.b16 %v4002, %v3938
        %v7139 = vpack.c.b16 %v4003, %v3939
        %v7140 = vpack.c.b16 %v4004, %v3940
        %v7141 = vpack.c.b16 %v4005, %v3941
        %v7142 = vpack.c.b16 %v4006, %v3942
        %v7143 = vpack.c.b16 %v4007, %v3943
        %v7144 = vpack.c.b16 %v4008, %v3944
        %v7145 = vpack.c.b16 %v4009, %v3945
        %v7146 = vpack.c.b16 %v4010, %v3946
        %v7147 = vpack.c.b16 %v4011, %v3947
        %v7148 = vpack.c.b16 %v4012, %v3948
        %v7149 = vpack.c.b16 %v4013, %v3949
        %v7150 = vpack.c.b16 %v4014, %v3950
        %v7151 = vpack.c.b16 %v4015, %v3951
        %v7152 = vpack.c.b16 %v4080, %v4016
        %v7153 = vpack.c.b16 %v4081, %v4017
        %v7154 = vpack.c.b16 %v4082, %v4018
        %v7155 = vpack.c.b16 %v4083, %v4019
        %v7156 = vpack.c.b16 %v4084, %v4020
        %v7157 = vpack.c.b16 %v4085, %v4021
        %v7158 = vpack.c.b16 %v4086, %v4022
        %v7159 = vpack.c.b16 %v4087, %v4023
        %v7160 = vpack.c.b16 %v4088, %v4024
        %v7161 = vpack.c.b16 %v4089, %v4025
        %v7162 = vpack.c.b16 %v4090, %v4026
        %v7163 = vpack.c.b16 %v4091, %v4027
        %v7164 = vpack.c.b16 %v4092, %v4028
        %v7165 = vpack.c.b16 %v4093, %v4029
        %v7166 = vpack.c.b16 %v4094, %v4030
        %v7167 = vpack.c.b16 %v4095, %v4031
        %v7168 = vpack.c.b16 %v4096, %v4032
        %v7169 = vpack.c.b16 %v4097, %v4033
        %v7170 = vpack.c.b16 %v4098, %v4034
        %v7171 = vpack.c.b16 %v4099, %v4035
        %v7172 = vpack.c.b16 %v4100, %v4036
        %v7173 = vpack.c.b16 %v4101, %v4037
        %v7174 = vpack.c.b16 %v4102, %v4038
        %v7175 = vpack.c.b16 %v4103, %v4039
        %v7176 = vpack.c.b16 %v4104, %v4040
        %v7177 = vpack.c.b16 %v4105, %v4041
        %v7178 = vpack.c.b16 %v4106, %v4042
        %v7179 = vpack.c.b16 %v4107, %v4043
        %v7180 = vpack.c.b16 %v4108, %v4044
        %v7181 = vpack.c.b16 %v4109, %v4045
        %v7182 = vpack.c.b16 %v4110, %v4046
        %v7183 = vpack.c.b16 %v4111, %v4047
        %v7184 = vpack.c.b16 %v4112, %v4048
        %v7185 = vpack.c.b16 %v4113, %v4049
        %v7186 = vpack.c.b16 %v4114, %v4050
        %v7187 = vpack.c.b16 %v4115, %v4051
        %v7188 = vpack.c.b16 %v4116, %v4052
        %v7189 = vpack.c.b16 %v4117, %v4053
        %v7190 = vpack.c.b16 %v4118, %v4054
        %v7191 = vpack.c.b16 %v4119, %v4055
        %v7192 = vpack.c.b16 %v4120, %v4056
        %v7193 = vpack.c.b16 %v4121, %v4057
        %v7194 = vpack.c.b16 %v4122, %v4058
        %v7195 = vpack.c.b16 %v4123, %v4059
        %v7196 = vpack.c.b16 %v4124, %v4060
        %v7197 = vpack.c.b16 %v4125, %v4061
        %v7198 = vpack.c.b16 %v4126, %v4062
        %v7199 = vpack.c.b16 %v4127, %v4063
        %v7200 = vpack.c.b16 %v4128, %v4064
        %v7201 = vpack.c.b16 %v4129, %v4065
        %v7202 = vpack.c.b16 %v4130, %v4066
        %v7203 = vpack.c.b16 %v4131, %v4067
        %v7204 = vpack.c.b16 %v4132, %v4068
        %v7205 = vpack.c.b16 %v4133, %v4069
        %v7206 = vpack.c.b16 %v4134, %v4070
        %v7207 = vpack.c.b16 %v4135, %v4071
        %v7208 = vpack.c.b16 %v4136, %v4072
        %v7209 = vpack.c.b16 %v4137, %v4073
        %v7210 = vpack.c.b16 %v4138, %v4074
        %v7211 = vpack.c.b16 %v4139, %v4075
        %v7212 = vpack.c.b16 %v4140, %v4076
        %v7213 = vpack.c.b16 %v4141, %v4077
        %v7214 = vpack.c.b16 %v4142, %v4078
        %v7215 = vpack.c.b16 %v4143, %v4079
        %v7216 = vpack.c.b16 %v4208, %v4144
        %v7217 = vpack.c.b16 %v4209, %v4145
        %v7218 = vpack.c.b16 %v4210, %v4146
        %v7219 = vpack.c.b16 %v4211, %v4147
        %v7220 = vpack.c.b16 %v4212, %v4148
        %v7221 = vpack.c.b16 %v4213, %v4149
        %v7222 = vpack.c.b16 %v4214, %v4150
        %v7223 = vpack.c.b16 %v4215, %v4151
        %v7224 = vpack.c.b16 %v4216, %v4152
        %v7225 = vpack.c.b16 %v4217, %v4153
        %v7226 = vpack.c.b16 %v4218, %v4154
        %v7227 = vpack.c.b16 %v4219, %v4155
        %v7228 = vpack.c.b16 %v4220, %v4156
        %v7229 = vpack.c.b16 %v4221, %v4157
        %v7230 = vpack.c.b16 %v4222, %v4158
        %v7231 = vpack.c.b16 %v4223, %v4159
        %v7232 = vpack.c.b16 %v4224, %v4160
        %v7233 = vpack.c.b16 %v4225, %v4161
        %v7234 = vpack.c.b16 %v4226, %v4162
        %v7235 = vpack.c.b16 %v4227, %v4163
        %v7236 = vpack.c.b16 %v4228, %v4164
        %v7237 = vpack.c.b16 %v4229, %v4165
        %v7238 = vpack.c.b16 %v4230, %v4166
        %v7239 = vpack.c.b16 %v4231, %v4167
        %v7240 = vpack.c.b16 %v4232, %v4168
        %v7241 = vpack.c.b16 %v4233, %v4169
        %v7242 = vpack.c.b16 %v4234, %v4170
        %v7243 = vpack.c.b16 %v4235, %v4171
        %v7244 = vpack.c.b16 %v4236, %v4172
        %v7245 = vpack.c.b16 %v4237, %v4173
        %v7246 = vpack.c.b16 %v4238, %v4174
        %v7247 = vpack.c.b16 %v4239, %v4175
        %v7248 = vpack.c.b16 %v4240, %v4176
        %v7249 = vpack.c.b16 %v4241, %v4177
        %v7250 = vpack.c.b16 %v4242, %v4178
        %v7251 = vpack.c.b16 %v4243, %v4179
        %v7252 = vpack.c.b16 %v4244, %v4180
        %v7253 = vpack.c.b16 %v4245, %v4181
        %v7254 = vpack.c.b16 %v4246, %v4182
        %v7255 = vpack.c.b16 %v4247, %v4183
        %v7256 = vpack.c.b16 %v4248, %v4184
        %v7257 = vpack.c.b16 %v4249, %v4185
        %v7258 = vpack.c.b16 %v4250, %v4186
        %v7259 = vpack.c.b16 %v4251, %v4187
        %v7260 = vpack.c.b16 %v4252, %v4188
        %v7261 = vpack.c.b16 %v4253, %v4189
        %v7262 = vpack.c.b16 %v4254, %v4190
        %v7263 = vpack.c.b16 %v4255, %v4191
        %v7264 = vpack.c.b16 %v4256, %v4192
        %v7265 = vpack.c.b16 %v4257, %v4193
        %v7266 = vpack.c.b16 %v4258, %v4194
        %v7267 = vpack.c.b16 %v4259, %v4195
        %v7268 = vpack.c.b16 %v4260, %v4196
        %v7269 = vpack.c.b16 %v4261, %v4197
        %v7270 = vpack.c.b16 %v4262, %v4198
        %v7271 = vpack.c.b16 %v4263, %v4199
        %v7272 = vpack.c.b16 %v4264, %v4200
        %v7273 = vpack.c.b16 %v4265, %v4201
        %v7274 = vpack.c.b16 %v4266, %v4202
        %v7275 = vpack.c.b16 %v4267, %v4203
        %v7276 = vpack.c.b16 %v4268, %v4204
        %v7277 = vpack.c.b16 %v4269, %v4205
        %v7278 = vpack.c.b16 %v4270, %v4206
        %v7279 = vpack.c.b16 %v4271, %v4207
        %v7280 = vpack.c.b16 %v4336, %v4272
        %v7281 = vpack.c.b16 %v4337, %v4273
        %v7282 = vpack.c.b16 %v4338, %v4274
        %v7283 = vpack.c.b16 %v4339, %v4275
        %v7284 = vpack.c.b16 %v4340, %v4276
        %v7285 = vpack.c.b16 %v4341, %v4277
        %v7286 = vpack.c.b16 %v4342, %v4278
        %v7287 = vpack.c.b16 %v4343, %v4279
        %v7288 = vpack.c.b16 %v4344, %v4280
        %v7289 = vpack.c.b16 %v4345, %v4281
        %v7290 = vpack.c.b16 %v4346, %v4282
        %v7291 = vpack.c.b16 %v4347, %v4283
        %v7292 = vpack.c.b16 %v4348, %v4284
        %v7293 = vpack.c.b16 %v4349, %v4285
        %v7294 = vpack.c.b16 %v4350, %v4286
        %v7295 = vpack.c.b16 %v4351, %v4287
        %v7296 = vpack.c.b16 %v4352, %v4288
        %v7297 = vpack.c.b16 %v4353, %v4289
        %v7298 = vpack.c.b16 %v4354, %v4290
        %v7299 = vpack.c.b16 %v4355, %v4291
        %v7300 = vpack.c.b16 %v4356, %v4292
        %v7301 = vpack.c.b16 %v4357, %v4293
        %v7302 = vpack.c.b16 %v4358, %v4294
        %v7303 = vpack.c.b16 %v4359, %v4295
        %v7304 = vpack.c.b16 %v4360, %v4296
        %v7305 = vpack.c.b16 %v4361, %v4297
        %v7306 = vpack.c.b16 %v4362, %v4298
        %v7307 = vpack.c.b16 %v4363, %v4299
        %v7308 = vpack.c.b16 %v4364, %v4300
        %v7309 = vpack.c.b16 %v4365, %v4301
        %v7310 = vpack.c.b16 %v4366, %v4302
        %v7311 = vpack.c.b16 %v4367, %v4303
        %v7312 = vpack.c.b16 %v4368, %v4304
        %v7313 = vpack.c.b16 %v4369, %v4305
        %v7314 = vpack.c.b16 %v4370, %v4306
        %v7315 = vpack.c.b16 %v4371, %v4307
        %v7316 = vpack.c.b16 %v4372, %v4308
        %v7317 = vpack.c.b16 %v4373, %v4309
        %v7318 = vpack.c.b16 %v4374, %v4310
        %v7319 = vpack.c.b16 %v4375, %v4311
        %v7320 = vpack.c.b16 %v4376, %v4312
        %v7321 = vpack.c.b16 %v4377, %v4313
        %v7322 = vpack.c.b16 %v4378, %v4314
        %v7323 = vpack.c.b16 %v4379, %v4315
        %v7324 = vpack.c.b16 %v4380, %v4316
        %v7325 = vpack.c.b16 %v4381, %v4317
        %v7326 = vpack.c.b16 %v4382, %v4318
        %v7327 = vpack.c.b16 %v4383, %v4319
        %v7328 = vpack.c.b16 %v4384, %v4320
        %v7329 = vpack.c.b16 %v4385, %v4321
        %v7330 = vpack.c.b16 %v4386, %v4322
        %v7331 = vpack.c.b16 %v4387, %v4323
        %v7332 = vpack.c.b16 %v4388, %v4324
        %v7333 = vpack.c.b16 %v4389, %v4325
        %v7334 = vpack.c.b16 %v4390, %v4326
        %v7335 = vpack.c.b16 %v4391, %v4327
        %v7336 = vpack.c.b16 %v4392, %v4328
        %v7337 = vpack.c.b16 %v4393, %v4329
        %v7338 = vpack.c.b16 %v4394, %v4330
        %v7339 = vpack.c.b16 %v4395, %v4331
        %v7340 = vpack.c.b16 %v4396, %v4332
        %v7341 = vpack.c.b16 %v4397, %v4333
        %v7342 = vpack.c.b16 %v4398, %v4334
        %v7343 = vpack.c.b16 %v4399, %v4335
        %v7344 = vpack.c.b16 %v4464, %v4400
        %v7345 = vpack.c.b16 %v4465, %v4401
        %v7346 = vpack.c.b16 %v4466, %v4402
        %v7347 = vpack.c.b16 %v4467, %v4403
        %v7348 = vpack.c.b16 %v4468, %v4404
        %v7349 = vpack.c.b16 %v4469, %v4405
        %v7350 = vpack.c.b16 %v4470, %v4406
        %v7351 = vpack.c.b16 %v4471, %v4407
        %v7352 = vpack.c.b16 %v4472, %v4408
        %v7353 = vpack.c.b16 %v4473, %v4409
        %v7354 = vpack.c.b16 %v4474, %v4410
        %v7355 = vpack.c.b16 %v4475, %v4411
        %v7356 = vpack.c.b16 %v4476, %v4412
        %v7357 = vpack.c.b16 %v4477, %v4413
        %v7358 = vpack.c.b16 %v4478, %v4414
        %v7359 = vpack.c.b16 %v4479, %v4415
        %v7360 = vpack.c.b16 %v4480, %v4416
        %v7361 = vpack.c.b16 %v4481, %v4417
        %v7362 = vpack.c.b16 %v4482, %v4418
        %v7363 = vpack.c.b16 %v4483, %v4419
        %v7364 = vpack.c.b16 %v4484, %v4420
        %v7365 = vpack.c.b16 %v4485, %v4421
        %v7366 = vpack.c.b16 %v4486, %v4422
        %v7367 = vpack.c.b16 %v4487, %v4423
        %v7368 = vpack.c.b16 %v4488, %v4424
        %v7369 = vpack.c.b16 %v4489, %v4425
        %v7370 = vpack.c.b16 %v4490, %v4426
        %v7371 = vpack.c.b16 %v4491, %v4427
        %v7372 = vpack.c.b16 %v4492, %v4428
        %v7373 = vpack.c.b16 %v4493, %v4429
        %v7374 = vpack.c.b16 %v4494, %v4430
        %v7375 = vpack.c.b16 %v4495, %v4431
        %v7376 = vpack.c.b16 %v4496, %v4432
        %v7377 = vpack.c.b16 %v4497, %v4433
        %v7378 = vpack.c.b16 %v4498, %v4434
        %v7379 = vpack.c.b16 %v4499, %v4435
        %v7380 = vpack.c.b16 %v4500, %v4436
        %v7381 = vpack.c.b16 %v4501, %v4437
        %v7382 = vpack.c.b16 %v4502, %v4438
        %v7383 = vpack.c.b16 %v4503, %v4439
        %v7384 = vpack.c.b16 %v4504, %v4440
        %v7385 = vpack.c.b16 %v4505, %v4441
        %v7386 = vpack.c.b16 %v4506, %v4442
        %v7387 = vpack.c.b16 %v4507, %v4443
        %v7388 = vpack.c.b16 %v4508, %v4444
        %v7389 = vpack.c.b16 %v4509, %v4445
        %v7390 = vpack.c.b16 %v4510, %v4446
        %v7391 = vpack.c.b16 %v4511, %v4447
        %v7392 = vpack.c.b16 %v4512, %v4448
        %v7393 = vpack.c.b16 %v4513, %v4449
        %v7394 = vpack.c.b16 %v4514, %v4450
        %v7395 = vpack.c.b16 %v4515, %v4451
        %v7396 = vpack.c.b16 %v4516, %v4452
        %v7397 = vpack.c.b16 %v4517, %v4453
        %v7398 = vpack.c.b16 %v4518, %v4454
        %v7399 = vpack.c.b16 %v4519, %v4455
        %v7400 = vpack.c.b16 %v4520, %v4456
        %v7401 = vpack.c.b16 %v4521, %v4457
        %v7402 = vpack.c.b16 %v4522, %v4458
        %v7403 = vpack.c.b16 %v4523, %v4459
        %v7404 = vpack.c.b16 %v4524, %v4460
        %v7405 = vpack.c.b16 %v4525, %v4461
        %v7406 = vpack.c.b16 %v4526, %v4462
        %v7407 = vpack.c.b16 %v4527, %v4463
        %v7408 = vpack.c.b16 %v4592, %v4528
        %v7409 = vpack.c.b16 %v4593, %v4529
        %v7410 = vpack.c.b16 %v4594, %v4530
        %v7411 = vpack.c.b16 %v4595, %v4531
        %v7412 = vpack.c.b16 %v4596, %v4532
        %v7413 = vpack.c.b16 %v4597, %v4533
        %v7414 = vpack.c.b16 %v4598, %v4534
        %v7415 = vpack.c.b16 %v4599, %v4535
        %v7416 = vpack.c.b16 %v4600, %v4536
        %v7417 = vpack.c.b16 %v4601, %v4537
        %v7418 = vpack.c.b16 %v4602, %v4538
        %v7419 = vpack.c.b16 %v4603, %v4539
        %v7420 = vpack.c.b16 %v4604, %v4540
        %v7421 = vpack.c.b16 %v4605, %v4541
        %v7422 = vpack.c.b16 %v4606, %v4542
        %v7423 = vpack.c.b16 %v4607, %v4543
        %v7424 = vpack.c.b16 %v4608, %v4544
        %v7425 = vpack.c.b16 %v4609, %v4545
        %v7426 = vpack.c.b16 %v4610, %v4546
        %v7427 = vpack.c.b16 %v4611, %v4547
        %v7428 = vpack.c.b16 %v4612, %v4548
        %v7429 = vpack.c.b16 %v4613, %v4549
        %v7430 = vpack.c.b16 %v4614, %v4550
        %v7431 = vpack.c.b16 %v4615, %v4551
        %v7432 = vpack.c.b16 %v4616, %v4552
        %v7433 = vpack.c.b16 %v4617, %v4553
        %v7434 = vpack.c.b16 %v4618, %v4554
        %v7435 = vpack.c.b16 %v4619, %v4555
        %v7436 = vpack.c.b16 %v4620, %v4556
        %v7437 = vpack.c.b16 %v4621, %v4557
        %v7438 = vpack.c.b16 %v4622, %v4558
        %v7439 = vpack.c.b16 %v4623, %v4559
        %v7440 = vpack.c.b16 %v4624, %v4560
        %v7441 = vpack.c.b16 %v4625, %v4561
        %v7442 = vpack.c.b16 %v4626, %v4562
        %v7443 = vpack.c.b16 %v4627, %v4563
        %v7444 = vpack.c.b16 %v4628, %v4564
        %v7445 = vpack.c.b16 %v4629, %v4565
        %v7446 = vpack.c.b16 %v4630, %v4566
        %v7447 = vpack.c.b16 %v4631, %v4567
        %v7448 = vpack.c.b16 %v4632, %v4568
        %v7449 = vpack.c.b16 %v4633, %v4569
        %v7450 = vpack.c.b16 %v4634, %v4570
        %v7451 = vpack.c.b16 %v4635, %v4571
        %v7452 = vpack.c.b16 %v4636, %v4572
        %v7453 = vpack.c.b16 %v4637, %v4573
        %v7454 = vpack.c.b16 %v4638, %v4574
        %v7455 = vpack.c.b16 %v4639, %v4575
        %v7456 = vpack.c.b16 %v4640, %v4576
        %v7457 = vpack.c.b16 %v4641, %v4577
        %v7458 = vpack.c.b16 %v4642, %v4578
        %v7459 = vpack.c.b16 %v4643, %v4579
        %v7460 = vpack.c.b16 %v4644, %v4580
        %v7461 = vpack.c.b16 %v4645, %v4581
        %v7462 = vpack.c.b16 %v4646, %v4582
        %v7463 = vpack.c.b16 %v4647, %v4583
        %v7464 = vpack.c.b16 %v4648, %v4584
        %v7465 = vpack.c.b16 %v4649, %v4585
        %v7466 = vpack.c.b16 %v4650, %v4586
        %v7467 = vpack.c.b16 %v4651, %v4587
        %v7468 = vpack.c.b16 %v4652, %v4588
        %v7469 = vpack.c.b16 %v4653, %v4589
        %v7470 = vpack.c.b16 %v4654, %v4590
        %v7471 = vpack.c.b16 %v4655, %v4591
        %v7472 = vpack.c.b16 %v4720, %v4656
        %v7473 = vpack.c.b16 %v4721, %v4657
        %v7474 = vpack.c.b16 %v4722, %v4658
        %v7475 = vpack.c.b16 %v4723, %v4659
        %v7476 = vpack.c.b16 %v4724, %v4660
        %v7477 = vpack.c.b16 %v4725, %v4661
        %v7478 = vpack.c.b16 %v4726, %v4662
        %v7479 = vpack.c.b16 %v4727, %v4663
        %v7480 = vpack.c.b16 %v4728, %v4664
        %v7481 = vpack.c.b16 %v4729, %v4665
        %v7482 = vpack.c.b16 %v4730, %v4666
        %v7483 = vpack.c.b16 %v4731, %v4667
        %v7484 = vpack.c.b16 %v4732, %v4668
        %v7485 = vpack.c.b16 %v4733, %v4669
        %v7486 = vpack.c.b16 %v4734, %v4670
        %v7487 = vpack.c.b16 %v4735, %v4671
        %v7488 = vpack.c.b16 %v4736, %v4672
        %v7489 = vpack.c.b16 %v4737, %v4673
        %v7490 = vpack.c.b16 %v4738, %v4674
        %v7491 = vpack.c.b16 %v4739, %v4675
        %v7492 = vpack.c.b16 %v4740, %v4676
        %v7493 = vpack.c.b16 %v4741, %v4677
        %v7494 = vpack.c.b16 %v4742, %v4678
        %v7495 = vpack.c.b16 %v4743, %v4679
        %v7496 = vpack.c.b16 %v4744, %v4680
        %v7497 = vpack.c.b16 %v4745, %v4681
        %v7498 = vpack.c.b16 %v4746, %v4682
        %v7499 = vpack.c.b16 %v4747, %v4683
        %v7500 = vpack.c.b16 %v4748, %v4684
        %v7501 = vpack.c.b16 %v4749, %v4685
        %v7502 = vpack.c.b16 %v4750, %v4686
        %v7503 = vpack.c.b16 %v4751, %v4687
        %v7504 = vpack.c.b16 %v4752, %v4688
        %v7505 = vpack.c.b16 %v4753, %v4689
        %v7506 = vpack.c.b16 %v4754, %v4690
        %v7507 = vpack.c.b16 %v4755, %v4691
        %v7508 = vpack.c.b16 %v4756, %v4692
        %v7509 = vpack.c.b16 %v4757, %v4693
        %v7510 = vpack.c.b16 %v4758, %v4694
        %v7511 = vpack.c.b16 %v4759, %v4695
        %v7512 = vpack.c.b16 %v4760, %v4696
        %v7513 = vpack.c.b16 %v4761, %v4697
        %v7514 = vpack.c.b16 %v4762, %v4698
        %v7515 = vpack.c.b16 %v4763, %v4699
        %v7516 = vpack.c.b16 %v4764, %v4700
        %v7517 = vpack.c.b16 %v4765, %v4701
        %v7518 = vpack.c.b16 %v4766, %v4702
        %v7519 = vpack.c.b16 %v4767, %v4703
        %v7520 = vpack.c.b16 %v4768, %v4704
        %v7521 = vpack.c.b16 %v4769, %v4705
        %v7522 = vpack.c.b16 %v4770, %v4706
        %v7523 = vpack.c.b16 %v4771, %v4707
        %v7524 = vpack.c.b16 %v4772, %v4708
        %v7525 = vpack.c.b16 %v4773, %v4709
        %v7526 = vpack.c.b16 %v4774, %v4710
        %v7527 = vpack.c.b16 %v4775, %v4711
        %v7528 = vpack.c.b16 %v4776, %v4712
        %v7529 = vpack.c.b16 %v4777, %v4713
        %v7530 = vpack.c.b16 %v4778, %v4714
        %v7531 = vpack.c.b16 %v4779, %v4715
        %v7532 = vpack.c.b16 %v4780, %v4716
        %v7533 = vpack.c.b16 %v4781, %v4717
        %v7534 = vpack.c.b16 %v4782, %v4718
        %v7535 = vpack.c.b16 %v4783, %v4719
        %v7536 = vpack.c.b16 %v4848, %v4784
        %v7537 = vpack.c.b16 %v4849, %v4785
        %v7538 = vpack.c.b16 %v4850, %v4786
        %v7539 = vpack.c.b16 %v4851, %v4787
        %v7540 = vpack.c.b16 %v4852, %v4788
        %v7541 = vpack.c.b16 %v4853, %v4789
        %v7542 = vpack.c.b16 %v4854, %v4790
        %v7543 = vpack.c.b16 %v4855, %v4791
        %v7544 = vpack.c.b16 %v4856, %v4792
        %v7545 = vpack.c.b16 %v4857, %v4793
        %v7546 = vpack.c.b16 %v4858, %v4794
        %v7547 = vpack.c.b16 %v4859, %v4795
        %v7548 = vpack.c.b16 %v4860, %v4796
        %v7549 = vpack.c.b16 %v4861, %v4797
        %v7550 = vpack.c.b16 %v4862, %v4798
        %v7551 = vpack.c.b16 %v4863, %v4799
        %v7552 = vpack.c.b16 %v4864, %v4800
        %v7553 = vpack.c.b16 %v4865, %v4801
        %v7554 = vpack.c.b16 %v4866, %v4802
        %v7555 = vpack.c.b16 %v4867, %v4803
        %v7556 = vpack.c.b16 %v4868, %v4804
        %v7557 = vpack.c.b16 %v4869, %v4805
        %v7558 = vpack.c.b16 %v4870, %v4806
        %v7559 = vpack.c.b16 %v4871, %v4807
        %v7560 = vpack.c.b16 %v4872, %v4808
        %v7561 = vpack.c.b16 %v4873, %v4809
        %v7562 = vpack.c.b16 %v4874, %v4810
        %v7563 = vpack.c.b16 %v4875, %v4811
        %v7564 = vpack.c.b16 %v4876, %v4812
        %v7565 = vpack.c.b16 %v4877, %v4813
        %v7566 = vpack.c.b16 %v4878, %v4814
        %v7567 = vpack.c.b16 %v4879, %v4815
        %v7568 = vpack.c.b16 %v4880, %v4816
        %v7569 = vpack.c.b16 %v4881, %v4817
        %v7570 = vpack.c.b16 %v4882, %v4818
        %v7571 = vpack.c.b16 %v4883, %v4819
        %v7572 = vpack.c.b16 %v4884, %v4820
        %v7573 = vpack.c.b16 %v4885, %v4821
        %v7574 = vpack.c.b16 %v4886, %v4822
        %v7575 = vpack.c.b16 %v4887, %v4823
        %v7576 = vpack.c.b16 %v4888, %v4824
        %v7577 = vpack.c.b16 %v4889, %v4825
        %v7578 = vpack.c.b16 %v4890, %v4826
        %v7579 = vpack.c.b16 %v4891, %v4827
        %v7580 = vpack.c.b16 %v4892, %v4828
        %v7581 = vpack.c.b16 %v4893, %v4829
        %v7582 = vpack.c.b16 %v4894, %v4830
        %v7583 = vpack.c.b16 %v4895, %v4831
        %v7584 = vpack.c.b16 %v4896, %v4832
        %v7585 = vpack.c.b16 %v4897, %v4833
        %v7586 = vpack.c.b16 %v4898, %v4834
        %v7587 = vpack.c.b16 %v4899, %v4835
        %v7588 = vpack.c.b16 %v4900, %v4836
        %v7589 = vpack.c.b16 %v4901, %v4837
        %v7590 = vpack.c.b16 %v4902, %v4838
        %v7591 = vpack.c.b16 %v4903, %v4839
        %v7592 = vpack.c.b16 %v4904, %v4840
        %v7593 = vpack.c.b16 %v4905, %v4841
        %v7594 = vpack.c.b16 %v4906, %v4842
        %v7595 = vpack.c.b16 %v4907, %v4843
        %v7596 = vpack.c.b16 %v4908, %v4844
        %v7597 = vpack.c.b16 %v4909, %v4845
        %v7598 = vpack.c.b16 %v4910, %v4846
        %v7599 = vpack.c.b16 %v4911, %v4847
        %v7600 = vpack.c.b16 %v4976, %v4912
        %v7601 = vpack.c.b16 %v4977, %v4913
        %v7602 = vpack.c.b16 %v4978, %v4914
        %v7603 = vpack.c.b16 %v4979, %v4915
        %v7604 = vpack.c.b16 %v4980, %v4916
        %v7605 = vpack.c.b16 %v4981, %v4917
        %v7606 = vpack.c.b16 %v4982, %v4918
        %v7607 = vpack.c.b16 %v4983, %v4919
        %v7608 = vpack.c.b16 %v4984, %v4920
        %v7609 = vpack.c.b16 %v4985, %v4921
        %v7610 = vpack.c.b16 %v4986, %v4922
        %v7611 = vpack.c.b16 %v4987, %v4923
        %v7612 = vpack.c.b16 %v4988, %v4924
        %v7613 = vpack.c.b16 %v4989, %v4925
        %v7614 = vpack.c.b16 %v4990, %v4926
        %v7615 = vpack.c.b16 %v4991, %v4927
        %v7616 = vpack.c.b16 %v4992, %v4928
        %v7617 = vpack.c.b16 %v4993, %v4929
        %v7618 = vpack.c.b16 %v4994, %v4930
        %v7619 = vpack.c.b16 %v4995, %v4931
        %v7620 = vpack.c.b16 %v4996, %v4932
        %v7621 = vpack.c.b16 %v4997, %v4933
        %v7622 = vpack.c.b16 %v4998, %v4934
        %v7623 = vpack.c.b16 %v4999, %v4935
        %v7624 = vpack.c.b16 %v5000, %v4936
        %v7625 = vpack.c.b16 %v5001, %v4937
        %v7626 = vpack.c.b16 %v5002, %v4938
        %v7627 = vpack.c.b16 %v5003, %v4939
        %v7628 = vpack.c.b16 %v5004, %v4940
        %v7629 = vpack.c.b16 %v5005, %v4941
        %v7630 = vpack.c.b16 %v5006, %v4942
        %v7631 = vpack.c.b16 %v5007, %v4943
        %v7632 = vpack.c.b16 %v5008, %v4944
        %v7633 = vpack.c.b16 %v5009, %v4945
        %v7634 = vpack.c.b16 %v5010, %v4946
        %v7635 = vpack.c.b16 %v5011, %v4947
        %v7636 = vpack.c.b16 %v5012, %v4948
        %v7637 = vpack.c.b16 %v5013, %v4949
        %v7638 = vpack.c.b16 %v5014, %v4950
        %v7639 = vpack.c.b16 %v5015, %v4951
        %v7640 = vpack.c.b16 %v5016, %v4952
        %v7641 = vpack.c.b16 %v5017, %v4953
        %v7642 = vpack.c.b16 %v5018, %v4954
        %v7643 = vpack.c.b16 %v5019, %v4955
        %v7644 = vpack.c.b16 %v5020, %v4956
        %v7645 = vpack.c.b16 %v5021, %v4957
        %v7646 = vpack.c.b16 %v5022, %v4958
        %v7647 = vpack.c.b16 %v5023, %v4959
        %v7648 = vpack.c.b16 %v5024, %v4960
        %v7649 = vpack.c.b16 %v5025, %v4961
        %v7650 = vpack.c.b16 %v5026, %v4962
        %v7651 = vpack.c.b16 %v5027, %v4963
        %v7652 = vpack.c.b16 %v5028, %v4964
        %v7653 = vpack.c.b16 %v5029, %v4965
        %v7654 = vpack.c.b16 %v5030, %v4966
        %v7655 = vpack.c.b16 %v5031, %v4967
        %v7656 = vpack.c.b16 %v5032, %v4968
        %v7657 = vpack.c.b16 %v5033, %v4969
        %v7658 = vpack.c.b16 %v5034, %v4970
        %v7659 = vpack.c.b16 %v5035, %v4971
        %v7660 = vpack.c.b16 %v5036, %v4972
        %v7661 = vpack.c.b16 %v5037, %v4973
        %v7662 = vpack.c.b16 %v5038, %v4974
        %v7663 = vpack.c.b16 %v5039, %v4975
        %v7664 = vpack.c.b16 %v5104, %v5040
        %v7665 = vpack.c.b16 %v5105, %v5041
        %v7666 = vpack.c.b16 %v5106, %v5042
        %v7667 = vpack.c.b16 %v5107, %v5043
        %v7668 = vpack.c.b16 %v5108, %v5044
        %v7669 = vpack.c.b16 %v5109, %v5045
        %v7670 = vpack.c.b16 %v5110, %v5046
        %v7671 = vpack.c.b16 %v5111, %v5047
        %v7672 = vpack.c.b16 %v5112, %v5048
        %v7673 = vpack.c.b16 %v5113, %v5049
        %v7674 = vpack.c.b16 %v5114, %v5050
        %v7675 = vpack.c.b16 %v5115, %v5051
        %v7676 = vpack.c.b16 %v5116, %v5052
        %v7677 = vpack.c.b16 %v5117, %v5053
        %v7678 = vpack.c.b16 %v5118, %v5054
        %v7679 = vpack.c.b16 %v5119, %v5055
        %v7680 = vpack.c.b16 %v5120, %v5056
        %v7681 = vpack.c.b16 %v5121, %v5057
        %v7682 = vpack.c.b16 %v5122, %v5058
        %v7683 = vpack.c.b16 %v5123, %v5059
        %v7684 = vpack.c.b16 %v5124, %v5060
        %v7685 = vpack.c.b16 %v5125, %v5061
        %v7686 = vpack.c.b16 %v5126, %v5062
        %v7687 = vpack.c.b16 %v5127, %v5063
        %v7688 = vpack.c.b16 %v5128, %v5064
        %v7689 = vpack.c.b16 %v5129, %v5065
        %v7690 = vpack.c.b16 %v5130, %v5066
        %v7691 = vpack.c.b16 %v5131, %v5067
        %v7692 = vpack.c.b16 %v5132, %v5068
        %v7693 = vpack.c.b16 %v5133, %v5069
        %v7694 = vpack.c.b16 %v5134, %v5070
        %v7695 = vpack.c.b16 %v5135, %v5071
        %v7696 = vpack.c.b16 %v5136, %v5072
        %v7697 = vpack.c.b16 %v5137, %v5073
        %v7698 = vpack.c.b16 %v5138, %v5074
        %v7699 = vpack.c.b16 %v5139, %v5075
        %v7700 = vpack.c.b16 %v5140, %v5076
        %v7701 = vpack.c.b16 %v5141, %v5077
        %v7702 = vpack.c.b16 %v5142, %v5078
        %v7703 = vpack.c.b16 %v5143, %v5079
        %v7704 = vpack.c.b16 %v5144, %v5080
        %v7705 = vpack.c.b16 %v5145, %v5081
        %v7706 = vpack.c.b16 %v5146, %v5082
        %v7707 = vpack.c.b16 %v5147, %v5083
        %v7708 = vpack.c.b16 %v5148, %v5084
        %v7709 = vpack.c.b16 %v5149, %v5085
        %v7710 = vpack.c.b16 %v5150, %v5086
        %v7711 = vpack.c.b16 %v5151, %v5087
        %v7712 = vpack.c.b16 %v5152, %v5088
        %v7713 = vpack.c.b16 %v5153, %v5089
        %v7714 = vpack.c.b16 %v5154, %v5090
        %v7715 = vpack.c.b16 %v5155, %v5091
        %v7716 = vpack.c.b16 %v5156, %v5092
        %v7717 = vpack.c.b16 %v5157, %v5093
        %v7718 = vpack.c.b16 %v5158, %v5094
        %v7719 = vpack.c.b16 %v5159, %v5095
        %v7720 = vpack.c.b16 %v5160, %v5096
        %v7721 = vpack.c.b16 %v5161, %v5097
        %v7722 = vpack.c.b16 %v5162, %v5098
        %v7723 = vpack.c.b16 %v5163, %v5099
        %v7724 = vpack.c.b16 %v5164, %v5100
        %v7725 = vpack.c.b16 %v5165, %v5101
        %v7726 = vpack.c.b16 %v5166, %v5102
        %v7727 = vpack.c.b16 %v5167, %v5103
        %v7728 = vpack.c.b16 %v5232, %v5168
        %v7729 = vpack.c.b16 %v5233, %v5169
        %v7730 = vpack.c.b16 %v5234, %v5170
        %v7731 = vpack.c.b16 %v5235, %v5171
        %v7732 = vpack.c.b16 %v5236, %v5172
        %v7733 = vpack.c.b16 %v5237, %v5173
        %v7734 = vpack.c.b16 %v5238, %v5174
        %v7735 = vpack.c.b16 %v5239, %v5175
        %v7736 = vpack.c.b16 %v5240, %v5176
        %v7737 = vpack.c.b16 %v5241, %v5177
        %v7738 = vpack.c.b16 %v5242, %v5178
        %v7739 = vpack.c.b16 %v5243, %v5179
        %v7740 = vpack.c.b16 %v5244, %v5180
        %v7741 = vpack.c.b16 %v5245, %v5181
        %v7742 = vpack.c.b16 %v5246, %v5182
        %v7743 = vpack.c.b16 %v5247, %v5183
        %v7744 = vpack.c.b16 %v5248, %v5184
        %v7745 = vpack.c.b16 %v5249, %v5185
        %v7746 = vpack.c.b16 %v5250, %v5186
        %v7747 = vpack.c.b16 %v5251, %v5187
        %v7748 = vpack.c.b16 %v5252, %v5188
        %v7749 = vpack.c.b16 %v5253, %v5189
        %v7750 = vpack.c.b16 %v5254, %v5190
        %v7751 = vpack.c.b16 %v5255, %v5191
        %v7752 = vpack.c.b16 %v5256, %v5192
        %v7753 = vpack.c.b16 %v5257, %v5193
        %v7754 = vpack.c.b16 %v5258, %v5194
        %v7755 = vpack.c.b16 %v5259, %v5195
        %v7756 = vpack.c.b16 %v5260, %v5196
        %v7757 = vpack.c.b16 %v5261, %v5197
        %v7758 = vpack.c.b16 %v5262, %v5198
        %v7759 = vpack.c.b16 %v5263, %v5199
        %v7760 = vpack.c.b16 %v5264, %v5200
        %v7761 = vpack.c.b16 %v5265, %v5201
        %v7762 = vpack.c.b16 %v5266, %v5202
        %v7763 = vpack.c.b16 %v5267, %v5203
        %v7764 = vpack.c.b16 %v5268, %v5204
        %v7765 = vpack.c.b16 %v5269, %v5205
        %v7766 = vpack.c.b16 %v5270, %v5206
        %v7767 = vpack.c.b16 %v5271, %v5207
        %v7768 = vpack.c.b16 %v5272, %v5208
        %v7769 = vpack.c.b16 %v5273, %v5209
        %v7770 = vpack.c.b16 %v5274, %v5210
        %v7771 = vpack.c.b16 %v5275, %v5211
        %v7772 = vpack.c.b16 %v5276, %v5212
        %v7773 = vpack.c.b16 %v5277, %v5213
        %v7774 = vpack.c.b16 %v5278, %v5214
        %v7775 = vpack.c.b16 %v5279, %v5215
        %v7776 = vpack.c.b16 %v5280, %v5216
        %v7777 = vpack.c.b16 %v5281, %v5217
        %v7778 = vpack.c.b16 %v5282, %v5218
        %v7779 = vpack.c.b16 %v5283, %v5219
        %v7780 = vpack.c.b16 %v5284, %v5220
        %v7781 = vpack.c.b16 %v5285, %v5221
        %v7782 = vpack.c.b16 %v5286, %v5222
        %v7783 = vpack.c.b16 %v5287, %v5223
        %v7784 = vpack.c.b16 %v5288, %v5224
        %v7785 = vpack.c.b16 %v5289, %v5225
        %v7786 = vpack.c.b16 %v5290, %v5226
        %v7787 = vpack.c.b16 %v5291, %v5227
        %v7788 = vpack.c.b16 %v5292, %v5228
        %v7789 = vpack.c.b16 %v5293, %v5229
        %v7790 = vpack.c.b16 %v5294, %v5230
        %v7791 = vpack.c.b16 %v5295, %v5231
        %v7792 = vpack.c.b16 %v5360, %v5296
        %v7793 = vpack.c.b16 %v5361, %v5297
        %v7794 = vpack.c.b16 %v5362, %v5298
        %v7795 = vpack.c.b16 %v5363, %v5299
        %v7796 = vpack.c.b16 %v5364, %v5300
        %v7797 = vpack.c.b16 %v5365, %v5301
        %v7798 = vpack.c.b16 %v5366, %v5302
        %v7799 = vpack.c.b16 %v5367, %v5303
        %v7800 = vpack.c.b16 %v5368, %v5304
        %v7801 = vpack.c.b16 %v5369, %v5305
        %v7802 = vpack.c.b16 %v5370, %v5306
        %v7803 = vpack.c.b16 %v5371, %v5307
        %v7804 = vpack.c.b16 %v5372, %v5308
        %v7805 = vpack.c.b16 %v5373, %v5309
        %v7806 = vpack.c.b16 %v5374, %v5310
        %v7807 = vpack.c.b16 %v5375, %v5311
        %v7808 = vpack.c.b16 %v5376, %v5312
        %v7809 = vpack.c.b16 %v5377, %v5313
        %v7810 = vpack.c.b16 %v5378, %v5314
        %v7811 = vpack.c.b16 %v5379, %v5315
        %v7812 = vpack.c.b16 %v5380, %v5316
        %v7813 = vpack.c.b16 %v5381, %v5317
        %v7814 = vpack.c.b16 %v5382, %v5318
        %v7815 = vpack.c.b16 %v5383, %v5319
        %v7816 = vpack.c.b16 %v5384, %v5320
        %v7817 = vpack.c.b16 %v5385, %v5321
        %v7818 = vpack.c.b16 %v5386, %v5322
        %v7819 = vpack.c.b16 %v5387, %v5323
        %v7820 = vpack.c.b16 %v5388, %v5324
        %v7821 = vpack.c.b16 %v5389, %v5325
        %v7822 = vpack.c.b16 %v5390, %v5326
        %v7823 = vpack.c.b16 %v5391, %v5327
        %v7824 = vpack.c.b16 %v5392, %v5328
        %v7825 = vpack.c.b16 %v5393, %v5329
        %v7826 = vpack.c.b16 %v5394, %v5330
        %v7827 = vpack.c.b16 %v5395, %v5331
        %v7828 = vpack.c.b16 %v5396, %v5332
        %v7829 = vpack.c.b16 %v5397, %v5333
        %v7830 = vpack.c.b16 %v5398, %v5334
        %v7831 = vpack.c.b16 %v5399, %v5335
        %v7832 = vpack.c.b16 %v5400, %v5336
        %v7833 = vpack.c.b16 %v5401, %v5337
        %v7834 = vpack.c.b16 %v5402, %v5338
        %v7835 = vpack.c.b16 %v5403, %v5339
        %v7836 = vpack.c.b16 %v5404, %v5340
        %v7837 = vpack.c.b16 %v5405, %v5341
        %v7838 = vpack.c.b16 %v5406, %v5342
        %v7839 = vpack.c.b16 %v5407, %v5343
        %v7840 = vpack.c.b16 %v5408, %v5344
        %v7841 = vpack.c.b16 %v5409, %v5345
        %v7842 = vpack.c.b16 %v5410, %v5346
        %v7843 = vpack.c.b16 %v5411, %v5347
        %v7844 = vpack.c.b16 %v5412, %v5348
        %v7845 = vpack.c.b16 %v5413, %v5349
        %v7846 = vpack.c.b16 %v5414, %v5350
        %v7847 = vpack.c.b16 %v5415, %v5351
        %v7848 = vpack.c.b16 %v5416, %v5352
        %v7849 = vpack.c.b16 %v5417, %v5353
        %v7850 = vpack.c.b16 %v5418, %v5354
        %v7851 = vpack.c.b16 %v5419, %v5355
        %v7852 = vpack.c.b16 %v5420, %v5356
        %v7853 = vpack.c.b16 %v5421, %v5357
        %v7854 = vpack.c.b16 %v5422, %v5358
        %v7855 = vpack.c.b16 %v5423, %v5359
        %v7856 = vpack.c.b16 %v5488, %v5424
        %v7857 = vpack.c.b16 %v5489, %v5425
        %v7858 = vpack.c.b16 %v5490, %v5426
        %v7859 = vpack.c.b16 %v5491, %v5427
        %v7860 = vpack.c.b16 %v5492, %v5428
        %v7861 = vpack.c.b16 %v5493, %v5429
        %v7862 = vpack.c.b16 %v5494, %v5430
        %v7863 = vpack.c.b16 %v5495, %v5431
        %v7864 = vpack.c.b16 %v5496, %v5432
        %v7865 = vpack.c.b16 %v5497, %v5433
        %v7866 = vpack.c.b16 %v5498, %v5434
        %v7867 = vpack.c.b16 %v5499, %v5435
        %v7868 = vpack.c.b16 %v5500, %v5436
        %v7869 = vpack.c.b16 %v5501, %v5437
        %v7870 = vpack.c.b16 %v5502, %v5438
        %v7871 = vpack.c.b16 %v5503, %v5439
        %v7872 = vpack.c.b16 %v5504, %v5440
        %v7873 = vpack.c.b16 %v5505, %v5441
        %v7874 = vpack.c.b16 %v5506, %v5442
        %v7875 = vpack.c.b16 %v5507, %v5443
        %v7876 = vpack.c.b16 %v5508, %v5444
        %v7877 = vpack.c.b16 %v5509, %v5445
        %v7878 = vpack.c.b16 %v5510, %v5446
        %v7879 = vpack.c.b16 %v5511, %v5447
        %v7880 = vpack.c.b16 %v5512, %v5448
        %v7881 = vpack.c.b16 %v5513, %v5449
        %v7882 = vpack.c.b16 %v5514, %v5450
        %v7883 = vpack.c.b16 %v5515, %v5451
        %v7884 = vpack.c.b16 %v5516, %v5452
        %v7885 = vpack.c.b16 %v5517, %v5453
        %v7886 = vpack.c.b16 %v5518, %v5454
        %v7887 = vpack.c.b16 %v5519, %v5455
        %v7888 = vpack.c.b16 %v5520, %v5456
        %v7889 = vpack.c.b16 %v5521, %v5457
        %v7890 = vpack.c.b16 %v5522, %v5458
        %v7891 = vpack.c.b16 %v5523, %v5459
        %v7892 = vpack.c.b16 %v5524, %v5460
        %v7893 = vpack.c.b16 %v5525, %v5461
        %v7894 = vpack.c.b16 %v5526, %v5462
        %v7895 = vpack.c.b16 %v5527, %v5463
        %v7896 = vpack.c.b16 %v5528, %v5464
        %v7897 = vpack.c.b16 %v5529, %v5465
        %v7898 = vpack.c.b16 %v5530, %v5466
        %v7899 = vpack.c.b16 %v5531, %v5467
        %v7900 = vpack.c.b16 %v5532, %v5468
        %v7901 = vpack.c.b16 %v5533, %v5469
        %v7902 = vpack.c.b16 %v5534, %v5470
        %v7903 = vpack.c.b16 %v5535, %v5471
        %v7904 = vpack.c.b16 %v5536, %v5472
        %v7905 = vpack.c.b16 %v5537, %v5473
        %v7906 = vpack.c.b16 %v5538, %v5474
        %v7907 = vpack.c.b16 %v5539, %v5475
        %v7908 = vpack.c.b16 %v5540, %v5476
        %v7909 = vpack.c.b16 %v5541, %v5477
        %v7910 = vpack.c.b16 %v5542, %v5478
        %v7911 = vpack.c.b16 %v5543, %v5479
        %v7912 = vpack.c.b16 %v5544, %v5480
        %v7913 = vpack.c.b16 %v5545, %v5481
        %v7914 = vpack.c.b16 %v5546, %v5482
        %v7915 = vpack.c.b16 %v5547, %v5483
        %v7916 = vpack.c.b16 %v5548, %v5484
        %v7917 = vpack.c.b16 %v5549, %v5485
        %v7918 = vpack.c.b16 %v5550, %v5486
        %v7919 = vpack.c.b16 %v5551, %v5487
        %v7920 = vpack.c.b16 %v5616, %v5552
        %v7921 = vpack.c.b16 %v5617, %v5553
        %v7922 = vpack.c.b16 %v5618, %v5554
        %v7923 = vpack.c.b16 %v5619, %v5555
        %v7924 = vpack.c.b16 %v5620, %v5556
        %v7925 = vpack.c.b16 %v5621, %v5557
        %v7926 = vpack.c.b16 %v5622, %v5558
        %v7927 = vpack.c.b16 %v5623, %v5559
        %v7928 = vpack.c.b16 %v5624, %v5560
        %v7929 = vpack.c.b16 %v5625, %v5561
        %v7930 = vpack.c.b16 %v5626, %v5562
        %v7931 = vpack.c.b16 %v5627, %v5563
        %v7932 = vpack.c.b16 %v5628, %v5564
        %v7933 = vpack.c.b16 %v5629, %v5565
        %v7934 = vpack.c.b16 %v5630, %v5566
        %v7935 = vpack.c.b16 %v5631, %v5567
        %v7936 = vpack.c.b16 %v5632, %v5568
        %v7937 = vpack.c.b16 %v5633, %v5569
        %v7938 = vpack.c.b16 %v5634, %v5570
        %v7939 = vpack.c.b16 %v5635, %v5571
        %v7940 = vpack.c.b16 %v5636, %v5572
        %v7941 = vpack.c.b16 %v5637, %v5573
        %v7942 = vpack.c.b16 %v5638, %v5574
        %v7943 = vpack.c.b16 %v5639, %v5575
        %v7944 = vpack.c.b16 %v5640, %v5576
        %v7945 = vpack.c.b16 %v5641, %v5577
        %v7946 = vpack.c.b16 %v5642, %v5578
        %v7947 = vpack.c.b16 %v5643, %v5579
        %v7948 = vpack.c.b16 %v5644, %v5580
        %v7949 = vpack.c.b16 %v5645, %v5581
        %v7950 = vpack.c.b16 %v5646, %v5582
        %v7951 = vpack.c.b16 %v5647, %v5583
        %v7952 = vpack.c.b16 %v5648, %v5584
        %v7953 = vpack.c.b16 %v5649, %v5585
        %v7954 = vpack.c.b16 %v5650, %v5586
        %v7955 = vpack.c.b16 %v5651, %v5587
        %v7956 = vpack.c.b16 %v5652, %v5588
        %v7957 = vpack.c.b16 %v5653, %v5589
        %v7958 = vpack.c.b16 %v5654, %v5590
        %v7959 = vpack.c.b16 %v5655, %v5591
        %v7960 = vpack.c.b16 %v5656, %v5592
        %v7961 = vpack.c.b16 %v5657, %v5593
        %v7962 = vpack.c.b16 %v5658, %v5594
        %v7963 = vpack.c.b16 %v5659, %v5595
        %v7964 = vpack.c.b16 %v5660, %v5596
        %v7965 = vpack.c.b16 %v5661, %v5597
        %v7966 = vpack.c.b16 %v5662, %v5598
        %v7967 = vpack.c.b16 %v5663, %v5599
        %v7968 = vpack.c.b16 %v5664, %v5600
        %v7969 = vpack.c.b16 %v5665, %v5601
        %v7970 = vpack.c.b16 %v5666, %v5602
        %v7971 = vpack.c.b16 %v5667, %v5603
        %v7972 = vpack.c.b16 %v5668, %v5604
        %v7973 = vpack.c.b16 %v5669, %v5605
        %v7974 = vpack.c.b16 %v5670, %v5606
        %v7975 = vpack.c.b16 %v5671, %v5607
        %v7976 = vpack.c.b16 %v5672, %v5608
        %v7977 = vpack.c.b16 %v5673, %v5609
        %v7978 = vpack.c.b16 %v5674, %v5610
        %v7979 = vpack.c.b16 %v5675, %v5611
        %v7980 = vpack.c.b16 %v5676, %v5612
        %v7981 = vpack.c.b16 %v5677, %v5613
        %v7982 = vpack.c.b16 %v5678, %v5614
        %v7983 = vpack.c.b16 %v5679, %v5615
        %v7984 = vpack.c.b16 %v5744, %v5680
        %v7985 = vpack.c.b16 %v5745, %v5681
        %v7986 = vpack.c.b16 %v5746, %v5682
        %v7987 = vpack.c.b16 %v5747, %v5683
        %v7988 = vpack.c.b16 %v5748, %v5684
        %v7989 = vpack.c.b16 %v5749, %v5685
        %v7990 = vpack.c.b16 %v5750, %v5686
        %v7991 = vpack.c.b16 %v5751, %v5687
        %v7992 = vpack.c.b16 %v5752, %v5688
        %v7993 = vpack.c.b16 %v5753, %v5689
        %v7994 = vpack.c.b16 %v5754, %v5690
        %v7995 = vpack.c.b16 %v5755, %v5691
        %v7996 = vpack.c.b16 %v5756, %v5692
        %v7997 = vpack.c.b16 %v5757, %v5693
        %v7998 = vpack.c.b16 %v5758, %v5694
        %v7999 = vpack.c.b16 %v5759, %v5695
        %v8000 = vpack.c.b16 %v5760, %v5696
        %v8001 = vpack.c.b16 %v5761, %v5697
        %v8002 = vpack.c.b16 %v5762, %v5698
        %v8003 = vpack.c.b16 %v5763, %v5699
        %v8004 = vpack.c.b16 %v5764, %v5700
        %v8005 = vpack.c.b16 %v5765, %v5701
        %v8006 = vpack.c.b16 %v5766, %v5702
        %v8007 = vpack.c.b16 %v5767, %v5703
        %v8008 = vpack.c.b16 %v5768, %v5704
        %v8009 = vpack.c.b16 %v5769, %v5705
        %v8010 = vpack.c.b16 %v5770, %v5706
        %v8011 = vpack.c.b16 %v5771, %v5707
        %v8012 = vpack.c.b16 %v5772, %v5708
        %v8013 = vpack.c.b16 %v5773, %v5709
        %v8014 = vpack.c.b16 %v5774, %v5710
        %v8015 = vpack.c.b16 %v5775, %v5711
        %v8016 = vpack.c.b16 %v5776, %v5712
        %v8017 = vpack.c.b16 %v5777, %v5713
        %v8018 = vpack.c.b16 %v5778, %v5714
        %v8019 = vpack.c.b16 %v5779, %v5715
        %v8020 = vpack.c.b16 %v5780, %v5716
        %v8021 = vpack.c.b16 %v5781, %v5717
        %v8022 = vpack.c.b16 %v5782, %v5718
        %v8023 = vpack.c.b16 %v5783, %v5719
        %v8024 = vpack.c.b16 %v5784, %v5720
        %v8025 = vpack.c.b16 %v5785, %v5721
        %v8026 = vpack.c.b16 %v5786, %v5722
        %v8027 = vpack.c.b16 %v5787, %v5723
        %v8028 = vpack.c.b16 %v5788, %v5724
        %v8029 = vpack.c.b16 %v5789, %v5725
        %v8030 = vpack.c.b16 %v5790, %v5726
        %v8031 = vpack.c.b16 %v5791, %v5727
        %v8032 = vpack.c.b16 %v5792, %v5728
        %v8033 = vpack.c.b16 %v5793, %v5729
        %v8034 = vpack.c.b16 %v5794, %v5730
        %v8035 = vpack.c.b16 %v5795, %v5731
        %v8036 = vpack.c.b16 %v5796, %v5732
        %v8037 = vpack.c.b16 %v5797, %v5733
        %v8038 = vpack.c.b16 %v5798, %v5734
        %v8039 = vpack.c.b16 %v5799, %v5735
        %v8040 = vpack.c.b16 %v5800, %v5736
        %v8041 = vpack.c.b16 %v5801, %v5737
        %v8042 = vpack.c.b16 %v5802, %v5738
        %v8043 = vpack.c.b16 %v5803, %v5739
        %v8044 = vpack.c.b16 %v5804, %v5740
        %v8045 = vpack.c.b16 %v5805, %v5741
        %v8046 = vpack.c.b16 %v5806, %v5742
        %v8047 = vpack.c.b16 %v5807, %v5743
        %v8048 = vpack.c.b16 %v5872, %v5808
        %v8049 = vpack.c.b16 %v5873, %v5809
        %v8050 = vpack.c.b16 %v5874, %v5810
        %v8051 = vpack.c.b16 %v5875, %v5811
        %v8052 = vpack.c.b16 %v5876, %v5812
        %v8053 = vpack.c.b16 %v5877, %v5813
        %v8054 = vpack.c.b16 %v5878, %v5814
        %v8055 = vpack.c.b16 %v5879, %v5815
        %v8056 = vpack.c.b16 %v5880, %v5816
        %v8057 = vpack.c.b16 %v5881, %v5817
        %v8058 = vpack.c.b16 %v5882, %v5818
        %v8059 = vpack.c.b16 %v5883, %v5819
        %v8060 = vpack.c.b16 %v5884, %v5820
        %v8061 = vpack.c.b16 %v5885, %v5821
        %v8062 = vpack.c.b16 %v5886, %v5822
        %v8063 = vpack.c.b16 %v5887, %v5823
        %v8064 = vpack.c.b16 %v5888, %v5824
        %v8065 = vpack.c.b16 %v5889, %v5825
        %v8066 = vpack.c.b16 %v5890, %v5826
        %v8067 = vpack.c.b16 %v5891, %v5827
        %v8068 = vpack.c.b16 %v5892, %v5828
        %v8069 = vpack.c.b16 %v5893, %v5829
        %v8070 = vpack.c.b16 %v5894, %v5830
        %v8071 = vpack.c.b16 %v5895, %v5831
        %v8072 = vpack.c.b16 %v5896, %v5832
        %v8073 = vpack.c.b16 %v5897, %v5833
        %v8074 = vpack.c.b16 %v5898, %v5834
        %v8075 = vpack.c.b16 %v5899, %v5835
        %v8076 = vpack.c.b16 %v5900, %v5836
        %v8077 = vpack.c.b16 %v5901, %v5837
        %v8078 = vpack.c.b16 %v5902, %v5838
        %v8079 = vpack.c.b16 %v5903, %v5839
        %v8080 = vpack.c.b16 %v5904, %v5840
        %v8081 = vpack.c.b16 %v5905, %v5841
        %v8082 = vpack.c.b16 %v5906, %v5842
        %v8083 = vpack.c.b16 %v5907, %v5843
        %v8084 = vpack.c.b16 %v5908, %v5844
        %v8085 = vpack.c.b16 %v5909, %v5845
        %v8086 = vpack.c.b16 %v5910, %v5846
        %v8087 = vpack.c.b16 %v5911, %v5847
        %v8088 = vpack.c.b16 %v5912, %v5848
        %v8089 = vpack.c.b16 %v5913, %v5849
        %v8090 = vpack.c.b16 %v5914, %v5850
        %v8091 = vpack.c.b16 %v5915, %v5851
        %v8092 = vpack.c.b16 %v5916, %v5852
        %v8093 = vpack.c.b16 %v5917, %v5853
        %v8094 = vpack.c.b16 %v5918, %v5854
        %v8095 = vpack.c.b16 %v5919, %v5855
        %v8096 = vpack.c.b16 %v5920, %v5856
        %v8097 = vpack.c.b16 %v5921, %v5857
        %v8098 = vpack.c.b16 %v5922, %v5858
        %v8099 = vpack.c.b16 %v5923, %v5859
        %v8100 = vpack.c.b16 %v5924, %v5860
        %v8101 = vpack.c.b16 %v5925, %v5861
        %v8102 = vpack.c.b16 %v5926, %v5862
        %v8103 = vpack.c.b16 %v5927, %v5863
        %v8104 = vpack.c.b16 %v5928, %v5864
        %v8105 = vpack.c.b16 %v5929, %v5865
        %v8106 = vpack.c.b16 %v5930, %v5866
        %v8107 = vpack.c.b16 %v5931, %v5867
        %v8108 = vpack.c.b16 %v5932, %v5868
        %v8109 = vpack.c.b16 %v5933, %v5869
        %v8110 = vpack.c.b16 %v5934, %v5870
        %v8111 = vpack.c.b16 %v5935, %v5871
        %v8112 = vpack.c.b16 %v6000, %v5936
        %v8113 = vpack.c.b16 %v6001, %v5937
        %v8114 = vpack.c.b16 %v6002, %v5938
        %v8115 = vpack.c.b16 %v6003, %v5939
        %v8116 = vpack.c.b16 %v6004, %v5940
        %v8117 = vpack.c.b16 %v6005, %v5941
        %v8118 = vpack.c.b16 %v6006, %v5942
        %v8119 = vpack.c.b16 %v6007, %v5943
        %v8120 = vpack.c.b16 %v6008, %v5944
        %v8121 = vpack.c.b16 %v6009, %v5945
        %v8122 = vpack.c.b16 %v6010, %v5946
        %v8123 = vpack.c.b16 %v6011, %v5947
        %v8124 = vpack.c.b16 %v6012, %v5948
        %v8125 = vpack.c.b16 %v6013, %v5949
        %v8126 = vpack.c.b16 %v6014, %v5950
        %v8127 = vpack.c.b16 %v6015, %v5951
        %v8128 = vpack.c.b16 %v6016, %v5952
        %v8129 = vpack.c.b16 %v6017, %v5953
        %v8130 = vpack.c.b16 %v6018, %v5954
        %v8131 = vpack.c.b16 %v6019, %v5955
        %v8132 = vpack.c.b16 %v6020, %v5956
        %v8133 = vpack.c.b16 %v6021, %v5957
        %v8134 = vpack.c.b16 %v6022, %v5958
        %v8135 = vpack.c.b16 %v6023, %v5959
        %v8136 = vpack.c.b16 %v6024, %v5960
        %v8137 = vpack.c.b16 %v6025, %v5961
        %v8138 = vpack.c.b16 %v6026, %v5962
        %v8139 = vpack.c.b16 %v6027, %v5963
        %v8140 = vpack.c.b16 %v6028, %v5964
        %v8141 = vpack.c.b16 %v6029, %v5965
        %v8142 = vpack.c.b16 %v6030, %v5966
        %v8143 = vpack.c.b16 %v6031, %v5967
        %v8144 = vpack.c.b16 %v6032, %v5968
        %v8145 = vpack.c.b16 %v6033, %v5969
        %v8146 = vpack.c.b16 %v6034, %v5970
        %v8147 = vpack.c.b16 %v6035, %v5971
        %v8148 = vpack.c.b16 %v6036, %v5972
        %v8149 = vpack.c.b16 %v6037, %v5973
        %v8150 = vpack.c.b16 %v6038, %v5974
        %v8151 = vpack.c.b16 %v6039, %v5975
        %v8152 = vpack.c.b16 %v6040, %v5976
        %v8153 = vpack.c.b16 %v6041, %v5977
        %v8154 = vpack.c.b16 %v6042, %v5978
        %v8155 = vpack.c.b16 %v6043, %v5979
        %v8156 = vpack.c.b16 %v6044, %v5980
        %v8157 = vpack.c.b16 %v6045, %v5981
        %v8158 = vpack.c.b16 %v6046, %v5982
        %v8159 = vpack.c.b16 %v6047, %v5983
        %v8160 = vpack.c.b16 %v6048, %v5984
        %v8161 = vpack.c.b16 %v6049, %v5985
        %v8162 = vpack.c.b16 %v6050, %v5986
        %v8163 = vpack.c.b16 %v6051, %v5987
        %v8164 = vpack.c.b16 %v6052, %v5988
        %v8165 = vpack.c.b16 %v6053, %v5989
        %v8166 = vpack.c.b16 %v6054, %v5990
        %v8167 = vpack.c.b16 %v6055, %v5991
        %v8168 = vpack.c.b16 %v6056, %v5992
        %v8169 = vpack.c.b16 %v6057, %v5993
        %v8170 = vpack.c.b16 %v6058, %v5994
        %v8171 = vpack.c.b16 %v6059, %v5995
        %v8172 = vpack.c.b16 %v6060, %v5996
        %v8173 = vpack.c.b16 %v6061, %v5997
        %v8174 = vpack.c.b16 %v6062, %v5998
        %v8175 = vpack.c.b16 %v6063, %v5999
        %v8176 = vpack.c.b16 %v6128, %v6064
        %v8177 = vpack.c.b16 %v6129, %v6065
        %v8178 = vpack.c.b16 %v6130, %v6066
        %v8179 = vpack.c.b16 %v6131, %v6067
        %v8180 = vpack.c.b16 %v6132, %v6068
        %v8181 = vpack.c.b16 %v6133, %v6069
        %v8182 = vpack.c.b16 %v6134, %v6070
        %v8183 = vpack.c.b16 %v6135, %v6071
        %v8184 = vpack.c.b16 %v6136, %v6072
        %v8185 = vpack.c.b16 %v6137, %v6073
        %v8186 = vpack.c.b16 %v6138, %v6074
        %v8187 = vpack.c.b16 %v6139, %v6075
        %v8188 = vpack.c.b16 %v6140, %v6076
        %v8189 = vpack.c.b16 %v6141, %v6077
        %v8190 = vpack.c.b16 %v6142, %v6078
        %v8191 = vpack.c.b16 %v6143, %v6079
        %v8192 = vpack.c.b16 %v6144, %v6080
        %v8193 = vpack.c.b16 %v6145, %v6081
        %v8194 = vpack.c.b16 %v6146, %v6082
        %v8195 = vpack.c.b16 %v6147, %v6083
        %v8196 = vpack.c.b16 %v6148, %v6084
        %v8197 = vpack.c.b16 %v6149, %v6085
        %v8198 = vpack.c.b16 %v6150, %v6086
        %v8199 = vpack.c.b16 %v6151, %v6087
        %v8200 = vpack.c.b16 %v6152, %v6088
        %v8201 = vpack.c.b16 %v6153, %v6089
        %v8202 = vpack.c.b16 %v6154, %v6090
        %v8203 = vpack.c.b16 %v6155, %v6091
        %v8204 = vpack.c.b16 %v6156, %v6092
        %v8205 = vpack.c.b16 %v6157, %v6093
        %v8206 = vpack.c.b16 %v6158, %v6094
        %v8207 = vpack.c.b16 %v6159, %v6095
        %v8208 = vpack.c.b16 %v6160, %v6096
        %v8209 = vpack.c.b16 %v6161, %v6097
        %v8210 = vpack.c.b16 %v6162, %v6098
        %v8211 = vpack.c.b16 %v6163, %v6099
        %v8212 = vpack.c.b16 %v6164, %v6100
        %v8213 = vpack.c.b16 %v6165, %v6101
        %v8214 = vpack.c.b16 %v6166, %v6102
        %v8215 = vpack.c.b16 %v6167, %v6103
        %v8216 = vpack.c.b16 %v6168, %v6104
        %v8217 = vpack.c.b16 %v6169, %v6105
        %v8218 = vpack.c.b16 %v6170, %v6106
        %v8219 = vpack.c.b16 %v6171, %v6107
        %v8220 = vpack.c.b16 %v6172, %v6108
        %v8221 = vpack.c.b16 %v6173, %v6109
        %v8222 = vpack.c.b16 %v6174, %v6110
        %v8223 = vpack.c.b16 %v6175, %v6111
        %v8224 = vpack.c.b16 %v6176, %v6112
        %v8225 = vpack.c.b16 %v6177, %v6113
        %v8226 = vpack.c.b16 %v6178, %v6114
        %v8227 = vpack.c.b16 %v6179, %v6115
        %v8228 = vpack.c.b16 %v6180, %v6116
        %v8229 = vpack.c.b16 %v6181, %v6117
        %v8230 = vpack.c.b16 %v6182, %v6118
        %v8231 = vpack.c.b16 %v6183, %v6119
        %v8232 = vpack.c.b16 %v6184, %v6120
        %v8233 = vpack.c.b16 %v6185, %v6121
        %v8234 = vpack.c.b16 %v6186, %v6122
        %v8235 = vpack.c.b16 %v6187, %v6123
        %v8236 = vpack.c.b16 %v6188, %v6124
        %v8237 = vpack.c.b16 %v6189, %v6125
        %v8238 = vpack.c.b16 %v6190, %v6126
        %v8239 = vpack.c.b16 %v6191, %v6127
        %v8240 = vpack.c.b16 %v6256, %v6192
        %v8241 = vpack.c.b16 %v6257, %v6193
        %v8242 = vpack.c.b16 %v6258, %v6194
        %v8243 = vpack.c.b16 %v6259, %v6195
        %v8244 = vpack.c.b16 %v6260, %v6196
        %v8245 = vpack.c.b16 %v6261, %v6197
        %v8246 = vpack.c.b16 %v6262, %v6198
        %v8247 = vpack.c.b16 %v6263, %v6199
        %v8248 = vpack.c.b16 %v6264, %v6200
        %v8249 = vpack.c.b16 %v6265, %v6201
        %v8250 = vpack.c.b16 %v6266, %v6202
        %v8251 = vpack.c.b16 %v6267, %v6203
        %v8252 = vpack.c.b16 %v6268, %v6204
        %v8253 = vpack.c.b16 %v6269, %v6205
        %v8254 = vpack.c.b16 %v6270, %v6206
        %v8255 = vpack.c.b16 %v6271, %v6207
        %v8256 = vpack.c.b16 %v6272, %v6208
        %v8257 = vpack.c.b16 %v6273, %v6209
        %v8258 = vpack.c.b16 %v6274, %v6210
        %v8259 = vpack.c.b16 %v6275, %v6211
        %v8260 = vpack.c.b16 %v6276, %v6212
        %v8261 = vpack.c.b16 %v6277, %v6213
        %v8262 = vpack.c.b16 %v6278, %v6214
        %v8263 = vpack.c.b16 %v6279, %v6215
        %v8264 = vpack.c.b16 %v6280, %v6216
        %v8265 = vpack.c.b16 %v6281, %v6217
        %v8266 = vpack.c.b16 %v6282, %v6218
        %v8267 = vpack.c.b16 %v6283, %v6219
        %v8268 = vpack.c.b16 %v6284, %v6220
        %v8269 = vpack.c.b16 %v6285, %v6221
        %v8270 = vpack.c.b16 %v6286, %v6222
        %v8271 = vpack.c.b16 %v6287, %v6223
        %v8272 = vpack.c.b16 %v6288, %v6224
        %v8273 = vpack.c.b16 %v6289, %v6225
        %v8274 = vpack.c.b16 %v6290, %v6226
        %v8275 = vpack.c.b16 %v6291, %v6227
        %v8276 = vpack.c.b16 %v6292, %v6228
        %v8277 = vpack.c.b16 %v6293, %v6229
        %v8278 = vpack.c.b16 %v6294, %v6230
        %v8279 = vpack.c.b16 %v6295, %v6231
        %v8280 = vpack.c.b16 %v6296, %v6232
        %v8281 = vpack.c.b16 %v6297, %v6233
        %v8282 = vpack.c.b16 %v6298, %v6234
        %v8283 = vpack.c.b16 %v6299, %v6235
        %v8284 = vpack.c.b16 %v6300, %v6236
        %v8285 = vpack.c.b16 %v6301, %v6237
        %v8286 = vpack.c.b16 %v6302, %v6238
        %v8287 = vpack.c.b16 %v6303, %v6239
        %v8288 = vpack.c.b16 %v6304, %v6240
        %v8289 = vpack.c.b16 %v6305, %v6241
        %v8290 = vpack.c.b16 %v6306, %v6242
        %v8291 = vpack.c.b16 %v6307, %v6243
        %v8292 = vpack.c.b16 %v6308, %v6244
        %v8293 = vpack.c.b16 %v6309, %v6245
        %v8294 = vpack.c.b16 %v6310, %v6246
        %v8295 = vpack.c.b16 %v6311, %v6247
        %v8296 = vpack.c.b16 %v6312, %v6248
        %v8297 = vpack.c.b16 %v6313, %v6249
        %v8298 = vpack.c.b16 %v6314, %v6250
        %v8299 = vpack.c.b16 %v6315, %v6251
        %v8300 = vpack.c.b16 %v6316, %v6252
        %v8301 = vpack.c.b16 %v6317, %v6253
        %v8302 = vpack.c.b16 %v6318, %v6254
        %v8303 = vpack.c.b16 %v6319, %v6255
        %v8304 = vpack.c.b16 %v6384, %v6320
        %v8305 = vpack.c.b16 %v6385, %v6321
        %v8306 = vpack.c.b16 %v6386, %v6322
        %v8307 = vpack.c.b16 %v6387, %v6323
        %v8308 = vpack.c.b16 %v6388, %v6324
        %v8309 = vpack.c.b16 %v6389, %v6325
        %v8310 = vpack.c.b16 %v6390, %v6326
        %v8311 = vpack.c.b16 %v6391, %v6327
        %v8312 = vpack.c.b16 %v6392, %v6328
        %v8313 = vpack.c.b16 %v6393, %v6329
        %v8314 = vpack.c.b16 %v6394, %v6330
        %v8315 = vpack.c.b16 %v6395, %v6331
        %v8316 = vpack.c.b16 %v6396, %v6332
        %v8317 = vpack.c.b16 %v6397, %v6333
        %v8318 = vpack.c.b16 %v6398, %v6334
        %v8319 = vpack.c.b16 %v6399, %v6335
        %v8320 = vpack.c.b16 %v6400, %v6336
        %v8321 = vpack.c.b16 %v6401, %v6337
        %v8322 = vpack.c.b16 %v6402, %v6338
        %v8323 = vpack.c.b16 %v6403, %v6339
        %v8324 = vpack.c.b16 %v6404, %v6340
        %v8325 = vpack.c.b16 %v6405, %v6341
        %v8326 = vpack.c.b16 %v6406, %v6342
        %v8327 = vpack.c.b16 %v6407, %v6343
        %v8328 = vpack.c.b16 %v6408, %v6344
        %v8329 = vpack.c.b16 %v6409, %v6345
        %v8330 = vpack.c.b16 %v6410, %v6346
        %v8331 = vpack.c.b16 %v6411, %v6347
        %v8332 = vpack.c.b16 %v6412, %v6348
        %v8333 = vpack.c.b16 %v6413, %v6349
        %v8334 = vpack.c.b16 %v6414, %v6350
        %v8335 = vpack.c.b16 %v6415, %v6351
        %v8336 = vpack.c.b16 %v6416, %v6352
        %v8337 = vpack.c.b16 %v6417, %v6353
        %v8338 = vpack.c.b16 %v6418, %v6354
        %v8339 = vpack.c.b16 %v6419, %v6355
        %v8340 = vpack.c.b16 %v6420, %v6356
        %v8341 = vpack.c.b16 %v6421, %v6357
        %v8342 = vpack.c.b16 %v6422, %v6358
        %v8343 = vpack.c.b16 %v6423, %v6359
        %v8344 = vpack.c.b16 %v6424, %v6360
        %v8345 = vpack.c.b16 %v6425, %v6361
        %v8346 = vpack.c.b16 %v6426, %v6362
        %v8347 = vpack.c.b16 %v6427, %v6363
        %v8348 = vpack.c.b16 %v6428, %v6364
        %v8349 = vpack.c.b16 %v6429, %v6365
        %v8350 = vpack.c.b16 %v6430, %v6366
        %v8351 = vpack.c.b16 %v6431, %v6367
        %v8352 = vpack.c.b16 %v6432, %v6368
        %v8353 = vpack.c.b16 %v6433, %v6369
        %v8354 = vpack.c.b16 %v6434, %v6370
        %v8355 = vpack.c.b16 %v6435, %v6371
        %v8356 = vpack.c.b16 %v6436, %v6372
        %v8357 = vpack.c.b16 %v6437, %v6373
        %v8358 = vpack.c.b16 %v6438, %v6374
        %v8359 = vpack.c.b16 %v6439, %v6375
        %v8360 = vpack.c.b16 %v6440, %v6376
        %v8361 = vpack.c.b16 %v6441, %v6377
        %v8362 = vpack.c.b16 %v6442, %v6378
        %v8363 = vpack.c.b16 %v6443, %v6379
        %v8364 = vpack.c.b16 %v6444, %v6380
        %v8365 = vpack.c.b16 %v6445, %v6381
        %v8366 = vpack.c.b16 %v6446, %v6382
        %v8367 = vpack.c.b16 %v6447, %v6383
        %v8368 = vpack.c.b16 %v6512, %v6448
        %v8369 = vpack.c.b16 %v6513, %v6449
        %v8370 = vpack.c.b16 %v6514, %v6450
        %v8371 = vpack.c.b16 %v6515, %v6451
        %v8372 = vpack.c.b16 %v6516, %v6452
        %v8373 = vpack.c.b16 %v6517, %v6453
        %v8374 = vpack.c.b16 %v6518, %v6454
        %v8375 = vpack.c.b16 %v6519, %v6455
        %v8376 = vpack.c.b16 %v6520, %v6456
        %v8377 = vpack.c.b16 %v6521, %v6457
        %v8378 = vpack.c.b16 %v6522, %v6458
        %v8379 = vpack.c.b16 %v6523, %v6459
        %v8380 = vpack.c.b16 %v6524, %v6460
        %v8381 = vpack.c.b16 %v6525, %v6461
        %v8382 = vpack.c.b16 %v6526, %v6462
        %v8383 = vpack.c.b16 %v6527, %v6463
        %v8384 = vpack.c.b16 %v6528, %v6464
        %v8385 = vpack.c.b16 %v6529, %v6465
        %v8386 = vpack.c.b16 %v6530, %v6466
        %v8387 = vpack.c.b16 %v6531, %v6467
        %v8388 = vpack.c.b16 %v6532, %v6468
        %v8389 = vpack.c.b16 %v6533, %v6469
        %v8390 = vpack.c.b16 %v6534, %v6470
        %v8391 = vpack.c.b16 %v6535, %v6471
        %v8392 = vpack.c.b16 %v6536, %v6472
        %v8393 = vpack.c.b16 %v6537, %v6473
        %v8394 = vpack.c.b16 %v6538, %v6474
        %v8395 = vpack.c.b16 %v6539, %v6475
        %v8396 = vpack.c.b16 %v6540, %v6476
        %v8397 = vpack.c.b16 %v6541, %v6477
        %v8398 = vpack.c.b16 %v6542, %v6478
        %v8399 = vpack.c.b16 %v6543, %v6479
        %v8400 = vpack.c.b16 %v6544, %v6480
        %v8401 = vpack.c.b16 %v6545, %v6481
        %v8402 = vpack.c.b16 %v6546, %v6482
        %v8403 = vpack.c.b16 %v6547, %v6483
        %v8404 = vpack.c.b16 %v6548, %v6484
        %v8405 = vpack.c.b16 %v6549, %v6485
        %v8406 = vpack.c.b16 %v6550, %v6486
        %v8407 = vpack.c.b16 %v6551, %v6487
        %v8408 = vpack.c.b16 %v6552, %v6488
        %v8409 = vpack.c.b16 %v6553, %v6489
        %v8410 = vpack.c.b16 %v6554, %v6490
        %v8411 = vpack.c.b16 %v6555, %v6491
        %v8412 = vpack.c.b16 %v6556, %v6492
        %v8413 = vpack.c.b16 %v6557, %v6493
        %v8414 = vpack.c.b16 %v6558, %v6494
        %v8415 = vpack.c.b16 %v6559, %v6495
        %v8416 = vpack.c.b16 %v6560, %v6496
        %v8417 = vpack.c.b16 %v6561, %v6497
        %v8418 = vpack.c.b16 %v6562, %v6498
        %v8419 = vpack.c.b16 %v6563, %v6499
        %v8420 = vpack.c.b16 %v6564, %v6500
        %v8421 = vpack.c.b16 %v6565, %v6501
        %v8422 = vpack.c.b16 %v6566, %v6502
        %v8423 = vpack.c.b16 %v6567, %v6503
        %v8424 = vpack.c.b16 %v6568, %v6504
        %v8425 = vpack.c.b16 %v6569, %v6505
        %v8426 = vpack.c.b16 %v6570, %v6506
        %v8427 = vpack.c.b16 %v6571, %v6507
        %v8428 = vpack.c.b16 %v6572, %v6508
        %v8429 = vpack.c.b16 %v6573, %v6509
        %v8430 = vpack.c.b16 %v6574, %v6510
        %v8431 = vpack.c.b16 %v6575, %v6511
        %v8432 = vpack.c.b16 %v6640, %v6576
        %v8433 = vpack.c.b16 %v6641, %v6577
        %v8434 = vpack.c.b16 %v6642, %v6578
        %v8435 = vpack.c.b16 %v6643, %v6579
        %v8436 = vpack.c.b16 %v6644, %v6580
        %v8437 = vpack.c.b16 %v6645, %v6581
        %v8438 = vpack.c.b16 %v6646, %v6582
        %v8439 = vpack.c.b16 %v6647, %v6583
        %v8440 = vpack.c.b16 %v6648, %v6584
        %v8441 = vpack.c.b16 %v6649, %v6585
        %v8442 = vpack.c.b16 %v6650, %v6586
        %v8443 = vpack.c.b16 %v6651, %v6587
        %v8444 = vpack.c.b16 %v6652, %v6588
        %v8445 = vpack.c.b16 %v6653, %v6589
        %v8446 = vpack.c.b16 %v6654, %v6590
        %v8447 = vpack.c.b16 %v6655, %v6591
        %v8448 = vpack.c.b16 %v6656, %v6592
        %v8449 = vpack.c.b16 %v6657, %v6593
        %v8450 = vpack.c.b16 %v6658, %v6594
        %v8451 = vpack.c.b16 %v6659, %v6595
        %v8452 = vpack.c.b16 %v6660, %v6596
        %v8453 = vpack.c.b16 %v6661, %v6597
        %v8454 = vpack.c.b16 %v6662, %v6598
        %v8455 = vpack.c.b16 %v6663, %v6599
        %v8456 = vpack.c.b16 %v6664, %v6600
        %v8457 = vpack.c.b16 %v6665, %v6601
        %v8458 = vpack.c.b16 %v6666, %v6602
        %v8459 = vpack.c.b16 %v6667, %v6603
        %v8460 = vpack.c.b16 %v6668, %v6604
        %v8461 = vpack.c.b16 %v6669, %v6605
        %v8462 = vpack.c.b16 %v6670, %v6606
        %v8463 = vpack.c.b16 %v6671, %v6607
        %v8464 = vpack.c.b16 %v6672, %v6608
        %v8465 = vpack.c.b16 %v6673, %v6609
        %v8466 = vpack.c.b16 %v6674, %v6610
        %v8467 = vpack.c.b16 %v6675, %v6611
        %v8468 = vpack.c.b16 %v6676, %v6612
        %v8469 = vpack.c.b16 %v6677, %v6613
        %v8470 = vpack.c.b16 %v6678, %v6614
        %v8471 = vpack.c.b16 %v6679, %v6615
        %v8472 = vpack.c.b16 %v6680, %v6616
        %v8473 = vpack.c.b16 %v6681, %v6617
        %v8474 = vpack.c.b16 %v6682, %v6618
        %v8475 = vpack.c.b16 %v6683, %v6619
        %v8476 = vpack.c.b16 %v6684, %v6620
        %v8477 = vpack.c.b16 %v6685, %v6621
        %v8478 = vpack.c.b16 %v6686, %v6622
        %v8479 = vpack.c.b16 %v6687, %v6623
        %v8480 = vpack.c.b16 %v6688, %v6624
        %v8481 = vpack.c.b16 %v6689, %v6625
        %v8482 = vpack.c.b16 %v6690, %v6626
        %v8483 = vpack.c.b16 %v6691, %v6627
        %v8484 = vpack.c.b16 %v6692, %v6628
        %v8485 = vpack.c.b16 %v6693, %v6629
        %v8486 = vpack.c.b16 %v6694, %v6630
        %v8487 = vpack.c.b16 %v6695, %v6631
        %v8488 = vpack.c.b16 %v6696, %v6632
        %v8489 = vpack.c.b16 %v6697, %v6633
        %v8490 = vpack.c.b16 %v6698, %v6634
        %v8491 = vpack.c.b16 %v6699, %v6635
        %v8492 = vpack.c.b16 %v6700, %v6636
        %v8493 = vpack.c.b16 %v6701, %v6637
        %v8494 = vpack.c.b16 %v6702, %v6638
        %v8495 = vpack.c.b16 %v6703, %v6639
        %v8496 = vpack.c.b16 %v6768, %v6704
        %v8497 = vpack.c.b16 %v6769, %v6705
        %v8498 = vpack.c.b16 %v6770, %v6706
        %v8499 = vpack.c.b16 %v6771, %v6707
        %v8500 = vpack.c.b16 %v6772, %v6708
        %v8501 = vpack.c.b16 %v6773, %v6709
        %v8502 = vpack.c.b16 %v6774, %v6710
        %v8503 = vpack.c.b16 %v6775, %v6711
        %v8504 = vpack.c.b16 %v6776, %v6712
        %v8505 = vpack.c.b16 %v6777, %v6713
        %v8506 = vpack.c.b16 %v6778, %v6714
        %v8507 = vpack.c.b16 %v6779, %v6715
        %v8508 = vpack.c.b16 %v6780, %v6716
        %v8509 = vpack.c.b16 %v6781, %v6717
        %v8510 = vpack.c.b16 %v6782, %v6718
        %v8511 = vpack.c.b16 %v6783, %v6719
        %v8512 = vpack.c.b16 %v6784, %v6720
        %v8513 = vpack.c.b16 %v6785, %v6721
        %v8514 = vpack.c.b16 %v6786, %v6722
        %v8515 = vpack.c.b16 %v6787, %v6723
        %v8516 = vpack.c.b16 %v6788, %v6724
        %v8517 = vpack.c.b16 %v6789, %v6725
        %v8518 = vpack.c.b16 %v6790, %v6726
        %v8519 = vpack.c.b16 %v6791, %v6727
        %v8520 = vpack.c.b16 %v6792, %v6728
        %v8521 = vpack.c.b16 %v6793, %v6729
        %v8522 = vpack.c.b16 %v6794, %v6730
        %v8523 = vpack.c.b16 %v6795, %v6731
        %v8524 = vpack.c.b16 %v6796, %v6732
        %v8525 = vpack.c.b16 %v6797, %v6733
        %v8526 = vpack.c.b16 %v6798, %v6734
        %v8527 = vpack.c.b16 %v6799, %v6735
        %v8528 = vpack.c.b16 %v6800, %v6736
        %v8529 = vpack.c.b16 %v6801, %v6737
        %v8530 = vpack.c.b16 %v6802, %v6738
        %v8531 = vpack.c.b16 %v6803, %v6739
        %v8532 = vpack.c.b16 %v6804, %v6740
        %v8533 = vpack.c.b16 %v6805, %v6741
        %v8534 = vpack.c.b16 %v6806, %v6742
        %v8535 = vpack.c.b16 %v6807, %v6743
        %v8536 = vpack.c.b16 %v6808, %v6744
        %v8537 = vpack.c.b16 %v6809, %v6745
        %v8538 = vpack.c.b16 %v6810, %v6746
        %v8539 = vpack.c.b16 %v6811, %v6747
        %v8540 = vpack.c.b16 %v6812, %v6748
        %v8541 = vpack.c.b16 %v6813, %v6749
        %v8542 = vpack.c.b16 %v6814, %v6750
        %v8543 = vpack.c.b16 %v6815, %v6751
        %v8544 = vpack.c.b16 %v6816, %v6752
        %v8545 = vpack.c.b16 %v6817, %v6753
        %v8546 = vpack.c.b16 %v6818, %v6754
        %v8547 = vpack.c.b16 %v6819, %v6755
        %v8548 = vpack.c.b16 %v6820, %v6756
        %v8549 = vpack.c.b16 %v6821, %v6757
        %v8550 = vpack.c.b16 %v6822, %v6758
        %v8551 = vpack.c.b16 %v6823, %v6759
        %v8552 = vpack.c.b16 %v6824, %v6760
        %v8553 = vpack.c.b16 %v6825, %v6761
        %v8554 = vpack.c.b16 %v6826, %v6762
        %v8555 = vpack.c.b16 %v6827, %v6763
        %v8556 = vpack.c.b16 %v6828, %v6764
        %v8557 = vpack.c.b16 %v6829, %v6765
        %v8558 = vpack.c.b16 %v6830, %v6766
        %v8559 = vpack.c.b16 %v6831, %v6767
        %v8560 = vpack.c.b16 %v6896, %v6832
        %v8561 = vpack.c.b16 %v6897, %v6833
        %v8562 = vpack.c.b16 %v6898, %v6834
        %v8563 = vpack.c.b16 %v6899, %v6835
        %v8564 = vpack.c.b16 %v6900, %v6836
        %v8565 = vpack.c.b16 %v6901, %v6837
        %v8566 = vpack.c.b16 %v6902, %v6838
        %v8567 = vpack.c.b16 %v6903, %v6839
        %v8568 = vpack.c.b16 %v6904, %v6840
        %v8569 = vpack.c.b16 %v6905, %v6841
        %v8570 = vpack.c.b16 %v6906, %v6842
        %v8571 = vpack.c.b16 %v6907, %v6843
        %v8572 = vpack.c.b16 %v6908, %v6844
        %v8573 = vpack.c.b16 %v6909, %v6845
        %v8574 = vpack.c.b16 %v6910, %v6846
        %v8575 = vpack.c.b16 %v6911, %v6847
        %v8576 = vpack.c.b16 %v6912, %v6848
        %v8577 = vpack.c.b16 %v6913, %v6849
        %v8578 = vpack.c.b16 %v6914, %v6850
        %v8579 = vpack.c.b16 %v6915, %v6851
        %v8580 = vpack.c.b16 %v6916, %v6852
        %v8581 = vpack.c.b16 %v6917, %v6853
        %v8582 = vpack.c.b16 %v6918, %v6854
        %v8583 = vpack.c.b16 %v6919, %v6855
        %v8584 = vpack.c.b16 %v6920, %v6856
        %v8585 = vpack.c.b16 %v6921, %v6857
        %v8586 = vpack.c.b16 %v6922, %v6858
        %v8587 = vpack.c.b16 %v6923, %v6859
        %v8588 = vpack.c.b16 %v6924, %v6860
        %v8589 = vpack.c.b16 %v6925, %v6861
        %v8590 = vpack.c.b16 %v6926, %v6862
        %v8591 = vpack.c.b16 %v6927, %v6863
        %v8592 = vpack.c.b16 %v6928, %v6864
        %v8593 = vpack.c.b16 %v6929, %v6865
        %v8594 = vpack.c.b16 %v6930, %v6866
        %v8595 = vpack.c.b16 %v6931, %v6867
        %v8596 = vpack.c.b16 %v6932, %v6868
        %v8597 = vpack.c.b16 %v6933, %v6869
        %v8598 = vpack.c.b16 %v6934, %v6870
        %v8599 = vpack.c.b16 %v6935, %v6871
        %v8600 = vpack.c.b16 %v6936, %v6872
        %v8601 = vpack.c.b16 %v6937, %v6873
        %v8602 = vpack.c.b16 %v6938, %v6874
        %v8603 = vpack.c.b16 %v6939, %v6875
        %v8604 = vpack.c.b16 %v6940, %v6876
        %v8605 = vpack.c.b16 %v6941, %v6877
        %v8606 = vpack.c.b16 %v6942, %v6878
        %v8607 = vpack.c.b16 %v6943, %v6879
        %v8608 = vpack.c.b16 %v6944, %v6880
        %v8609 = vpack.c.b16 %v6945, %v6881
        %v8610 = vpack.c.b16 %v6946, %v6882
        %v8611 = vpack.c.b16 %v6947, %v6883
        %v8612 = vpack.c.b16 %v6948, %v6884
        %v8613 = vpack.c.b16 %v6949, %v6885
        %v8614 = vpack.c.b16 %v6950, %v6886
        %v8615 = vpack.c.b16 %v6951, %v6887
        %v8616 = vpack.c.b16 %v6952, %v6888
        %v8617 = vpack.c.b16 %v6953, %v6889
        %v8618 = vpack.c.b16 %v6954, %v6890
        %v8619 = vpack.c.b16 %v6955, %v6891
        %v8620 = vpack.c.b16 %v6956, %v6892
        %v8621 = vpack.c.b16 %v6957, %v6893
        %v8622 = vpack.c.b16 %v6958, %v6894
        %v8623 = vpack.c.b16 %v6959, %v6895
        %v8624 = vpack.c.b16 %v7024, %v6960
        %v8625 = vpack.c.b16 %v7025, %v6961
        %v8626 = vpack.c.b16 %v7026, %v6962
        %v8627 = vpack.c.b16 %v7027, %v6963
        %v8628 = vpack.c.b16 %v7028, %v6964
        %v8629 = vpack.c.b16 %v7029, %v6965
        %v8630 = vpack.c.b16 %v7030, %v6966
        %v8631 = vpack.c.b16 %v7031, %v6967
        %v8632 = vpack.c.b16 %v7032, %v6968
        %v8633 = vpack.c.b16 %v7033, %v6969
        %v8634 = vpack.c.b16 %v7034, %v6970
        %v8635 = vpack.c.b16 %v7035, %v6971
        %v8636 = vpack.c.b16 %v7036, %v6972
        %v8637 = vpack.c.b16 %v7037, %v6973
        %v8638 = vpack.c.b16 %v7038, %v6974
        %v8639 = vpack.c.b16 %v7039, %v6975
        %v8640 = vpack.c.b16 %v7040, %v6976
        %v8641 = vpack.c.b16 %v7041, %v6977
        %v8642 = vpack.c.b16 %v7042, %v6978
        %v8643 = vpack.c.b16 %v7043, %v6979
        %v8644 = vpack.c.b16 %v7044, %v6980
        %v8645 = vpack.c.b16 %v7045, %v6981
        %v8646 = vpack.c.b16 %v7046, %v6982
        %v8647 = vpack.c.b16 %v7047, %v6983
        %v8648 = vpack.c.b16 %v7048, %v6984
        %v8649 = vpack.c.b16 %v7049, %v6985
        %v8650 = vpack.c.b16 %v7050, %v6986
        %v8651 = vpack.c.b16 %v7051, %v6987
        %v8652 = vpack.c.b16 %v7052, %v6988
        %v8653 = vpack.c.b16 %v7053, %v6989
        %v8654 = vpack.c.b16 %v7054, %v6990
        %v8655 = vpack.c.b16 %v7055, %v6991
        %v8656 = vpack.c.b16 %v7056, %v6992
        %v8657 = vpack.c.b16 %v7057, %v6993
        %v8658 = vpack.c.b16 %v7058, %v6994
        %v8659 = vpack.c.b16 %v7059, %v6995
        %v8660 = vpack.c.b16 %v7060, %v6996
        %v8661 = vpack.c.b16 %v7061, %v6997
        %v8662 = vpack.c.b16 %v7062, %v6998
        %v8663 = vpack.c.b16 %v7063, %v6999
        %v8664 = vpack.c.b16 %v7064, %v7000
        %v8665 = vpack.c.b16 %v7065, %v7001
        %v8666 = vpack.c.b16 %v7066, %v7002
        %v8667 = vpack.c.b16 %v7067, %v7003
        %v8668 = vpack.c.b16 %v7068, %v7004
        %v8669 = vpack.c.b16 %v7069, %v7005
        %v8670 = vpack.c.b16 %v7070, %v7006
        %v8671 = vpack.c.b16 %v7071, %v7007
        %v8672 = vpack.c.b16 %v7072, %v7008
        %v8673 = vpack.c.b16 %v7073, %v7009
        %v8674 = vpack.c.b16 %v7074, %v7010
        %v8675 = vpack.c.b16 %v7075, %v7011
        %v8676 = vpack.c.b16 %v7076, %v7012
        %v8677 = vpack.c.b16 %v7077, %v7013
        %v8678 = vpack.c.b16 %v7078, %v7014
        %v8679 = vpack.c.b16 %v7079, %v7015
        %v8680 = vpack.c.b16 %v7080, %v7016
        %v8681 = vpack.c.b16 %v7081, %v7017
        %v8682 = vpack.c.b16 %v7082, %v7018
        %v8683 = vpack.c.b16 %v7083, %v7019
        %v8684 = vpack.c.b16 %v7084, %v7020
        %v8685 = vpack.c.b16 %v7085, %v7021
        %v8686 = vpack.c.b16 %v7086, %v7022
        %v8687 = vpack.c.b16 %v7087, %v7023
        %10288 = vmatprep.subr.bf16.mxu0 %v7089
        %10289 = vmatpush1.bf16.xpose.msra.mxu0 %v7088
        %10290 = vmatprep.subr.bf16.mxu0 %v7153
        %10291 = vmatpush1.bf16.xpose.msra.mxu0 %v7152
        %10292 = vmatprep.subr.bf16.mxu0 %v7217
        %10293 = vmatpush1.bf16.xpose.msra.mxu0 %v7216
        %10294 = vmatprep.subr.bf16.mxu0 %v7281
        %10295 = vmatpush1.bf16.xpose.msra.mxu0 %v7280
        %10296 = vmatprep.subr.bf16.mxu0 %v7345
        %10297 = vmatpush1.bf16.xpose.msra.mxu0 %v7344
        %10298 = vmatprep.subr.bf16.mxu0 %v7409
        %10299 = vmatpush1.bf16.xpose.msra.mxu0 %v7408
        %10300 = vmatprep.subr.bf16.mxu0 %v7473
        %10301 = vmatpush1.bf16.xpose.msra.mxu0 %v7472
        %10302 = vmatprep.subr.bf16.mxu0 %v7537
        %10303 = vmatpush1.bf16.xpose.msra.mxu0 %v7536
        %10304 = vmatprep.subr.bf16.mxu0 %v7601
        %10305 = vmatpush1.bf16.xpose.msra.mxu0 %v7600
        %10306 = vmatprep.subr.bf16.mxu0 %v7665
        %10307 = vmatpush1.bf16.xpose.msra.mxu0 %v7664
        %10308 = vmatprep.subr.bf16.mxu0 %v7729
        %10309 = vmatpush1.bf16.xpose.msra.mxu0 %v7728
        %10310 = vmatprep.subr.bf16.mxu0 %v7793
        %10311 = vmatpush1.bf16.xpose.msra.mxu0 %v7792
        %10312 = vmatprep.subr.bf16.mxu0 %v7857
        %10313 = vmatpush1.bf16.xpose.msra.mxu0 %v7856
        %10314 = vmatprep.subr.bf16.mxu0 %v7921
        %10315 = vmatpush1.bf16.xpose.msra.mxu0 %v7920
        %10316 = vmatprep.subr.bf16.mxu0 %v7985
        %10317 = vmatpush1.bf16.xpose.msra.mxu0 %v7984
        %10318 = vmatprep.subr.bf16.mxu0 %v8049
        %10319 = vmatpush1.bf16.xpose.msra.mxu0 %v8048
        %10320 = vmatprep.mubr.bf16.mxu0 %v1869
        %10321 = vmatmul.mubr.bf16.gmra.mrb[0].mxu0 %v1855
        %v10322 = vpop.f32.mrb[0].mxu0
        %v10323 = vadd.f32 0.0, %v10322
        %v10324 = vpop.f32.mrb[0].mxu0
        %v10325 = vadd.f32 0.0, %v10324
        %v10326 = vpop.f32.mrb[0].mxu0
        %v10327 = vpop.f32.mrb[0].mxu0
        %10328 = vdwg.mxu0
        %10329 = vmatprep.subr.bf16.mxu0 %v7091
        %10330 = vmatpush1.bf16.xpose.msra.mxu0 %v7090
        %10331 = vmatprep.subr.bf16.mxu0 %v7155
        %10332 = vmatpush1.bf16.xpose.msra.mxu0 %v7154
        %10333 = vmatprep.subr.bf16.mxu0 %v7219
        %10334 = vmatpush1.bf16.xpose.msra.mxu0 %v7218
        %10335 = vmatprep.subr.bf16.mxu0 %v7283
        %10336 = vmatpush1.bf16.xpose.msra.mxu0 %v7282
        %10337 = vmatprep.subr.bf16.mxu0 %v7347
        %10338 = vmatpush1.bf16.xpose.msra.mxu0 %v7346
        %10339 = vmatprep.subr.bf16.mxu0 %v7411
        %10340 = vmatpush1.bf16.xpose.msra.mxu0 %v7410
        %10341 = vmatprep.subr.bf16.mxu0 %v7475
        %10342 = vmatpush1.bf16.xpose.msra.mxu0 %v7474
        %10343 = vmatprep.subr.bf16.mxu0 %v7539
        %10344 = vmatpush1.bf16.xpose.msra.mxu0 %v7538
        %10345 = vmatprep.subr.bf16.mxu0 %v7603
        %10346 = vmatpush1.bf16.xpose.msra.mxu0 %v7602
        %10347 = vmatprep.subr.bf16.mxu0 %v7667
        %10348 = vmatpush1.bf16.xpose.msra.mxu0 %v7666
        %10349 = vmatprep.subr.bf16.mxu0 %v7731
        %10350 = vmatpush1.bf16.xpose.msra.mxu0 %v7730
        %10351 = vmatprep.subr.bf16.mxu0 %v7795
        %10352 = vmatpush1.bf16.xpose.msra.mxu0 %v7794
        %10353 = vmatprep.subr.bf16.mxu0 %v7859
        %10354 = vmatpush1.bf16.xpose.msra.mxu0 %v7858
        %10355 = vmatprep.subr.bf16.mxu0 %v7923
        %10356 = vmatpush1.bf16.xpose.msra.mxu0 %v7922
        %10357 = vmatprep.subr.bf16.mxu0 %v7987
        %10358 = vmatpush1.bf16.xpose.msra.mxu0 %v7986
        %10359 = vmatprep.subr.bf16.mxu0 %v8051
        %10360 = vmatpush1.bf16.xpose.msra.mxu0 %v8050
        %10361 = vmatprep.mubr.bf16.mxu0 %v1879
        %10362 = vmatmul.mubr.bf16.gmra.mrb[0].mxu0 %v1877
        %v10363 = vpop.f32.mrb[0].mxu0
        %v10364 = vadd.f32 %v10323, %v10363
        %v10365 = vpop.f32.mrb[0].mxu0
        %v10366 = vadd.f32 %v10325, %v10365
        %v10367 = vpop.f32.mrb[0].mxu0
        %v10368 = vpop.f32.mrb[0].mxu0
        %10369 = vdwg.mxu0
        %10370 = vmatprep.subr.bf16.mxu0 %v7093
        %10371 = vmatpush1.bf16.xpose.msra.mxu0 %v7092
        %10372 = vmatprep.subr.bf16.mxu0 %v7157
        %10373 = vmatpush1.bf16.xpose.msra.mxu0 %v7156
        %10374 = vmatprep.subr.bf16.mxu0 %v7221
        %10375 = vmatpush1.bf16.xpose.msra.mxu0 %v7220
        %10376 = vmatprep.subr.bf16.mxu0 %v7285
        %10377 = vmatpush1.bf16.xpose.msra.mxu0 %v7284
        %10378 = vmatprep.subr.bf16.mxu0 %v7349
        %10379 = vmatpush1.bf16.xpose.msra.mxu0 %v7348
        %10380 = vmatprep.subr.bf16.mxu0 %v7413
        %10381 = vmatpush1.bf16.xpose.msra.mxu0 %v7412
        %10382 = vmatprep.subr.bf16.mxu0 %v7477
        %10383 = vmatpush1.bf16.xpose.msra.mxu0 %v7476
        %10384 = vmatprep.subr.bf16.mxu0 %v7541
        %10385 = vmatpush1.bf16.xpose.msra.mxu0 %v7540
        %10386 = vmatprep.subr.bf16.mxu0 %v7605
        %10387 = vmatpush1.bf16.xpose.msra.mxu0 %v7604
        %10388 = vmatprep.subr.bf16.mxu0 %v7669
        %10389 = vmatpush1.bf16.xpose.msra.mxu0 %v7668
        %10390 = vmatprep.subr.bf16.mxu0 %v7733
        %10391 = vmatpush1.bf16.xpose.msra.mxu0 %v7732
        %10392 = vmatprep.subr.bf16.mxu0 %v7797
        %10393 = vmatpush1.bf16.xpose.msra.mxu0 %v7796
        %10394 = vmatprep.subr.bf16.mxu0 %v7861
        %10395 = vmatpush1.bf16.xpose.msra.mxu0 %v7860
        %10396 = vmatprep.subr.bf16.mxu0 %v7925
        %10397 = vmatpush1.bf16.xpose.msra.mxu0 %v7924
        %10398 = vmatprep.subr.bf16.mxu0 %v7989
        %10399 = vmatpush1.bf16.xpose.msra.mxu0 %v7988
        %10400 = vmatprep.subr.bf16.mxu0 %v8053
        %10401 = vmatpush1.bf16.xpose.msra.mxu0 %v8052
        %10402 = vmatprep.mubr.bf16.mxu0 %v1876
        %10403 = vmatmul.mubr.bf16.gmra.mrb[0].mxu0 %v1862
        %v10404 = vpop.f32.mrb[0].mxu0
        %v10405 = vadd.f32 %v10364, %v10404
        %v10406 = vpop.f32.mrb[0].mxu0
        %v10407 = vadd.f32 %v10366, %v10406
        %v10408 = vpop.f32.mrb[0].mxu0
        %v10409 = vpop.f32.mrb[0].mxu0
        %10410 = vdwg.mxu0
        %10411 = vmatprep.subr.bf16.mxu0 %v7095
        %10412 = vmatpush1.bf16.xpose.msra.mxu0 %v7094
        %10413 = vmatprep.subr.bf16.mxu0 %v7159
        %10414 = vmatpush1.bf16.xpose.msra.mxu0 %v7158
        %10415 = vmatprep.subr.bf16.mxu0 %v7223
        %10416 = vmatpush1.bf16.xpose.msra.mxu0 %v7222
        %10417 = vmatprep.subr.bf16.mxu0 %v7287
        %10418 = vmatpush1.bf16.xpose.msra.mxu0 %v7286
        %10419 = vmatprep.subr.bf16.mxu0 %v7351
        %10420 = vmatpush1.bf16.xpose.msra.mxu0 %v7350
        %10421 = vmatprep.subr.bf16.mxu0 %v7415
        %10422 = vmatpush1.bf16.xpose.msra.mxu0 %v7414
        %10423 = vmatprep.subr.bf16.mxu0 %v7479
        %10424 = vmatpush1.bf16.xpose.msra.mxu0 %v7478
        %10425 = vmatprep.subr.bf16.mxu0 %v7543
        %10426 = vmatpush1.bf16.xpose.msra.mxu0 %v7542
        %10427 = vmatprep.subr.bf16.mxu0 %v7607
        %10428 = vmatpush1.bf16.xpose.msra.mxu0 %v7606
        %10429 = vmatprep.subr.bf16.mxu0 %v7671
        %10430 = vmatpush1.bf16.xpose.msra.mxu0 %v7670
        %10431 = vmatprep.subr.bf16.mxu0 %v7735
        %10432 = vmatpush1.bf16.xpose.msra.mxu0 %v7734
        %10433 = vmatprep.subr.bf16.mxu0 %v7799
        %10434 = vmatpush1.bf16.xpose.msra.mxu0 %v7798
        %10435 = vmatprep.subr.bf16.mxu0 %v7863
        %10436 = vmatpush1.bf16.xpose.msra.mxu0 %v7862
        %10437 = vmatprep.subr.bf16.mxu0 %v7927
        %10438 = vmatpush1.bf16.xpose.msra.mxu0 %v7926
        %10439 = vmatprep.subr.bf16.mxu0 %v7991
        %10440 = vmatpush1.bf16.xpose.msra.mxu0 %v7990
        %10441 = vmatprep.subr.bf16.mxu0 %v8055
        %10442 = vmatpush1.bf16.xpose.msra.mxu0 %v8054
        %10443 = vmatprep.mubr.bf16.mxu0 %v1880
        %10444 = vmatmul.mubr.bf16.gmra.mrb[0].mxu0 %v1878
        %v10445 = vpop.f32.mrb[0].mxu0
        %v10446 = vadd.f32 %v10405, %v10445
        %v10447 = vpop.f32.mrb[0].mxu0
        %v10448 = vadd.f32 %v10407, %v10447
        %v10449 = vpop.f32.mrb[0].mxu0
        %v10450 = vpop.f32.mrb[0].mxu0
        %10451 = vdwg.mxu0
        %10452 = vmatprep.subr.bf16.mxu0 %v7097
        %10453 = vmatpush1.bf16.xpose.msra.mxu0 %v7096
        %10454 = vmatprep.subr.bf16.mxu0 %v7161
        %10455 = vmatpush1.bf16.xpose.msra.mxu0 %v7160
        %10456 = vmatprep.subr.bf16.mxu0 %v7225
        %10457 = vmatpush1.bf16.xpose.msra.mxu0 %v7224
        %10458 = vmatprep.subr.bf16.mxu0 %v7289
        %10459 = vmatpush1.bf16.xpose.msra.mxu0 %v7288
        %10460 = vmatprep.subr.bf16.mxu0 %v7353
        %10461 = vmatpush1.bf16.xpose.msra.mxu0 %v7352
        %10462 = vmatprep.subr.bf16.mxu0 %v7417
        %10463 = vmatpush1.bf16.xpose.msra.mxu0 %v7416
        %10464 = vmatprep.subr.bf16.mxu0 %v7481
        %10465 = vmatpush1.bf16.xpose.msra.mxu0 %v7480
        %10466 = vmatprep.subr.bf16.mxu0 %v7545
        %10467 = vmatpush1.bf16.xpose.msra.mxu0 %v7544
        %10468 = vmatprep.subr.bf16.mxu0 %v7609
        %10469 = vmatpush1.bf16.xpose.msra.mxu0 %v7608
        %10470 = vmatprep.subr.bf16.mxu0 %v7673
        %10471 = vmatpush1.bf16.xpose.msra.mxu0 %v7672
        %10472 = vmatprep.subr.bf16.mxu0 %v7737
        %10473 = vmatpush1.bf16.xpose.msra.mxu0 %v7736
        %10474 = vmatprep.subr.bf16.mxu0 %v7801
        %10475 = vmatpush1.bf16.xpose.msra.mxu0 %v7800
        %10476 = vmatprep.subr.bf16.mxu0 %v7865
        %10477 = vmatpush1.bf16.xpose.msra.mxu0 %v7864
        %10478 = vmatprep.subr.bf16.mxu0 %v7929
        %10479 = vmatpush1.bf16.xpose.msra.mxu0 %v7928
        %10480 = vmatprep.subr.bf16.mxu0 %v7993
        %10481 = vmatpush1.bf16.xpose.msra.mxu0 %v7992
        %10482 = vmatprep.subr.bf16.mxu0 %v8057
        %10483 = vmatpush1.bf16.xpose.msra.mxu0 %v8056
        %10484 = vmatprep.mubr.bf16.mxu0 %v1918
        %10485 = vmatmul.mubr.bf16.gmra.mrb[0].mxu0 %v1904
        %v10486 = vpop.f32.mrb[0].mxu0
        %v10487 = vadd.f32 %v10446, %v10486
        %v10488 = vpop.f32.mrb[0].mxu0
        %v10489 = vadd.f32 %v10448, %v10488
        %v10490 = vpop.f32.mrb[0].mxu0
        %v10491 = vpop.f32.mrb[0].mxu0
        %10492 = vdwg.mxu0
        %10493 = vmatprep.subr.bf16.mxu0 %v7099
        %10494 = vmatpush1.bf16.xpose.msra.mxu0 %v7098
        %10495 = vmatprep.subr.bf16.mxu0 %v7163
        %10496 = vmatpush1.bf16.xpose.msra.mxu0 %v7162
        %10497 = vmatprep.subr.bf16.mxu0 %v7227
        %10498 = vmatpush1.bf16.xpose.msra.mxu0 %v7226
        %10499 = vmatprep.subr.bf16.mxu0 %v7291
        %10500 = vmatpush1.bf16.xpose.msra.mxu0 %v7290
        %10501 = vmatprep.subr.bf16.mxu0 %v7355
        %10502 = vmatpush1.bf16.xpose.msra.mxu0 %v7354
        %10503 = vmatprep.subr.bf16.mxu0 %v7419
        %10504 = vmatpush1.bf16.xpose.msra.mxu0 %v7418
        %10505 = vmatprep.subr.bf16.mxu0 %v7483
        %10506 = vmatpush1.bf16.xpose.msra.mxu0 %v7482
        %10507 = vmatprep.subr.bf16.mxu0 %v7547
        %10508 = vmatpush1.bf16.xpose.msra.mxu0 %v7546
        %10509 = vmatprep.subr.bf16.mxu0 %v7611
        %10510 = vmatpush1.bf16.xpose.msra.mxu0 %v7610
        %10511 = vmatprep.subr.bf16.mxu0 %v7675
        %10512 = vmatpush1.bf16.xpose.msra.mxu0 %v7674
        %10513 = vmatprep.subr.bf16.mxu0 %v7739
        %10514 = vmatpush1.bf16.xpose.msra.mxu0 %v7738
        %10515 = vmatprep.subr.bf16.mxu0 %v7803
        %10516 = vmatpush1.bf16.xpose.msra.mxu0 %v7802
        %10517 = vmatprep.subr.bf16.mxu0 %v7867
        %10518 = vmatpush1.bf16.xpose.msra.mxu0 %v7866
        %10519 = vmatprep.subr.bf16.mxu0 %v7931
        %10520 = vmatpush1.bf16.xpose.msra.mxu0 %v7930
        %10521 = vmatprep.subr.bf16.mxu0 %v7995
        %10522 = vmatpush1.bf16.xpose.msra.mxu0 %v7994
        %10523 = vmatprep.subr.bf16.mxu0 %v8059
        %10524 = vmatpush1.bf16.xpose.msra.mxu0 %v8058
        %10525 = vmatprep.mubr.bf16.mxu0 %v1928
        %10526 = vmatmul.mubr.bf16.gmra.mrb[0].mxu0 %v1926
        %v10527 = vpop.f32.mrb[0].mxu0
        %v10528 = vadd.f32 %v10487, %v10527
        %v10529 = vpop.f32.mrb[0].mxu0
        %v10530 = vadd.f32 %v10489, %v10529
        %v10531 = vpop.f32.mrb[0].mxu0
        %v10532 = vpop.f32.mrb[0].mxu0
        %10533 = vdwg.mxu0
        %10534 = vmatprep.subr.bf16.mxu0 %v7101
        %10535 = vmatpush1.bf16.xpose.msra.mxu0 %v7100
        %10536 = vmatprep.subr.bf16.mxu0 %v7165
        %10537 = vmatpush1.bf16.xpose.msra.mxu0 %v7164
        %10538 = vmatprep.subr.bf16.mxu0 %v7229
        %10539 = vmatpush1.bf16.xpose.msra.mxu0 %v7228
        %10540 = vmatprep.subr.bf16.mxu0 %v7293
        %10541 = vmatpush1.bf16.xpose.msra.mxu0 %v7292
        %10542 = vmatprep.subr.bf16.mxu0 %v7357
        %10543 = vmatpush1.bf16.xpose.msra.mxu0 %v7356
        %10544 = vmatprep.subr.bf16.mxu0 %v7421
        %10545 = vmatpush1.bf16.xpose.msra.mxu0 %v7420
        %10546 = vmatprep.subr.bf16.mxu0 %v7485
        %10547 = vmatpush1.bf16.xpose.msra.mxu0 %v7484
        %10548 = vmatprep.subr.bf16.mxu0 %v7549
        %10549 = vmatpush1.bf16.xpose.msra.mxu0 %v7548
        %10550 = vmatprep.subr.bf16.mxu0 %v7613
        %10551 = vmatpush1.bf16.xpose.msra.mxu0 %v7612
        %10552 = vmatprep.subr.bf16.mxu0 %v7677
        %10553 = vmatpush1.bf16.xpose.msra.mxu0 %v7676
        %10554 = vmatprep.subr.bf16.mxu0 %v7741
        %10555 = vmatpush1.bf16.xpose.msra.mxu0 %v7740
        %10556 = vmatprep.subr.bf16.mxu0 %v7805
        %10557 = vmatpush1.bf16.xpose.msra.mxu0 %v7804
        %10558 = vmatprep.subr.bf16.mxu0 %v7869
        %10559 = vmatpush1.bf16.xpose.msra.mxu0 %v7868
        %10560 = vmatprep.subr.bf16.mxu0 %v7933
        %10561 = vmatpush1.bf16.xpose.msra.mxu0 %v7932
        %10562 = vmatprep.subr.bf16.mxu0 %v7997
        %10563 = vmatpush1.bf16.xpose.msra.mxu0 %v7996
        %10564 = vmatprep.subr.bf16.mxu0 %v8061
        %10565 = vmatpush1.bf16.xpose.msra.mxu0 %v8060
        %10566 = vmatprep.mubr.bf16.mxu0 %v1925
        %10567 = vmatmul.mubr.bf16.gmra.mrb[0].mxu0 %v1911
        %v10568 = vpop.f32.mrb[0].mxu0
        %v10569 = vadd.f32 %v10528, %v10568
        %v10570 = vpop.f32.mrb[0].mxu0
        %v10571 = vadd.f32 %v10530, %v10570
        %v10572 = vpop.f32.mrb[0].mxu0
        %v10573 = vpop.f32.mrb[0].mxu0
        %10574 = vdwg.mxu0
        %10575 = vmatprep.subr.bf16.mxu0 %v7103
        %10576 = vmatpush1.bf16.xpose.msra.mxu0 %v7102
        %10577 = vmatprep.subr.bf16.mxu0 %v7167
        %10578 = vmatpush1.bf16.xpose.msra.mxu0 %v7166
        %10579 = vmatprep.subr.bf16.mxu0 %v7231
        %10580 = vmatpush1.bf16.xpose.msra.mxu0 %v7230
        %10581 = vmatprep.subr.bf16.mxu0 %v7295
        %10582 = vmatpush1.bf16.xpose.msra.mxu0 %v7294
        %10583 = vmatprep.subr.bf16.mxu0 %v7359
        %10584 = vmatpush1.bf16.xpose.msra.mxu0 %v7358
        %10585 = vmatprep.subr.bf16.mxu0 %v7423
        %10586 = vmatpush1.bf16.xpose.msra.mxu0 %v7422
        %10587 = vmatprep.subr.bf16.mxu0 %v7487
        %10588 = vmatpush1.bf16.xpose.msra.mxu0 %v7486
        %10589 = vmatprep.subr.bf16.mxu0 %v7551
        %10590 = vmatpush1.bf16.xpose.msra.mxu0 %v7550
        %10591 = vmatprep.subr.bf16.mxu0 %v7615
        %10592 = vmatpush1.bf16.xpose.msra.mxu0 %v7614
        %10593 = vmatprep.subr.bf16.mxu0 %v7679
        %10594 = vmatpush1.bf16.xpose.msra.mxu0 %v7678
        %10595 = vmatprep.subr.bf16.mxu0 %v7743
        %10596 = vmatpush1.bf16.xpose.msra.mxu0 %v7742
        %10597 = vmatprep.subr.bf16.mxu0 %v7807
        %10598 = vmatpush1.bf16.xpose.msra.mxu0 %v7806
        %10599 = vmatprep.subr.bf16.mxu0 %v7871
        %10600 = vmatpush1.bf16.xpose.msra.mxu0 %v7870
        %10601 = vmatprep.subr.bf16.mxu0 %v7935
        %10602 = vmatpush1.bf16.xpose.msra.mxu0 %v7934
        %10603 = vmatprep.subr.bf16.mxu0 %v7999
        %10604 = vmatpush1.bf16.xpose.msra.mxu0 %v7998
        %10605 = vmatprep.subr.bf16.mxu0 %v8063
        %10606 = vmatpush1.bf16.xpose.msra.mxu0 %v8062
        %10607 = vmatprep.mubr.bf16.mxu0 %v1929
        %10608 = vmatmul.mubr.bf16.gmra.mrb[0].mxu0 %v1927
        %v10609 = vpop.f32.mrb[0].mxu0
        %v10610 = vadd.f32 %v10569, %v10609
        %v10611 = vpop.f32.mrb[0].mxu0
        %v10612 = vadd.f32 %v10571, %v10611
        %v10613 = vpop.f32.mrb[0].mxu0
        %v10614 = vpop.f32.mrb[0].mxu0
        %10615 = vdwg.mxu0
        %10616 = vmatprep.subr.bf16.mxu0 %v7105
        %10617 = vmatpush1.bf16.xpose.msra.mxu0 %v7104
        %10618 = vmatprep.subr.bf16.mxu0 %v7169
        %10619 = vmatpush1.bf16.xpose.msra.mxu0 %v7168
        %10620 = vmatprep.subr.bf16.mxu0 %v7233
        %10621 = vmatpush1.bf16.xpose.msra.mxu0 %v7232
        %10622 = vmatprep.subr.bf16.mxu0 %v7297
        %10623 = vmatpush1.bf16.xpose.msra.mxu0 %v7296
        %10624 = vmatprep.subr.bf16.mxu0 %v7361
        %10625 = vmatpush1.bf16.xpose.msra.mxu0 %v7360
        %10626 = vmatprep.subr.bf16.mxu0 %v7425
        %10627 = vmatpush1.bf16.xpose.msra.mxu0 %v7424
        %10628 = vmatprep.subr.bf16.mxu0 %v7489
        %10629 = vmatpush1.bf16.xpose.msra.mxu0 %v7488
        %10630 = vmatprep.subr.bf16.mxu0 %v7553
        %10631 = vmatpush1.bf16.xpose.msra.mxu0 %v7552
        %10632 = vmatprep.subr.bf16.mxu0 %v7617
        %10633 = vmatpush1.bf16.xpose.msra.mxu0 %v7616
        %10634 = vmatprep.subr.bf16.mxu0 %v7681
        %10635 = vmatpush1.bf16.xpose.msra.mxu0 %v7680
        %10636 = vmatprep.subr.bf16.mxu0 %v7745
        %10637 = vmatpush1.bf16.xpose.msra.mxu0 %v7744
        %10638 = vmatprep.subr.bf16.mxu0 %v7809
        %10639 = vmatpush1.bf16.xpose.msra.mxu0 %v7808
        %10640 = vmatprep.subr.bf16.mxu0 %v7873
        %10641 = vmatpush1.bf16.xpose.msra.mxu0 %v7872
        %10642 = vmatprep.subr.bf16.mxu0 %v7937
        %10643 = vmatpush1.bf16.xpose.msra.mxu0 %v7936
        %10644 = vmatprep.subr.bf16.mxu0 %v8001
        %10645 = vmatpush1.bf16.xpose.msra.mxu0 %v8000
        %10646 = vmatprep.subr.bf16.mxu0 %v8065
        %10647 = vmatpush1.bf16.xpose.msra.mxu0 %v8064
        %10648 = vmatprep.mubr.bf16.mxu0 %v1967
        %10649 = vmatmul.mubr.bf16.gmra.mrb[0].mxu0 %v1953
        %v10650 = vpop.f32.mrb[0].mxu0
        %v10651 = vadd.f32 %v10610, %v10650
        %v10652 = vpop.f32.mrb[0].mxu0
        %v10653 = vadd.f32 %v10612, %v10652
        %v10654 = vpop.f32.mrb[0].mxu0
        %v10655 = vpop.f32.mrb[0].mxu0
        %10656 = vdwg.mxu0
        %10657 = vmatprep.subr.bf16.mxu0 %v7107
        %10658 = vmatpush1.bf16.xpose.msra.mxu0 %v7106
        %10659 = vmatprep.subr.bf16.mxu0 %v7171
        %10660 = vmatpush1.bf16.xpose.msra.mxu0 %v7170
        %10661 = vmatprep.subr.bf16.mxu0 %v7235
        %10662 = vmatpush1.bf16.xpose.msra.mxu0 %v7234
        %10663 = vmatprep.subr.bf16.mxu0 %v7299
        %10664 = vmatpush1.bf16.xpose.msra.mxu0 %v7298
        %10665 = vmatprep.subr.bf16.mxu0 %v7363
        %10666 = vmatpush1.bf16.xpose.msra.mxu0 %v7362
        %10667 = vmatprep.subr.bf16.mxu0 %v7427
        %10668 = vmatpush1.bf16.xpose.msra.mxu0 %v7426
        %10669 = vmatprep.subr.bf16.mxu0 %v7491
        %10670 = vmatpush1.bf16.xpose.msra.mxu0 %v7490
        %10671 = vmatprep.subr.bf16.mxu0 %v7555
        %10672 = vmatpush1.bf16.xpose.msra.mxu0 %v7554
        %10673 = vmatprep.subr.bf16.mxu0 %v7619
        %10674 = vmatpush1.bf16.xpose.msra.mxu0 %v7618
        %10675 = vmatprep.subr.bf16.mxu0 %v7683
        %10676 = vmatpush1.bf16.xpose.msra.mxu0 %v7682
        %10677 = vmatprep.subr.bf16.mxu0 %v7747
        %10678 = vmatpush1.bf16.xpose.msra.mxu0 %v7746
        %10679 = vmatprep.subr.bf16.mxu0 %v7811
        %10680 = vmatpush1.bf16.xpose.msra.mxu0 %v7810
        %10681 = vmatprep.subr.bf16.mxu0 %v7875
        %10682 = vmatpush1.bf16.xpose.msra.mxu0 %v7874
        %10683 = vmatprep.subr.bf16.mxu0 %v7939
        %10684 = vmatpush1.bf16.xpose.msra.mxu0 %v7938
        %10685 = vmatprep.subr.bf16.mxu0 %v8003
        %10686 = vmatpush1.bf16.xpose.msra.mxu0 %v8002
        %10687 = vmatprep.subr.bf16.mxu0 %v8067
        %10688 = vmatpush1.bf16.xpose.msra.mxu0 %v8066
        %10689 = vmatprep.mubr.bf16.mxu0 %v1977
        %10690 = vmatmul.mubr.bf16.gmra.mrb[0].mxu0 %v1975
        %v10691 = vpop.f32.mrb[0].mxu0
        %v10692 = vadd.f32 %v10651, %v10691
        %v10693 = vpop.f32.mrb[0].mxu0
        %v10694 = vadd.f32 %v10653, %v10693
        %v10695 = vpop.f32.mrb[0].mxu0
        %v10696 = vpop.f32.mrb[0].mxu0
        %10697 = vdwg.mxu0
        %10698 = vmatprep.subr.bf16.mxu0 %v7109
        %10699 = vmatpush1.bf16.xpose.msra.mxu0 %v7108
        %10700 = vmatprep.subr.bf16.mxu0 %v7173
        %10701 = vmatpush1.bf16.xpose.msra.mxu0 %v7172
        %10702 = vmatprep.subr.bf16.mxu0 %v7237
        %10703 = vmatpush1.bf16.xpose.msra.mxu0 %v7236
        %10704 = vmatprep.subr.bf16.mxu0 %v7301
        %10705 = vmatpush1.bf16.xpose.msra.mxu0 %v7300
        %10706 = vmatprep.subr.bf16.mxu0 %v7365
        %10707 = vmatpush1.bf16.xpose.msra.mxu0 %v7364
        %10708 = vmatprep.subr.bf16.mxu0 %v7429
        %10709 = vmatpush1.bf16.xpose.msra.mxu0 %v7428
        %10710 = vmatprep.subr.bf16.mxu0 %v7493
        %10711 = vmatpush1.bf16.xpose.msra.mxu0 %v7492
        %10712 = vmatprep.subr.bf16.mxu0 %v7557
        %10713 = vmatpush1.bf16.xpose.msra.mxu0 %v7556
        %10714 = vmatprep.subr.bf16.mxu0 %v7621
        %10715 = vmatpush1.bf16.xpose.msra.mxu0 %v7620
        %10716 = vmatprep.subr.bf16.mxu0 %v7685
        %10717 = vmatpush1.bf16.xpose.msra.mxu0 %v7684
        %10718 = vmatprep.subr.bf16.mxu0 %v7749
        %10719 = vmatpush1.bf16.xpose.msra.mxu0 %v7748
        %10720 = vmatprep.subr.bf16.mxu0 %v7813
        %10721 = vmatpush1.bf16.xpose.msra.mxu0 %v7812
        %10722 = vmatprep.subr.bf16.mxu0 %v7877
        %10723 = vmatpush1.bf16.xpose.msra.mxu0 %v7876
        %10724 = vmatprep.subr.bf16.mxu0 %v7941
        %10725 = vmatpush1.bf16.xpose.msra.mxu0 %v7940
        %10726 = vmatprep.subr.bf16.mxu0 %v8005
        %10727 = vmatpush1.bf16.xpose.msra.mxu0 %v8004
        %10728 = vmatprep.subr.bf16.mxu0 %v8069
        %10729 = vmatpush1.bf16.xpose.msra.mxu0 %v8068
        %10730 = vmatprep.mubr.bf16.mxu0 %v1974
        %10731 = vmatmul.mubr.bf16.gmra.mrb[0].mxu0 %v1960
        %v10732 = vpop.f32.mrb[0].mxu0
        %v10733 = vadd.f32 %v10692, %v10732
        %v10734 = vpop.f32.mrb[0].mxu0
        %v10735 = vadd.f32 %v10694, %v10734
        %v10736 = vpop.f32.mrb[0].mxu0
        %v10737 = vpop.f32.mrb[0].mxu0
        %10738 = vdwg.mxu0
        %10739 = vmatprep.subr.bf16.mxu0 %v7111
        %10740 = vmatpush1.bf16.xpose.msra.mxu0 %v7110
        %10741 = vmatprep.subr.bf16.mxu0 %v7175
        %10742 = vmatpush1.bf16.xpose.msra.mxu0 %v7174
        %10743 = vmatprep.subr.bf16.mxu0 %v7239
        %10744 = vmatpush1.bf16.xpose.msra.mxu0 %v7238
        %10745 = vmatprep.subr.bf16.mxu0 %v7303
        %10746 = vmatpush1.bf16.xpose.msra.mxu0 %v7302
        %10747 = vmatprep.subr.bf16.mxu0 %v7367
        %10748 = vmatpush1.bf16.xpose.msra.mxu0 %v7366
        %10749 = vmatprep.subr.bf16.mxu0 %v7431
        %10750 = vmatpush1.bf16.xpose.msra.mxu0 %v7430
        %10751 = vmatprep.subr.bf16.mxu0 %v7495
        %10752 = vmatpush1.bf16.xpose.msra.mxu0 %v7494
        %10753 = vmatprep.subr.bf16.mxu0 %v7559
        %10754 = vmatpush1.bf16.xpose.msra.mxu0 %v7558
        %10755 = vmatprep.subr.bf16.mxu0 %v7623
        %10756 = vmatpush1.bf16.xpose.msra.mxu0 %v7622
        %10757 = vmatprep.subr.bf16.mxu0 %v7687
        %10758 = vmatpush1.bf16.xpose.msra.mxu0 %v7686
        %10759 = vmatprep.subr.bf16.mxu0 %v7751
        %10760 = vmatpush1.bf16.xpose.msra.mxu0 %v7750
        %10761 = vmatprep.subr.bf16.mxu0 %v7815
        %10762 = vmatpush1.bf16.xpose.msra.mxu0 %v7814
        %10763 = vmatprep.subr.bf16.mxu0 %v7879
        %10764 = vmatpush1.bf16.xpose.msra.mxu0 %v7878
        %10765 = vmatprep.subr.bf16.mxu0 %v7943
        %10766 = vmatpush1.bf16.xpose.msra.mxu0 %v7942
        %10767 = vmatprep.subr.bf16.mxu0 %v8007
        %10768 = vmatpush1.bf16.xpose.msra.mxu0 %v8006
        %10769 = vmatprep.subr.bf16.mxu0 %v8071
        %10770 = vmatpush1.bf16.xpose.msra.mxu0 %v8070
        %10771 = vmatprep.mubr.bf16.mxu0 %v1978
        %10772 = vmatmul.mubr.bf16.gmra.mrb[0].mxu0 %v1976
        %v10773 = vpop.f32.mrb[0].mxu0
        %v10774 = vadd.f32 %v10733, %v10773
        %v10775 = vpop.f32.mrb[0].mxu0
        %v10776 = vadd.f32 %v10735, %v10775
        %v10777 = vpop.f32.mrb[0].mxu0
        %v10778 = vpop.f32.mrb[0].mxu0
        %10779 = vdwg.mxu0
        %10780 = vmatprep.subr.bf16.mxu0 %v7113
        %10781 = vmatpush1.bf16.xpose.msra.mxu0 %v7112
        %10782 = vmatprep.subr.bf16.mxu0 %v7177
        %10783 = vmatpush1.bf16.xpose.msra.mxu0 %v7176
        %10784 = vmatprep.subr.bf16.mxu0 %v7241
        %10785 = vmatpush1.bf16.xpose.msra.mxu0 %v7240
        %10786 = vmatprep.subr.bf16.mxu0 %v7305
        %10787 = vmatpush1.bf16.xpose.msra.mxu0 %v7304
        %10788 = vmatprep.subr.bf16.mxu0 %v7369
        %10789 = vmatpush1.bf16.xpose.msra.mxu0 %v7368
        %10790 = vmatprep.subr.bf16.mxu0 %v7433
        %10791 = vmatpush1.bf16.xpose.msra.mxu0 %v7432
        %10792 = vmatprep.subr.bf16.mxu0 %v7497
        %10793 = vmatpush1.bf16.xpose.msra.mxu0 %v7496
        %10794 = vmatprep.subr.bf16.mxu0 %v7561
        %10795 = vmatpush1.bf16.xpose.msra.mxu0 %v7560
        %10796 = vmatprep.subr.bf16.mxu0 %v7625
        %10797 = vmatpush1.bf16.xpose.msra.mxu0 %v7624
        %10798 = vmatprep.subr.bf16.mxu0 %v7689
        %10799 = vmatpush1.bf16.xpose.msra.mxu0 %v7688
        %10800 = vmatprep.subr.bf16.mxu0 %v7753
        %10801 = vmatpush1.bf16.xpose.msra.mxu0 %v7752
        %10802 = vmatprep.subr.bf16.mxu0 %v7817
        %10803 = vmatpush1.bf16.xpose.msra.mxu0 %v7816
        %10804 = vmatprep.subr.bf16.mxu0 %v7881
        %10805 = vmatpush1.bf16.xpose.msra.mxu0 %v7880
        %10806 = vmatprep.subr.bf16.mxu0 %v7945
        %10807 = vmatpush1.bf16.xpose.msra.mxu0 %v7944
        %10808 = vmatprep.subr.bf16.mxu0 %v8009
        %10809 = vmatpush1.bf16.xpose.msra.mxu0 %v8008
        %10810 = vmatprep.subr.bf16.mxu0 %v8073
        %10811 = vmatpush1.bf16.xpose.msra.mxu0 %v8072
        %10812 = vmatprep.mubr.bf16.mxu0 %v2016
        %10813 = vmatmul.mubr.bf16.gmra.mrb[0].mxu0 %v2002
        %v10814 = vpop.f32.mrb[0].mxu0
        %v10815 = vadd.f32 %v10774, %v10814
        %v10816 = vpop.f32.mrb[0].mxu0
        %v10817 = vadd.f32 %v10776, %v10816
        %v10818 = vpop.f32.mrb[0].mxu0
        %v10819 = vpop.f32.mrb[0].mxu0
        %10820 = vdwg.mxu0
        %10821 = vmatprep.subr.bf16.mxu0 %v7115
        %10822 = vmatpush1.bf16.xpose.msra.mxu0 %v7114
        %10823 = vmatprep.subr.bf16.mxu0 %v7179
        %10824 = vmatpush1.bf16.xpose.msra.mxu0 %v7178
        %10825 = vmatprep.subr.bf16.mxu0 %v7243
        %10826 = vmatpush1.bf16.xpose.msra.mxu0 %v7242
        %10827 = vmatprep.subr.bf16.mxu0 %v7307
        %10828 = vmatpush1.bf16.xpose.msra.mxu0 %v7306
        %10829 = vmatprep.subr.bf16.mxu0 %v7371
        %10830 = vmatpush1.bf16.xpose.msra.mxu0 %v7370
        %10831 = vmatprep.subr.bf16.mxu0 %v7435
        %10832 = vmatpush1.bf16.xpose.msra.mxu0 %v7434
        %10833 = vmatprep.subr.bf16.mxu0 %v7499
        %10834 = vmatpush1.bf16.xpose.msra.mxu0 %v7498
        %10835 = vmatprep.subr.bf16.mxu0 %v7563
        %10836 = vmatpush1.bf16.xpose.msra.mxu0 %v7562
        %10837 = vmatprep.subr.bf16.mxu0 %v7627
        %10838 = vmatpush1.bf16.xpose.msra.mxu0 %v7626
        %10839 = vmatprep.subr.bf16.mxu0 %v7691
        %10840 = vmatpush1.bf16.xpose.msra.mxu0 %v7690
        %10841 = vmatprep.subr.bf16.mxu0 %v7755
        %10842 = vmatpush1.bf16.xpose.msra.mxu0 %v7754
        %10843 = vmatprep.subr.bf16.mxu0 %v7819
        %10844 = vmatpush1.bf16.xpose.msra.mxu0 %v7818
        %10845 = vmatprep.subr.bf16.mxu0 %v7883
        %10846 = vmatpush1.bf16.xpose.msra.mxu0 %v7882
        %10847 = vmatprep.subr.bf16.mxu0 %v7947
        %10848 = vmatpush1.bf16.xpose.msra.mxu0 %v7946
        %10849 = vmatprep.subr.bf16.mxu0 %v8011
        %10850 = vmatpush1.bf16.xpose.msra.mxu0 %v8010
        %10851 = vmatprep.subr.bf16.mxu0 %v8075
        %10852 = vmatpush1.bf16.xpose.msra.mxu0 %v8074
        %10853 = vmatprep.mubr.bf16.mxu0 %v2026
        %10854 = vmatmul.mubr.bf16.gmra.mrb[0].mxu0 %v2024
        %v10855 = vpop.f32.mrb[0].mxu0
        %v10856 = vadd.f32 %v10815, %v10855
        %v10857 = vpop.f32.mrb[0].mxu0
        %v10858 = vadd.f32 %v10817, %v10857
        %v10859 = vpop.f32.mrb[0].mxu0
        %v10860 = vpop.f32.mrb[0].mxu0
        %10861 = vdwg.mxu0
        %10862 = vmatprep.subr.bf16.mxu0 %v7117
        %10863 = vmatpush1.bf16.xpose.msra.mxu0 %v7116
        %10864 = vmatprep.subr.bf16.mxu0 %v7181
        %10865 = vmatpush1.bf16.xpose.msra.mxu0 %v7180
        %10866 = vmatprep.subr.bf16.mxu0 %v7245
        %10867 = vmatpush1.bf16.xpose.msra.mxu0 %v7244
        %10868 = vmatprep.subr.bf16.mxu0 %v7309
        %10869 = vmatpush1.bf16.xpose.msra.mxu0 %v7308
        %10870 = vmatprep.subr.bf16.mxu0 %v7373
        %10871 = vmatpush1.bf16.xpose.msra.mxu0 %v7372
        %10872 = vmatprep.subr.bf16.mxu0 %v7437
        %10873 = vmatpush1.bf16.xpose.msra.mxu0 %v7436
        %10874 = vmatprep.subr.bf16.mxu0 %v7501
        %10875 = vmatpush1.bf16.xpose.msra.mxu0 %v7500
        %10876 = vmatprep.subr.bf16.mxu0 %v7565
        %10877 = vmatpush1.bf16.xpose.msra.mxu0 %v7564
        %10878 = vmatprep.subr.bf16.mxu0 %v7629
        %10879 = vmatpush1.bf16.xpose.msra.mxu0 %v7628
        %10880 = vmatprep.subr.bf16.mxu0 %v7693
        %10881 = vmatpush1.bf16.xpose.msra.mxu0 %v7692
        %10882 = vmatprep.subr.bf16.mxu0 %v7757
        %10883 = vmatpush1.bf16.xpose.msra.mxu0 %v7756
        %10884 = vmatprep.subr.bf16.mxu0 %v7821
        %10885 = vmatpush1.bf16.xpose.msra.mxu0 %v7820
        %10886 = vmatprep.subr.bf16.mxu0 %v7885
        %10887 = vmatpush1.bf16.xpose.msra.mxu0 %v7884
        %10888 = vmatprep.subr.bf16.mxu0 %v7949
        %10889 = vmatpush1.bf16.xpose.msra.mxu0 %v7948
        %10890 = vmatprep.subr.bf16.mxu0 %v8013
        %10891 = vmatpush1.bf16.xpose.msra.mxu0 %v8012
        %10892 = vmatprep.subr.bf16.mxu0 %v8077
        %10893 = vmatpush1.bf16.xpose.msra.mxu0 %v8076
        %10894 = vmatprep.mubr.bf16.mxu0 %v2023
        %10895 = vmatmul.mubr.bf16.gmra.mrb[0].mxu0 %v2009
        %v10896 = vpop.f32.mrb[0].mxu0
        %v10897 = vadd.f32 %v10856, %v10896
        %v10898 = vpop.f32.mrb[0].mxu0
        %v10899 = vadd.f32 %v10858, %v10898
        %v10900 = vpop.f32.mrb[0].mxu0
        %v10901 = vpop.f32.mrb[0].mxu0
        %10902 = vdwg.mxu0
        %10903 = vmatprep.subr.bf16.mxu0 %v7119
        %10904 = vmatpush1.bf16.xpose.msra.mxu0 %v7118
        %10905 = vmatprep.subr.bf16.mxu0 %v7183
        %10906 = vmatpush1.bf16.xpose.msra.mxu0 %v7182
        %10907 = vmatprep.subr.bf16.mxu0 %v7247
        %10908 = vmatpush1.bf16.xpose.msra.mxu0 %v7246
        %10909 = vmatprep.subr.bf16.mxu0 %v7311
        %10910 = vmatpush1.bf16.xpose.msra.mxu0 %v7310
        %10911 = vmatprep.subr.bf16.mxu0 %v7375
        %10912 = vmatpush1.bf16.xpose.msra.mxu0 %v7374
        %10913 = vmatprep.subr.bf16.mxu0 %v7439
        %10914 = vmatpush1.bf16.xpose.msra.mxu0 %v7438
        %10915 = vmatprep.subr.bf16.mxu0 %v7503
        %10916 = vmatpush1.bf16.xpose.msra.mxu0 %v7502
        %10917 = vmatprep.subr.bf16.mxu0 %v7567
        %10918 = vmatpush1.bf16.xpose.msra.mxu0 %v7566
        %10919 = vmatprep.subr.bf16.mxu0 %v7631
        %10920 = vmatpush1.bf16.xpose.msra.mxu0 %v7630
        %10921 = vmatprep.subr.bf16.mxu0 %v7695
        %10922 = vmatpush1.bf16.xpose.msra.mxu0 %v7694
        %10923 = vmatprep.subr.bf16.mxu0 %v7759
        %10924 = vmatpush1.bf16.xpose.msra.mxu0 %v7758
        %10925 = vmatprep.subr.bf16.mxu0 %v7823
        %10926 = vmatpush1.bf16.xpose.msra.mxu0 %v7822
        %10927 = vmatprep.subr.bf16.mxu0 %v7887
        %10928 = vmatpush1.bf16.xpose.msra.mxu0 %v7886
        %10929 = vmatprep.subr.bf16.mxu0 %v7951
        %10930 = vmatpush1.bf16.xpose.msra.mxu0 %v7950
        %10931 = vmatprep.subr.bf16.mxu0 %v8015
        %10932 = vmatpush1.bf16.xpose.msra.mxu0 %v8014
        %10933 = vmatprep.subr.bf16.mxu0 %v8079
        %10934 = vmatpush1.bf16.xpose.msra.mxu0 %v8078
        %10935 = vmatprep.mubr.bf16.mxu0 %v2027
        %10936 = vmatmul.mubr.bf16.gmra.mrb[0].mxu0 %v2025
        %v10937 = vpop.f32.mrb[0].mxu0
        %v10938 = vadd.f32 %v10897, %v10937
        %v10939 = vpop.f32.mrb[0].mxu0
        %v10940 = vadd.f32 %v10899, %v10939
        %v10941 = vpop.f32.mrb[0].mxu0
        %v10942 = vpop.f32.mrb[0].mxu0
        %10943 = vdwg.mxu0
        %10944 = vmatprep.subr.bf16.mxu0 %v7121
        %10945 = vmatpush1.bf16.xpose.msra.mxu0 %v7120
        %10946 = vmatprep.subr.bf16.mxu0 %v7185
        %10947 = vmatpush1.bf16.xpose.msra.mxu0 %v7184
        %10948 = vmatprep.subr.bf16.mxu0 %v7249
        %10949 = vmatpush1.bf16.xpose.msra.mxu0 %v7248
        %10950 = vmatprep.subr.bf16.mxu0 %v7313
        %10951 = vmatpush1.bf16.xpose.msra.mxu0 %v7312
        %10952 = vmatprep.subr.bf16.mxu0 %v7377
        %10953 = vmatpush1.bf16.xpose.msra.mxu0 %v7376
        %10954 = vmatprep.subr.bf16.mxu0 %v7441
        %10955 = vmatpush1.bf16.xpose.msra.mxu0 %v7440
        %10956 = vmatprep.subr.bf16.mxu0 %v7505
        %10957 = vmatpush1.bf16.xpose.msra.mxu0 %v7504
        %10958 = vmatprep.subr.bf16.mxu0 %v7569
        %10959 = vmatpush1.bf16.xpose.msra.mxu0 %v7568
        %10960 = vmatprep.subr.bf16.mxu0 %v7633
        %10961 = vmatpush1.bf16.xpose.msra.mxu0 %v7632
        %10962 = vmatprep.subr.bf16.mxu0 %v7697
        %10963 = vmatpush1.bf16.xpose.msra.mxu0 %v7696
        %10964 = vmatprep.subr.bf16.mxu0 %v7761
        %10965 = vmatpush1.bf16.xpose.msra.mxu0 %v7760
        %10966 = vmatprep.subr.bf16.mxu0 %v7825
        %10967 = vmatpush1.bf16.xpose.msra.mxu0 %v7824
        %10968 = vmatprep.subr.bf16.mxu0 %v7889
        %10969 = vmatpush1.bf16.xpose.msra.mxu0 %v7888
        %10970 = vmatprep.subr.bf16.mxu0 %v7953
        %10971 = vmatpush1.bf16.xpose.msra.mxu0 %v7952
        %10972 = vmatprep.subr.bf16.mxu0 %v8017
        %10973 = vmatpush1.bf16.xpose.msra.mxu0 %v8016
        %10974 = vmatprep.subr.bf16.mxu0 %v8081
        %10975 = vmatpush1.bf16.xpose.msra.mxu0 %v8080
        %10976 = vmatprep.mubr.bf16.mxu0 %v2065
        %10977 = vmatmul.mubr.bf16.gmra.mrb[0].mxu0 %v2051
        %v10978 = vpop.f32.mrb[0].mxu0
        %v10979 = vadd.f32 %v10938, %v10978
        %v10980 = vpop.f32.mrb[0].mxu0
        %v10981 = vadd.f32 %v10940, %v10980
        %v10982 = vpop.f32.mrb[0].mxu0
        %v10983 = vpop.f32.mrb[0].mxu0
        %10984 = vdwg.mxu0
        %10985 = vmatprep.subr.bf16.mxu0 %v7123
        %10986 = vmatpush1.bf16.xpose.msra.mxu0 %v7122
        %10987 = vmatprep.subr.bf16.mxu0 %v7187
        %10988 = vmatpush1.bf16.xpose.msra.mxu0 %v7186
        %10989 = vmatprep.subr.bf16.mxu0 %v7251
        %10990 = vmatpush1.bf16.xpose.msra.mxu0 %v7250
        %10991 = vmatprep.subr.bf16.mxu0 %v7315
        %10992 = vmatpush1.bf16.xpose.msra.mxu0 %v7314
        %10993 = vmatprep.subr.bf16.mxu0 %v7379
        %10994 = vmatpush1.bf16.xpose.msra.mxu0 %v7378
        %10995 = vmatprep.subr.bf16.mxu0 %v7443
        %10996 = vmatpush1.bf16.xpose.msra.mxu0 %v7442
        %10997 = vmatprep.subr.bf16.mxu0 %v7507
        %10998 = vmatpush1.bf16.xpose.msra.mxu0 %v7506
        %10999 = vmatprep.subr.bf16.mxu0 %v7571
        %11000 = vmatpush1.bf16.xpose.msra.mxu0 %v7570
        %11001 = vmatprep.subr.bf16.mxu0 %v7635
        %11002 = vmatpush1.bf16.xpose.msra.mxu0 %v7634
        %11003 = vmatprep.subr.bf16.mxu0 %v7699
        %11004 = vmatpush1.bf16.xpose.msra.mxu0 %v7698
        %11005 = vmatprep.subr.bf16.mxu0 %v7763
        %11006 = vmatpush1.bf16.xpose.msra.mxu0 %v7762
        %11007 = vmatprep.subr.bf16.mxu0 %v7827
        %11008 = vmatpush1.bf16.xpose.msra.mxu0 %v7826
        %11009 = vmatprep.subr.bf16.mxu0 %v7891
        %11010 = vmatpush1.bf16.xpose.msra.mxu0 %v7890
        %11011 = vmatprep.subr.bf16.mxu0 %v7955
        %11012 = vmatpush1.bf16.xpose.msra.mxu0 %v7954
        %11013 = vmatprep.subr.bf16.mxu0 %v8019
        %11014 = vmatpush1.bf16.xpose.msra.mxu0 %v8018
        %11015 = vmatprep.subr.bf16.mxu0 %v8083
        %11016 = vmatpush1.bf16.xpose.msra.mxu0 %v8082
        %11017 = vmatprep.mubr.bf16.mxu0 %v2075
        %11018 = vmatmul.mubr.bf16.gmra.mrb[0].mxu0 %v2073
        %v11019 = vpop.f32.mrb[0].mxu0
        %v11020 = vadd.f32 %v10979, %v11019
        %v11021 = vpop.f32.mrb[0].mxu0
        %v11022 = vadd.f32 %v10981, %v11021
        %v11023 = vpop.f32.mrb[0].mxu0
        %v11024 = vpop.f32.mrb[0].mxu0
        %11025 = vdwg.mxu0
        %11026 = vmatprep.subr.bf16.mxu0 %v7125
        %11027 = vmatpush1.bf16.xpose.msra.mxu0 %v7124
        %11028 = vmatprep.subr.bf16.mxu0 %v7189
        %11029 = vmatpush1.bf16.xpose.msra.mxu0 %v7188
        %11030 = vmatprep.subr.bf16.mxu0 %v7253
        %11031 = vmatpush1.bf16.xpose.msra.mxu0 %v7252
        %11032 = vmatprep.subr.bf16.mxu0 %v7317
        %11033 = vmatpush1.bf16.xpose.msra.mxu0 %v7316
        %11034 = vmatprep.subr.bf16.mxu0 %v7381
        %11035 = vmatpush1.bf16.xpose.msra.mxu0 %v7380
        %11036 = vmatprep.subr.bf16.mxu0 %v7445
        %11037 = vmatpush1.bf16.xpose.msra.mxu0 %v7444
        %11038 = vmatprep.subr.bf16.mxu0 %v7509
        %11039 = vmatpush1.bf16.xpose.msra.mxu0 %v7508
        %11040 = vmatprep.subr.bf16.mxu0 %v7573
        %11041 = vmatpush1.bf16.xpose.msra.mxu0 %v7572
        %11042 = vmatprep.subr.bf16.mxu0 %v7637
        %11043 = vmatpush1.bf16.xpose.msra.mxu0 %v7636
        %11044 = vmatprep.subr.bf16.mxu0 %v7701
        %11045 = vmatpush1.bf16.xpose.msra.mxu0 %v7700
        %11046 = vmatprep.subr.bf16.mxu0 %v7765
        %11047 = vmatpush1.bf16.xpose.msra.mxu0 %v7764
        %11048 = vmatprep.subr.bf16.mxu0 %v7829
        %11049 = vmatpush1.bf16.xpose.msra.mxu0 %v7828
        %11050 = vmatprep.subr.bf16.mxu0 %v7893
        %11051 = vmatpush1.bf16.xpose.msra.mxu0 %v7892
        %11052 = vmatprep.subr.bf16.mxu0 %v7957
        %11053 = vmatpush1.bf16.xpose.msra.mxu0 %v7956
        %11054 = vmatprep.subr.bf16.mxu0 %v8021
        %11055 = vmatpush1.bf16.xpose.msra.mxu0 %v8020
        %11056 = vmatprep.subr.bf16.mxu0 %v8085
        %11057 = vmatpush1.bf16.xpose.msra.mxu0 %v8084
        %11058 = vmatprep.mubr.bf16.mxu0 %v2072
        %11059 = vmatmul.mubr.bf16.gmra.mrb[0].mxu0 %v2058
        %v11060 = vpop.f32.mrb[0].mxu0
        %v11061 = vadd.f32 %v11020, %v11060
        %v11062 = vpop.f32.mrb[0].mxu0
        %v11063 = vadd.f32 %v11022, %v11062
        %v11064 = vpop.f32.mrb[0].mxu0
        %v11065 = vpop.f32.mrb[0].mxu0
        %11066 = vdwg.mxu0
        %11067 = vmatprep.subr.bf16.mxu0 %v7127
        %11068 = vmatpush1.bf16.xpose.msra.mxu0 %v7126
        %11069 = vmatprep.subr.bf16.mxu0 %v7191
        %11070 = vmatpush1.bf16.xpose.msra.mxu0 %v7190
        %11071 = vmatprep.subr.bf16.mxu0 %v7255
        %11072 = vmatpush1.bf16.xpose.msra.mxu0 %v7254
        %11073 = vmatprep.subr.bf16.mxu0 %v7319
        %11074 = vmatpush1.bf16.xpose.msra.mxu0 %v7318
        %11075 = vmatprep.subr.bf16.mxu0 %v7383
        %11076 = vmatpush1.bf16.xpose.msra.mxu0 %v7382
        %11077 = vmatprep.subr.bf16.mxu0 %v7447
        %11078 = vmatpush1.bf16.xpose.msra.mxu0 %v7446
        %11079 = vmatprep.subr.bf16.mxu0 %v7511
        %11080 = vmatpush1.bf16.xpose.msra.mxu0 %v7510
        %11081 = vmatprep.subr.bf16.mxu0 %v7575
        %11082 = vmatpush1.bf16.xpose.msra.mxu0 %v7574
        %11083 = vmatprep.subr.bf16.mxu0 %v7639
        %11084 = vmatpush1.bf16.xpose.msra.mxu0 %v7638
        %11085 = vmatprep.subr.bf16.mxu0 %v7703
        %11086 = vmatpush1.bf16.xpose.msra.mxu0 %v7702
        %11087 = vmatprep.subr.bf16.mxu0 %v7767
        %11088 = vmatpush1.bf16.xpose.msra.mxu0 %v7766
        %11089 = vmatprep.subr.bf16.mxu0 %v7831
        %11090 = vmatpush1.bf16.xpose.msra.mxu0 %v7830
        %11091 = vmatprep.subr.bf16.mxu0 %v7895
        %11092 = vmatpush1.bf16.xpose.msra.mxu0 %v7894
        %11093 = vmatprep.subr.bf16.mxu0 %v7959
        %11094 = vmatpush1.bf16.xpose.msra.mxu0 %v7958
        %11095 = vmatprep.subr.bf16.mxu0 %v8023
        %11096 = vmatpush1.bf16.xpose.msra.mxu0 %v8022
        %11097 = vmatprep.subr.bf16.mxu0 %v8087
        %11098 = vmatpush1.bf16.xpose.msra.mxu0 %v8086
        %11099 = vmatprep.mubr.bf16.mxu0 %v2076
        %11100 = vmatmul.mubr.bf16.gmra.mrb[0].mxu0 %v2074
        %v11101 = vpop.f32.mrb[0].mxu0
        %v11102 = vadd.f32 %v11061, %v11101
        %v11103 = vpop.f32.mrb[0].mxu0
        %v11104 = vadd.f32 %v11063, %v11103
        %v11105 = vpop.f32.mrb[0].mxu0
        %v11106 = vpop.f32.mrb[0].mxu0
        %11107 = vdwg.mxu0
        %11108 = vmatprep.subr.bf16.mxu0 %v7129
        %11109 = vmatpush1.bf16.xpose.msra.mxu0 %v7128
        %11110 = vmatprep.subr.bf16.mxu0 %v7193
        %11111 = vmatpush1.bf16.xpose.msra.mxu0 %v7192
        %11112 = vmatprep.subr.bf16.mxu0 %v7257
        %11113 = vmatpush1.bf16.xpose.msra.mxu0 %v7256
        %11114 = vmatprep.subr.bf16.mxu0 %v7321
        %11115 = vmatpush1.bf16.xpose.msra.mxu0 %v7320
        %11116 = vmatprep.subr.bf16.mxu0 %v7385
        %11117 = vmatpush1.bf16.xpose.msra.mxu0 %v7384
        %11118 = vmatprep.subr.bf16.mxu0 %v7449
        %11119 = vmatpush1.bf16.xpose.msra.mxu0 %v7448
        %11120 = vmatprep.subr.bf16.mxu0 %v7513
        %11121 = vmatpush1.bf16.xpose.msra.mxu0 %v7512
        %11122 = vmatprep.subr.bf16.mxu0 %v7577
        %11123 = vmatpush1.bf16.xpose.msra.mxu0 %v7576
        %11124 = vmatprep.subr.bf16.mxu0 %v7641
        %11125 = vmatpush1.bf16.xpose.msra.mxu0 %v7640
        %11126 = vmatprep.subr.bf16.mxu0 %v7705
        %11127 = vmatpush1.bf16.xpose.msra.mxu0 %v7704
        %11128 = vmatprep.subr.bf16.mxu0 %v7769
        %11129 = vmatpush1.bf16.xpose.msra.mxu0 %v7768
        %11130 = vmatprep.subr.bf16.mxu0 %v7833
        %11131 = vmatpush1.bf16.xpose.msra.mxu0 %v7832
        %11132 = vmatprep.subr.bf16.mxu0 %v7897
        %11133 = vmatpush1.bf16.xpose.msra.mxu0 %v7896
        %11134 = vmatprep.subr.bf16.mxu0 %v7961
        %11135 = vmatpush1.bf16.xpose.msra.mxu0 %v7960
        %11136 = vmatprep.subr.bf16.mxu0 %v8025
        %11137 = vmatpush1.bf16.xpose.msra.mxu0 %v8024
        %11138 = vmatprep.subr.bf16.mxu0 %v8089
        %11139 = vmatpush1.bf16.xpose.msra.mxu0 %v8088
        %11140 = vmatprep.mubr.bf16.mxu0 %v2114
        %11141 = vmatmul.mubr.bf16.gmra.mrb[0].mxu0 %v2100
        %v11142 = vpop.f32.mrb[0].mxu0
        %v11143 = vadd.f32 %v11102, %v11142
        %v11144 = vpop.f32.mrb[0].mxu0
        %v11145 = vadd.f32 %v11104, %v11144
        %v11146 = vpop.f32.mrb[0].mxu0
        %v11147 = vpop.f32.mrb[0].mxu0
        %11148 = vdwg.mxu0
        %11149 = vmatprep.subr.bf16.mxu0 %v7131
        %11150 = vmatpush1.bf16.xpose.msra.mxu0 %v7130
        %11151 = vmatprep.subr.bf16.mxu0 %v7195
        %11152 = vmatpush1.bf16.xpose.msra.mxu0 %v7194
        %11153 = vmatprep.subr.bf16.mxu0 %v7259
        %11154 = vmatpush1.bf16.xpose.msra.mxu0 %v7258
        %11155 = vmatprep.subr.bf16.mxu0 %v7323
        %11156 = vmatpush1.bf16.xpose.msra.mxu0 %v7322
        %11157 = vmatprep.subr.bf16.mxu0 %v7387
        %11158 = vmatpush1.bf16.xpose.msra.mxu0 %v7386
        %11159 = vmatprep.subr.bf16.mxu0 %v7451
        %11160 = vmatpush1.bf16.xpose.msra.mxu0 %v7450
        %11161 = vmatprep.subr.bf16.mxu0 %v7515
        %11162 = vmatpush1.bf16.xpose.msra.mxu0 %v7514
        %11163 = vmatprep.subr.bf16.mxu0 %v7579
        %11164 = vmatpush1.bf16.xpose.msra.mxu0 %v7578
        %11165 = vmatprep.subr.bf16.mxu0 %v7643
        %11166 = vmatpush1.bf16.xpose.msra.mxu0 %v7642
        %11167 = vmatprep.subr.bf16.mxu0 %v7707
        %11168 = vmatpush1.bf16.xpose.msra.mxu0 %v7706
        %11169 = vmatprep.subr.bf16.mxu0 %v7771
        %11170 = vmatpush1.bf16.xpose.msra.mxu0 %v7770
        %11171 = vmatprep.subr.bf16.mxu0 %v7835
        %11172 = vmatpush1.bf16.xpose.msra.mxu0 %v7834
        %11173 = vmatprep.subr.bf16.mxu0 %v7899
        %11174 = vmatpush1.bf16.xpose.msra.mxu0 %v7898
        %11175 = vmatprep.subr.bf16.mxu0 %v7963
        %11176 = vmatpush1.bf16.xpose.msra.mxu0 %v7962
        %11177 = vmatprep.subr.bf16.mxu0 %v8027
        %11178 = vmatpush1.bf16.xpose.msra.mxu0 %v8026
        %11179 = vmatprep.subr.bf16.mxu0 %v8091
        %11180 = vmatpush1.bf16.xpose.msra.mxu0 %v8090
        %11181 = vmatprep.mubr.bf16.mxu0 %v2124
        %11182 = vmatmul.mubr.bf16.gmra.mrb[0].mxu0 %v2122
        %v11183 = vpop.f32.mrb[0].mxu0
        %v11184 = vadd.f32 %v11143, %v11183
        %v11185 = vpop.f32.mrb[0].mxu0
        %v11186 = vadd.f32 %v11145, %v11185
        %v11187 = vpop.f32.mrb[0].mxu0
        %v11188 = vpop.f32.mrb[0].mxu0
        %11189 = vdwg.mxu0
        %11190 = vmatprep.subr.bf16.mxu0 %v7133
        %11191 = vmatpush1.bf16.xpose.msra.mxu0 %v7132
        %11192 = vmatprep.subr.bf16.mxu0 %v7197
        %11193 = vmatpush1.bf16.xpose.msra.mxu0 %v7196
        %11194 = vmatprep.subr.bf16.mxu0 %v7261
        %11195 = vmatpush1.bf16.xpose.msra.mxu0 %v7260
        %11196 = vmatprep.subr.bf16.mxu0 %v7325
        %11197 = vmatpush1.bf16.xpose.msra.mxu0 %v7324
        %11198 = vmatprep.subr.bf16.mxu0 %v7389
        %11199 = vmatpush1.bf16.xpose.msra.mxu0 %v7388
        %11200 = vmatprep.subr.bf16.mxu0 %v7453
        %11201 = vmatpush1.bf16.xpose.msra.mxu0 %v7452
        %11202 = vmatprep.subr.bf16.mxu0 %v7517
        %11203 = vmatpush1.bf16.xpose.msra.mxu0 %v7516
        %11204 = vmatprep.subr.bf16.mxu0 %v7581
        %11205 = vmatpush1.bf16.xpose.msra.mxu0 %v7580
        %11206 = vmatprep.subr.bf16.mxu0 %v7645
        %11207 = vmatpush1.bf16.xpose.msra.mxu0 %v7644
        %11208 = vmatprep.subr.bf16.mxu0 %v7709
        %11209 = vmatpush1.bf16.xpose.msra.mxu0 %v7708
        %11210 = vmatprep.subr.bf16.mxu0 %v7773
        %11211 = vmatpush1.bf16.xpose.msra.mxu0 %v7772
        %11212 = vmatprep.subr.bf16.mxu0 %v7837
        %11213 = vmatpush1.bf16.xpose.msra.mxu0 %v7836
        %11214 = vmatprep.subr.bf16.mxu0 %v7901
        %11215 = vmatpush1.bf16.xpose.msra.mxu0 %v7900
        %11216 = vmatprep.subr.bf16.mxu0 %v7965
        %11217 = vmatpush1.bf16.xpose.msra.mxu0 %v7964
        %11218 = vmatprep.subr.bf16.mxu0 %v8029
        %11219 = vmatpush1.bf16.xpose.msra.mxu0 %v8028
        %11220 = vmatprep.subr.bf16.mxu0 %v8093
        %11221 = vmatpush1.bf16.xpose.msra.mxu0 %v8092
        %11222 = vmatprep.mubr.bf16.mxu0 %v2121
        %11223 = vmatmul.mubr.bf16.gmra.mrb[0].mxu0 %v2107
        %v11224 = vpop.f32.mrb[0].mxu0
        %v11225 = vadd.f32 %v11184, %v11224
        %v11226 = vpop.f32.mrb[0].mxu0
        %v11227 = vadd.f32 %v11186, %v11226
        %v11228 = vpop.f32.mrb[0].mxu0
        %v11229 = vpop.f32.mrb[0].mxu0
        %11230 = vdwg.mxu0
        %11231 = vmatprep.subr.bf16.mxu0 %v7135
        %11232 = vmatpush1.bf16.xpose.msra.mxu0 %v7134
        %11233 = vmatprep.subr.bf16.mxu0 %v7199
        %11234 = vmatpush1.bf16.xpose.msra.mxu0 %v7198
        %11235 = vmatprep.subr.bf16.mxu0 %v7263
        %11236 = vmatpush1.bf16.xpose.msra.mxu0 %v7262
        %11237 = vmatprep.subr.bf16.mxu0 %v7327
        %11238 = vmatpush1.bf16.xpose.msra.mxu0 %v7326
        %11239 = vmatprep.subr.bf16.mxu0 %v7391
        %11240 = vmatpush1.bf16.xpose.msra.mxu0 %v7390
        %11241 = vmatprep.subr.bf16.mxu0 %v7455
        %11242 = vmatpush1.bf16.xpose.msra.mxu0 %v7454
        %11243 = vmatprep.subr.bf16.mxu0 %v7519
        %11244 = vmatpush1.bf16.xpose.msra.mxu0 %v7518
        %11245 = vmatprep.subr.bf16.mxu0 %v7583
        %11246 = vmatpush1.bf16.xpose.msra.mxu0 %v7582
        %11247 = vmatprep.subr.bf16.mxu0 %v7647
        %11248 = vmatpush1.bf16.xpose.msra.mxu0 %v7646
        %11249 = vmatprep.subr.bf16.mxu0 %v7711
        %11250 = vmatpush1.bf16.xpose.msra.mxu0 %v7710
        %11251 = vmatprep.subr.bf16.mxu0 %v7775
        %11252 = vmatpush1.bf16.xpose.msra.mxu0 %v7774
        %11253 = vmatprep.subr.bf16.mxu0 %v7839
        %11254 = vmatpush1.bf16.xpose.msra.mxu0 %v7838
        %11255 = vmatprep.subr.bf16.mxu0 %v7903
        %11256 = vmatpush1.bf16.xpose.msra.mxu0 %v7902
        %11257 = vmatprep.subr.bf16.mxu0 %v7967
        %11258 = vmatpush1.bf16.xpose.msra.mxu0 %v7966
        %11259 = vmatprep.subr.bf16.mxu0 %v8031
        %11260 = vmatpush1.bf16.xpose.msra.mxu0 %v8030
        %11261 = vmatprep.subr.bf16.mxu0 %v8095
        %11262 = vmatpush1.bf16.xpose.msra.mxu0 %v8094
        %11263 = vmatprep.mubr.bf16.mxu0 %v2125
        %11264 = vmatmul.mubr.bf16.gmra.mrb[0].mxu0 %v2123
        %v11265 = vpop.f32.mrb[0].mxu0
        %v11266 = vadd.f32 %v11225, %v11265
        %v11267 = vpop.f32.mrb[0].mxu0
        %v11268 = vadd.f32 %v11227, %v11267
        %v11269 = vpop.f32.mrb[0].mxu0
        %v11270 = vpop.f32.mrb[0].mxu0
        %11271 = vdwg.mxu0
        %11272 = vmatprep.subr.bf16.mxu0 %v7137
        %11273 = vmatpush1.bf16.xpose.msra.mxu0 %v7136
        %11274 = vmatprep.subr.bf16.mxu0 %v7201
        %11275 = vmatpush1.bf16.xpose.msra.mxu0 %v7200
        %11276 = vmatprep.subr.bf16.mxu0 %v7265
        %11277 = vmatpush1.bf16.xpose.msra.mxu0 %v7264
        %11278 = vmatprep.subr.bf16.mxu0 %v7329
        %11279 = vmatpush1.bf16.xpose.msra.mxu0 %v7328
        %11280 = vmatprep.subr.bf16.mxu0 %v7393
        %11281 = vmatpush1.bf16.xpose.msra.mxu0 %v7392
        %11282 = vmatprep.subr.bf16.mxu0 %v7457
        %11283 = vmatpush1.bf16.xpose.msra.mxu0 %v7456
        %11284 = vmatprep.subr.bf16.mxu0 %v7521
        %11285 = vmatpush1.bf16.xpose.msra.mxu0 %v7520
        %11286 = vmatprep.subr.bf16.mxu0 %v7585
        %11287 = vmatpush1.bf16.xpose.msra.mxu0 %v7584
        %11288 = vmatprep.subr.bf16.mxu0 %v7649
        %11289 = vmatpush1.bf16.xpose.msra.mxu0 %v7648
        %11290 = vmatprep.subr.bf16.mxu0 %v7713
        %11291 = vmatpush1.bf16.xpose.msra.mxu0 %v7712
        %11292 = vmatprep.subr.bf16.mxu0 %v7777
        %11293 = vmatpush1.bf16.xpose.msra.mxu0 %v7776
        %11294 = vmatprep.subr.bf16.mxu0 %v7841
        %11295 = vmatpush1.bf16.xpose.msra.mxu0 %v7840
        %11296 = vmatprep.subr.bf16.mxu0 %v7905
        %11297 = vmatpush1.bf16.xpose.msra.mxu0 %v7904
        %11298 = vmatprep.subr.bf16.mxu0 %v7969
        %11299 = vmatpush1.bf16.xpose.msra.mxu0 %v7968
        %11300 = vmatprep.subr.bf16.mxu0 %v8033
        %11301 = vmatpush1.bf16.xpose.msra.mxu0 %v8032
        %11302 = vmatprep.subr.bf16.mxu0 %v8097
        %11303 = vmatpush1.bf16.xpose.msra.mxu0 %v8096
        %11304 = vmatprep.mubr.bf16.mxu0 %v2163
        %11305 = vmatmul.mubr.bf16.gmra.mrb[0].mxu0 %v2149
        %v11306 = vpop.f32.mrb[0].mxu0
        %v11307 = vadd.f32 %v11266, %v11306
        %v11308 = vpop.f32.mrb[0].mxu0
        %v11309 = vadd.f32 %v11268, %v11308
        %v11310 = vpop.f32.mrb[0].mxu0
        %v11311 = vpop.f32.mrb[0].mxu0
        %11312 = vdwg.mxu0
        %11313 = vmatprep.subr.bf16.mxu0 %v7139
        %11314 = vmatpush1.bf16.xpose.msra.mxu0 %v7138
        %11315 = vmatprep.subr.bf16.mxu0 %v7203
        %11316 = vmatpush1.bf16.xpose.msra.mxu0 %v7202
        %11317 = vmatprep.subr.bf16.mxu0 %v7267
        %11318 = vmatpush1.bf16.xpose.msra.mxu0 %v7266
        %11319 = vmatprep.subr.bf16.mxu0 %v7331
        %11320 = vmatpush1.bf16.xpose.msra.mxu0 %v7330
        %11321 = vmatprep.subr.bf16.mxu0 %v7395
        %11322 = vmatpush1.bf16.xpose.msra.mxu0 %v7394
        %11323 = vmatprep.subr.bf16.mxu0 %v7459
        %11324 = vmatpush1.bf16.xpose.msra.mxu0 %v7458
        %11325 = vmatprep.subr.bf16.mxu0 %v7523
        %11326 = vmatpush1.bf16.xpose.msra.mxu0 %v7522
        %11327 = vmatprep.subr.bf16.mxu0 %v7587
        %11328 = vmatpush1.bf16.xpose.msra.mxu0 %v7586
        %11329 = vmatprep.subr.bf16.mxu0 %v7651
        %11330 = vmatpush1.bf16.xpose.msra.mxu0 %v7650
        %11331 = vmatprep.subr.bf16.mxu0 %v7715
        %11332 = vmatpush1.bf16.xpose.msra.mxu0 %v7714
        %11333 = vmatprep.subr.bf16.mxu0 %v7779
        %11334 = vmatpush1.bf16.xpose.msra.mxu0 %v7778
        %11335 = vmatprep.subr.bf16.mxu0 %v7843
        %11336 = vmatpush1.bf16.xpose.msra.mxu0 %v7842
        %11337 = vmatprep.subr.bf16.mxu0 %v7907
        %11338 = vmatpush1.bf16.xpose.msra.mxu0 %v7906
        %11339 = vmatprep.subr.bf16.mxu0 %v7971
        %11340 = vmatpush1.bf16.xpose.msra.mxu0 %v7970
        %11341 = vmatprep.subr.bf16.mxu0 %v8035
        %11342 = vmatpush1.bf16.xpose.msra.mxu0 %v8034
        %11343 = vmatprep.subr.bf16.mxu0 %v8099
        %11344 = vmatpush1.bf16.xpose.msra.mxu0 %v8098
        %11345 = vmatprep.mubr.bf16.mxu0 %v2173
        %11346 = vmatmul.mubr.bf16.gmra.mrb[0].mxu0 %v2171
        %v11347 = vpop.f32.mrb[0].mxu0
        %v11348 = vadd.f32 %v11307, %v11347
        %v11349 = vpop.f32.mrb[0].mxu0
        %v11350 = vadd.f32 %v11309, %v11349
        %v11351 = vpop.f32.mrb[0].mxu0
        %v11352 = vpop.f32.mrb[0].mxu0
        %11353 = vdwg.mxu0
        %11354 = vmatprep.subr.bf16.mxu0 %v7141
        %11355 = vmatpush1.bf16.xpose.msra.mxu0 %v7140
        %11356 = vmatprep.subr.bf16.mxu0 %v7205
        %11357 = vmatpush1.bf16.xpose.msra.mxu0 %v7204
        %11358 = vmatprep.subr.bf16.mxu0 %v7269
        %11359 = vmatpush1.bf16.xpose.msra.mxu0 %v7268
        %11360 = vmatprep.subr.bf16.mxu0 %v7333
        %11361 = vmatpush1.bf16.xpose.msra.mxu0 %v7332
        %11362 = vmatprep.subr.bf16.mxu0 %v7397
        %11363 = vmatpush1.bf16.xpose.msra.mxu0 %v7396
        %11364 = vmatprep.subr.bf16.mxu0 %v7461
        %11365 = vmatpush1.bf16.xpose.msra.mxu0 %v7460
        %11366 = vmatprep.subr.bf16.mxu0 %v7525
        %11367 = vmatpush1.bf16.xpose.msra.mxu0 %v7524
        %11368 = vmatprep.subr.bf16.mxu0 %v7589
        %11369 = vmatpush1.bf16.xpose.msra.mxu0 %v7588
        %11370 = vmatprep.subr.bf16.mxu0 %v7653
        %11371 = vmatpush1.bf16.xpose.msra.mxu0 %v7652
        %11372 = vmatprep.subr.bf16.mxu0 %v7717
        %11373 = vmatpush1.bf16.xpose.msra.mxu0 %v7716
        %11374 = vmatprep.subr.bf16.mxu0 %v7781
        %11375 = vmatpush1.bf16.xpose.msra.mxu0 %v7780
        %11376 = vmatprep.subr.bf16.mxu0 %v7845
        %11377 = vmatpush1.bf16.xpose.msra.mxu0 %v7844
        %11378 = vmatprep.subr.bf16.mxu0 %v7909
        %11379 = vmatpush1.bf16.xpose.msra.mxu0 %v7908
        %11380 = vmatprep.subr.bf16.mxu0 %v7973
        %11381 = vmatpush1.bf16.xpose.msra.mxu0 %v7972
        %11382 = vmatprep.subr.bf16.mxu0 %v8037
        %11383 = vmatpush1.bf16.xpose.msra.mxu0 %v8036
        %11384 = vmatprep.subr.bf16.mxu0 %v8101
        %11385 = vmatpush1.bf16.xpose.msra.mxu0 %v8100
        %11386 = vmatprep.mubr.bf16.mxu0 %v2170
        %11387 = vmatmul.mubr.bf16.gmra.mrb[0].mxu0 %v2156
        %v11388 = vpop.f32.mrb[0].mxu0
        %v11389 = vadd.f32 %v11348, %v11388
        %v11390 = vpop.f32.mrb[0].mxu0
        %v11391 = vadd.f32 %v11350, %v11390
        %v11392 = vpop.f32.mrb[0].mxu0
        %v11393 = vpop.f32.mrb[0].mxu0
        %11394 = vdwg.mxu0
        %11395 = vmatprep.subr.bf16.mxu0 %v7143
        %11396 = vmatpush1.bf16.xpose.msra.mxu0 %v7142
        %11397 = vmatprep.subr.bf16.mxu0 %v7207
        %11398 = vmatpush1.bf16.xpose.msra.mxu0 %v7206
        %11399 = vmatprep.subr.bf16.mxu0 %v7271
        %11400 = vmatpush1.bf16.xpose.msra.mxu0 %v7270
        %11401 = vmatprep.subr.bf16.mxu0 %v7335
        %11402 = vmatpush1.bf16.xpose.msra.mxu0 %v7334
        %11403 = vmatprep.subr.bf16.mxu0 %v7399
        %11404 = vmatpush1.bf16.xpose.msra.mxu0 %v7398
        %11405 = vmatprep.subr.bf16.mxu0 %v7463
        %11406 = vmatpush1.bf16.xpose.msra.mxu0 %v7462
        %11407 = vmatprep.subr.bf16.mxu0 %v7527
        %11408 = vmatpush1.bf16.xpose.msra.mxu0 %v7526
        %11409 = vmatprep.subr.bf16.mxu0 %v7591
        %11410 = vmatpush1.bf16.xpose.msra.mxu0 %v7590
        %11411 = vmatprep.subr.bf16.mxu0 %v7655
        %11412 = vmatpush1.bf16.xpose.msra.mxu0 %v7654
        %11413 = vmatprep.subr.bf16.mxu0 %v7719
        %11414 = vmatpush1.bf16.xpose.msra.mxu0 %v7718
        %11415 = vmatprep.subr.bf16.mxu0 %v7783
        %11416 = vmatpush1.bf16.xpose.msra.mxu0 %v7782
        %11417 = vmatprep.subr.bf16.mxu0 %v7847
        %11418 = vmatpush1.bf16.xpose.msra.mxu0 %v7846
        %11419 = vmatprep.subr.bf16.mxu0 %v7911
        %11420 = vmatpush1.bf16.xpose.msra.mxu0 %v7910
        %11421 = vmatprep.subr.bf16.mxu0 %v7975
        %11422 = vmatpush1.bf16.xpose.msra.mxu0 %v7974
        %11423 = vmatprep.subr.bf16.mxu0 %v8039
        %11424 = vmatpush1.bf16.xpose.msra.mxu0 %v8038
        %11425 = vmatprep.subr.bf16.mxu0 %v8103
        %11426 = vmatpush1.bf16.xpose.msra.mxu0 %v8102
        %11427 = vmatprep.mubr.bf16.mxu0 %v2174
        %11428 = vmatmul.mubr.bf16.gmra.mrb[0].mxu0 %v2172
        %v11429 = vpop.f32.mrb[0].mxu0
        %v11430 = vadd.f32 %v11389, %v11429
        %v11431 = vpop.f32.mrb[0].mxu0
        %v11432 = vadd.f32 %v11391, %v11431
        %v11433 = vpop.f32.mrb[0].mxu0
        %v11434 = vpop.f32.mrb[0].mxu0
        %11435 = vdwg.mxu0
        %11436 = vmatprep.subr.bf16.mxu0 %v7145
        %11437 = vmatpush1.bf16.xpose.msra.mxu0 %v7144
        %11438 = vmatprep.subr.bf16.mxu0 %v7209
        %11439 = vmatpush1.bf16.xpose.msra.mxu0 %v7208
        %11440 = vmatprep.subr.bf16.mxu0 %v7273
        %11441 = vmatpush1.bf16.xpose.msra.mxu0 %v7272
        %11442 = vmatprep.subr.bf16.mxu0 %v7337
        %11443 = vmatpush1.bf16.xpose.msra.mxu0 %v7336
        %11444 = vmatprep.subr.bf16.mxu0 %v7401
        %11445 = vmatpush1.bf16.xpose.msra.mxu0 %v7400
        %11446 = vmatprep.subr.bf16.mxu0 %v7465
        %11447 = vmatpush1.bf16.xpose.msra.mxu0 %v7464
        %11448 = vmatprep.subr.bf16.mxu0 %v7529
        %11449 = vmatpush1.bf16.xpose.msra.mxu0 %v7528
        %11450 = vmatprep.subr.bf16.mxu0 %v7593
        %11451 = vmatpush1.bf16.xpose.msra.mxu0 %v7592
        %11452 = vmatprep.subr.bf16.mxu0 %v7657
        %11453 = vmatpush1.bf16.xpose.msra.mxu0 %v7656
        %11454 = vmatprep.subr.bf16.mxu0 %v7721
        %11455 = vmatpush1.bf16.xpose.msra.mxu0 %v7720
        %11456 = vmatprep.subr.bf16.mxu0 %v7785
        %11457 = vmatpush1.bf16.xpose.msra.mxu0 %v7784
        %11458 = vmatprep.subr.bf16.mxu0 %v7849
        %11459 = vmatpush1.bf16.xpose.msra.mxu0 %v7848
        %11460 = vmatprep.subr.bf16.mxu0 %v7913
        %11461 = vmatpush1.bf16.xpose.msra.mxu0 %v7912
        %11462 = vmatprep.subr.bf16.mxu0 %v7977
        %11463 = vmatpush1.bf16.xpose.msra.mxu0 %v7976
        %11464 = vmatprep.subr.bf16.mxu0 %v8041
        %11465 = vmatpush1.bf16.xpose.msra.mxu0 %v8040
        %11466 = vmatprep.subr.bf16.mxu0 %v8105
        %11467 = vmatpush1.bf16.xpose.msra.mxu0 %v8104
        %11468 = vmatprep.mubr.bf16.mxu0 %v2212
        %11469 = vmatmul.mubr.bf16.gmra.mrb[0].mxu0 %v2198
        %v11470 = vpop.f32.mrb[0].mxu0
        %v11471 = vadd.f32 %v11430, %v11470
        %v11472 = vpop.f32.mrb[0].mxu0
        %v11473 = vadd.f32 %v11432, %v11472
        %v11474 = vpop.f32.mrb[0].mxu0
        %v11475 = vpop.f32.mrb[0].mxu0
        %11476 = vdwg.mxu0
        %11477 = vmatprep.subr.bf16.mxu0 %v7147
        %11478 = vmatpush1.bf16.xpose.msra.mxu0 %v7146
        %11479 = vmatprep.subr.bf16.mxu0 %v7211
        %11480 = vmatpush1.bf16.xpose.msra.mxu0 %v7210
        %11481 = vmatprep.subr.bf16.mxu0 %v7275
        %11482 = vmatpush1.bf16.xpose.msra.mxu0 %v7274
        %11483 = vmatprep.subr.bf16.mxu0 %v7339
        %11484 = vmatpush1.bf16.xpose.msra.mxu0 %v7338
        %11485 = vmatprep.subr.bf16.mxu0 %v7403
        %11486 = vmatpush1.bf16.xpose.msra.mxu0 %v7402
        %11487 = vmatprep.subr.bf16.mxu0 %v7467
        %11488 = vmatpush1.bf16.xpose.msra.mxu0 %v7466
        %11489 = vmatprep.subr.bf16.mxu0 %v7531
        %11490 = vmatpush1.bf16.xpose.msra.mxu0 %v7530
        %11491 = vmatprep.subr.bf16.mxu0 %v7595
        %11492 = vmatpush1.bf16.xpose.msra.mxu0 %v7594
        %11493 = vmatprep.subr.bf16.mxu0 %v7659
        %11494 = vmatpush1.bf16.xpose.msra.mxu0 %v7658
        %11495 = vmatprep.subr.bf16.mxu0 %v7723
        %11496 = vmatpush1.bf16.xpose.msra.mxu0 %v7722
        %11497 = vmatprep.subr.bf16.mxu0 %v7787
        %11498 = vmatpush1.bf16.xpose.msra.mxu0 %v7786
        %11499 = vmatprep.subr.bf16.mxu0 %v7851
        %11500 = vmatpush1.bf16.xpose.msra.mxu0 %v7850
        %11501 = vmatprep.subr.bf16.mxu0 %v7915
        %11502 = vmatpush1.bf16.xpose.msra.mxu0 %v7914
        %11503 = vmatprep.subr.bf16.mxu0 %v7979
        %11504 = vmatpush1.bf16.xpose.msra.mxu0 %v7978
        %11505 = vmatprep.subr.bf16.mxu0 %v8043
        %11506 = vmatpush1.bf16.xpose.msra.mxu0 %v8042
        %11507 = vmatprep.subr.bf16.mxu0 %v8107
        %11508 = vmatpush1.bf16.xpose.msra.mxu0 %v8106
        %11509 = vmatprep.mubr.bf16.mxu0 %v2222
        %11510 = vmatmul.mubr.bf16.gmra.mrb[0].mxu0 %v2220
        %v11511 = vpop.f32.mrb[0].mxu0
        %v11512 = vadd.f32 %v11471, %v11511
        %v11513 = vpop.f32.mrb[0].mxu0
        %v11514 = vadd.f32 %v11473, %v11513
        %v11515 = vpop.f32.mrb[0].mxu0
        %v11516 = vpop.f32.mrb[0].mxu0
        %11517 = vdwg.mxu0
        %11518 = vmatprep.subr.bf16.mxu0 %v7149
        %11519 = vmatpush1.bf16.xpose.msra.mxu0 %v7148
        %11520 = vmatprep.subr.bf16.mxu0 %v7213
        %11521 = vmatpush1.bf16.xpose.msra.mxu0 %v7212
        %11522 = vmatprep.subr.bf16.mxu0 %v7277
        %11523 = vmatpush1.bf16.xpose.msra.mxu0 %v7276
        %11524 = vmatprep.subr.bf16.mxu0 %v7341
        %11525 = vmatpush1.bf16.xpose.msra.mxu0 %v7340
        %11526 = vmatprep.subr.bf16.mxu0 %v7405
        %11527 = vmatpush1.bf16.xpose.msra.mxu0 %v7404
        %11528 = vmatprep.subr.bf16.mxu0 %v7469
        %11529 = vmatpush1.bf16.xpose.msra.mxu0 %v7468
        %11530 = vmatprep.subr.bf16.mxu0 %v7533
        %11531 = vmatpush1.bf16.xpose.msra.mxu0 %v7532
        %11532 = vmatprep.subr.bf16.mxu0 %v7597
        %11533 = vmatpush1.bf16.xpose.msra.mxu0 %v7596
        %11534 = vmatprep.subr.bf16.mxu0 %v7661
        %11535 = vmatpush1.bf16.xpose.msra.mxu0 %v7660
        %11536 = vmatprep.subr.bf16.mxu0 %v7725
        %11537 = vmatpush1.bf16.xpose.msra.mxu0 %v7724
        %11538 = vmatprep.subr.bf16.mxu0 %v7789
        %11539 = vmatpush1.bf16.xpose.msra.mxu0 %v7788
        %11540 = vmatprep.subr.bf16.mxu0 %v7853
        %11541 = vmatpush1.bf16.xpose.msra.mxu0 %v7852
        %11542 = vmatprep.subr.bf16.mxu0 %v7917
        %11543 = vmatpush1.bf16.xpose.msra.mxu0 %v7916
        %11544 = vmatprep.subr.bf16.mxu0 %v7981
        %11545 = vmatpush1.bf16.xpose.msra.mxu0 %v7980
        %11546 = vmatprep.subr.bf16.mxu0 %v8045
        %11547 = vmatpush1.bf16.xpose.msra.mxu0 %v8044
        %11548 = vmatprep.subr.bf16.mxu0 %v8109
        %11549 = vmatpush1.bf16.xpose.msra.mxu0 %v8108
        %11550 = vmatprep.mubr.bf16.mxu0 %v2219
        %11551 = vmatmul.mubr.bf16.gmra.mrb[0].mxu0 %v2205
        %v11552 = vpop.f32.mrb[0].mxu0
        %v11553 = vadd.f32 %v11512, %v11552
        %v11554 = vpop.f32.mrb[0].mxu0
        %v11555 = vadd.f32 %v11514, %v11554
        %v11556 = vpop.f32.mrb[0].mxu0
        %v11557 = vpop.f32.mrb[0].mxu0
        %11558 = vdwg.mxu0
        %11559 = vmatprep.subr.bf16.mxu0 %v7151
        %11560 = vmatpush1.bf16.xpose.msra.mxu0 %v7150
        %11561 = vmatprep.subr.bf16.mxu0 %v7215
        %11562 = vmatpush1.bf16.xpose.msra.mxu0 %v7214
        %11563 = vmatprep.subr.bf16.mxu0 %v7279
        %11564 = vmatpush1.bf16.xpose.msra.mxu0 %v7278
        %11565 = vmatprep.subr.bf16.mxu0 %v7343
        %11566 = vmatpush1.bf16.xpose.msra.mxu0 %v7342
        %11567 = vmatprep.subr.bf16.mxu0 %v7407
        %11568 = vmatpush1.bf16.xpose.msra.mxu0 %v7406
        %11569 = vmatprep.subr.bf16.mxu0 %v7471
        %11570 = vmatpush1.bf16.xpose.msra.mxu0 %v7470
        %11571 = vmatprep.subr.bf16.mxu0 %v7535
        %11572 = vmatpush1.bf16.xpose.msra.mxu0 %v7534
        %11573 = vmatprep.subr.bf16.mxu0 %v7599
        %11574 = vmatpush1.bf16.xpose.msra.mxu0 %v7598
        %11575 = vmatprep.subr.bf16.mxu0 %v7663
        %11576 = vmatpush1.bf16.xpose.msra.mxu0 %v7662
        %11577 = vmatprep.subr.bf16.mxu0 %v7727
        %11578 = vmatpush1.bf16.xpose.msra.mxu0 %v7726
        %11579 = vmatprep.subr.bf16.mxu0 %v7791
        %11580 = vmatpush1.bf16.xpose.msra.mxu0 %v7790
        %11581 = vmatprep.subr.bf16.mxu0 %v7855
        %11582 = vmatpush1.bf16.xpose.msra.mxu0 %v7854
        %11583 = vmatprep.subr.bf16.mxu0 %v7919
        %11584 = vmatpush1.bf16.xpose.msra.mxu0 %v7918
        %11585 = vmatprep.subr.bf16.mxu0 %v7983
        %11586 = vmatpush1.bf16.xpose.msra.mxu0 %v7982
        %11587 = vmatprep.subr.bf16.mxu0 %v8047
        %11588 = vmatpush1.bf16.xpose.msra.mxu0 %v8046
        %11589 = vmatprep.subr.bf16.mxu0 %v8111
        %11590 = vmatpush1.bf16.xpose.msra.mxu0 %v8110
        %11591 = vmatprep.mubr.bf16.mxu0 %v2223
        %11592 = vmatmul.mubr.bf16.gmra.mrb[0].mxu0 %v2221
        %v11593 = vpop.f32.mrb[0].mxu0
        %v11594 = vadd.f32 %v11553, %v11593
        %v11595 = vpop.f32.mrb[0].mxu0
        %v11596 = vadd.f32 %v11555, %v11595
        %v11597 = vpop.f32.mrb[0].mxu0
        %v11598 = vpop.f32.mrb[0].mxu0
        %11599 = vdwg.mxu0
        %11600 = vmatprep.subr.bf16.mxu0 %v8113
        %11601 = vmatpush1.bf16.xpose.msra.mxu0 %v8112
        %11602 = vmatprep.subr.bf16.mxu0 %v8177
        %11603 = vmatpush1.bf16.xpose.msra.mxu0 %v8176
        %11604 = vmatprep.subr.bf16.mxu0 %v8241
        %11605 = vmatpush1.bf16.xpose.msra.mxu0 %v8240
        %11606 = vmatprep.subr.bf16.mxu0 %v8305
        %11607 = vmatpush1.bf16.xpose.msra.mxu0 %v8304
        %11608 = vmatprep.subr.bf16.mxu0 %v8369
        %11609 = vmatpush1.bf16.xpose.msra.mxu0 %v8368
        %11610 = vmatprep.subr.bf16.mxu0 %v8433
        %11611 = vmatpush1.bf16.xpose.msra.mxu0 %v8432
        %11612 = vmatprep.subr.bf16.mxu0 %v8497
        %11613 = vmatpush1.bf16.xpose.msra.mxu0 %v8496
        %11614 = vmatprep.subr.bf16.mxu0 %v8561
        %11615 = vmatpush1.bf16.xpose.msra.mxu0 %v8560
        %11616 = vmatprep.subr.bf16.mxu0 %v8625
        %11617 = vmatpush1.bf16.xpose.msra.mxu0 %v8624
        %11618 = vmatprep.subr.bf16.mxu0 0
        %11619 = vmatpush1.bf16.xpose.msra.mxu0 0
        %11620 = vmatprep.subr.bf16.mxu0 0
        %11621 = vmatpush1.bf16.xpose.msra.mxu0 0
        %11622 = vmatprep.subr.bf16.mxu0 0
        %11623 = vmatpush1.bf16.xpose.msra.mxu0 0
        %11624 = vmatprep.subr.bf16.mxu0 0
        %11625 = vmatpush1.bf16.xpose.msra.mxu0 0
        %11626 = vmatprep.subr.bf16.mxu0 0
        %11627 = vmatpush1.bf16.xpose.msra.mxu0 0
        %11628 = vmatprep.subr.bf16.mxu0 0
        %11629 = vmatpush1.bf16.xpose.msra.mxu0 0
        %11630 = vmatprep.subr.bf16.mxu0 0
        %11631 = vmatpush1.bf16.xpose.msra.mxu0 0
        %11632 = vmatprep.mubr.bf16.mxu0 %v1869
        %11633 = vmatmul.mubr.bf16.gmra.mrb[0].mxu0 %v1855
        %v11634 = vpop.f32.mrb[0].mxu0
        %v11635 = vadd.f32 0.0, %v11634
        %v11636 = vpop.f32.mrb[0].mxu0
        %v11637 = vadd.f32 0.0, %v11636
        %v11638 = vpop.f32.mrb[0].mxu0
        %v11639 = vpop.f32.mrb[0].mxu0
        %11640 = vdwg.mxu0
        %11641 = vmatprep.subr.bf16.mxu0 %v8115
        %11642 = vmatpush1.bf16.xpose.msra.mxu0 %v8114
        %11643 = vmatprep.subr.bf16.mxu0 %v8179
        %11644 = vmatpush1.bf16.xpose.msra.mxu0 %v8178
        %11645 = vmatprep.subr.bf16.mxu0 %v8243
        %11646 = vmatpush1.bf16.xpose.msra.mxu0 %v8242
        %11647 = vmatprep.subr.bf16.mxu0 %v8307
        %11648 = vmatpush1.bf16.xpose.msra.mxu0 %v8306
        %11649 = vmatprep.subr.bf16.mxu0 %v8371
        %11650 = vmatpush1.bf16.xpose.msra.mxu0 %v8370
        %11651 = vmatprep.subr.bf16.mxu0 %v8435
        %11652 = vmatpush1.bf16.xpose.msra.mxu0 %v8434
        %11653 = vmatprep.subr.bf16.mxu0 %v8499
        %11654 = vmatpush1.bf16.xpose.msra.mxu0 %v8498
        %11655 = vmatprep.subr.bf16.mxu0 %v8563
        %11656 = vmatpush1.bf16.xpose.msra.mxu0 %v8562
        %11657 = vmatprep.subr.bf16.mxu0 %v8627
        %11658 = vmatpush1.bf16.xpose.msra.mxu0 %v8626
        %11659 = vmatprep.subr.bf16.mxu0 0
        %11660 = vmatpush1.bf16.xpose.msra.mxu0 0
        %11661 = vmatprep.subr.bf16.mxu0 0
        %11662 = vmatpush1.bf16.xpose.msra.mxu0 0
        %11663 = vmatprep.subr.bf16.mxu0 0
        %11664 = vmatpush1.bf16.xpose.msra.mxu0 0
        %11665 = vmatprep.subr.bf16.mxu0 0
        %11666 = vmatpush1.bf16.xpose.msra.mxu0 0
        %11667 = vmatprep.subr.bf16.mxu0 0
        %11668 = vmatpush1.bf16.xpose.msra.mxu0 0
        %11669 = vmatprep.subr.bf16.mxu0 0
        %11670 = vmatpush1.bf16.xpose.msra.mxu0 0
        %11671 = vmatprep.subr.bf16.mxu0 0
        %11672 = vmatpush1.bf16.xpose.msra.mxu0 0
        %11673 = vmatprep.mubr.bf16.mxu0 %v1879
        %11674 = vmatmul.mubr.bf16.gmra.mrb[0].mxu0 %v1877
        %v11675 = vpop.f32.mrb[0].mxu0
        %v11676 = vadd.f32 %v11635, %v11675
        %v11677 = vpop.f32.mrb[0].mxu0
        %v11678 = vadd.f32 %v11637, %v11677
        %v11679 = vpop.f32.mrb[0].mxu0
        %v11680 = vpop.f32.mrb[0].mxu0
        %11681 = vdwg.mxu0
        %11682 = vmatprep.subr.bf16.mxu0 %v8117
        %11683 = vmatpush1.bf16.xpose.msra.mxu0 %v8116
        %11684 = vmatprep.subr.bf16.mxu0 %v8181
        %11685 = vmatpush1.bf16.xpose.msra.mxu0 %v8180
        %11686 = vmatprep.subr.bf16.mxu0 %v8245
        %11687 = vmatpush1.bf16.xpose.msra.mxu0 %v8244
        %11688 = vmatprep.subr.bf16.mxu0 %v8309
        %11689 = vmatpush1.bf16.xpose.msra.mxu0 %v8308
        %11690 = vmatprep.subr.bf16.mxu0 %v8373
        %11691 = vmatpush1.bf16.xpose.msra.mxu0 %v8372
        %11692 = vmatprep.subr.bf16.mxu0 %v8437
        %11693 = vmatpush1.bf16.xpose.msra.mxu0 %v8436
        %11694 = vmatprep.subr.bf16.mxu0 %v8501
        %11695 = vmatpush1.bf16.xpose.msra.mxu0 %v8500
        %11696 = vmatprep.subr.bf16.mxu0 %v8565
        %11697 = vmatpush1.bf16.xpose.msra.mxu0 %v8564
        %11698 = vmatprep.subr.bf16.mxu0 %v8629
        %11699 = vmatpush1.bf16.xpose.msra.mxu0 %v8628
        %11700 = vmatprep.subr.bf16.mxu0 0
        %11701 = vmatpush1.bf16.xpose.msra.mxu0 0
        %11702 = vmatprep.subr.bf16.mxu0 0
        %11703 = vmatpush1.bf16.xpose.msra.mxu0 0
        %11704 = vmatprep.subr.bf16.mxu0 0
        %11705 = vmatpush1.bf16.xpose.msra.mxu0 0
        %11706 = vmatprep.subr.bf16.mxu0 0
        %11707 = vmatpush1.bf16.xpose.msra.mxu0 0
        %11708 = vmatprep.subr.bf16.mxu0 0
        %11709 = vmatpush1.bf16.xpose.msra.mxu0 0
        %11710 = vmatprep.subr.bf16.mxu0 0
        %11711 = vmatpush1.bf16.xpose.msra.mxu0 0
        %11712 = vmatprep.subr.bf16.mxu0 0
        %11713 = vmatpush1.bf16.xpose.msra.mxu0 0
        %11714 = vmatprep.mubr.bf16.mxu0 %v1876
        %11715 = vmatmul.mubr.bf16.gmra.mrb[0].mxu0 %v1862
        %v11716 = vpop.f32.mrb[0].mxu0
        %v11717 = vadd.f32 %v11676, %v11716
        %v11718 = vpop.f32.mrb[0].mxu0
        %v11719 = vadd.f32 %v11678, %v11718
        %v11720 = vpop.f32.mrb[0].mxu0
        %v11721 = vpop.f32.mrb[0].mxu0
        %11722 = vdwg.mxu0
        %11723 = vmatprep.subr.bf16.mxu0 %v8119
        %11724 = vmatpush1.bf16.xpose.msra.mxu0 %v8118
        %11725 = vmatprep.subr.bf16.mxu0 %v8183
        %11726 = vmatpush1.bf16.xpose.msra.mxu0 %v8182
        %11727 = vmatprep.subr.bf16.mxu0 %v8247
        %11728 = vmatpush1.bf16.xpose.msra.mxu0 %v8246
        %11729 = vmatprep.subr.bf16.mxu0 %v8311
        %11730 = vmatpush1.bf16.xpose.msra.mxu0 %v8310
        %11731 = vmatprep.subr.bf16.mxu0 %v8375
        %11732 = vmatpush1.bf16.xpose.msra.mxu0 %v8374
        %11733 = vmatprep.subr.bf16.mxu0 %v8439
        %11734 = vmatpush1.bf16.xpose.msra.mxu0 %v8438
        %11735 = vmatprep.subr.bf16.mxu0 %v8503
        %11736 = vmatpush1.bf16.xpose.msra.mxu0 %v8502
        %11737 = vmatprep.subr.bf16.mxu0 %v8567
        %11738 = vmatpush1.bf16.xpose.msra.mxu0 %v8566
        %11739 = vmatprep.subr.bf16.mxu0 %v8631
        %11740 = vmatpush1.bf16.xpose.msra.mxu0 %v8630
        %11741 = vmatprep.subr.bf16.mxu0 0
        %11742 = vmatpush1.bf16.xpose.msra.mxu0 0
        %11743 = vmatprep.subr.bf16.mxu0 0
        %11744 = vmatpush1.bf16.xpose.msra.mxu0 0
        %11745 = vmatprep.subr.bf16.mxu0 0
        %11746 = vmatpush1.bf16.xpose.msra.mxu0 0
        %11747 = vmatprep.subr.bf16.mxu0 0
        %11748 = vmatpush1.bf16.xpose.msra.mxu0 0
        %11749 = vmatprep.subr.bf16.mxu0 0
        %11750 = vmatpush1.bf16.xpose.msra.mxu0 0
        %11751 = vmatprep.subr.bf16.mxu0 0
        %11752 = vmatpush1.bf16.xpose.msra.mxu0 0
        %11753 = vmatprep.subr.bf16.mxu0 0
        %11754 = vmatpush1.bf16.xpose.msra.mxu0 0
        %11755 = vmatprep.mubr.bf16.mxu0 %v1880
        %11756 = vmatmul.mubr.bf16.gmra.mrb[0].mxu0 %v1878
        %v11757 = vpop.f32.mrb[0].mxu0
        %v11758 = vadd.f32 %v11717, %v11757
        %v11759 = vpop.f32.mrb[0].mxu0
        %v11760 = vadd.f32 %v11719, %v11759
        %v11761 = vpop.f32.mrb[0].mxu0
        %v11762 = vpop.f32.mrb[0].mxu0
        %11763 = vdwg.mxu0
        %11764 = vmatprep.subr.bf16.mxu0 %v8121
        %11765 = vmatpush1.bf16.xpose.msra.mxu0 %v8120
        %11766 = vmatprep.subr.bf16.mxu0 %v8185
        %11767 = vmatpush1.bf16.xpose.msra.mxu0 %v8184
        %11768 = vmatprep.subr.bf16.mxu0 %v8249
        %11769 = vmatpush1.bf16.xpose.msra.mxu0 %v8248
        %11770 = vmatprep.subr.bf16.mxu0 %v8313
        %11771 = vmatpush1.bf16.xpose.msra.mxu0 %v8312
        %11772 = vmatprep.subr.bf16.mxu0 %v8377
        %11773 = vmatpush1.bf16.xpose.msra.mxu0 %v8376
        %11774 = vmatprep.subr.bf16.mxu0 %v8441
        %11775 = vmatpush1.bf16.xpose.msra.mxu0 %v8440
        %11776 = vmatprep.subr.bf16.mxu0 %v8505
        %11777 = vmatpush1.bf16.xpose.msra.mxu0 %v8504
        %11778 = vmatprep.subr.bf16.mxu0 %v8569
        %11779 = vmatpush1.bf16.xpose.msra.mxu0 %v8568
        %11780 = vmatprep.subr.bf16.mxu0 %v8633
        %11781 = vmatpush1.bf16.xpose.msra.mxu0 %v8632
        %11782 = vmatprep.subr.bf16.mxu0 0
        %11783 = vmatpush1.bf16.xpose.msra.mxu0 0
        %11784 = vmatprep.subr.bf16.mxu0 0
        %11785 = vmatpush1.bf16.xpose.msra.mxu0 0
        %11786 = vmatprep.subr.bf16.mxu0 0
        %11787 = vmatpush1.bf16.xpose.msra.mxu0 0
        %11788 = vmatprep.subr.bf16.mxu0 0
        %11789 = vmatpush1.bf16.xpose.msra.mxu0 0
        %11790 = vmatprep.subr.bf16.mxu0 0
        %11791 = vmatpush1.bf16.xpose.msra.mxu0 0
        %11792 = vmatprep.subr.bf16.mxu0 0
        %11793 = vmatpush1.bf16.xpose.msra.mxu0 0
        %11794 = vmatprep.subr.bf16.mxu0 0
        %11795 = vmatpush1.bf16.xpose.msra.mxu0 0
        %11796 = vmatprep.mubr.bf16.mxu0 %v1918
        %11797 = vmatmul.mubr.bf16.gmra.mrb[0].mxu0 %v1904
        %v11798 = vpop.f32.mrb[0].mxu0
        %v11799 = vadd.f32 %v11758, %v11798
        %v11800 = vpop.f32.mrb[0].mxu0
        %v11801 = vadd.f32 %v11760, %v11800
        %v11802 = vpop.f32.mrb[0].mxu0
        %v11803 = vpop.f32.mrb[0].mxu0
        %11804 = vdwg.mxu0
        %11805 = vmatprep.subr.bf16.mxu0 %v8123
        %11806 = vmatpush1.bf16.xpose.msra.mxu0 %v8122
        %11807 = vmatprep.subr.bf16.mxu0 %v8187
        %11808 = vmatpush1.bf16.xpose.msra.mxu0 %v8186
        %11809 = vmatprep.subr.bf16.mxu0 %v8251
        %11810 = vmatpush1.bf16.xpose.msra.mxu0 %v8250
        %11811 = vmatprep.subr.bf16.mxu0 %v8315
        %11812 = vmatpush1.bf16.xpose.msra.mxu0 %v8314
        %11813 = vmatprep.subr.bf16.mxu0 %v8379
        %11814 = vmatpush1.bf16.xpose.msra.mxu0 %v8378
        %11815 = vmatprep.subr.bf16.mxu0 %v8443
        %11816 = vmatpush1.bf16.xpose.msra.mxu0 %v8442
        %11817 = vmatprep.subr.bf16.mxu0 %v8507
        %11818 = vmatpush1.bf16.xpose.msra.mxu0 %v8506
        %11819 = vmatprep.subr.bf16.mxu0 %v8571
        %11820 = vmatpush1.bf16.xpose.msra.mxu0 %v8570
        %11821 = vmatprep.subr.bf16.mxu0 %v8635
        %11822 = vmatpush1.bf16.xpose.msra.mxu0 %v8634
        %11823 = vmatprep.subr.bf16.mxu0 0
        %11824 = vmatpush1.bf16.xpose.msra.mxu0 0
        %11825 = vmatprep.subr.bf16.mxu0 0
        %11826 = vmatpush1.bf16.xpose.msra.mxu0 0
        %11827 = vmatprep.subr.bf16.mxu0 0
        %11828 = vmatpush1.bf16.xpose.msra.mxu0 0
        %11829 = vmatprep.subr.bf16.mxu0 0
        %11830 = vmatpush1.bf16.xpose.msra.mxu0 0
        %11831 = vmatprep.subr.bf16.mxu0 0
        %11832 = vmatpush1.bf16.xpose.msra.mxu0 0
        %11833 = vmatprep.subr.bf16.mxu0 0
        %11834 = vmatpush1.bf16.xpose.msra.mxu0 0
        %11835 = vmatprep.subr.bf16.mxu0 0
        %11836 = vmatpush1.bf16.xpose.msra.mxu0 0
        %11837 = vmatprep.mubr.bf16.mxu0 %v1928
        %11838 = vmatmul.mubr.bf16.gmra.mrb[0].mxu0 %v1926
        %v11839 = vpop.f32.mrb[0].mxu0
        %v11840 = vadd.f32 %v11799, %v11839
        %v11841 = vpop.f32.mrb[0].mxu0
        %v11842 = vadd.f32 %v11801, %v11841
        %v11843 = vpop.f32.mrb[0].mxu0
        %v11844 = vpop.f32.mrb[0].mxu0
        %11845 = vdwg.mxu0
        %11846 = vmatprep.subr.bf16.mxu0 %v8125
        %11847 = vmatpush1.bf16.xpose.msra.mxu0 %v8124
        %11848 = vmatprep.subr.bf16.mxu0 %v8189
        %11849 = vmatpush1.bf16.xpose.msra.mxu0 %v8188
        %11850 = vmatprep.subr.bf16.mxu0 %v8253
        %11851 = vmatpush1.bf16.xpose.msra.mxu0 %v8252
        %11852 = vmatprep.subr.bf16.mxu0 %v8317
        %11853 = vmatpush1.bf16.xpose.msra.mxu0 %v8316
        %11854 = vmatprep.subr.bf16.mxu0 %v8381
        %11855 = vmatpush1.bf16.xpose.msra.mxu0 %v8380
        %11856 = vmatprep.subr.bf16.mxu0 %v8445
        %11857 = vmatpush1.bf16.xpose.msra.mxu0 %v8444
        %11858 = vmatprep.subr.bf16.mxu0 %v8509
        %11859 = vmatpush1.bf16.xpose.msra.mxu0 %v8508
        %11860 = vmatprep.subr.bf16.mxu0 %v8573
        %11861 = vmatpush1.bf16.xpose.msra.mxu0 %v8572
        %11862 = vmatprep.subr.bf16.mxu0 %v8637
        %11863 = vmatpush1.bf16.xpose.msra.mxu0 %v8636
        %11864 = vmatprep.subr.bf16.mxu0 0
        %11865 = vmatpush1.bf16.xpose.msra.mxu0 0
        %11866 = vmatprep.subr.bf16.mxu0 0
        %11867 = vmatpush1.bf16.xpose.msra.mxu0 0
        %11868 = vmatprep.subr.bf16.mxu0 0
        %11869 = vmatpush1.bf16.xpose.msra.mxu0 0
        %11870 = vmatprep.subr.bf16.mxu0 0
        %11871 = vmatpush1.bf16.xpose.msra.mxu0 0
        %11872 = vmatprep.subr.bf16.mxu0 0
        %11873 = vmatpush1.bf16.xpose.msra.mxu0 0
        %11874 = vmatprep.subr.bf16.mxu0 0
        %11875 = vmatpush1.bf16.xpose.msra.mxu0 0
        %11876 = vmatprep.subr.bf16.mxu0 0
        %11877 = vmatpush1.bf16.xpose.msra.mxu0 0
        %11878 = vmatprep.mubr.bf16.mxu0 %v1925
        %11879 = vmatmul.mubr.bf16.gmra.mrb[0].mxu0 %v1911
        %v11880 = vpop.f32.mrb[0].mxu0
        %v11881 = vadd.f32 %v11840, %v11880
        %v11882 = vpop.f32.mrb[0].mxu0
        %v11883 = vadd.f32 %v11842, %v11882
        %v11884 = vpop.f32.mrb[0].mxu0
        %v11885 = vpop.f32.mrb[0].mxu0
        %11886 = vdwg.mxu0
        %11887 = vmatprep.subr.bf16.mxu0 %v8127
        %11888 = vmatpush1.bf16.xpose.msra.mxu0 %v8126
        %11889 = vmatprep.subr.bf16.mxu0 %v8191
        %11890 = vmatpush1.bf16.xpose.msra.mxu0 %v8190
        %11891 = vmatprep.subr.bf16.mxu0 %v8255
        %11892 = vmatpush1.bf16.xpose.msra.mxu0 %v8254
        %11893 = vmatprep.subr.bf16.mxu0 %v8319
        %11894 = vmatpush1.bf16.xpose.msra.mxu0 %v8318
        %11895 = vmatprep.subr.bf16.mxu0 %v8383
        %11896 = vmatpush1.bf16.xpose.msra.mxu0 %v8382
        %11897 = vmatprep.subr.bf16.mxu0 %v8447
        %11898 = vmatpush1.bf16.xpose.msra.mxu0 %v8446
        %11899 = vmatprep.subr.bf16.mxu0 %v8511
        %11900 = vmatpush1.bf16.xpose.msra.mxu0 %v8510
        %11901 = vmatprep.subr.bf16.mxu0 %v8575
        %11902 = vmatpush1.bf16.xpose.msra.mxu0 %v8574
        %11903 = vmatprep.subr.bf16.mxu0 %v8639
        %11904 = vmatpush1.bf16.xpose.msra.mxu0 %v8638
        %11905 = vmatprep.subr.bf16.mxu0 0
        %11906 = vmatpush1.bf16.xpose.msra.mxu0 0
        %11907 = vmatprep.subr.bf16.mxu0 0
        %11908 = vmatpush1.bf16.xpose.msra.mxu0 0
        %11909 = vmatprep.subr.bf16.mxu0 0
        %11910 = vmatpush1.bf16.xpose.msra.mxu0 0
        %11911 = vmatprep.subr.bf16.mxu0 0
        %11912 = vmatpush1.bf16.xpose.msra.mxu0 0
        %11913 = vmatprep.subr.bf16.mxu0 0
        %11914 = vmatpush1.bf16.xpose.msra.mxu0 0
        %11915 = vmatprep.subr.bf16.mxu0 0
        %11916 = vmatpush1.bf16.xpose.msra.mxu0 0
        %11917 = vmatprep.subr.bf16.mxu0 0
        %11918 = vmatpush1.bf16.xpose.msra.mxu0 0
        %11919 = vmatprep.mubr.bf16.mxu0 %v1929
        %11920 = vmatmul.mubr.bf16.gmra.mrb[0].mxu0 %v1927
        %v11921 = vpop.f32.mrb[0].mxu0
        %v11922 = vadd.f32 %v11881, %v11921
        %v11923 = vpop.f32.mrb[0].mxu0
        %v11924 = vadd.f32 %v11883, %v11923
        %v11925 = vpop.f32.mrb[0].mxu0
        %v11926 = vpop.f32.mrb[0].mxu0
        %11927 = vdwg.mxu0
        %11928 = vmatprep.subr.bf16.mxu0 %v8129
        %11929 = vmatpush1.bf16.xpose.msra.mxu0 %v8128
        %11930 = vmatprep.subr.bf16.mxu0 %v8193
        %11931 = vmatpush1.bf16.xpose.msra.mxu0 %v8192
        %11932 = vmatprep.subr.bf16.mxu0 %v8257
        %11933 = vmatpush1.bf16.xpose.msra.mxu0 %v8256
        %11934 = vmatprep.subr.bf16.mxu0 %v8321
        %11935 = vmatpush1.bf16.xpose.msra.mxu0 %v8320
        %11936 = vmatprep.subr.bf16.mxu0 %v8385
        %11937 = vmatpush1.bf16.xpose.msra.mxu0 %v8384
        %11938 = vmatprep.subr.bf16.mxu0 %v8449
        %11939 = vmatpush1.bf16.xpose.msra.mxu0 %v8448
        %11940 = vmatprep.subr.bf16.mxu0 %v8513
        %11941 = vmatpush1.bf16.xpose.msra.mxu0 %v8512
        %11942 = vmatprep.subr.bf16.mxu0 %v8577
        %11943 = vmatpush1.bf16.xpose.msra.mxu0 %v8576
        %11944 = vmatprep.subr.bf16.mxu0 %v8641
        %11945 = vmatpush1.bf16.xpose.msra.mxu0 %v8640
        %11946 = vmatprep.subr.bf16.mxu0 0
        %11947 = vmatpush1.bf16.xpose.msra.mxu0 0
        %11948 = vmatprep.subr.bf16.mxu0 0
        %11949 = vmatpush1.bf16.xpose.msra.mxu0 0
        %11950 = vmatprep.subr.bf16.mxu0 0
        %11951 = vmatpush1.bf16.xpose.msra.mxu0 0
        %11952 = vmatprep.subr.bf16.mxu0 0
        %11953 = vmatpush1.bf16.xpose.msra.mxu0 0
        %11954 = vmatprep.subr.bf16.mxu0 0
        %11955 = vmatpush1.bf16.xpose.msra.mxu0 0
        %11956 = vmatprep.subr.bf16.mxu0 0
        %11957 = vmatpush1.bf16.xpose.msra.mxu0 0
        %11958 = vmatprep.subr.bf16.mxu0 0
        %11959 = vmatpush1.bf16.xpose.msra.mxu0 0
        %11960 = vmatprep.mubr.bf16.mxu0 %v1967
        %11961 = vmatmul.mubr.bf16.gmra.mrb[0].mxu0 %v1953
        %v11962 = vpop.f32.mrb[0].mxu0
        %v11963 = vadd.f32 %v11922, %v11962
        %v11964 = vpop.f32.mrb[0].mxu0
        %v11965 = vadd.f32 %v11924, %v11964
        %v11966 = vpop.f32.mrb[0].mxu0
        %v11967 = vpop.f32.mrb[0].mxu0
        %11968 = vdwg.mxu0
        %11969 = vmatprep.subr.bf16.mxu0 %v8131
        %11970 = vmatpush1.bf16.xpose.msra.mxu0 %v8130
        %11971 = vmatprep.subr.bf16.mxu0 %v8195
        %11972 = vmatpush1.bf16.xpose.msra.mxu0 %v8194
        %11973 = vmatprep.subr.bf16.mxu0 %v8259
        %11974 = vmatpush1.bf16.xpose.msra.mxu0 %v8258
        %11975 = vmatprep.subr.bf16.mxu0 %v8323
        %11976 = vmatpush1.bf16.xpose.msra.mxu0 %v8322
        %11977 = vmatprep.subr.bf16.mxu0 %v8387
        %11978 = vmatpush1.bf16.xpose.msra.mxu0 %v8386
        %11979 = vmatprep.subr.bf16.mxu0 %v8451
        %11980 = vmatpush1.bf16.xpose.msra.mxu0 %v8450
        %11981 = vmatprep.subr.bf16.mxu0 %v8515
        %11982 = vmatpush1.bf16.xpose.msra.mxu0 %v8514
        %11983 = vmatprep.subr.bf16.mxu0 %v8579
        %11984 = vmatpush1.bf16.xpose.msra.mxu0 %v8578
        %11985 = vmatprep.subr.bf16.mxu0 %v8643
        %11986 = vmatpush1.bf16.xpose.msra.mxu0 %v8642
        %11987 = vmatprep.subr.bf16.mxu0 0
        %11988 = vmatpush1.bf16.xpose.msra.mxu0 0
        %11989 = vmatprep.subr.bf16.mxu0 0
        %11990 = vmatpush1.bf16.xpose.msra.mxu0 0
        %11991 = vmatprep.subr.bf16.mxu0 0
        %11992 = vmatpush1.bf16.xpose.msra.mxu0 0
        %11993 = vmatprep.subr.bf16.mxu0 0
        %11994 = vmatpush1.bf16.xpose.msra.mxu0 0
        %11995 = vmatprep.subr.bf16.mxu0 0
        %11996 = vmatpush1.bf16.xpose.msra.mxu0 0
        %11997 = vmatprep.subr.bf16.mxu0 0
        %11998 = vmatpush1.bf16.xpose.msra.mxu0 0
        %11999 = vmatprep.subr.bf16.mxu0 0
        %12000 = vmatpush1.bf16.xpose.msra.mxu0 0
        %12001 = vmatprep.mubr.bf16.mxu0 %v1977
        %12002 = vmatmul.mubr.bf16.gmra.mrb[0].mxu0 %v1975
        %v12003 = vpop.f32.mrb[0].mxu0
        %v12004 = vadd.f32 %v11963, %v12003
        %v12005 = vpop.f32.mrb[0].mxu0
        %v12006 = vadd.f32 %v11965, %v12005
        %v12007 = vpop.f32.mrb[0].mxu0
        %v12008 = vpop.f32.mrb[0].mxu0
        %12009 = vdwg.mxu0
        %12010 = vmatprep.subr.bf16.mxu0 %v8133
        %12011 = vmatpush1.bf16.xpose.msra.mxu0 %v8132
        %12012 = vmatprep.subr.bf16.mxu0 %v8197
        %12013 = vmatpush1.bf16.xpose.msra.mxu0 %v8196
        %12014 = vmatprep.subr.bf16.mxu0 %v8261
        %12015 = vmatpush1.bf16.xpose.msra.mxu0 %v8260
        %12016 = vmatprep.subr.bf16.mxu0 %v8325
        %12017 = vmatpush1.bf16.xpose.msra.mxu0 %v8324
        %12018 = vmatprep.subr.bf16.mxu0 %v8389
        %12019 = vmatpush1.bf16.xpose.msra.mxu0 %v8388
        %12020 = vmatprep.subr.bf16.mxu0 %v8453
        %12021 = vmatpush1.bf16.xpose.msra.mxu0 %v8452
        %12022 = vmatprep.subr.bf16.mxu0 %v8517
        %12023 = vmatpush1.bf16.xpose.msra.mxu0 %v8516
        %12024 = vmatprep.subr.bf16.mxu0 %v8581
        %12025 = vmatpush1.bf16.xpose.msra.mxu0 %v8580
        %12026 = vmatprep.subr.bf16.mxu0 %v8645
        %12027 = vmatpush1.bf16.xpose.msra.mxu0 %v8644
        %12028 = vmatprep.subr.bf16.mxu0 0
        %12029 = vmatpush1.bf16.xpose.msra.mxu0 0
        %12030 = vmatprep.subr.bf16.mxu0 0
        %12031 = vmatpush1.bf16.xpose.msra.mxu0 0
        %12032 = vmatprep.subr.bf16.mxu0 0
        %12033 = vmatpush1.bf16.xpose.msra.mxu0 0
        %12034 = vmatprep.subr.bf16.mxu0 0
        %12035 = vmatpush1.bf16.xpose.msra.mxu0 0
        %12036 = vmatprep.subr.bf16.mxu0 0
        %12037 = vmatpush1.bf16.xpose.msra.mxu0 0
        %12038 = vmatprep.subr.bf16.mxu0 0
        %12039 = vmatpush1.bf16.xpose.msra.mxu0 0
        %12040 = vmatprep.subr.bf16.mxu0 0
        %12041 = vmatpush1.bf16.xpose.msra.mxu0 0
        %12042 = vmatprep.mubr.bf16.mxu0 %v1974
        %12043 = vmatmul.mubr.bf16.gmra.mrb[0].mxu0 %v1960
        %v12044 = vpop.f32.mrb[0].mxu0
        %v12045 = vadd.f32 %v12004, %v12044
        %v12046 = vpop.f32.mrb[0].mxu0
        %v12047 = vadd.f32 %v12006, %v12046
        %v12048 = vpop.f32.mrb[0].mxu0
        %v12049 = vpop.f32.mrb[0].mxu0
        %12050 = vdwg.mxu0
        %12051 = vmatprep.subr.bf16.mxu0 %v8135
        %12052 = vmatpush1.bf16.xpose.msra.mxu0 %v8134
        %12053 = vmatprep.subr.bf16.mxu0 %v8199
        %12054 = vmatpush1.bf16.xpose.msra.mxu0 %v8198
        %12055 = vmatprep.subr.bf16.mxu0 %v8263
        %12056 = vmatpush1.bf16.xpose.msra.mxu0 %v8262
        %12057 = vmatprep.subr.bf16.mxu0 %v8327
        %12058 = vmatpush1.bf16.xpose.msra.mxu0 %v8326
        %12059 = vmatprep.subr.bf16.mxu0 %v8391
        %12060 = vmatpush1.bf16.xpose.msra.mxu0 %v8390
        %12061 = vmatprep.subr.bf16.mxu0 %v8455
        %12062 = vmatpush1.bf16.xpose.msra.mxu0 %v8454
        %12063 = vmatprep.subr.bf16.mxu0 %v8519
        %12064 = vmatpush1.bf16.xpose.msra.mxu0 %v8518
        %12065 = vmatprep.subr.bf16.mxu0 %v8583
        %12066 = vmatpush1.bf16.xpose.msra.mxu0 %v8582
        %12067 = vmatprep.subr.bf16.mxu0 %v8647
        %12068 = vmatpush1.bf16.xpose.msra.mxu0 %v8646
        %12069 = vmatprep.subr.bf16.mxu0 0
        %12070 = vmatpush1.bf16.xpose.msra.mxu0 0
        %12071 = vmatprep.subr.bf16.mxu0 0
        %12072 = vmatpush1.bf16.xpose.msra.mxu0 0
        %12073 = vmatprep.subr.bf16.mxu0 0
        %12074 = vmatpush1.bf16.xpose.msra.mxu0 0
        %12075 = vmatprep.subr.bf16.mxu0 0
        %12076 = vmatpush1.bf16.xpose.msra.mxu0 0
        %12077 = vmatprep.subr.bf16.mxu0 0
        %12078 = vmatpush1.bf16.xpose.msra.mxu0 0
        %12079 = vmatprep.subr.bf16.mxu0 0
        %12080 = vmatpush1.bf16.xpose.msra.mxu0 0
        %12081 = vmatprep.subr.bf16.mxu0 0
        %12082 = vmatpush1.bf16.xpose.msra.mxu0 0
        %12083 = vmatprep.mubr.bf16.mxu0 %v1978
        %12084 = vmatmul.mubr.bf16.gmra.mrb[0].mxu0 %v1976
        %v12085 = vpop.f32.mrb[0].mxu0
        %v12086 = vadd.f32 %v12045, %v12085
        %v12087 = vpop.f32.mrb[0].mxu0
        %v12088 = vadd.f32 %v12047, %v12087
        %v12089 = vpop.f32.mrb[0].mxu0
        %v12090 = vpop.f32.mrb[0].mxu0
        %12091 = vdwg.mxu0
        %12092 = vmatprep.subr.bf16.mxu0 %v8137
        %12093 = vmatpush1.bf16.xpose.msra.mxu0 %v8136
        %12094 = vmatprep.subr.bf16.mxu0 %v8201
        %12095 = vmatpush1.bf16.xpose.msra.mxu0 %v8200
        %12096 = vmatprep.subr.bf16.mxu0 %v8265
        %12097 = vmatpush1.bf16.xpose.msra.mxu0 %v8264
        %12098 = vmatprep.subr.bf16.mxu0 %v8329
        %12099 = vmatpush1.bf16.xpose.msra.mxu0 %v8328
        %12100 = vmatprep.subr.bf16.mxu0 %v8393
        %12101 = vmatpush1.bf16.xpose.msra.mxu0 %v8392
        %12102 = vmatprep.subr.bf16.mxu0 %v8457
        %12103 = vmatpush1.bf16.xpose.msra.mxu0 %v8456
        %12104 = vmatprep.subr.bf16.mxu0 %v8521
        %12105 = vmatpush1.bf16.xpose.msra.mxu0 %v8520
        %12106 = vmatprep.subr.bf16.mxu0 %v8585
        %12107 = vmatpush1.bf16.xpose.msra.mxu0 %v8584
        %12108 = vmatprep.subr.bf16.mxu0 %v8649
        %12109 = vmatpush1.bf16.xpose.msra.mxu0 %v8648
        %12110 = vmatprep.subr.bf16.mxu0 0
        %12111 = vmatpush1.bf16.xpose.msra.mxu0 0
        %12112 = vmatprep.subr.bf16.mxu0 0
        %12113 = vmatpush1.bf16.xpose.msra.mxu0 0
        %12114 = vmatprep.subr.bf16.mxu0 0
        %12115 = vmatpush1.bf16.xpose.msra.mxu0 0
        %12116 = vmatprep.subr.bf16.mxu0 0
        %12117 = vmatpush1.bf16.xpose.msra.mxu0 0
        %12118 = vmatprep.subr.bf16.mxu0 0
        %12119 = vmatpush1.bf16.xpose.msra.mxu0 0
        %12120 = vmatprep.subr.bf16.mxu0 0
        %12121 = vmatpush1.bf16.xpose.msra.mxu0 0
        %12122 = vmatprep.subr.bf16.mxu0 0
        %12123 = vmatpush1.bf16.xpose.msra.mxu0 0
        %12124 = vmatprep.mubr.bf16.mxu0 %v2016
        %12125 = vmatmul.mubr.bf16.gmra.mrb[0].mxu0 %v2002
        %v12126 = vpop.f32.mrb[0].mxu0
        %v12127 = vadd.f32 %v12086, %v12126
        %v12128 = vpop.f32.mrb[0].mxu0
        %v12129 = vadd.f32 %v12088, %v12128
        %v12130 = vpop.f32.mrb[0].mxu0
        %v12131 = vpop.f32.mrb[0].mxu0
        %12132 = vdwg.mxu0
        %12133 = vmatprep.subr.bf16.mxu0 %v8139
        %12134 = vmatpush1.bf16.xpose.msra.mxu0 %v8138
        %12135 = vmatprep.subr.bf16.mxu0 %v8203
        %12136 = vmatpush1.bf16.xpose.msra.mxu0 %v8202
        %12137 = vmatprep.subr.bf16.mxu0 %v8267
        %12138 = vmatpush1.bf16.xpose.msra.mxu0 %v8266
        %12139 = vmatprep.subr.bf16.mxu0 %v8331
        %12140 = vmatpush1.bf16.xpose.msra.mxu0 %v8330
        %12141 = vmatprep.subr.bf16.mxu0 %v8395
        %12142 = vmatpush1.bf16.xpose.msra.mxu0 %v8394
        %12143 = vmatprep.subr.bf16.mxu0 %v8459
        %12144 = vmatpush1.bf16.xpose.msra.mxu0 %v8458
        %12145 = vmatprep.subr.bf16.mxu0 %v8523
        %12146 = vmatpush1.bf16.xpose.msra.mxu0 %v8522
        %12147 = vmatprep.subr.bf16.mxu0 %v8587
        %12148 = vmatpush1.bf16.xpose.msra.mxu0 %v8586
        %12149 = vmatprep.subr.bf16.mxu0 %v8651
        %12150 = vmatpush1.bf16.xpose.msra.mxu0 %v8650
        %12151 = vmatprep.subr.bf16.mxu0 0
        %12152 = vmatpush1.bf16.xpose.msra.mxu0 0
        %12153 = vmatprep.subr.bf16.mxu0 0
        %12154 = vmatpush1.bf16.xpose.msra.mxu0 0
        %12155 = vmatprep.subr.bf16.mxu0 0
        %12156 = vmatpush1.bf16.xpose.msra.mxu0 0
        %12157 = vmatprep.subr.bf16.mxu0 0
        %12158 = vmatpush1.bf16.xpose.msra.mxu0 0
        %12159 = vmatprep.subr.bf16.mxu0 0
        %12160 = vmatpush1.bf16.xpose.msra.mxu0 0
        %12161 = vmatprep.subr.bf16.mxu0 0
        %12162 = vmatpush1.bf16.xpose.msra.mxu0 0
        %12163 = vmatprep.subr.bf16.mxu0 0
        %12164 = vmatpush1.bf16.xpose.msra.mxu0 0
        %12165 = vmatprep.mubr.bf16.mxu0 %v2026
        %12166 = vmatmul.mubr.bf16.gmra.mrb[0].mxu0 %v2024
        %v12167 = vpop.f32.mrb[0].mxu0
        %v12168 = vadd.f32 %v12127, %v12167
        %v12169 = vpop.f32.mrb[0].mxu0
        %v12170 = vadd.f32 %v12129, %v12169
        %v12171 = vpop.f32.mrb[0].mxu0
        %v12172 = vpop.f32.mrb[0].mxu0
        %12173 = vdwg.mxu0
        %12174 = vmatprep.subr.bf16.mxu0 %v8141
        %12175 = vmatpush1.bf16.xpose.msra.mxu0 %v8140
        %12176 = vmatprep.subr.bf16.mxu0 %v8205
        %12177 = vmatpush1.bf16.xpose.msra.mxu0 %v8204
        %12178 = vmatprep.subr.bf16.mxu0 %v8269
        %12179 = vmatpush1.bf16.xpose.msra.mxu0 %v8268
        %12180 = vmatprep.subr.bf16.mxu0 %v8333
        %12181 = vmatpush1.bf16.xpose.msra.mxu0 %v8332
        %12182 = vmatprep.subr.bf16.mxu0 %v8397
        %12183 = vmatpush1.bf16.xpose.msra.mxu0 %v8396
        %12184 = vmatprep.subr.bf16.mxu0 %v8461
        %12185 = vmatpush1.bf16.xpose.msra.mxu0 %v8460
        %12186 = vmatprep.subr.bf16.mxu0 %v8525
        %12187 = vmatpush1.bf16.xpose.msra.mxu0 %v8524
        %12188 = vmatprep.subr.bf16.mxu0 %v8589
        %12189 = vmatpush1.bf16.xpose.msra.mxu0 %v8588
        %12190 = vmatprep.subr.bf16.mxu0 %v8653
        %12191 = vmatpush1.bf16.xpose.msra.mxu0 %v8652
        %12192 = vmatprep.subr.bf16.mxu0 0
        %12193 = vmatpush1.bf16.xpose.msra.mxu0 0
        %12194 = vmatprep.subr.bf16.mxu0 0
        %12195 = vmatpush1.bf16.xpose.msra.mxu0 0
        %12196 = vmatprep.subr.bf16.mxu0 0
        %12197 = vmatpush1.bf16.xpose.msra.mxu0 0
        %12198 = vmatprep.subr.bf16.mxu0 0
        %12199 = vmatpush1.bf16.xpose.msra.mxu0 0
        %12200 = vmatprep.subr.bf16.mxu0 0
        %12201 = vmatpush1.bf16.xpose.msra.mxu0 0
        %12202 = vmatprep.subr.bf16.mxu0 0
        %12203 = vmatpush1.bf16.xpose.msra.mxu0 0
        %12204 = vmatprep.subr.bf16.mxu0 0
        %12205 = vmatpush1.bf16.xpose.msra.mxu0 0
        %12206 = vmatprep.mubr.bf16.mxu0 %v2023
        %12207 = vmatmul.mubr.bf16.gmra.mrb[0].mxu0 %v2009
        %v12208 = vpop.f32.mrb[0].mxu0
        %v12209 = vadd.f32 %v12168, %v12208
        %v12210 = vpop.f32.mrb[0].mxu0
        %v12211 = vadd.f32 %v12170, %v12210
        %v12212 = vpop.f32.mrb[0].mxu0
        %v12213 = vpop.f32.mrb[0].mxu0
        %12214 = vdwg.mxu0
        %12215 = vmatprep.subr.bf16.mxu0 %v8143
        %12216 = vmatpush1.bf16.xpose.msra.mxu0 %v8142
        %12217 = vmatprep.subr.bf16.mxu0 %v8207
        %12218 = vmatpush1.bf16.xpose.msra.mxu0 %v8206
        %12219 = vmatprep.subr.bf16.mxu0 %v8271
        %12220 = vmatpush1.bf16.xpose.msra.mxu0 %v8270
        %12221 = vmatprep.subr.bf16.mxu0 %v8335
        %12222 = vmatpush1.bf16.xpose.msra.mxu0 %v8334
        %12223 = vmatprep.subr.bf16.mxu0 %v8399
        %12224 = vmatpush1.bf16.xpose.msra.mxu0 %v8398
        %12225 = vmatprep.subr.bf16.mxu0 %v8463
        %12226 = vmatpush1.bf16.xpose.msra.mxu0 %v8462
        %12227 = vmatprep.subr.bf16.mxu0 %v8527
        %12228 = vmatpush1.bf16.xpose.msra.mxu0 %v8526
        %12229 = vmatprep.subr.bf16.mxu0 %v8591
        %12230 = vmatpush1.bf16.xpose.msra.mxu0 %v8590
        %12231 = vmatprep.subr.bf16.mxu0 %v8655
        %12232 = vmatpush1.bf16.xpose.msra.mxu0 %v8654
        %12233 = vmatprep.subr.bf16.mxu0 0
        %12234 = vmatpush1.bf16.xpose.msra.mxu0 0
        %12235 = vmatprep.subr.bf16.mxu0 0
        %12236 = vmatpush1.bf16.xpose.msra.mxu0 0
        %12237 = vmatprep.subr.bf16.mxu0 0
        %12238 = vmatpush1.bf16.xpose.msra.mxu0 0
        %12239 = vmatprep.subr.bf16.mxu0 0
        %12240 = vmatpush1.bf16.xpose.msra.mxu0 0
        %12241 = vmatprep.subr.bf16.mxu0 0
        %12242 = vmatpush1.bf16.xpose.msra.mxu0 0
        %12243 = vmatprep.subr.bf16.mxu0 0
        %12244 = vmatpush1.bf16.xpose.msra.mxu0 0
        %12245 = vmatprep.subr.bf16.mxu0 0
        %12246 = vmatpush1.bf16.xpose.msra.mxu0 0
        %12247 = vmatprep.mubr.bf16.mxu0 %v2027
        %12248 = vmatmul.mubr.bf16.gmra.mrb[0].mxu0 %v2025
        %v12249 = vpop.f32.mrb[0].mxu0
        %v12250 = vadd.f32 %v12209, %v12249
        %v12251 = vpop.f32.mrb[0].mxu0
        %v12252 = vadd.f32 %v12211, %v12251
        %v12253 = vpop.f32.mrb[0].mxu0
        %v12254 = vpop.f32.mrb[0].mxu0
        %12255 = vdwg.mxu0
        %12256 = vmatprep.subr.bf16.mxu0 %v8145
        %12257 = vmatpush1.bf16.xpose.msra.mxu0 %v8144
        %12258 = vmatprep.subr.bf16.mxu0 %v8209
        %12259 = vmatpush1.bf16.xpose.msra.mxu0 %v8208
        %12260 = vmatprep.subr.bf16.mxu0 %v8273
        %12261 = vmatpush1.bf16.xpose.msra.mxu0 %v8272
        %12262 = vmatprep.subr.bf16.mxu0 %v8337
        %12263 = vmatpush1.bf16.xpose.msra.mxu0 %v8336
        %12264 = vmatprep.subr.bf16.mxu0 %v8401
        %12265 = vmatpush1.bf16.xpose.msra.mxu0 %v8400
        %12266 = vmatprep.subr.bf16.mxu0 %v8465
        %12267 = vmatpush1.bf16.xpose.msra.mxu0 %v8464
        %12268 = vmatprep.subr.bf16.mxu0 %v8529
        %12269 = vmatpush1.bf16.xpose.msra.mxu0 %v8528
        %12270 = vmatprep.subr.bf16.mxu0 %v8593
        %12271 = vmatpush1.bf16.xpose.msra.mxu0 %v8592
        %12272 = vmatprep.subr.bf16.mxu0 %v8657
        %12273 = vmatpush1.bf16.xpose.msra.mxu0 %v8656
        %12274 = vmatprep.subr.bf16.mxu0 0
        %12275 = vmatpush1.bf16.xpose.msra.mxu0 0
        %12276 = vmatprep.subr.bf16.mxu0 0
        %12277 = vmatpush1.bf16.xpose.msra.mxu0 0
        %12278 = vmatprep.subr.bf16.mxu0 0
        %12279 = vmatpush1.bf16.xpose.msra.mxu0 0
        %12280 = vmatprep.subr.bf16.mxu0 0
        %12281 = vmatpush1.bf16.xpose.msra.mxu0 0
        %12282 = vmatprep.subr.bf16.mxu0 0
        %12283 = vmatpush1.bf16.xpose.msra.mxu0 0
        %12284 = vmatprep.subr.bf16.mxu0 0
        %12285 = vmatpush1.bf16.xpose.msra.mxu0 0
        %12286 = vmatprep.subr.bf16.mxu0 0
        %12287 = vmatpush1.bf16.xpose.msra.mxu0 0
        %12288 = vmatprep.mubr.bf16.mxu0 %v2065
        %12289 = vmatmul.mubr.bf16.gmra.mrb[0].mxu0 %v2051
        %v12290 = vpop.f32.mrb[0].mxu0
        %v12291 = vadd.f32 %v12250, %v12290
        %v12292 = vpop.f32.mrb[0].mxu0
        %v12293 = vadd.f32 %v12252, %v12292
        %v12294 = vpop.f32.mrb[0].mxu0
        %v12295 = vpop.f32.mrb[0].mxu0
        %12296 = vdwg.mxu0
        %12297 = vmatprep.subr.bf16.mxu0 %v8147
        %12298 = vmatpush1.bf16.xpose.msra.mxu0 %v8146
        %12299 = vmatprep.subr.bf16.mxu0 %v8211
        %12300 = vmatpush1.bf16.xpose.msra.mxu0 %v8210
        %12301 = vmatprep.subr.bf16.mxu0 %v8275
        %12302 = vmatpush1.bf16.xpose.msra.mxu0 %v8274
        %12303 = vmatprep.subr.bf16.mxu0 %v8339
        %12304 = vmatpush1.bf16.xpose.msra.mxu0 %v8338
        %12305 = vmatprep.subr.bf16.mxu0 %v8403
        %12306 = vmatpush1.bf16.xpose.msra.mxu0 %v8402
        %12307 = vmatprep.subr.bf16.mxu0 %v8467
        %12308 = vmatpush1.bf16.xpose.msra.mxu0 %v8466
        %12309 = vmatprep.subr.bf16.mxu0 %v8531
        %12310 = vmatpush1.bf16.xpose.msra.mxu0 %v8530
        %12311 = vmatprep.subr.bf16.mxu0 %v8595
        %12312 = vmatpush1.bf16.xpose.msra.mxu0 %v8594
        %12313 = vmatprep.subr.bf16.mxu0 %v8659
        %12314 = vmatpush1.bf16.xpose.msra.mxu0 %v8658
        %12315 = vmatprep.subr.bf16.mxu0 0
        %12316 = vmatpush1.bf16.xpose.msra.mxu0 0
        %12317 = vmatprep.subr.bf16.mxu0 0
        %12318 = vmatpush1.bf16.xpose.msra.mxu0 0
        %12319 = vmatprep.subr.bf16.mxu0 0
        %12320 = vmatpush1.bf16.xpose.msra.mxu0 0
        %12321 = vmatprep.subr.bf16.mxu0 0
        %12322 = vmatpush1.bf16.xpose.msra.mxu0 0
        %12323 = vmatprep.subr.bf16.mxu0 0
        %12324 = vmatpush1.bf16.xpose.msra.mxu0 0
        %12325 = vmatprep.subr.bf16.mxu0 0
        %12326 = vmatpush1.bf16.xpose.msra.mxu0 0
        %12327 = vmatprep.subr.bf16.mxu0 0
        %12328 = vmatpush1.bf16.xpose.msra.mxu0 0
        %12329 = vmatprep.mubr.bf16.mxu0 %v2075
        %12330 = vmatmul.mubr.bf16.gmra.mrb[0].mxu0 %v2073
        %v12331 = vpop.f32.mrb[0].mxu0
        %v12332 = vadd.f32 %v12291, %v12331
        %v12333 = vpop.f32.mrb[0].mxu0
        %v12334 = vadd.f32 %v12293, %v12333
        %v12335 = vpop.f32.mrb[0].mxu0
        %v12336 = vpop.f32.mrb[0].mxu0
        %12337 = vdwg.mxu0
        %12338 = vmatprep.subr.bf16.mxu0 %v8149
        %12339 = vmatpush1.bf16.xpose.msra.mxu0 %v8148
        %12340 = vmatprep.subr.bf16.mxu0 %v8213
        %12341 = vmatpush1.bf16.xpose.msra.mxu0 %v8212
        %12342 = vmatprep.subr.bf16.mxu0 %v8277
        %12343 = vmatpush1.bf16.xpose.msra.mxu0 %v8276
        %12344 = vmatprep.subr.bf16.mxu0 %v8341
        %12345 = vmatpush1.bf16.xpose.msra.mxu0 %v8340
        %12346 = vmatprep.subr.bf16.mxu0 %v8405
        %12347 = vmatpush1.bf16.xpose.msra.mxu0 %v8404
        %12348 = vmatprep.subr.bf16.mxu0 %v8469
        %12349 = vmatpush1.bf16.xpose.msra.mxu0 %v8468
        %12350 = vmatprep.subr.bf16.mxu0 %v8533
        %12351 = vmatpush1.bf16.xpose.msra.mxu0 %v8532
        %12352 = vmatprep.subr.bf16.mxu0 %v8597
        %12353 = vmatpush1.bf16.xpose.msra.mxu0 %v8596
        %12354 = vmatprep.subr.bf16.mxu0 %v8661
        %12355 = vmatpush1.bf16.xpose.msra.mxu0 %v8660
        %12356 = vmatprep.subr.bf16.mxu0 0
        %12357 = vmatpush1.bf16.xpose.msra.mxu0 0
        %12358 = vmatprep.subr.bf16.mxu0 0
        %12359 = vmatpush1.bf16.xpose.msra.mxu0 0
        %12360 = vmatprep.subr.bf16.mxu0 0
        %12361 = vmatpush1.bf16.xpose.msra.mxu0 0
        %12362 = vmatprep.subr.bf16.mxu0 0
        %12363 = vmatpush1.bf16.xpose.msra.mxu0 0
        %12364 = vmatprep.subr.bf16.mxu0 0
        %12365 = vmatpush1.bf16.xpose.msra.mxu0 0
        %12366 = vmatprep.subr.bf16.mxu0 0
        %12367 = vmatpush1.bf16.xpose.msra.mxu0 0
        %12368 = vmatprep.subr.bf16.mxu0 0
        %12369 = vmatpush1.bf16.xpose.msra.mxu0 0
        %12370 = vmatprep.mubr.bf16.mxu0 %v2072
        %12371 = vmatmul.mubr.bf16.gmra.mrb[0].mxu0 %v2058
        %v12372 = vpop.f32.mrb[0].mxu0
        %v12373 = vadd.f32 %v12332, %v12372
        %v12374 = vpop.f32.mrb[0].mxu0
        %v12375 = vadd.f32 %v12334, %v12374
        %v12376 = vpop.f32.mrb[0].mxu0
        %v12377 = vpop.f32.mrb[0].mxu0
        %12378 = vdwg.mxu0
        %12379 = vmatprep.subr.bf16.mxu0 %v8151
        %12380 = vmatpush1.bf16.xpose.msra.mxu0 %v8150
        %12381 = vmatprep.subr.bf16.mxu0 %v8215
        %12382 = vmatpush1.bf16.xpose.msra.mxu0 %v8214
        %12383 = vmatprep.subr.bf16.mxu0 %v8279
        %12384 = vmatpush1.bf16.xpose.msra.mxu0 %v8278
        %12385 = vmatprep.subr.bf16.mxu0 %v8343
        %12386 = vmatpush1.bf16.xpose.msra.mxu0 %v8342
        %12387 = vmatprep.subr.bf16.mxu0 %v8407
        %12388 = vmatpush1.bf16.xpose.msra.mxu0 %v8406
        %12389 = vmatprep.subr.bf16.mxu0 %v8471
        %12390 = vmatpush1.bf16.xpose.msra.mxu0 %v8470
        %12391 = vmatprep.subr.bf16.mxu0 %v8535
        %12392 = vmatpush1.bf16.xpose.msra.mxu0 %v8534
        %12393 = vmatprep.subr.bf16.mxu0 %v8599
        %12394 = vmatpush1.bf16.xpose.msra.mxu0 %v8598
        %12395 = vmatprep.subr.bf16.mxu0 %v8663
        %12396 = vmatpush1.bf16.xpose.msra.mxu0 %v8662
        %12397 = vmatprep.subr.bf16.mxu0 0
        %12398 = vmatpush1.bf16.xpose.msra.mxu0 0
        %12399 = vmatprep.subr.bf16.mxu0 0
        %12400 = vmatpush1.bf16.xpose.msra.mxu0 0
        %12401 = vmatprep.subr.bf16.mxu0 0
        %12402 = vmatpush1.bf16.xpose.msra.mxu0 0
        %12403 = vmatprep.subr.bf16.mxu0 0
        %12404 = vmatpush1.bf16.xpose.msra.mxu0 0
        %12405 = vmatprep.subr.bf16.mxu0 0
        %12406 = vmatpush1.bf16.xpose.msra.mxu0 0
        %12407 = vmatprep.subr.bf16.mxu0 0
        %12408 = vmatpush1.bf16.xpose.msra.mxu0 0
        %12409 = vmatprep.subr.bf16.mxu0 0
        %12410 = vmatpush1.bf16.xpose.msra.mxu0 0
        %12411 = vmatprep.mubr.bf16.mxu0 %v2076
        %12412 = vmatmul.mubr.bf16.gmra.mrb[0].mxu0 %v2074
        %v12413 = vpop.f32.mrb[0].mxu0
        %v12414 = vadd.f32 %v12373, %v12413
        %v12415 = vpop.f32.mrb[0].mxu0
        %v12416 = vadd.f32 %v12375, %v12415
        %v12417 = vpop.f32.mrb[0].mxu0
        %v12418 = vpop.f32.mrb[0].mxu0
        %12419 = vdwg.mxu0
        %12420 = vmatprep.subr.bf16.mxu0 %v8153
        %12421 = vmatpush1.bf16.xpose.msra.mxu0 %v8152
        %12422 = vmatprep.subr.bf16.mxu0 %v8217
        %12423 = vmatpush1.bf16.xpose.msra.mxu0 %v8216
        %12424 = vmatprep.subr.bf16.mxu0 %v8281
        %12425 = vmatpush1.bf16.xpose.msra.mxu0 %v8280
        %12426 = vmatprep.subr.bf16.mxu0 %v8345
        %12427 = vmatpush1.bf16.xpose.msra.mxu0 %v8344
        %12428 = vmatprep.subr.bf16.mxu0 %v8409
        %12429 = vmatpush1.bf16.xpose.msra.mxu0 %v8408
        %12430 = vmatprep.subr.bf16.mxu0 %v8473
        %12431 = vmatpush1.bf16.xpose.msra.mxu0 %v8472
        %12432 = vmatprep.subr.bf16.mxu0 %v8537
        %12433 = vmatpush1.bf16.xpose.msra.mxu0 %v8536
        %12434 = vmatprep.subr.bf16.mxu0 %v8601
        %12435 = vmatpush1.bf16.xpose.msra.mxu0 %v8600
        %12436 = vmatprep.subr.bf16.mxu0 %v8665
        %12437 = vmatpush1.bf16.xpose.msra.mxu0 %v8664
        %12438 = vmatprep.subr.bf16.mxu0 0
        %12439 = vmatpush1.bf16.xpose.msra.mxu0 0
        %12440 = vmatprep.subr.bf16.mxu0 0
        %12441 = vmatpush1.bf16.xpose.msra.mxu0 0
        %12442 = vmatprep.subr.bf16.mxu0 0
        %12443 = vmatpush1.bf16.xpose.msra.mxu0 0
        %12444 = vmatprep.subr.bf16.mxu0 0
        %12445 = vmatpush1.bf16.xpose.msra.mxu0 0
        %12446 = vmatprep.subr.bf16.mxu0 0
        %12447 = vmatpush1.bf16.xpose.msra.mxu0 0
        %12448 = vmatprep.subr.bf16.mxu0 0
        %12449 = vmatpush1.bf16.xpose.msra.mxu0 0
        %12450 = vmatprep.subr.bf16.mxu0 0
        %12451 = vmatpush1.bf16.xpose.msra.mxu0 0
        %12452 = vmatprep.mubr.bf16.mxu0 %v2114
        %12453 = vmatmul.mubr.bf16.gmra.mrb[0].mxu0 %v2100
        %v12454 = vpop.f32.mrb[0].mxu0
        %v12455 = vadd.f32 %v12414, %v12454
        %v12456 = vpop.f32.mrb[0].mxu0
        %v12457 = vadd.f32 %v12416, %v12456
        %v12458 = vpop.f32.mrb[0].mxu0
        %v12459 = vpop.f32.mrb[0].mxu0
        %12460 = vdwg.mxu0
        %12461 = vmatprep.subr.bf16.mxu0 %v8155
        %12462 = vmatpush1.bf16.xpose.msra.mxu0 %v8154
        %12463 = vmatprep.subr.bf16.mxu0 %v8219
        %12464 = vmatpush1.bf16.xpose.msra.mxu0 %v8218
        %12465 = vmatprep.subr.bf16.mxu0 %v8283
        %12466 = vmatpush1.bf16.xpose.msra.mxu0 %v8282
        %12467 = vmatprep.subr.bf16.mxu0 %v8347
        %12468 = vmatpush1.bf16.xpose.msra.mxu0 %v8346
        %12469 = vmatprep.subr.bf16.mxu0 %v8411
        %12470 = vmatpush1.bf16.xpose.msra.mxu0 %v8410
        %12471 = vmatprep.subr.bf16.mxu0 %v8475
        %12472 = vmatpush1.bf16.xpose.msra.mxu0 %v8474
        %12473 = vmatprep.subr.bf16.mxu0 %v8539
        %12474 = vmatpush1.bf16.xpose.msra.mxu0 %v8538
        %12475 = vmatprep.subr.bf16.mxu0 %v8603
        %12476 = vmatpush1.bf16.xpose.msra.mxu0 %v8602
        %12477 = vmatprep.subr.bf16.mxu0 %v8667
        %12478 = vmatpush1.bf16.xpose.msra.mxu0 %v8666
        %12479 = vmatprep.subr.bf16.mxu0 0
        %12480 = vmatpush1.bf16.xpose.msra.mxu0 0
        %12481 = vmatprep.subr.bf16.mxu0 0
        %12482 = vmatpush1.bf16.xpose.msra.mxu0 0
        %12483 = vmatprep.subr.bf16.mxu0 0
        %12484 = vmatpush1.bf16.xpose.msra.mxu0 0
        %12485 = vmatprep.subr.bf16.mxu0 0
        %12486 = vmatpush1.bf16.xpose.msra.mxu0 0
        %12487 = vmatprep.subr.bf16.mxu0 0
        %12488 = vmatpush1.bf16.xpose.msra.mxu0 0
        %12489 = vmatprep.subr.bf16.mxu0 0
        %12490 = vmatpush1.bf16.xpose.msra.mxu0 0
        %12491 = vmatprep.subr.bf16.mxu0 0
        %12492 = vmatpush1.bf16.xpose.msra.mxu0 0
        %12493 = vmatprep.mubr.bf16.mxu0 %v2124
        %12494 = vmatmul.mubr.bf16.gmra.mrb[0].mxu0 %v2122
        %v12495 = vpop.f32.mrb[0].mxu0
        %v12496 = vadd.f32 %v12455, %v12495
        %v12497 = vpop.f32.mrb[0].mxu0
        %v12498 = vadd.f32 %v12457, %v12497
        %v12499 = vpop.f32.mrb[0].mxu0
        %v12500 = vpop.f32.mrb[0].mxu0
        %12501 = vdwg.mxu0
        %12502 = vmatprep.subr.bf16.mxu0 %v8157
        %12503 = vmatpush1.bf16.xpose.msra.mxu0 %v8156
        %12504 = vmatprep.subr.bf16.mxu0 %v8221
        %12505 = vmatpush1.bf16.xpose.msra.mxu0 %v8220
        %12506 = vmatprep.subr.bf16.mxu0 %v8285
        %12507 = vmatpush1.bf16.xpose.msra.mxu0 %v8284
        %12508 = vmatprep.subr.bf16.mxu0 %v8349
        %12509 = vmatpush1.bf16.xpose.msra.mxu0 %v8348
        %12510 = vmatprep.subr.bf16.mxu0 %v8413
        %12511 = vmatpush1.bf16.xpose.msra.mxu0 %v8412
        %12512 = vmatprep.subr.bf16.mxu0 %v8477
        %12513 = vmatpush1.bf16.xpose.msra.mxu0 %v8476
        %12514 = vmatprep.subr.bf16.mxu0 %v8541
        %12515 = vmatpush1.bf16.xpose.msra.mxu0 %v8540
        %12516 = vmatprep.subr.bf16.mxu0 %v8605
        %12517 = vmatpush1.bf16.xpose.msra.mxu0 %v8604
        %12518 = vmatprep.subr.bf16.mxu0 %v8669
        %12519 = vmatpush1.bf16.xpose.msra.mxu0 %v8668
        %12520 = vmatprep.subr.bf16.mxu0 0
        %12521 = vmatpush1.bf16.xpose.msra.mxu0 0
        %12522 = vmatprep.subr.bf16.mxu0 0
        %12523 = vmatpush1.bf16.xpose.msra.mxu0 0
        %12524 = vmatprep.subr.bf16.mxu0 0
        %12525 = vmatpush1.bf16.xpose.msra.mxu0 0
        %12526 = vmatprep.subr.bf16.mxu0 0
        %12527 = vmatpush1.bf16.xpose.msra.mxu0 0
        %12528 = vmatprep.subr.bf16.mxu0 0
        %12529 = vmatpush1.bf16.xpose.msra.mxu0 0
        %12530 = vmatprep.subr.bf16.mxu0 0
        %12531 = vmatpush1.bf16.xpose.msra.mxu0 0
        %12532 = vmatprep.subr.bf16.mxu0 0
        %12533 = vmatpush1.bf16.xpose.msra.mxu0 0
        %12534 = vmatprep.mubr.bf16.mxu0 %v2121
        %12535 = vmatmul.mubr.bf16.gmra.mrb[0].mxu0 %v2107
        %v12536 = vpop.f32.mrb[0].mxu0
        %v12537 = vadd.f32 %v12496, %v12536
        %v12538 = vpop.f32.mrb[0].mxu0
        %v12539 = vadd.f32 %v12498, %v12538
        %v12540 = vpop.f32.mrb[0].mxu0
        %v12541 = vpop.f32.mrb[0].mxu0
        %12542 = vdwg.mxu0
        %12543 = vmatprep.subr.bf16.mxu0 %v8159
        %12544 = vmatpush1.bf16.xpose.msra.mxu0 %v8158
        %12545 = vmatprep.subr.bf16.mxu0 %v8223
        %12546 = vmatpush1.bf16.xpose.msra.mxu0 %v8222
        %12547 = vmatprep.subr.bf16.mxu0 %v8287
        %12548 = vmatpush1.bf16.xpose.msra.mxu0 %v8286
        %12549 = vmatprep.subr.bf16.mxu0 %v8351
        %12550 = vmatpush1.bf16.xpose.msra.mxu0 %v8350
        %12551 = vmatprep.subr.bf16.mxu0 %v8415
        %12552 = vmatpush1.bf16.xpose.msra.mxu0 %v8414
        %12553 = vmatprep.subr.bf16.mxu0 %v8479
        %12554 = vmatpush1.bf16.xpose.msra.mxu0 %v8478
        %12555 = vmatprep.subr.bf16.mxu0 %v8543
        %12556 = vmatpush1.bf16.xpose.msra.mxu0 %v8542
        %12557 = vmatprep.subr.bf16.mxu0 %v8607
        %12558 = vmatpush1.bf16.xpose.msra.mxu0 %v8606
        %12559 = vmatprep.subr.bf16.mxu0 %v8671
        %12560 = vmatpush1.bf16.xpose.msra.mxu0 %v8670
        %12561 = vmatprep.subr.bf16.mxu0 0
        %12562 = vmatpush1.bf16.xpose.msra.mxu0 0
        %12563 = vmatprep.subr.bf16.mxu0 0
        %12564 = vmatpush1.bf16.xpose.msra.mxu0 0
        %12565 = vmatprep.subr.bf16.mxu0 0
        %12566 = vmatpush1.bf16.xpose.msra.mxu0 0
        %12567 = vmatprep.subr.bf16.mxu0 0
        %12568 = vmatpush1.bf16.xpose.msra.mxu0 0
        %12569 = vmatprep.subr.bf16.mxu0 0
        %12570 = vmatpush1.bf16.xpose.msra.mxu0 0
        %12571 = vmatprep.subr.bf16.mxu0 0
        %12572 = vmatpush1.bf16.xpose.msra.mxu0 0
        %12573 = vmatprep.subr.bf16.mxu0 0
        %12574 = vmatpush1.bf16.xpose.msra.mxu0 0
        %12575 = vmatprep.mubr.bf16.mxu0 %v2125
        %12576 = vmatmul.mubr.bf16.gmra.mrb[0].mxu0 %v2123
        %v12577 = vpop.f32.mrb[0].mxu0
        %v12578 = vadd.f32 %v12537, %v12577
        %v12579 = vpop.f32.mrb[0].mxu0
        %v12580 = vadd.f32 %v12539, %v12579
        %v12581 = vpop.f32.mrb[0].mxu0
        %v12582 = vpop.f32.mrb[0].mxu0
        %12583 = vdwg.mxu0
        %12584 = vmatprep.subr.bf16.mxu0 %v8161
        %12585 = vmatpush1.bf16.xpose.msra.mxu0 %v8160
        %12586 = vmatprep.subr.bf16.mxu0 %v8225
        %12587 = vmatpush1.bf16.xpose.msra.mxu0 %v8224
        %12588 = vmatprep.subr.bf16.mxu0 %v8289
        %12589 = vmatpush1.bf16.xpose.msra.mxu0 %v8288
        %12590 = vmatprep.subr.bf16.mxu0 %v8353
        %12591 = vmatpush1.bf16.xpose.msra.mxu0 %v8352
        %12592 = vmatprep.subr.bf16.mxu0 %v8417
        %12593 = vmatpush1.bf16.xpose.msra.mxu0 %v8416
        %12594 = vmatprep.subr.bf16.mxu0 %v8481
        %12595 = vmatpush1.bf16.xpose.msra.mxu0 %v8480
        %12596 = vmatprep.subr.bf16.mxu0 %v8545
        %12597 = vmatpush1.bf16.xpose.msra.mxu0 %v8544
        %12598 = vmatprep.subr.bf16.mxu0 %v8609
        %12599 = vmatpush1.bf16.xpose.msra.mxu0 %v8608
        %12600 = vmatprep.subr.bf16.mxu0 %v8673
        %12601 = vmatpush1.bf16.xpose.msra.mxu0 %v8672
        %12602 = vmatprep.subr.bf16.mxu0 0
        %12603 = vmatpush1.bf16.xpose.msra.mxu0 0
        %12604 = vmatprep.subr.bf16.mxu0 0
        %12605 = vmatpush1.bf16.xpose.msra.mxu0 0
        %12606 = vmatprep.subr.bf16.mxu0 0
        %12607 = vmatpush1.bf16.xpose.msra.mxu0 0
        %12608 = vmatprep.subr.bf16.mxu0 0
        %12609 = vmatpush1.bf16.xpose.msra.mxu0 0
        %12610 = vmatprep.subr.bf16.mxu0 0
        %12611 = vmatpush1.bf16.xpose.msra.mxu0 0
        %12612 = vmatprep.subr.bf16.mxu0 0
        %12613 = vmatpush1.bf16.xpose.msra.mxu0 0
        %12614 = vmatprep.subr.bf16.mxu0 0
        %12615 = vmatpush1.bf16.xpose.msra.mxu0 0
        %12616 = vmatprep.mubr.bf16.mxu0 %v2163
        %12617 = vmatmul.mubr.bf16.gmra.mrb[0].mxu0 %v2149
        %v12618 = vpop.f32.mrb[0].mxu0
        %v12619 = vadd.f32 %v12578, %v12618
        %v12620 = vpop.f32.mrb[0].mxu0
        %v12621 = vadd.f32 %v12580, %v12620
        %v12622 = vpop.f32.mrb[0].mxu0
        %v12623 = vpop.f32.mrb[0].mxu0
        %12624 = vdwg.mxu0
        %12625 = vmatprep.subr.bf16.mxu0 %v8163
        %12626 = vmatpush1.bf16.xpose.msra.mxu0 %v8162
        %12627 = vmatprep.subr.bf16.mxu0 %v8227
        %12628 = vmatpush1.bf16.xpose.msra.mxu0 %v8226
        %12629 = vmatprep.subr.bf16.mxu0 %v8291
        %12630 = vmatpush1.bf16.xpose.msra.mxu0 %v8290
        %12631 = vmatprep.subr.bf16.mxu0 %v8355
        %12632 = vmatpush1.bf16.xpose.msra.mxu0 %v8354
        %12633 = vmatprep.subr.bf16.mxu0 %v8419
        %12634 = vmatpush1.bf16.xpose.msra.mxu0 %v8418
        %12635 = vmatprep.subr.bf16.mxu0 %v8483
        %12636 = vmatpush1.bf16.xpose.msra.mxu0 %v8482
        %12637 = vmatprep.subr.bf16.mxu0 %v8547
        %12638 = vmatpush1.bf16.xpose.msra.mxu0 %v8546
        %12639 = vmatprep.subr.bf16.mxu0 %v8611
        %12640 = vmatpush1.bf16.xpose.msra.mxu0 %v8610
        %12641 = vmatprep.subr.bf16.mxu0 %v8675
        %12642 = vmatpush1.bf16.xpose.msra.mxu0 %v8674
        %12643 = vmatprep.subr.bf16.mxu0 0
        %12644 = vmatpush1.bf16.xpose.msra.mxu0 0
        %12645 = vmatprep.subr.bf16.mxu0 0
        %12646 = vmatpush1.bf16.xpose.msra.mxu0 0
        %12647 = vmatprep.subr.bf16.mxu0 0
        %12648 = vmatpush1.bf16.xpose.msra.mxu0 0
        %12649 = vmatprep.subr.bf16.mxu0 0
        %12650 = vmatpush1.bf16.xpose.msra.mxu0 0
        %12651 = vmatprep.subr.bf16.mxu0 0
        %12652 = vmatpush1.bf16.xpose.msra.mxu0 0
        %12653 = vmatprep.subr.bf16.mxu0 0
        %12654 = vmatpush1.bf16.xpose.msra.mxu0 0
        %12655 = vmatprep.subr.bf16.mxu0 0
        %12656 = vmatpush1.bf16.xpose.msra.mxu0 0
        %12657 = vmatprep.mubr.bf16.mxu0 %v2173
        %12658 = vmatmul.mubr.bf16.gmra.mrb[0].mxu0 %v2171
        %v12659 = vpop.f32.mrb[0].mxu0
        %v12660 = vadd.f32 %v12619, %v12659
        %v12661 = vpop.f32.mrb[0].mxu0
        %v12662 = vadd.f32 %v12621, %v12661
        %v12663 = vpop.f32.mrb[0].mxu0
        %v12664 = vpop.f32.mrb[0].mxu0
        %12665 = vdwg.mxu0
        %12666 = vmatprep.subr.bf16.mxu0 %v8165
        %12667 = vmatpush1.bf16.xpose.msra.mxu0 %v8164
        %12668 = vmatprep.subr.bf16.mxu0 %v8229
        %12669 = vmatpush1.bf16.xpose.msra.mxu0 %v8228
        %12670 = vmatprep.subr.bf16.mxu0 %v8293
        %12671 = vmatpush1.bf16.xpose.msra.mxu0 %v8292
        %12672 = vmatprep.subr.bf16.mxu0 %v8357
        %12673 = vmatpush1.bf16.xpose.msra.mxu0 %v8356
        %12674 = vmatprep.subr.bf16.mxu0 %v8421
        %12675 = vmatpush1.bf16.xpose.msra.mxu0 %v8420
        %12676 = vmatprep.subr.bf16.mxu0 %v8485
        %12677 = vmatpush1.bf16.xpose.msra.mxu0 %v8484
        %12678 = vmatprep.subr.bf16.mxu0 %v8549
        %12679 = vmatpush1.bf16.xpose.msra.mxu0 %v8548
        %12680 = vmatprep.subr.bf16.mxu0 %v8613
        %12681 = vmatpush1.bf16.xpose.msra.mxu0 %v8612
        %12682 = vmatprep.subr.bf16.mxu0 %v8677
        %12683 = vmatpush1.bf16.xpose.msra.mxu0 %v8676
        %12684 = vmatprep.subr.bf16.mxu0 0
        %12685 = vmatpush1.bf16.xpose.msra.mxu0 0
        %12686 = vmatprep.subr.bf16.mxu0 0
        %12687 = vmatpush1.bf16.xpose.msra.mxu0 0
        %12688 = vmatprep.subr.bf16.mxu0 0
        %12689 = vmatpush1.bf16.xpose.msra.mxu0 0
        %12690 = vmatprep.subr.bf16.mxu0 0
        %12691 = vmatpush1.bf16.xpose.msra.mxu0 0
        %12692 = vmatprep.subr.bf16.mxu0 0
        %12693 = vmatpush1.bf16.xpose.msra.mxu0 0
        %12694 = vmatprep.subr.bf16.mxu0 0
        %12695 = vmatpush1.bf16.xpose.msra.mxu0 0
        %12696 = vmatprep.subr.bf16.mxu0 0
        %12697 = vmatpush1.bf16.xpose.msra.mxu0 0
        %12698 = vmatprep.mubr.bf16.mxu0 %v2170
        %12699 = vmatmul.mubr.bf16.gmra.mrb[0].mxu0 %v2156
        %v12700 = vpop.f32.mrb[0].mxu0
        %v12701 = vadd.f32 %v12660, %v12700
        %v12702 = vpop.f32.mrb[0].mxu0
        %v12703 = vadd.f32 %v12662, %v12702
        %v12704 = vpop.f32.mrb[0].mxu0
        %v12705 = vpop.f32.mrb[0].mxu0
        %12706 = vdwg.mxu0
        %12707 = vmatprep.subr.bf16.mxu0 %v8167
        %12708 = vmatpush1.bf16.xpose.msra.mxu0 %v8166
        %12709 = vmatprep.subr.bf16.mxu0 %v8231
        %12710 = vmatpush1.bf16.xpose.msra.mxu0 %v8230
        %12711 = vmatprep.subr.bf16.mxu0 %v8295
        %12712 = vmatpush1.bf16.xpose.msra.mxu0 %v8294
        %12713 = vmatprep.subr.bf16.mxu0 %v8359
        %12714 = vmatpush1.bf16.xpose.msra.mxu0 %v8358
        %12715 = vmatprep.subr.bf16.mxu0 %v8423
        %12716 = vmatpush1.bf16.xpose.msra.mxu0 %v8422
        %12717 = vmatprep.subr.bf16.mxu0 %v8487
        %12718 = vmatpush1.bf16.xpose.msra.mxu0 %v8486
        %12719 = vmatprep.subr.bf16.mxu0 %v8551
        %12720 = vmatpush1.bf16.xpose.msra.mxu0 %v8550
        %12721 = vmatprep.subr.bf16.mxu0 %v8615
        %12722 = vmatpush1.bf16.xpose.msra.mxu0 %v8614
        %12723 = vmatprep.subr.bf16.mxu0 %v8679
        %12724 = vmatpush1.bf16.xpose.msra.mxu0 %v8678
        %12725 = vmatprep.subr.bf16.mxu0 0
        %12726 = vmatpush1.bf16.xpose.msra.mxu0 0
        %12727 = vmatprep.subr.bf16.mxu0 0
        %12728 = vmatpush1.bf16.xpose.msra.mxu0 0
        %12729 = vmatprep.subr.bf16.mxu0 0
        %12730 = vmatpush1.bf16.xpose.msra.mxu0 0
        %12731 = vmatprep.subr.bf16.mxu0 0
        %12732 = vmatpush1.bf16.xpose.msra.mxu0 0
        %12733 = vmatprep.subr.bf16.mxu0 0
        %12734 = vmatpush1.bf16.xpose.msra.mxu0 0
        %12735 = vmatprep.subr.bf16.mxu0 0
        %12736 = vmatpush1.bf16.xpose.msra.mxu0 0
        %12737 = vmatprep.subr.bf16.mxu0 0
        %12738 = vmatpush1.bf16.xpose.msra.mxu0 0
        %12739 = vmatprep.mubr.bf16.mxu0 %v2174
        %12740 = vmatmul.mubr.bf16.gmra.mrb[0].mxu0 %v2172
        %v12741 = vpop.f32.mrb[0].mxu0
        %v12742 = vadd.f32 %v12701, %v12741
        %v12743 = vpop.f32.mrb[0].mxu0
        %v12744 = vadd.f32 %v12703, %v12743
        %v12745 = vpop.f32.mrb[0].mxu0
        %v12746 = vpop.f32.mrb[0].mxu0
        %12747 = vdwg.mxu0
        %12748 = vmatprep.subr.bf16.mxu0 %v8169
        %12749 = vmatpush1.bf16.xpose.msra.mxu0 %v8168
        %12750 = vmatprep.subr.bf16.mxu0 %v8233
        %12751 = vmatpush1.bf16.xpose.msra.mxu0 %v8232
        %12752 = vmatprep.subr.bf16.mxu0 %v8297
        %12753 = vmatpush1.bf16.xpose.msra.mxu0 %v8296
        %12754 = vmatprep.subr.bf16.mxu0 %v8361
        %12755 = vmatpush1.bf16.xpose.msra.mxu0 %v8360
        %12756 = vmatprep.subr.bf16.mxu0 %v8425
        %12757 = vmatpush1.bf16.xpose.msra.mxu0 %v8424
        %12758 = vmatprep.subr.bf16.mxu0 %v8489
        %12759 = vmatpush1.bf16.xpose.msra.mxu0 %v8488
        %12760 = vmatprep.subr.bf16.mxu0 %v8553
        %12761 = vmatpush1.bf16.xpose.msra.mxu0 %v8552
        %12762 = vmatprep.subr.bf16.mxu0 %v8617
        %12763 = vmatpush1.bf16.xpose.msra.mxu0 %v8616
        %12764 = vmatprep.subr.bf16.mxu0 %v8681
        %12765 = vmatpush1.bf16.xpose.msra.mxu0 %v8680
        %12766 = vmatprep.subr.bf16.mxu0 0
        %12767 = vmatpush1.bf16.xpose.msra.mxu0 0
        %12768 = vmatprep.subr.bf16.mxu0 0
        %12769 = vmatpush1.bf16.xpose.msra.mxu0 0
        %12770 = vmatprep.subr.bf16.mxu0 0
        %12771 = vmatpush1.bf16.xpose.msra.mxu0 0
        %12772 = vmatprep.subr.bf16.mxu0 0
        %12773 = vmatpush1.bf16.xpose.msra.mxu0 0
        %12774 = vmatprep.subr.bf16.mxu0 0
        %12775 = vmatpush1.bf16.xpose.msra.mxu0 0
        %12776 = vmatprep.subr.bf16.mxu0 0
        %12777 = vmatpush1.bf16.xpose.msra.mxu0 0
        %12778 = vmatprep.subr.bf16.mxu0 0
        %12779 = vmatpush1.bf16.xpose.msra.mxu0 0
        %12780 = vmatprep.mubr.bf16.mxu0 %v2212
        %12781 = vmatmul.mubr.bf16.gmra.mrb[0].mxu0 %v2198
        %v12782 = vpop.f32.mrb[0].mxu0
        %v12783 = vadd.f32 %v12742, %v12782
        %v12784 = vpop.f32.mrb[0].mxu0
        %v12785 = vadd.f32 %v12744, %v12784
        %v12786 = vpop.f32.mrb[0].mxu0
        %v12787 = vpop.f32.mrb[0].mxu0
        %12788 = vdwg.mxu0
        %12789 = vmatprep.subr.bf16.mxu0 %v8171
        %12790 = vmatpush1.bf16.xpose.msra.mxu0 %v8170
        %12791 = vmatprep.subr.bf16.mxu0 %v8235
        %12792 = vmatpush1.bf16.xpose.msra.mxu0 %v8234
        %12793 = vmatprep.subr.bf16.mxu0 %v8299
        %12794 = vmatpush1.bf16.xpose.msra.mxu0 %v8298
        %12795 = vmatprep.subr.bf16.mxu0 %v8363
        %12796 = vmatpush1.bf16.xpose.msra.mxu0 %v8362
        %12797 = vmatprep.subr.bf16.mxu0 %v8427
        %12798 = vmatpush1.bf16.xpose.msra.mxu0 %v8426
        %12799 = vmatprep.subr.bf16.mxu0 %v8491
        %12800 = vmatpush1.bf16.xpose.msra.mxu0 %v8490
        %12801 = vmatprep.subr.bf16.mxu0 %v8555
        %12802 = vmatpush1.bf16.xpose.msra.mxu0 %v8554
        %12803 = vmatprep.subr.bf16.mxu0 %v8619
        %12804 = vmatpush1.bf16.xpose.msra.mxu0 %v8618
        %12805 = vmatprep.subr.bf16.mxu0 %v8683
        %12806 = vmatpush1.bf16.xpose.msra.mxu0 %v8682
        %12807 = vmatprep.subr.bf16.mxu0 0
        %12808 = vmatpush1.bf16.xpose.msra.mxu0 0
        %12809 = vmatprep.subr.bf16.mxu0 0
        %12810 = vmatpush1.bf16.xpose.msra.mxu0 0
        %12811 = vmatprep.subr.bf16.mxu0 0
        %12812 = vmatpush1.bf16.xpose.msra.mxu0 0
        %12813 = vmatprep.subr.bf16.mxu0 0
        %12814 = vmatpush1.bf16.xpose.msra.mxu0 0
        %12815 = vmatprep.subr.bf16.mxu0 0
        %12816 = vmatpush1.bf16.xpose.msra.mxu0 0
        %12817 = vmatprep.subr.bf16.mxu0 0
        %12818 = vmatpush1.bf16.xpose.msra.mxu0 0
        %12819 = vmatprep.subr.bf16.mxu0 0
        %12820 = vmatpush1.bf16.xpose.msra.mxu0 0
        %12821 = vmatprep.mubr.bf16.mxu0 %v2222
        %12822 = vmatmul.mubr.bf16.gmra.mrb[0].mxu0 %v2220
        %v12823 = vpop.f32.mrb[0].mxu0
        %v12824 = vadd.f32 %v12783, %v12823
        %v12825 = vpop.f32.mrb[0].mxu0
        %v12826 = vadd.f32 %v12785, %v12825
        %v12827 = vpop.f32.mrb[0].mxu0
        %v12828 = vpop.f32.mrb[0].mxu0
        %12829 = vdwg.mxu0
        %12830 = vmatprep.subr.bf16.mxu0 %v8173
        %12831 = vmatpush1.bf16.xpose.msra.mxu0 %v8172
        %12832 = vmatprep.subr.bf16.mxu0 %v8237
        %12833 = vmatpush1.bf16.xpose.msra.mxu0 %v8236
        %12834 = vmatprep.subr.bf16.mxu0 %v8301
        %12835 = vmatpush1.bf16.xpose.msra.mxu0 %v8300
        %12836 = vmatprep.subr.bf16.mxu0 %v8365
        %12837 = vmatpush1.bf16.xpose.msra.mxu0 %v8364
        %12838 = vmatprep.subr.bf16.mxu0 %v8429
        %12839 = vmatpush1.bf16.xpose.msra.mxu0 %v8428
        %12840 = vmatprep.subr.bf16.mxu0 %v8493
        %12841 = vmatpush1.bf16.xpose.msra.mxu0 %v8492
        %12842 = vmatprep.subr.bf16.mxu0 %v8557
        %12843 = vmatpush1.bf16.xpose.msra.mxu0 %v8556
        %12844 = vmatprep.subr.bf16.mxu0 %v8621
        %12845 = vmatpush1.bf16.xpose.msra.mxu0 %v8620
        %12846 = vmatprep.subr.bf16.mxu0 %v8685
        %12847 = vmatpush1.bf16.xpose.msra.mxu0 %v8684
        %12848 = vmatprep.subr.bf16.mxu0 0
        %12849 = vmatpush1.bf16.xpose.msra.mxu0 0
        %12850 = vmatprep.subr.bf16.mxu0 0
        %12851 = vmatpush1.bf16.xpose.msra.mxu0 0
        %12852 = vmatprep.subr.bf16.mxu0 0
        %12853 = vmatpush1.bf16.xpose.msra.mxu0 0
        %12854 = vmatprep.subr.bf16.mxu0 0
        %12855 = vmatpush1.bf16.xpose.msra.mxu0 0
        %12856 = vmatprep.subr.bf16.mxu0 0
        %12857 = vmatpush1.bf16.xpose.msra.mxu0 0
        %12858 = vmatprep.subr.bf16.mxu0 0
        %12859 = vmatpush1.bf16.xpose.msra.mxu0 0
        %12860 = vmatprep.subr.bf16.mxu0 0
        %12861 = vmatpush1.bf16.xpose.msra.mxu0 0
        %12862 = vmatprep.mubr.bf16.mxu0 %v2219
        %12863 = vmatmul.mubr.bf16.gmra.mrb[0].mxu0 %v2205
        %v12864 = vpop.f32.mrb[0].mxu0
        %v12865 = vadd.f32 %v12824, %v12864
        %v12866 = vpop.f32.mrb[0].mxu0
        %v12867 = vadd.f32 %v12826, %v12866
        %v12868 = vpop.f32.mrb[0].mxu0
        %v12869 = vpop.f32.mrb[0].mxu0
        %12870 = vdwg.mxu0
        %12871 = vmatprep.subr.bf16.mxu0 %v8175
        %12872 = vmatpush1.bf16.xpose.msra.mxu0 %v8174
        %12873 = vmatprep.subr.bf16.mxu0 %v8239
        %12874 = vmatpush1.bf16.xpose.msra.mxu0 %v8238
        %12875 = vmatprep.subr.bf16.mxu0 %v8303
        %12876 = vmatpush1.bf16.xpose.msra.mxu0 %v8302
        %12877 = vmatprep.subr.bf16.mxu0 %v8367
        %12878 = vmatpush1.bf16.xpose.msra.mxu0 %v8366
        %12879 = vmatprep.subr.bf16.mxu0 %v8431
        %12880 = vmatpush1.bf16.xpose.msra.mxu0 %v8430
        %12881 = vmatprep.subr.bf16.mxu0 %v8495
        %12882 = vmatpush1.bf16.xpose.msra.mxu0 %v8494
        %12883 = vmatprep.subr.bf16.mxu0 %v8559
        %12884 = vmatpush1.bf16.xpose.msra.mxu0 %v8558
        %12885 = vmatprep.subr.bf16.mxu0 %v8623
        %12886 = vmatpush1.bf16.xpose.msra.mxu0 %v8622
        %12887 = vmatprep.subr.bf16.mxu0 %v8687
        %12888 = vmatpush1.bf16.xpose.msra.mxu0 %v8686
        %12889 = vmatprep.subr.bf16.mxu0 0
        %12890 = vmatpush1.bf16.xpose.msra.mxu0 0
        %12891 = vmatprep.subr.bf16.mxu0 0
        %12892 = vmatpush1.bf16.xpose.msra.mxu0 0
        %12893 = vmatprep.subr.bf16.mxu0 0
        %12894 = vmatpush1.bf16.xpose.msra.mxu0 0
        %12895 = vmatprep.subr.bf16.mxu0 0
        %12896 = vmatpush1.bf16.xpose.msra.mxu0 0
        %12897 = vmatprep.subr.bf16.mxu0 0
        %12898 = vmatpush1.bf16.xpose.msra.mxu0 0
        %12899 = vmatprep.subr.bf16.mxu0 0
        %12900 = vmatpush1.bf16.xpose.msra.mxu0 0
        %12901 = vmatprep.subr.bf16.mxu0 0
        %12902 = vmatpush1.bf16.xpose.msra.mxu0 0
        %12903 = vmatprep.mubr.bf16.mxu0 %v2223
        %12904 = vmatmul.mubr.bf16.gmra.mrb[0].mxu0 %v2221
        %v12905 = vpop.f32.mrb[0].mxu0
        %v12906 = vadd.f32 %v12865, %v12905
        %v12907 = vpop.f32.mrb[0].mxu0
        %v12908 = vadd.f32 %v12867, %v12907
        %v12909 = vpop.f32.mrb[0].mxu0
        %v12910 = vpop.f32.mrb[0].mxu0
        %12911 = vdwg.mxu0
        %v12916 = vcombine.low %v11594, %v11596
        %v12917 = vcombine.low %v12906, %v12908
        %v12919 = vunpack.c.l.s4 1983009808
        %v12920 = vunpack.c.0.s8 %v12919
        %v12921 = vlaneseq
        %v12922 = vshrl.u32 %v12921, 7
        %v12923 = vsub.s32 %v12920, %v12922
        %v12924 = vrot.slane %v12916, %v12923
        %v12926 = vunpack.c.l.s4 1983009808
        %v12927 = vunpack.c.0.s8 %v12926
        %v12928 = vlaneseq
        %v12929 = vshrl.u32 %v12928, 7
        %v12930 = vsub.s32 %v12927, %v12929
        %v12931 = vrot.slane %v12917, %v12930
        %v12932 = vcombine.low %v12924, %v12931
        %v12934 = vadd.f32 %v223, %v12932
        %vm12935 = vcmask 1041408
        %vm12936 = vcmask 1043458
        %vm12937 = vmor %vm12936, %vm12935
        %vm12938 = vcmask 1045508
        %vm12939 = vmor %vm12938, %vm12937
        %vm12940 = vcmask 130054
        %vm12941 = vmor %vm12940, %vm12939
        %12942 = vst.msk [vmem:[%s192] sm:$0xff] %vm12941, %v12934
        %s12943 = sand.u32 %s91, 1
        %s12944 = scalar_lea.sflag [#allocation4], %s12943
        %s12945 = sand.u32 %s91, 1
        %s12946 = smul.addr %s12945, 8
        %s12947 = scalar_lea.vmem [#allocation7], %s12946
        // Predicated region
        $region41: #{tpu_custom_call.1} parent=27 // pred_check
          %p12948 = pneg %p101
        $region42: #{tpu_custom_call.1} parent=27 // pred_check_branch
          %12950 = sbr.rel (%p12948) target = $region44
        $region43: #{tpu_custom_call.1} parent=27 // pred_region
          %s12952 = ssub.s32 128, 128
          %12953 = vsyncadd %s12944, %s12952
          %s12954 = smul.addr %s24, 4
          %s12955 = smul.addr %s12954, 32
          %s12956 = scalar_lea.hbm %s2, %s12955
          %s12958 = sshll.u32 %s12947, 4
          %s12959 = int_to_ptr.vmem [resolvable:$true] %s12958
          %12961 = dma.vmem_to_hbm [thread:$0]  %s12959, 128, %s12956, %s12944
        $region44: #{tpu_custom_call.1} parent=27 // pred_fallthru
          _
      $region28: #{tpu_custom_call.1} parent=5 // pred_fallthru
        _
      %p12962 = scmp.le.s32.totalorder 2, %s15
      // Predicated region
      $region45: #{tpu_custom_call.1} parent=5 // pred_check
        %p12963 = pneg %p12962
      $region46: #{tpu_custom_call.1} parent=5 // pred_check_branch
        %12965 = sbr.rel (%p12963) target = $region48
      $region47: #{tpu_custom_call.1} parent=5 // pred_region
        %s12966 = ssub.s32 %s15, 2
        // Predicated region
        $region49: #{tpu_custom_call.1} parent=47 // pred_check
          %p12967 = pneg %p107
        $region50: #{tpu_custom_call.1} parent=47 // pred_check_branch
          %12969 = sbr.rel (%p12967) target = $region52
        $region51: #{tpu_custom_call.1} parent=47 // pred_region
          %s12970 = sand.u32 %s92, 1
          %s12971 = scalar_lea.sflag [#allocation4], %s12970
          %s12972 = sand.u32 %s92, 1
          %s12973 = smul.addr %s12972, 8
          %s12974 = scalar_lea.vmem [#allocation7], %s12973
          %12975 = dma.done %s12971, 128
        $region52: #{tpu_custom_call.1} parent=47 // pred_fallthru
          _
      $region48: #{tpu_custom_call.1} parent=5 // pred_fallthru
        _
    $region6: #{tpu_custom_call.1} parent=1 // loop_footer
      %s19 = sadd.s32 1, %s15
    $region7: #{tpu_custom_call.1} parent=1 // loop_footer_branch
      %14 = sbr.rel target = $region3
    $region8: #{tpu_custom_call.1} parent=1 // loop_exit
      _
    %12976 = vsyncpa [#allocation3], 1
    %s12977 = scalar_lea.sflag [#allocation3], 1
    %12978 = vsyncpa %s12977, 1
    %12979 = vsyncpa [#allocation6], 1
    %s12980 = scalar_lea.sflag [#allocation6], 1
    %12981 = vsyncpa %s12980, 1
    %12982 = vsyncpa [#allocation4], 1
    %s12983 = scalar_lea.sflag [#allocation4], 1
    %12984 = vsyncpa %s12983, 1

</llo_original>
